<compile_context>
chip_gen: v5e
topology: v5e:2x2
jax: 0.10.0
libtpu: 0.0.40
codegen_flags: <defaults>
</compile_context>

<pallas_src>
import functools

import numpy as np
import jax
import jax.numpy as jnp
from jax.experimental import pallas as pl
from jax.experimental.pallas import tpu as pltpu

BN_EPS = 1e-5
MXU_DTYPE = jnp.bfloat16      # matmul operand dtype (f32 accumulation on MXU)


def _mm(a, b):
    """MXU matmul: bf16 operands, f32 accumulation."""
    return jnp.dot(a.astype(MXU_DTYPE), b.astype(MXU_DTYPE),
                   preferred_element_type=jnp.float32)


# ---------------------------------------------------------------------------
# The fused TAM kernel (one grid step == one batch element, fully VMEM-resident)
# ---------------------------------------------------------------------------
def _tam_kernel(x_ref, x1_ref, x2_ref,
                w31_ref, b31_ref,
                wf1_ref, sf1_ref, bf1_ref, wf2_ref, bf2_ref,
                lap_ref,
                w3_ref, s3_ref, b3_ref,
                w5_ref, s5_ref, b5_ref, ml_ref, mr_ref,
                pool_ref, wc1_ref, sc1_ref, bc1_ref,
                wch_ref, bch_ref, wcw_ref, bcw_ref,
                eh_ref, ew_ref,
                o_ref, *, H, W, C):
    L = H * W
    xin = x_ref[0]                                   # (L, C)  == tmp
    x1in = x1_ref[0]
    x2in = x2_ref[0]

    # ---- x = conv3_1(cat([x, x1, x2], 1)) + tmp  (1x1 conv WITH bias).
    #      No concat materialized: Cin-split matmuls accumulated. ----
    w31 = w31_ref[...]                               # (3C, C)
    xx = (_mm(xin, w31[0:C]) + _mm(x1in, w31[C:2 * C])
          + _mm(x2in, w31[2 * C:3 * C]) + b31_ref[0] + xin)

    # ---- x_bg = (1 - sigmoid(x)) * tmp ----
    x_bg = (1.0 - jax.nn.sigmoid(xx)) * xin

    # ---- pred_f = sigmoid(conv_f(x));  conv_f = BasicConv2d(C,C//4,1) -> Conv2d(C//4,1,1) ----
    mid = jnp.maximum(_mm(xx, wf1_ref[...]) * sf1_ref[0] + bf1_ref[0], 0.0)
    pf = jax.nn.sigmoid(_mm(mid, wf2_ref[...]) + bf2_ref[0])        # (L, 1)

    # ---- make_laplace(pred_f, 1): precomputed linear pyramid operator ----
    lap = pf - _mm(lap_ref[...], pf)                                # (L, 1)

    # ---- pred_edge = x * lap + x ;  x_out = conv3(cat([pred_edge, x_bg], 1)) ----
    pred_edge = xx * (lap + 1.0)
    w3 = w3_ref[...]                                 # (2C, C)
    t3 = _mm(pred_edge, w3[0:C]) + _mm(x_bg, w3[C:2 * C])
    t3 = jnp.maximum(t3 * s3_ref[0] + b3_ref[0], 0.0)

    # ---- conv5: 3x3, pad 1, stride 1 on the flat (L, C) layout.
    #      Zero padding happens in VMEM; each tap is a shifted slice + column
    #      mask + matmul (no reshape in the tap loop). ----
    P = 8 * ((W + 8) // 8)                           # sublane-aligned pad rows (>= W+1)
    zrow = jnp.zeros((P, C), jnp.float32)
    tp = jnp.concatenate([zrow, t3, zrow], axis=0)   # (L + 2P, C)
    ml = ml_ref[...]                                 # (L, 1): 0 where col == 0
    mr = mr_ref[...]                                 # (L, 1): 0 where col == W-1
    acc = jnp.zeros((L, C), jnp.float32)
    tap = 0
    for dh in (-1, 0, 1):
        for dw in (-1, 0, 1):
            s = P + dh * W + dw
            win = tp[s:s + L, :]
            if dw == -1:
                win = win * ml
            elif dw == 1:
                win = win * mr
            acc = acc + _mm(win, w5_ref[tap * C:(tap + 1) * C, :])
            tap += 1
    t5 = jnp.maximum(acc * s5_ref[0] + b5_ref[0], 0.0)

    # ---- CoordAtt: pools via one (H+W, L) matrix, 1x1 convs as matmuls,
    #      BN(+folded conv1 bias) + h_swish + sigmoids, gates expanded back
    #      with 0/1 matrices. ----
    pooled = _mm(pool_ref[...], t5)                  # (H+W, C): [W-mean rows; H-mean cols]
    y = _mm(pooled, wc1_ref[...]) * sc1_ref[0] + bc1_ref[0]
    y = y * (jnp.clip(y + 3.0, 0.0, 6.0) * (1.0 / 6.0))             # h_swish
    a_h = jax.nn.sigmoid(_mm(y[0:H], wch_ref[...]) + bch_ref[0])    # (H, C)
    a_w = jax.nn.sigmoid(_mm(y[H:H + W], wcw_ref[...]) + bcw_ref[0])  # (W, C)
    gate = _mm(eh_ref[...], a_h) * _mm(ew_ref[...], a_w)            # (L, C)
    o_ref[0] = (t5 * gate).astype(o_ref.dtype)


# ---------------------------------------------------------------------------
# Host-side precomputed geometry constants
# ---------------------------------------------------------------------------
def _make_laplace_operator(n):
    """1-D factor A so that make_laplace's `up` image equals A_h @ f @ A_w^T."""
    g1 = np.array([1.0, 4.0, 6.0, 4.0, 1.0], np.float64) / 16.0
    G = np.zeros((n, n), np.float64)                 # 1-D gauss conv, reflect pad 2
    for i in range(n):
        for a in range(-2, 3):
            src = i + a
            if src < 0:
                src = -src
            if src > n - 1:
                src = 2 * (n - 1) - src
            G[i, src] += g1[a + 2]
    D = np.zeros((n // 2, n), np.float64)            # downsample [::2]
    D[np.arange(n // 2), 2 * np.arange(n // 2)] = 1.0
    U = np.zeros((n, n // 2), np.float64)            # zero-interleave upsample
    U[2 * np.arange(n // 2), np.arange(n // 2)] = 1.0
    return 2.0 * G @ U @ D @ G                       # 4*g split as (2g1) x (2g1)


def _coordatt_geometry(H, W):
    L = H * W
    pool = np.zeros((H + W, L), np.float32)
    eh = np.zeros((L, H), np.float32)
    ew = np.zeros((L, W), np.float32)
    for i in range(H):
        for j in range(W):
            k = i * W + j
            pool[i, k] = 1.0 / W                     # mean over W  -> x_h
            pool[H + j, k] = 1.0 / H                 # mean over H  -> x_w
            eh[k, i] = 1.0
            ew[k, j] = 1.0
    return pool, eh, ew


def _col_masks(H, W):
    L = H * W
    col = np.arange(L) % W
    ml = (col != 0).astype(np.float32).reshape(L, 1)
    mr = (col != W - 1).astype(np.float32).reshape(L, 1)
    return ml, mr


# ---------------------------------------------------------------------------
# Deterministic synthetic parameters (shapes follow the PyTorch __init__)
# ---------------------------------------------------------------------------
def init_tam(key, hidden_dim, H, W):
    C = hidden_dim
    C4 = max(1, C // 4)
    mip = max(8, C // 32)                            # CoordAtt reduction = 32
    assert H % 2 == 0 and W % 2 == 0, "make_laplace operator assumes even H, W"
    ks = jax.random.split(key, 8)
    f32 = jnp.float32

    def conv_w(k, cin, cout):
        w = jax.random.normal(k, (cin, cout), f32) / np.sqrt(cin)
        return w.astype(MXU_DTYPE)

    def bias(k, cout):
        return 0.1 * jax.random.normal(k, (1, cout), f32)

    def bn_fold(k, cout):
        k1, k2, k3, k4 = jax.random.split(k, 4)
        gamma = 1.0 + 0.1 * jax.random.normal(k1, (cout,), f32)
        beta = 0.1 * jax.random.normal(k2, (cout,), f32)
        mean = 0.1 * jax.random.normal(k3, (cout,), f32)
        var = jnp.abs(jax.random.normal(k4, (cout,), f32)) + 0.5
        s = gamma / jnp.sqrt(var + BN_EPS)
        return s.reshape(1, cout), (beta - mean * s).reshape(1, cout)

    # conv3_1: Conv2d(3C, C, 1) with bias   (input chunks ordered [x, x1, x2])
    kk = jax.random.split(ks[0], 2)
    w31, b31 = conv_w(kk[0], 3 * C, C), bias(kk[1], C)
    # conv_f: BasicConv2d(C, C//4, 1) -> Conv2d(C//4, 1, 1)
    kk = jax.random.split(ks[1], 4)
    wf1 = conv_w(kk[0], C, C4)
    sf1, bf1 = bn_fold(kk[1], C4)
    wf2, bf2 = conv_w(kk[2], C4, 1), bias(kk[3], 1)
    # conv3: BasicConv2d(2C, C, 1)          (input chunks ordered [pred_edge, x_bg])
    kk = jax.random.split(ks[2], 2)
    w3 = conv_w(kk[0], 2 * C, C)
    s3, b3 = bn_fold(kk[1], C)
    # conv5: BasicConv2d(C, C, 3, 1, 1); weight laid out tap-major as (9*C, C)
    kk = jax.random.split(ks[3], 2)
    w5 = (jax.random.normal(kk[0], (3, 3, C, C), f32) / np.sqrt(9 * C)
          ).reshape(9 * C, C).astype(MXU_DTYPE)
    s5, b5 = bn_fold(kk[1], C)
    # CoordAtt(C, C): conv1(C->mip)+BN+h_swish, conv_h / conv_w (mip->C) + sigmoid
    kk = jax.random.split(ks[4], 7)
    wc1 = conv_w(kk[0], C, mip)
    sc1, tc1 = bn_fold(kk[2], mip)
    bc1 = sc1 * bias(kk[1], mip) + tc1               # conv1 bias folded into BN affine
    wch, bch = conv_w(kk[3], mip, C), bias(kk[4], C)
    wcw, bcw = conv_w(kk[5], mip, C), bias(kk[6], C)

    # geometry constants
    Ah, Aw = _make_laplace_operator(H), _make_laplace_operator(W)
    lap_op = jnp.asarray(np.kron(Ah, Aw), MXU_DTYPE)                 # (L, L)
    pool_np, eh_np, ew_np = _coordatt_geometry(H, W)
    ml_np, mr_np = _col_masks(H, W)

    consts = [w31, b31,
              wf1, sf1, bf1, wf2, bf2,
              lap_op,
              w3, s3, b3,
              w5, s5, b5,
              jnp.asarray(ml_np), jnp.asarray(mr_np),
              jnp.asarray(pool_np, MXU_DTYPE), wc1, sc1, bc1,
              wch, bch, wcw, bcw,
              jnp.asarray(eh_np, MXU_DTYPE), jnp.asarray(ew_np, MXU_DTYPE)]
    return consts


# ---------------------------------------------------------------------------
# Public wrapper: NCHW in / NCHW out (like the PyTorch module)
# ---------------------------------------------------------------------------
def tam_forward(x, x1, x2, consts):
    N, C, H, W = x.shape
    L = H * W

    def to_flat(a):                                  # NCHW -> (N, H*W, C)
        return jnp.transpose(a, (0, 2, 3, 1)).reshape(N, L, C)

    data_spec = pl.BlockSpec((1, L, C), lambda n: (n, 0, 0))
    const_spec = lambda a: pl.BlockSpec(a.shape, lambda n: (0, 0))   # all consts are 2-D

    kernel = functools.partial(_tam_kernel, H=H, W=W, C=C)
    out = pl.pallas_call(
        kernel,
        out_shape=jax.ShapeDtypeStruct((N, L, C), jnp.float32),
        grid=(N,),
        in_specs=[data_spec, data_spec, data_spec] + [const_spec(a) for a in consts],
        out_specs=pl.BlockSpec((1, L, C), lambda n: (n, 0, 0)),
        compiler_params=pltpu.CompilerParams(dimension_semantics=("parallel",)),
    )(to_flat(x), to_flat(x1), to_flat(x2), *consts)
    return jnp.transpose(out.reshape(N, H, W, C), (0, 3, 1, 2))      # -> NCHW


if __name__ == "__main__":
    key = jax.random.PRNGKey(0)
    pkey, k1, k2, k3 = jax.random.split(key, 4)

    hidden_dim, N, H, W = 32, 2, 16, 16
    consts = init_tam(pkey, hidden_dim, H, W)

    x = jax.random.normal(k1, (N, hidden_dim, H, W), jnp.float32)
    x1 = jax.random.normal(k2, (N, hidden_dim, H, W), jnp.float32)
    x2 = jax.random.normal(k3, (N, hidden_dim, H, W), jnp.float32)

    y = jax.jit(tam_forward)(x, x1, x2, consts)
    jax.block_until_ready(y)

    assert y.shape == (N, hidden_dim, H, W), y.shape
    assert bool(jnp.all(jnp.isfinite(y)))
    print("KERNEL_OK")
</pallas_src>

<mosaic_0001>
module attributes {stable_mosaic.version = 11 : i64} {
  func.func @_tam_kernel(%arg0: i32, %arg1: memref<1x256x32xf32, #tpu.memory_space<vmem>>, %arg2: memref<1x256x32xf32, #tpu.memory_space<vmem>>, %arg3: memref<1x256x32xf32, #tpu.memory_space<vmem>>, %arg4: memref<96x32xbf16, #tpu.memory_space<vmem>>, %arg5: memref<1x32xf32, #tpu.memory_space<vmem>>, %arg6: memref<32x8xbf16, #tpu.memory_space<vmem>>, %arg7: memref<1x8xf32, #tpu.memory_space<vmem>>, %arg8: memref<1x8xf32, #tpu.memory_space<vmem>>, %arg9: memref<8x1xbf16, #tpu.memory_space<vmem>>, %arg10: memref<1x1xf32, #tpu.memory_space<vmem>>, %arg11: memref<256x256xbf16, #tpu.memory_space<vmem>>, %arg12: memref<64x32xbf16, #tpu.memory_space<vmem>>, %arg13: memref<1x32xf32, #tpu.memory_space<vmem>>, %arg14: memref<1x32xf32, #tpu.memory_space<vmem>>, %arg15: memref<288x32xbf16, #tpu.memory_space<vmem>>, %arg16: memref<1x32xf32, #tpu.memory_space<vmem>>, %arg17: memref<1x32xf32, #tpu.memory_space<vmem>>, %arg18: memref<256x1xf32, #tpu.memory_space<vmem>>, %arg19: memref<256x1xf32, #tpu.memory_space<vmem>>, %arg20: memref<32x256xbf16, #tpu.memory_space<vmem>>, %arg21: memref<32x8xbf16, #tpu.memory_space<vmem>>, %arg22: memref<1x8xf32, #tpu.memory_space<vmem>>, %arg23: memref<1x8xf32, #tpu.memory_space<vmem>>, %arg24: memref<8x32xbf16, #tpu.memory_space<vmem>>, %arg25: memref<1x32xf32, #tpu.memory_space<vmem>>, %arg26: memref<8x32xbf16, #tpu.memory_space<vmem>>, %arg27: memref<1x32xf32, #tpu.memory_space<vmem>>, %arg28: memref<256x16xbf16, #tpu.memory_space<vmem>>, %arg29: memref<256x16xbf16, #tpu.memory_space<vmem>>, %arg30: memref<1x256x32xf32, #tpu.memory_space<vmem>>) attributes {dimension_semantics = [#tpu.dimension_semantics<parallel>], iteration_bounds = array<i64: 2>, scalar_prefetch = 0 : i64, scratch_operands = 0 : i64, tpu.core_type = #tpu.core_type<tc>, window_params = [{transform_indices = @transform_0, window_bounds = array<i64: 1, 256, 32>}, {transform_indices = @transform_1, window_bounds = array<i64: 1, 256, 32>}, {transform_indices = @transform_2, window_bounds = array<i64: 1, 256, 32>}, {pipeline_mode = #tpu.pipeline_mode<synchronous>, transform_indices = @transform_3, window_bounds = array<i64: 96, 32>}, {pipeline_mode = #tpu.pipeline_mode<synchronous>, transform_indices = @transform_4, window_bounds = array<i64: 1, 32>}, {pipeline_mode = #tpu.pipeline_mode<synchronous>, transform_indices = @transform_5, window_bounds = array<i64: 32, 8>}, {pipeline_mode = #tpu.pipeline_mode<synchronous>, transform_indices = @transform_6, window_bounds = array<i64: 1, 8>}, {pipeline_mode = #tpu.pipeline_mode<synchronous>, transform_indices = @transform_7, window_bounds = array<i64: 1, 8>}, {pipeline_mode = #tpu.pipeline_mode<synchronous>, transform_indices = @transform_8, window_bounds = array<i64: 8, 1>}, {pipeline_mode = #tpu.pipeline_mode<synchronous>, transform_indices = @transform_9, window_bounds = array<i64: 1, 1>}, {pipeline_mode = #tpu.pipeline_mode<synchronous>, transform_indices = @transform_10, window_bounds = array<i64: 256, 256>}, {pipeline_mode = #tpu.pipeline_mode<synchronous>, transform_indices = @transform_11, window_bounds = array<i64: 64, 32>}, {pipeline_mode = #tpu.pipeline_mode<synchronous>, transform_indices = @transform_12, window_bounds = array<i64: 1, 32>}, {pipeline_mode = #tpu.pipeline_mode<synchronous>, transform_indices = @transform_13, window_bounds = array<i64: 1, 32>}, {pipeline_mode = #tpu.pipeline_mode<synchronous>, transform_indices = @transform_14, window_bounds = array<i64: 288, 32>}, {pipeline_mode = #tpu.pipeline_mode<synchronous>, transform_indices = @transform_15, window_bounds = array<i64: 1, 32>}, {pipeline_mode = #tpu.pipeline_mode<synchronous>, transform_indices = @transform_16, window_bounds = array<i64: 1, 32>}, {pipeline_mode = #tpu.pipeline_mode<synchronous>, transform_indices = @transform_17, window_bounds = array<i64: 256, 1>}, {pipeline_mode = #tpu.pipeline_mode<synchronous>, transform_indices = @transform_18, window_bounds = array<i64: 256, 1>}, {pipeline_mode = #tpu.pipeline_mode<synchronous>, transform_indices = @transform_19, window_bounds = array<i64: 32, 256>}, {pipeline_mode = #tpu.pipeline_mode<synchronous>, transform_indices = @transform_20, window_bounds = array<i64: 32, 8>}, {pipeline_mode = #tpu.pipeline_mode<synchronous>, transform_indices = @transform_21, window_bounds = array<i64: 1, 8>}, {pipeline_mode = #tpu.pipeline_mode<synchronous>, transform_indices = @transform_22, window_bounds = array<i64: 1, 8>}, {pipeline_mode = #tpu.pipeline_mode<synchronous>, transform_indices = @transform_23, window_bounds = array<i64: 8, 32>}, {pipeline_mode = #tpu.pipeline_mode<synchronous>, transform_indices = @transform_24, window_bounds = array<i64: 1, 32>}, {pipeline_mode = #tpu.pipeline_mode<synchronous>, transform_indices = @transform_25, window_bounds = array<i64: 8, 32>}, {pipeline_mode = #tpu.pipeline_mode<synchronous>, transform_indices = @transform_26, window_bounds = array<i64: 1, 32>}, {pipeline_mode = #tpu.pipeline_mode<synchronous>, transform_indices = @transform_27, window_bounds = array<i64: 256, 16>}, {pipeline_mode = #tpu.pipeline_mode<synchronous>, transform_indices = @transform_28, window_bounds = array<i64: 256, 16>}, {transform_indices = @transform_29, window_bounds = array<i64: 1, 256, 32>}]} {
    %c0 = arith.constant 0 : index
    %c0_0 = arith.constant 0 : index
    %c0_1 = arith.constant 0 : index
    %0 = vector.load %arg1[%c0, %c0_0, %c0_1] : memref<1x256x32xf32, #tpu.memory_space<vmem>>, vector<1x256x32xf32>
    %1 = vector.shape_cast %0 : vector<1x256x32xf32> to vector<256x32xf32>
    %c0_2 = arith.constant 0 : index
    %c0_3 = arith.constant 0 : index
    %c0_4 = arith.constant 0 : index
    %2 = vector.load %arg2[%c0_2, %c0_3, %c0_4] : memref<1x256x32xf32, #tpu.memory_space<vmem>>, vector<1x256x32xf32>
    %3 = vector.shape_cast %2 : vector<1x256x32xf32> to vector<256x32xf32>
    %c0_5 = arith.constant 0 : index
    %c0_6 = arith.constant 0 : index
    %c0_7 = arith.constant 0 : index
    %4 = vector.load %arg3[%c0_5, %c0_6, %c0_7] : memref<1x256x32xf32, #tpu.memory_space<vmem>>, vector<1x256x32xf32>
    %5 = vector.shape_cast %4 : vector<1x256x32xf32> to vector<256x32xf32>
    %c0_8 = arith.constant 0 : index
    %c0_9 = arith.constant 0 : index
    %6 = vector.load %arg4[%c0_8, %c0_9] : memref<96x32xbf16, #tpu.memory_space<vmem>>, vector<96x32xbf16>
    %7 = vector.extract_strided_slice %6 {offsets = [0, 0], sizes = [32, 32], strides = [1, 1]} : vector<96x32xbf16> to vector<32x32xbf16>
    %8 = arith.truncf %1 : vector<256x32xf32> to vector<256x32xbf16>
    %cst = arith.constant dense<0.000000e+00> : vector<256x32xf32>
    %9 = tpu.matmul %8, %7, %cst {dimension_numbers = #tpu.dot_dimension_numbers<[1], [0], [0], [1], [0, 0, 1, 1], [], []>} : vector<256x32xbf16>, vector<32x32xbf16>, vector<256x32xf32> -> vector<256x32xf32>
    %10 = vector.extract_strided_slice %6 {offsets = [32, 0], sizes = [32, 32], strides = [1, 1]} : vector<96x32xbf16> to vector<32x32xbf16>
    %11 = arith.truncf %3 : vector<256x32xf32> to vector<256x32xbf16>
    %cst_10 = arith.constant dense<0.000000e+00> : vector<256x32xf32>
    %12 = tpu.matmul %11, %10, %cst_10 {dimension_numbers = #tpu.dot_dimension_numbers<[1], [0], [0], [1], [0, 0, 1, 1], [], []>} : vector<256x32xbf16>, vector<32x32xbf16>, vector<256x32xf32> -> vector<256x32xf32>
    %13 = arith.addf %9, %12 : vector<256x32xf32>
    %14 = vector.extract_strided_slice %6 {offsets = [64, 0], sizes = [32, 32], strides = [1, 1]} : vector<96x32xbf16> to vector<32x32xbf16>
    %15 = arith.truncf %5 : vector<256x32xf32> to vector<256x32xbf16>
    %cst_11 = arith.constant dense<0.000000e+00> : vector<256x32xf32>
    %16 = tpu.matmul %15, %14, %cst_11 {dimension_numbers = #tpu.dot_dimension_numbers<[1], [0], [0], [1], [0, 0, 1, 1], [], []>} : vector<256x32xbf16>, vector<32x32xbf16>, vector<256x32xf32> -> vector<256x32xf32>
    %17 = arith.addf %13, %16 : vector<256x32xf32>
    %c0_12 = arith.constant 0 : index
    %c0_13 = arith.constant 0 : index
    %18 = vector.load %arg5[%c0_12, %c0_13] : memref<1x32xf32, #tpu.memory_space<vmem>>, vector<1x32xf32>
    %19 = vector.shape_cast %18 : vector<1x32xf32> to vector<32xf32>
    %20 = vector.shape_cast %19 : vector<32xf32> to vector<1x32xf32>
    %21 = vector.broadcast %20 : vector<1x32xf32> to vector<256x32xf32>
    %22 = arith.addf %17, %21 : vector<256x32xf32>
    %23 = arith.addf %22, %1 : vector<256x32xf32>
    %24 = arith.negf %23 : vector<256x32xf32>
    %25 = math.exp %24 : vector<256x32xf32>
    %cst_14 = arith.constant 1.000000e+00 : f32
    %26 = vector.broadcast %cst_14 : f32 to vector<256x32xf32>
    %27 = arith.addf %26, %25 : vector<256x32xf32>
    %28 = arith.divf %26, %27 : vector<256x32xf32>
    %cst_15 = arith.constant 1.000000e+00 : f32
    %29 = vector.broadcast %cst_15 : f32 to vector<256x32xf32>
    %30 = arith.subf %29, %28 : vector<256x32xf32>
    %31 = arith.mulf %30, %1 : vector<256x32xf32>
    %c0_16 = arith.constant 0 : index
    %c0_17 = arith.constant 0 : index
    %32 = vector.load %arg6[%c0_16, %c0_17] : memref<32x8xbf16, #tpu.memory_space<vmem>>, vector<32x8xbf16>
    %33 = arith.truncf %23 : vector<256x32xf32> to vector<256x32xbf16>
    %cst_18 = arith.constant dense<0.000000e+00> : vector<256x8xf32>
    %34 = tpu.matmul %33, %32, %cst_18 {dimension_numbers = #tpu.dot_dimension_numbers<[1], [0], [0], [1], [0, 0, 1, 1], [], []>} : vector<256x32xbf16>, vector<32x8xbf16>, vector<256x8xf32> -> vector<256x8xf32>
    %c0_19 = arith.constant 0 : index
    %c0_20 = arith.constant 0 : index
    %35 = vector.load %arg7[%c0_19, %c0_20] : memref<1x8xf32, #tpu.memory_space<vmem>>, vector<1x8xf32>
    %36 = vector.shape_cast %35 : vector<1x8xf32> to vector<8xf32>
    %37 = vector.shape_cast %36 : vector<8xf32> to vector<1x8xf32>
    %38 = vector.broadcast %37 : vector<1x8xf32> to vector<256x8xf32>
    %39 = arith.mulf %34, %38 : vector<256x8xf32>
    %c0_21 = arith.constant 0 : index
    %c0_22 = arith.constant 0 : index
    %40 = vector.load %arg8[%c0_21, %c0_22] : memref<1x8xf32, #tpu.memory_space<vmem>>, vector<1x8xf32>
    %41 = vector.shape_cast %40 : vector<1x8xf32> to vector<8xf32>
    %42 = vector.shape_cast %41 : vector<8xf32> to vector<1x8xf32>
    %43 = vector.broadcast %42 : vector<1x8xf32> to vector<256x8xf32>
    %44 = arith.addf %39, %43 : vector<256x8xf32>
    %cst_23 = arith.constant 0.000000e+00 : f32
    %45 = vector.broadcast %cst_23 : f32 to vector<256x8xf32>
    %46 = arith.maximumf %44, %45 : vector<256x8xf32>
    %c0_24 = arith.constant 0 : index
    %c0_25 = arith.constant 0 : index
    %47 = vector.load %arg9[%c0_24, %c0_25] : memref<8x1xbf16, #tpu.memory_space<vmem>>, vector<8x1xbf16>
    %48 = arith.truncf %46 : vector<256x8xf32> to vector<256x8xbf16>
    %cst_26 = arith.constant dense<0.000000e+00> : vector<256x1xf32>
    %49 = tpu.matmul %48, %47, %cst_26 {dimension_numbers = #tpu.dot_dimension_numbers<[1], [0], [0], [1], [0, 0, 1, 1], [], []>} : vector<256x8xbf16>, vector<8x1xbf16>, vector<256x1xf32> -> vector<256x1xf32>
    %c0_27 = arith.constant 0 : index
    %c0_28 = arith.constant 0 : index
    %50 = vector.load %arg10[%c0_27, %c0_28] : memref<1x1xf32, #tpu.memory_space<vmem>>, vector<1x1xf32>
    %51 = vector.shape_cast %50 : vector<1x1xf32> to vector<1xf32>
    %52 = vector.shape_cast %51 : vector<1xf32> to vector<1x1xf32>
    %53 = vector.broadcast %52 : vector<1x1xf32> to vector<256x1xf32>
    %54 = arith.addf %49, %53 : vector<256x1xf32>
    %55 = arith.negf %54 : vector<256x1xf32>
    %56 = math.exp %55 : vector<256x1xf32>
    %cst_29 = arith.constant 1.000000e+00 : f32
    %57 = vector.broadcast %cst_29 : f32 to vector<256x1xf32>
    %58 = arith.addf %57, %56 : vector<256x1xf32>
    %59 = arith.divf %57, %58 : vector<256x1xf32>
    %c0_30 = arith.constant 0 : index
    %c0_31 = arith.constant 0 : index
    %60 = vector.load %arg11[%c0_30, %c0_31] : memref<256x256xbf16, #tpu.memory_space<vmem>>, vector<256x256xbf16>
    %61 = arith.truncf %59 : vector<256x1xf32> to vector<256x1xbf16>
    %cst_32 = arith.constant dense<0.000000e+00> : vector<256x1xf32>
    %62 = tpu.matmul %60, %61, %cst_32 {dimension_numbers = #tpu.dot_dimension_numbers<[1], [0], [0], [1], [0, 0, 1, 1], [], []>} : vector<256x256xbf16>, vector<256x1xbf16>, vector<256x1xf32> -> vector<256x1xf32>
    %63 = arith.subf %59, %62 : vector<256x1xf32>
    %cst_33 = arith.constant 1.000000e+00 : f32
    %64 = vector.broadcast %cst_33 : f32 to vector<256x1xf32>
    %65 = arith.addf %63, %64 : vector<256x1xf32>
    %66 = vector.broadcast %65 : vector<256x1xf32> to vector<256x32xf32>
    %67 = arith.mulf %23, %66 : vector<256x32xf32>
    %c0_34 = arith.constant 0 : index
    %c0_35 = arith.constant 0 : index
    %68 = vector.load %arg12[%c0_34, %c0_35] : memref<64x32xbf16, #tpu.memory_space<vmem>>, vector<64x32xbf16>
    %69 = vector.extract_strided_slice %68 {offsets = [0, 0], sizes = [32, 32], strides = [1, 1]} : vector<64x32xbf16> to vector<32x32xbf16>
    %70 = arith.truncf %67 : vector<256x32xf32> to vector<256x32xbf16>
    %cst_36 = arith.constant dense<0.000000e+00> : vector<256x32xf32>
    %71 = tpu.matmul %70, %69, %cst_36 {dimension_numbers = #tpu.dot_dimension_numbers<[1], [0], [0], [1], [0, 0, 1, 1], [], []>} : vector<256x32xbf16>, vector<32x32xbf16>, vector<256x32xf32> -> vector<256x32xf32>
    %72 = vector.extract_strided_slice %68 {offsets = [32, 0], sizes = [32, 32], strides = [1, 1]} : vector<64x32xbf16> to vector<32x32xbf16>
    %73 = arith.truncf %31 : vector<256x32xf32> to vector<256x32xbf16>
    %cst_37 = arith.constant dense<0.000000e+00> : vector<256x32xf32>
    %74 = tpu.matmul %73, %72, %cst_37 {dimension_numbers = #tpu.dot_dimension_numbers<[1], [0], [0], [1], [0, 0, 1, 1], [], []>} : vector<256x32xbf16>, vector<32x32xbf16>, vector<256x32xf32> -> vector<256x32xf32>
    %75 = arith.addf %71, %74 : vector<256x32xf32>
    %c0_38 = arith.constant 0 : index
    %c0_39 = arith.constant 0 : index
    %76 = vector.load %arg13[%c0_38, %c0_39] : memref<1x32xf32, #tpu.memory_space<vmem>>, vector<1x32xf32>
    %77 = vector.shape_cast %76 : vector<1x32xf32> to vector<32xf32>
    %78 = vector.shape_cast %77 : vector<32xf32> to vector<1x32xf32>
    %79 = vector.broadcast %78 : vector<1x32xf32> to vector<256x32xf32>
    %80 = arith.mulf %75, %79 : vector<256x32xf32>
    %c0_40 = arith.constant 0 : index
    %c0_41 = arith.constant 0 : index
    %81 = vector.load %arg14[%c0_40, %c0_41] : memref<1x32xf32, #tpu.memory_space<vmem>>, vector<1x32xf32>
    %82 = vector.shape_cast %81 : vector<1x32xf32> to vector<32xf32>
    %83 = vector.shape_cast %82 : vector<32xf32> to vector<1x32xf32>
    %84 = vector.broadcast %83 : vector<1x32xf32> to vector<256x32xf32>
    %85 = arith.addf %80, %84 : vector<256x32xf32>
    %cst_42 = arith.constant 0.000000e+00 : f32
    %86 = vector.broadcast %cst_42 : f32 to vector<256x32xf32>
    %87 = arith.maximumf %85, %86 : vector<256x32xf32>
    %cst_43 = arith.constant 0.000000e+00 : f32
    %88 = vector.broadcast %cst_43 : f32 to vector<24x32xf32>
    %89 = tpu.concatenate %88, %87, %88 in 0 : vector<24x32xf32>, vector<256x32xf32>, vector<24x32xf32> -> vector<304x32xf32>
    %c0_44 = arith.constant 0 : index
    %c0_45 = arith.constant 0 : index
    %90 = vector.load %arg18[%c0_44, %c0_45] : memref<256x1xf32, #tpu.memory_space<vmem>>, vector<256x1xf32>
    %c0_46 = arith.constant 0 : index
    %c0_47 = arith.constant 0 : index
    %91 = vector.load %arg19[%c0_46, %c0_47] : memref<256x1xf32, #tpu.memory_space<vmem>>, vector<256x1xf32>
    %cst_48 = arith.constant 0.000000e+00 : f32
    %92 = vector.broadcast %cst_48 : f32 to vector<256x32xf32>
    %93 = vector.extract_strided_slice %89 {offsets = [7, 0], sizes = [256, 32], strides = [1, 1]} : vector<304x32xf32> to vector<256x32xf32>
    %94 = vector.broadcast %90 : vector<256x1xf32> to vector<256x32xf32>
    %95 = arith.mulf %93, %94 : vector<256x32xf32>
    %c0_49 = arith.constant 0 : index
    %c0_50 = arith.constant 0 : index
    %96 = vector.load %arg15[%c0_49, %c0_50] : memref<288x32xbf16, #tpu.memory_space<vmem>>, vector<32x32xbf16>
    %97 = arith.truncf %95 : vector<256x32xf32> to vector<256x32xbf16>
    %cst_51 = arith.constant dense<0.000000e+00> : vector<256x32xf32>
    %98 = tpu.matmul %97, %96, %cst_51 {dimension_numbers = #tpu.dot_dimension_numbers<[1], [0], [0], [1], [0, 0, 1, 1], [], []>} : vector<256x32xbf16>, vector<32x32xbf16>, vector<256x32xf32> -> vector<256x32xf32>
    %99 = arith.addf %92, %98 : vector<256x32xf32>
    %100 = vector.extract_strided_slice %89 {offsets = [8, 0], sizes = [256, 32], strides = [1, 1]} : vector<304x32xf32> to vector<256x32xf32>
    %c32 = arith.constant 32 : index
    %c0_52 = arith.constant 0 : index
    %101 = vector.load %arg15[%c32, %c0_52] : memref<288x32xbf16, #tpu.memory_space<vmem>>, vector<32x32xbf16>
    %102 = arith.truncf %100 : vector<256x32xf32> to vector<256x32xbf16>
    %cst_53 = arith.constant dense<0.000000e+00> : vector<256x32xf32>
    %103 = tpu.matmul %102, %101, %cst_53 {dimension_numbers = #tpu.dot_dimension_numbers<[1], [0], [0], [1], [0, 0, 1, 1], [], []>} : vector<256x32xbf16>, vector<32x32xbf16>, vector<256x32xf32> -> vector<256x32xf32>
    %104 = arith.addf %99, %103 : vector<256x32xf32>
    %105 = vector.extract_strided_slice %89 {offsets = [9, 0], sizes = [256, 32], strides = [1, 1]} : vector<304x32xf32> to vector<256x32xf32>
    %106 = vector.broadcast %91 : vector<256x1xf32> to vector<256x32xf32>
    %107 = arith.mulf %105, %106 : vector<256x32xf32>
    %c64 = arith.constant 64 : index
    %c0_54 = arith.constant 0 : index
    %108 = vector.load %arg15[%c64, %c0_54] : memref<288x32xbf16, #tpu.memory_space<vmem>>, vector<32x32xbf16>
    %109 = arith.truncf %107 : vector<256x32xf32> to vector<256x32xbf16>
    %cst_55 = arith.constant dense<0.000000e+00> : vector<256x32xf32>
    %110 = tpu.matmul %109, %108, %cst_55 {dimension_numbers = #tpu.dot_dimension_numbers<[1], [0], [0], [1], [0, 0, 1, 1], [], []>} : vector<256x32xbf16>, vector<32x32xbf16>, vector<256x32xf32> -> vector<256x32xf32>
    %111 = arith.addf %104, %110 : vector<256x32xf32>
    %112 = vector.extract_strided_slice %89 {offsets = [23, 0], sizes = [256, 32], strides = [1, 1]} : vector<304x32xf32> to vector<256x32xf32>
    %113 = vector.broadcast %90 : vector<256x1xf32> to vector<256x32xf32>
    %114 = arith.mulf %112, %113 : vector<256x32xf32>
    %c96 = arith.constant 96 : index
    %c0_56 = arith.constant 0 : index
    %115 = vector.load %arg15[%c96, %c0_56] : memref<288x32xbf16, #tpu.memory_space<vmem>>, vector<32x32xbf16>
    %116 = arith.truncf %114 : vector<256x32xf32> to vector<256x32xbf16>
    %cst_57 = arith.constant dense<0.000000e+00> : vector<256x32xf32>
    %117 = tpu.matmul %116, %115, %cst_57 {dimension_numbers = #tpu.dot_dimension_numbers<[1], [0], [0], [1], [0, 0, 1, 1], [], []>} : vector<256x32xbf16>, vector<32x32xbf16>, vector<256x32xf32> -> vector<256x32xf32>
    %118 = arith.addf %111, %117 : vector<256x32xf32>
    %119 = vector.extract_strided_slice %89 {offsets = [24, 0], sizes = [256, 32], strides = [1, 1]} : vector<304x32xf32> to vector<256x32xf32>
    %c128 = arith.constant 128 : index
    %c0_58 = arith.constant 0 : index
    %120 = vector.load %arg15[%c128, %c0_58] : memref<288x32xbf16, #tpu.memory_space<vmem>>, vector<32x32xbf16>
    %121 = arith.truncf %119 : vector<256x32xf32> to vector<256x32xbf16>
    %cst_59 = arith.constant dense<0.000000e+00> : vector<256x32xf32>
    %122 = tpu.matmul %121, %120, %cst_59 {dimension_numbers = #tpu.dot_dimension_numbers<[1], [0], [0], [1], [0, 0, 1, 1], [], []>} : vector<256x32xbf16>, vector<32x32xbf16>, vector<256x32xf32> -> vector<256x32xf32>
    %123 = arith.addf %118, %122 : vector<256x32xf32>
    %124 = vector.extract_strided_slice %89 {offsets = [25, 0], sizes = [256, 32], strides = [1, 1]} : vector<304x32xf32> to vector<256x32xf32>
    %125 = vector.broadcast %91 : vector<256x1xf32> to vector<256x32xf32>
    %126 = arith.mulf %124, %125 : vector<256x32xf32>
    %c160 = arith.constant 160 : index
    %c0_60 = arith.constant 0 : index
    %127 = vector.load %arg15[%c160, %c0_60] : memref<288x32xbf16, #tpu.memory_space<vmem>>, vector<32x32xbf16>
    %128 = arith.truncf %126 : vector<256x32xf32> to vector<256x32xbf16>
    %cst_61 = arith.constant dense<0.000000e+00> : vector<256x32xf32>
    %129 = tpu.matmul %128, %127, %cst_61 {dimension_numbers = #tpu.dot_dimension_numbers<[1], [0], [0], [1], [0, 0, 1, 1], [], []>} : vector<256x32xbf16>, vector<32x32xbf16>, vector<256x32xf32> -> vector<256x32xf32>
    %130 = arith.addf %123, %129 : vector<256x32xf32>
    %131 = vector.extract_strided_slice %89 {offsets = [39, 0], sizes = [256, 32], strides = [1, 1]} : vector<304x32xf32> to vector<256x32xf32>
    %132 = vector.broadcast %90 : vector<256x1xf32> to vector<256x32xf32>
    %133 = arith.mulf %131, %132 : vector<256x32xf32>
    %c192 = arith.constant 192 : index
    %c0_62 = arith.constant 0 : index
    %134 = vector.load %arg15[%c192, %c0_62] : memref<288x32xbf16, #tpu.memory_space<vmem>>, vector<32x32xbf16>
    %135 = arith.truncf %133 : vector<256x32xf32> to vector<256x32xbf16>
    %cst_63 = arith.constant dense<0.000000e+00> : vector<256x32xf32>
    %136 = tpu.matmul %135, %134, %cst_63 {dimension_numbers = #tpu.dot_dimension_numbers<[1], [0], [0], [1], [0, 0, 1, 1], [], []>} : vector<256x32xbf16>, vector<32x32xbf16>, vector<256x32xf32> -> vector<256x32xf32>
    %137 = arith.addf %130, %136 : vector<256x32xf32>
    %138 = vector.extract_strided_slice %89 {offsets = [40, 0], sizes = [256, 32], strides = [1, 1]} : vector<304x32xf32> to vector<256x32xf32>
    %c224 = arith.constant 224 : index
    %c0_64 = arith.constant 0 : index
    %139 = vector.load %arg15[%c224, %c0_64] : memref<288x32xbf16, #tpu.memory_space<vmem>>, vector<32x32xbf16>
    %140 = arith.truncf %138 : vector<256x32xf32> to vector<256x32xbf16>
    %cst_65 = arith.constant dense<0.000000e+00> : vector<256x32xf32>
    %141 = tpu.matmul %140, %139, %cst_65 {dimension_numbers = #tpu.dot_dimension_numbers<[1], [0], [0], [1], [0, 0, 1, 1], [], []>} : vector<256x32xbf16>, vector<32x32xbf16>, vector<256x32xf32> -> vector<256x32xf32>
    %142 = arith.addf %137, %141 : vector<256x32xf32>
    %143 = vector.extract_strided_slice %89 {offsets = [41, 0], sizes = [256, 32], strides = [1, 1]} : vector<304x32xf32> to vector<256x32xf32>
    %144 = vector.broadcast %91 : vector<256x1xf32> to vector<256x32xf32>
    %145 = arith.mulf %143, %144 : vector<256x32xf32>
    %c256 = arith.constant 256 : index
    %c0_66 = arith.constant 0 : index
    %146 = vector.load %arg15[%c256, %c0_66] : memref<288x32xbf16, #tpu.memory_space<vmem>>, vector<32x32xbf16>
    %147 = arith.truncf %145 : vector<256x32xf32> to vector<256x32xbf16>
    %cst_67 = arith.constant dense<0.000000e+00> : vector<256x32xf32>
    %148 = tpu.matmul %147, %146, %cst_67 {dimension_numbers = #tpu.dot_dimension_numbers<[1], [0], [0], [1], [0, 0, 1, 1], [], []>} : vector<256x32xbf16>, vector<32x32xbf16>, vector<256x32xf32> -> vector<256x32xf32>
    %149 = arith.addf %142, %148 : vector<256x32xf32>
    %c0_68 = arith.constant 0 : index
    %c0_69 = arith.constant 0 : index
    %150 = vector.load %arg16[%c0_68, %c0_69] : memref<1x32xf32, #tpu.memory_space<vmem>>, vector<1x32xf32>
    %151 = vector.shape_cast %150 : vector<1x32xf32> to vector<32xf32>
    %152 = vector.shape_cast %151 : vector<32xf32> to vector<1x32xf32>
    %153 = vector.broadcast %152 : vector<1x32xf32> to vector<256x32xf32>
    %154 = arith.mulf %149, %153 : vector<256x32xf32>
    %c0_70 = arith.constant 0 : index
    %c0_71 = arith.constant 0 : index
    %155 = vector.load %arg17[%c0_70, %c0_71] : memref<1x32xf32, #tpu.memory_space<vmem>>, vector<1x32xf32>
    %156 = vector.shape_cast %155 : vector<1x32xf32> to vector<32xf32>
    %157 = vector.shape_cast %156 : vector<32xf32> to vector<1x32xf32>
    %158 = vector.broadcast %157 : vector<1x32xf32> to vector<256x32xf32>
    %159 = arith.addf %154, %158 : vector<256x32xf32>
    %cst_72 = arith.constant 0.000000e+00 : f32
    %160 = vector.broadcast %cst_72 : f32 to vector<256x32xf32>
    %161 = arith.maximumf %159, %160 : vector<256x32xf32>
    %c0_73 = arith.constant 0 : index
    %c0_74 = arith.constant 0 : index
    %162 = vector.load %arg20[%c0_73, %c0_74] : memref<32x256xbf16, #tpu.memory_space<vmem>>, vector<32x256xbf16>
    %163 = arith.truncf %161 : vector<256x32xf32> to vector<256x32xbf16>
    %cst_75 = arith.constant dense<0.000000e+00> : vector<32x32xf32>
    %164 = tpu.matmul %162, %163, %cst_75 {dimension_numbers = #tpu.dot_dimension_numbers<[1], [0], [0], [1], [0, 0, 1, 1], [], []>} : vector<32x256xbf16>, vector<256x32xbf16>, vector<32x32xf32> -> vector<32x32xf32>
    %c0_76 = arith.constant 0 : index
    %c0_77 = arith.constant 0 : index
    %165 = vector.load %arg21[%c0_76, %c0_77] : memref<32x8xbf16, #tpu.memory_space<vmem>>, vector<32x8xbf16>
    %166 = arith.truncf %164 : vector<32x32xf32> to vector<32x32xbf16>
    %cst_78 = arith.constant dense<0.000000e+00> : vector<32x8xf32>
    %167 = tpu.matmul %166, %165, %cst_78 {dimension_numbers = #tpu.dot_dimension_numbers<[1], [0], [0], [1], [0, 0, 1, 1], [], []>} : vector<32x32xbf16>, vector<32x8xbf16>, vector<32x8xf32> -> vector<32x8xf32>
    %c0_79 = arith.constant 0 : index
    %c0_80 = arith.constant 0 : index
    %168 = vector.load %arg22[%c0_79, %c0_80] : memref<1x8xf32, #tpu.memory_space<vmem>>, vector<1x8xf32>
    %169 = vector.shape_cast %168 : vector<1x8xf32> to vector<8xf32>
    %170 = vector.shape_cast %169 : vector<8xf32> to vector<1x8xf32>
    %171 = vector.broadcast %170 : vector<1x8xf32> to vector<32x8xf32>
    %172 = arith.mulf %167, %171 : vector<32x8xf32>
    %c0_81 = arith.constant 0 : index
    %c0_82 = arith.constant 0 : index
    %173 = vector.load %arg23[%c0_81, %c0_82] : memref<1x8xf32, #tpu.memory_space<vmem>>, vector<1x8xf32>
    %174 = vector.shape_cast %173 : vector<1x8xf32> to vector<8xf32>
    %175 = vector.shape_cast %174 : vector<8xf32> to vector<1x8xf32>
    %176 = vector.broadcast %175 : vector<1x8xf32> to vector<32x8xf32>
    %177 = arith.addf %172, %176 : vector<32x8xf32>
    %cst_83 = arith.constant 3.000000e+00 : f32
    %178 = vector.broadcast %cst_83 : f32 to vector<32x8xf32>
    %179 = arith.addf %177, %178 : vector<32x8xf32>
    %cst_84 = arith.constant 0.000000e+00 : f32
    %cst_85 = arith.constant 6.000000e+00 : f32
    %180 = vector.broadcast %cst_84 : f32 to vector<32x8xf32>
    %181 = arith.maximumf %180, %179 : vector<32x8xf32>
    %182 = vector.broadcast %cst_85 : f32 to vector<32x8xf32>
    %183 = arith.minimumf %182, %181 : vector<32x8xf32>
    %cst_86 = arith.constant 0.166666672 : f32
    %184 = vector.broadcast %cst_86 : f32 to vector<32x8xf32>
    %185 = arith.mulf %183, %184 : vector<32x8xf32>
    %186 = arith.mulf %177, %185 : vector<32x8xf32>
    %187 = vector.extract_strided_slice %186 {offsets = [0, 0], sizes = [16, 8], strides = [1, 1]} : vector<32x8xf32> to vector<16x8xf32>
    %c0_87 = arith.constant 0 : index
    %c0_88 = arith.constant 0 : index
    %188 = vector.load %arg24[%c0_87, %c0_88] : memref<8x32xbf16, #tpu.memory_space<vmem>>, vector<8x32xbf16>
    %189 = arith.truncf %187 : vector<16x8xf32> to vector<16x8xbf16>
    %cst_89 = arith.constant dense<0.000000e+00> : vector<16x32xf32>
    %190 = tpu.matmul %189, %188, %cst_89 {dimension_numbers = #tpu.dot_dimension_numbers<[1], [0], [0], [1], [0, 0, 1, 1], [], []>} : vector<16x8xbf16>, vector<8x32xbf16>, vector<16x32xf32> -> vector<16x32xf32>
    %c0_90 = arith.constant 0 : index
    %c0_91 = arith.constant 0 : index
    %191 = vector.load %arg25[%c0_90, %c0_91] : memref<1x32xf32, #tpu.memory_space<vmem>>, vector<1x32xf32>
    %192 = vector.shape_cast %191 : vector<1x32xf32> to vector<32xf32>
    %193 = vector.shape_cast %192 : vector<32xf32> to vector<1x32xf32>
    %194 = vector.broadcast %193 : vector<1x32xf32> to vector<16x32xf32>
    %195 = arith.addf %190, %194 : vector<16x32xf32>
    %196 = arith.negf %195 : vector<16x32xf32>
    %197 = math.exp %196 : vector<16x32xf32>
    %cst_92 = arith.constant 1.000000e+00 : f32
    %198 = vector.broadcast %cst_92 : f32 to vector<16x32xf32>
    %199 = arith.addf %198, %197 : vector<16x32xf32>
    %200 = arith.divf %198, %199 : vector<16x32xf32>
    %201 = vector.extract_strided_slice %186 {offsets = [16, 0], sizes = [16, 8], strides = [1, 1]} : vector<32x8xf32> to vector<16x8xf32>
    %c0_93 = arith.constant 0 : index
    %c0_94 = arith.constant 0 : index
    %202 = vector.load %arg26[%c0_93, %c0_94] : memref<8x32xbf16, #tpu.memory_space<vmem>>, vector<8x32xbf16>
    %203 = arith.truncf %201 : vector<16x8xf32> to vector<16x8xbf16>
    %cst_95 = arith.constant dense<0.000000e+00> : vector<16x32xf32>
    %204 = tpu.matmul %203, %202, %cst_95 {dimension_numbers = #tpu.dot_dimension_numbers<[1], [0], [0], [1], [0, 0, 1, 1], [], []>} : vector<16x8xbf16>, vector<8x32xbf16>, vector<16x32xf32> -> vector<16x32xf32>
    %c0_96 = arith.constant 0 : index
    %c0_97 = arith.constant 0 : index
    %205 = vector.load %arg27[%c0_96, %c0_97] : memref<1x32xf32, #tpu.memory_space<vmem>>, vector<1x32xf32>
    %206 = vector.shape_cast %205 : vector<1x32xf32> to vector<32xf32>
    %207 = vector.shape_cast %206 : vector<32xf32> to vector<1x32xf32>
    %208 = vector.broadcast %207 : vector<1x32xf32> to vector<16x32xf32>
    %209 = arith.addf %204, %208 : vector<16x32xf32>
    %210 = arith.negf %209 : vector<16x32xf32>
    %211 = math.exp %210 : vector<16x32xf32>
    %cst_98 = arith.constant 1.000000e+00 : f32
    %212 = vector.broadcast %cst_98 : f32 to vector<16x32xf32>
    %213 = arith.addf %212, %211 : vector<16x32xf32>
    %214 = arith.divf %212, %213 : vector<16x32xf32>
    %c0_99 = arith.constant 0 : index
    %c0_100 = arith.constant 0 : index
    %215 = vector.load %arg28[%c0_99, %c0_100] : memref<256x16xbf16, #tpu.memory_space<vmem>>, vector<256x16xbf16>
    %216 = arith.truncf %200 : vector<16x32xf32> to vector<16x32xbf16>
    %cst_101 = arith.constant dense<0.000000e+00> : vector<256x32xf32>
    %217 = tpu.matmul %215, %216, %cst_101 {dimension_numbers = #tpu.dot_dimension_numbers<[1], [0], [0], [1], [0, 0, 1, 1], [], []>} : vector<256x16xbf16>, vector<16x32xbf16>, vector<256x32xf32> -> vector<256x32xf32>
    %c0_102 = arith.constant 0 : index
    %c0_103 = arith.constant 0 : index
    %218 = vector.load %arg29[%c0_102, %c0_103] : memref<256x16xbf16, #tpu.memory_space<vmem>>, vector<256x16xbf16>
    %219 = arith.truncf %214 : vector<16x32xf32> to vector<16x32xbf16>
    %cst_104 = arith.constant dense<0.000000e+00> : vector<256x32xf32>
    %220 = tpu.matmul %218, %219, %cst_104 {dimension_numbers = #tpu.dot_dimension_numbers<[1], [0], [0], [1], [0, 0, 1, 1], [], []>} : vector<256x16xbf16>, vector<16x32xbf16>, vector<256x32xf32> -> vector<256x32xf32>
    %221 = arith.mulf %217, %220 : vector<256x32xf32>
    %222 = arith.mulf %161, %221 : vector<256x32xf32>
    %c0_105 = arith.constant 0 : index
    %c0_106 = arith.constant 0 : index
    %c0_107 = arith.constant 0 : index
    %223 = vector.load %arg30[%c0_105, %c0_106, %c0_107] : memref<1x256x32xf32, #tpu.memory_space<vmem>>, vector<1x256x32xf32>
    %224 = vector.shape_cast %223 : vector<1x256x32xf32> to vector<256x32xf32>
    %225 = vector.shape_cast %222 : vector<256x32xf32> to vector<1x256x32xf32>
    tpu.vector_store %arg30[%c0_105, %c0_106, %c0_107], %225 {strides = array<i32>} : memref<1x256x32xf32, #tpu.memory_space<vmem>>, vector<1x256x32xf32>,
    return
  }
  func.func @transform_0(%arg0: i32) -> (i32, i32, i32) {
    %c0_i32 = arith.constant 0 : i32
    %c0_i32_0 = arith.constant 0 : i32
    %c0_i32_1 = arith.constant 0 : i32
    return %arg0, %c0_i32, %c0_i32_0 : i32, i32, i32
  }
  func.func @transform_1(%arg0: i32) -> (i32, i32, i32) {
    %c0_i32 = arith.constant 0 : i32
    %c0_i32_0 = arith.constant 0 : i32
    %c0_i32_1 = arith.constant 0 : i32
    return %arg0, %c0_i32, %c0_i32_0 : i32, i32, i32
  }
  func.func @transform_2(%arg0: i32) -> (i32, i32, i32) {
    %c0_i32 = arith.constant 0 : i32
    %c0_i32_0 = arith.constant 0 : i32
    %c0_i32_1 = arith.constant 0 : i32
    return %arg0, %c0_i32, %c0_i32_0 : i32, i32, i32
  }
  func.func @transform_3(%arg0: i32) -> (i32, i32) {
    %c0_i32 = arith.constant 0 : i32
    %c0_i32_0 = arith.constant 0 : i32
    %c0_i32_1 = arith.constant 0 : i32
    return %c0_i32, %c0_i32_0 : i32, i32
  }
  func.func @transform_4(%arg0: i32) -> (i32, i32) {
    %c0_i32 = arith.constant 0 : i32
    %c0_i32_0 = arith.constant 0 : i32
    %c0_i32_1 = arith.constant 0 : i32
    return %c0_i32, %c0_i32_0 : i32, i32
  }
  func.func @transform_5(%arg0: i32) -> (i32, i32) {
    %c0_i32 = arith.constant 0 : i32
    %c0_i32_0 = arith.constant 0 : i32
    %c0_i32_1 = arith.constant 0 : i32
    return %c0_i32, %c0_i32_0 : i32, i32
  }
  func.func @transform_6(%arg0: i32) -> (i32, i32) {
    %c0_i32 = arith.constant 0 : i32
    %c0_i32_0 = arith.constant 0 : i32
    %c0_i32_1 = arith.constant 0 : i32
    return %c0_i32, %c0_i32_0 : i32, i32
  }
  func.func @transform_7(%arg0: i32) -> (i32, i32) {
    %c0_i32 = arith.constant 0 : i32
    %c0_i32_0 = arith.constant 0 : i32
    %c0_i32_1 = arith.constant 0 : i32
    return %c0_i32, %c0_i32_0 : i32, i32
  }
  func.func @transform_8(%arg0: i32) -> (i32, i32) {
    %c0_i32 = arith.constant 0 : i32
    %c0_i32_0 = arith.constant 0 : i32
    %c0_i32_1 = arith.constant 0 : i32
    return %c0_i32, %c0_i32_0 : i32, i32
  }
  func.func @transform_9(%arg0: i32) -> (i32, i32) {
    %c0_i32 = arith.constant 0 : i32
    %c0_i32_0 = arith.constant 0 : i32
    %c0_i32_1 = arith.constant 0 : i32
    return %c0_i32, %c0_i32_0 : i32, i32
  }
  func.func @transform_10(%arg0: i32) -> (i32, i32) {
    %c0_i32 = arith.constant 0 : i32
    %c0_i32_0 = arith.constant 0 : i32
    %c0_i32_1 = arith.constant 0 : i32
    return %c0_i32, %c0_i32_0 : i32, i32
  }
  func.func @transform_11(%arg0: i32) -> (i32, i32) {
    %c0_i32 = arith.constant 0 : i32
    %c0_i32_0 = arith.constant 0 : i32
    %c0_i32_1 = arith.constant 0 : i32
    return %c0_i32, %c0_i32_0 : i32, i32
  }
  func.func @transform_12(%arg0: i32) -> (i32, i32) {
    %c0_i32 = arith.constant 0 : i32
    %c0_i32_0 = arith.constant 0 : i32
    %c0_i32_1 = arith.constant 0 : i32
    return %c0_i32, %c0_i32_0 : i32, i32
  }
  func.func @transform_13(%arg0: i32) -> (i32, i32) {
    %c0_i32 = arith.constant 0 : i32
    %c0_i32_0 = arith.constant 0 : i32
    %c0_i32_1 = arith.constant 0 : i32
    return %c0_i32, %c0_i32_0 : i32, i32
  }
  func.func @transform_14(%arg0: i32) -> (i32, i32) {
    %c0_i32 = arith.constant 0 : i32
    %c0_i32_0 = arith.constant 0 : i32
    %c0_i32_1 = arith.constant 0 : i32
    return %c0_i32, %c0_i32_0 : i32, i32
  }
  func.func @transform_15(%arg0: i32) -> (i32, i32) {
    %c0_i32 = arith.constant 0 : i32
    %c0_i32_0 = arith.constant 0 : i32
    %c0_i32_1 = arith.constant 0 : i32
    return %c0_i32, %c0_i32_0 : i32, i32
  }
  func.func @transform_16(%arg0: i32) -> (i32, i32) {
    %c0_i32 = arith.constant 0 : i32
    %c0_i32_0 = arith.constant 0 : i32
    %c0_i32_1 = arith.constant 0 : i32
    return %c0_i32, %c0_i32_0 : i32, i32
  }
  func.func @transform_17(%arg0: i32) -> (i32, i32) {
    %c0_i32 = arith.constant 0 : i32
    %c0_i32_0 = arith.constant 0 : i32
    %c0_i32_1 = arith.constant 0 : i32
    return %c0_i32, %c0_i32_0 : i32, i32
  }
  func.func @transform_18(%arg0: i32) -> (i32, i32) {
    %c0_i32 = arith.constant 0 : i32
    %c0_i32_0 = arith.constant 0 : i32
    %c0_i32_1 = arith.constant 0 : i32
    return %c0_i32, %c0_i32_0 : i32, i32
  }
  func.func @transform_19(%arg0: i32) -> (i32, i32) {
    %c0_i32 = arith.constant 0 : i32
    %c0_i32_0 = arith.constant 0 : i32
    %c0_i32_1 = arith.constant 0 : i32
    return %c0_i32, %c0_i32_0 : i32, i32
  }
  func.func @transform_20(%arg0: i32) -> (i32, i32) {
    %c0_i32 = arith.constant 0 : i32
    %c0_i32_0 = arith.constant 0 : i32
    %c0_i32_1 = arith.constant 0 : i32
    return %c0_i32, %c0_i32_0 : i32, i32
  }
  func.func @transform_21(%arg0: i32) -> (i32, i32) {
    %c0_i32 = arith.constant 0 : i32
    %c0_i32_0 = arith.constant 0 : i32
    %c0_i32_1 = arith.constant 0 : i32
    return %c0_i32, %c0_i32_0 : i32, i32
  }
  func.func @transform_22(%arg0: i32) -> (i32, i32) {
    %c0_i32 = arith.constant 0 : i32
    %c0_i32_0 = arith.constant 0 : i32
    %c0_i32_1 = arith.constant 0 : i32
    return %c0_i32, %c0_i32_0 : i32, i32
  }
  func.func @transform_23(%arg0: i32) -> (i32, i32) {
    %c0_i32 = arith.constant 0 : i32
    %c0_i32_0 = arith.constant 0 : i32
    %c0_i32_1 = arith.constant 0 : i32
    return %c0_i32, %c0_i32_0 : i32, i32
  }
  func.func @transform_24(%arg0: i32) -> (i32, i32) {
    %c0_i32 = arith.constant 0 : i32
    %c0_i32_0 = arith.constant 0 : i32
    %c0_i32_1 = arith.constant 0 : i32
    return %c0_i32, %c0_i32_0 : i32, i32
  }
  func.func @transform_25(%arg0: i32) -> (i32, i32) {
    %c0_i32 = arith.constant 0 : i32
    %c0_i32_0 = arith.constant 0 : i32
    %c0_i32_1 = arith.constant 0 : i32
    return %c0_i32, %c0_i32_0 : i32, i32
  }
  func.func @transform_26(%arg0: i32) -> (i32, i32) {
    %c0_i32 = arith.constant 0 : i32
    %c0_i32_0 = arith.constant 0 : i32
    %c0_i32_1 = arith.constant 0 : i32
    return %c0_i32, %c0_i32_0 : i32, i32
  }
  func.func @transform_27(%arg0: i32) -> (i32, i32) {
    %c0_i32 = arith.constant 0 : i32
    %c0_i32_0 = arith.constant 0 : i32
    %c0_i32_1 = arith.constant 0 : i32
    return %c0_i32, %c0_i32_0 : i32, i32
  }
  func.func @transform_28(%arg0: i32) -> (i32, i32) {
    %c0_i32 = arith.constant 0 : i32
    %c0_i32_0 = arith.constant 0 : i32
    %c0_i32_1 = arith.constant 0 : i32
    return %c0_i32, %c0_i32_0 : i32, i32
  }
  func.func @transform_29(%arg0: i32) -> (i32, i32, i32) {
    %c0_i32 = arith.constant 0 : i32
    %c0_i32_0 = arith.constant 0 : i32
    %c0_i32_1 = arith.constant 0 : i32
    return %arg0, %c0_i32, %c0_i32_0 : i32, i32, i32
  }
}

</mosaic_0001>

<llo_original>
// kernel: tam_forward.1
$region0: #{tam_forward.1}
  #allocation0 [shape = 'u32[]', space=smem, size = 0x4, offset = 0x4, fixed_abs, tag = 'smem constant byte address 0x4 - core index']
  #allocation1 [shape = 'u32[72,128]{1,0:T(1,128)}', space=vmem, size = 0x9000, scoped, tag = 'internal scratch']
  #allocation2 [shape = 'f32[1,1]{1,0:T(1,128)S(1)}', space=vmem, size = 0x200, scoped, tag = 'scoped memory for tam_forward.1']
  %s0 = inlined_call_operand.smem [shape: u32[30], index: -1, kind: input, shape index: {}]
  %s1 = sld [smem:[%s0]]
  %s2 = scalar_lea.smem %s0, 1
  %s3 = sld [smem:[%s2]]
  %s4 = scalar_lea.smem %s0, 2
  %s5 = sld [smem:[%s4]]
  %s6 = scalar_lea.smem %s0, 3
  %s7 = sld [smem:[%s6]]
  %s8 = scalar_lea.smem %s0, 4
  %s9 = sld [smem:[%s8]]
  %s10 = scalar_lea.smem %s0, 5
  %s11 = sld [smem:[%s10]]
  %s12 = scalar_lea.smem %s0, 6
  %s13 = sld [smem:[%s12]]
  %s14 = scalar_lea.smem %s0, 7
  %s15 = sld [smem:[%s14]]
  %s16 = scalar_lea.smem %s0, 8
  %s17 = sld [smem:[%s16]]
  %s18 = scalar_lea.smem %s0, 9
  %s19 = sld [smem:[%s18]]
  %s20 = scalar_lea.smem %s0, 10
  %s21 = sld [smem:[%s20]]
  %s22 = scalar_lea.smem %s0, 11
  %s23 = sld [smem:[%s22]]
  %s24 = scalar_lea.smem %s0, 12
  %s25 = sld [smem:[%s24]]
  %s26 = scalar_lea.smem %s0, 13
  %s27 = sld [smem:[%s26]]
  %s28 = scalar_lea.smem %s0, 14
  %s29 = sld [smem:[%s28]]
  %s30 = scalar_lea.smem %s0, 15
  %s31 = sld [smem:[%s30]]
  %s32 = scalar_lea.smem %s0, 16
  %s33 = sld [smem:[%s32]]
  %s34 = scalar_lea.smem %s0, 17
  %s35 = sld [smem:[%s34]]
  %s36 = scalar_lea.smem %s0, 18
  %s37 = sld [smem:[%s36]]
  %s38 = scalar_lea.smem %s0, 19
  %s39 = sld [smem:[%s38]]
  %s40 = scalar_lea.smem %s0, 20
  %s41 = sld [smem:[%s40]]
  %s42 = scalar_lea.smem %s0, 21
  %s43 = sld [smem:[%s42]]
  %s44 = scalar_lea.smem %s0, 22
  %s45 = sld [smem:[%s44]]
  %s46 = scalar_lea.smem %s0, 23
  %s47 = sld [smem:[%s46]]
  %s48 = scalar_lea.smem %s0, 24
  %s49 = sld [smem:[%s48]]
  %s50 = scalar_lea.smem %s0, 25
  %s51 = sld [smem:[%s50]]
  %s52 = scalar_lea.smem %s0, 26
  %s53 = sld [smem:[%s52]]
  %s54 = scalar_lea.smem %s0, 27
  %s55 = sld [smem:[%s54]]
  %s56 = scalar_lea.smem %s0, 28
  %s57 = sld [smem:[%s56]]
  %s58 = scalar_lea.smem %s0, 29
  %s59 = sld [smem:[%s58]]
  %s60 = sld [smem:[#allocation0]]
  $region157: #{tam_forward.1} parent=0
    _
  %s62 = ssub.s32 1, %s60
  %s63 = scalar_select 0, %s62, %s60
  %v64 = vstv %s19
  %65 = vst [vmem:[#allocation2] sm:$0x1] %v64
  $region1: #{tam_forward.1} parent=0
    #allocation3 [shape = 'u8[262144]{0}', space=vmem, size = 0x40000, scoped, tag = 'input window, operand 1']
    #allocation4 [shape = 's32[2]{0}', space=sflag, size = 0x8, scoped, tag = 'scoped memory for tam_forward.1']
    #allocation5 [shape = 's32[2]{0}', space=sflag, size = 0x8, scoped, tag = 'scoped memory for tam_forward.1']
    #allocation6 [shape = 'u8[262144]{0}', space=vmem, size = 0x40000, scoped, tag = 'input window, operand 2']
    #allocation7 [shape = 's32[2]{0}', space=sflag, size = 0x8, scoped, tag = 'scoped memory for tam_forward.1']
    #allocation8 [shape = 'u8[262144]{0}', space=vmem, size = 0x40000, scoped, tag = 'output window, operand 0']
    %66 = vsyncpa [#allocation4], 0
    %s67 = scalar_lea.sflag [#allocation4], 1
    %68 = vsyncpa %s67, 0
    %69 = vsyncpa [#allocation7], 0
    %s70 = scalar_lea.sflag [#allocation7], 1
    %71 = vsyncpa %s70, 0
    %72 = vsyncpa [#allocation5], 0
    %s73 = scalar_lea.sflag [#allocation5], 1
    %74 = vsyncpa %s73, 0
    loop: start=0, step=1, limit=4
    $region2: #{tam_forward.1} parent=1 // loop_pre_header
      _
    $region3: #{tam_forward.1} parent=1 // loop_header
      %s76 = sphi 0, %s80
      %p77 = scmp.ge.s32.totalorder %s76, 4
      %s86 = sphi 0, %s88
      %s89 = sphi 0, %s86
      %s90 = sphi 0, %s89
      %s106 = sphi 0, %s90
      %s112 = sphi 0, %s114
      %s115 = sphi 0, %s112
      %s116 = sphi 0, %s115
      %s132 = sphi 0, %s116
      %s138 = sphi 0, %s140
      %s141 = sphi 0, %s138
      %s142 = sphi 0, %s141
      %s158 = sphi 0, %s142
      %s162 = sphi 0, %s162
      %s164 = sphi 0, %s162
      %s165 = sphi 0, %s164
      %s179 = sphi 0, %s165
      %s183 = sphi 0, %s183
      %s185 = sphi 0, %s183
      %s186 = sphi 0, %s185
      %s200 = sphi 0, %s186
      %s204 = sphi 0, %s204
      %s206 = sphi 0, %s204
      %s207 = sphi 0, %s206
      %s221 = sphi 0, %s207
      %s225 = sphi 0, %s225
      %s227 = sphi 0, %s225
      %s228 = sphi 0, %s227
      %s242 = sphi 0, %s228
      %s246 = sphi 0, %s246
      %s248 = sphi 0, %s246
      %s249 = sphi 0, %s248
      %s263 = sphi 0, %s249
      %s267 = sphi 0, %s267
      %s269 = sphi 0, %s267
      %s270 = sphi 0, %s269
      %s284 = sphi 0, %s270
      %s288 = sphi 0, %s288
      %s290 = sphi 0, %s288
      %s291 = sphi 0, %s290
      %s305 = sphi 0, %s291
      %s309 = sphi 0, %s309
      %s311 = sphi 0, %s309
      %s312 = sphi 0, %s311
      %s326 = sphi 0, %s312
      %s330 = sphi 0, %s330
      %s332 = sphi 0, %s330
      %s333 = sphi 0, %s332
      %s347 = sphi 0, %s333
      %s351 = sphi 0, %s351
      %s353 = sphi 0, %s351
      %s354 = sphi 0, %s353
      %s368 = sphi 0, %s354
      %s372 = sphi 0, %s372
      %s374 = sphi 0, %s372
      %s375 = sphi 0, %s374
      %s389 = sphi 0, %s375
      %s393 = sphi 0, %s393
      %s395 = sphi 0, %s393
      %s396 = sphi 0, %s395
      %s410 = sphi 0, %s396
      %s414 = sphi 0, %s414
      %s416 = sphi 0, %s414
      %s417 = sphi 0, %s416
      %s431 = sphi 0, %s417
      %s435 = sphi 0, %s435
      %s437 = sphi 0, %s435
      %s438 = sphi 0, %s437
      %s452 = sphi 0, %s438
      %s456 = sphi 0, %s456
      %s458 = sphi 0, %s456
      %s459 = sphi 0, %s458
      %s473 = sphi 0, %s459
      %s477 = sphi 0, %s477
      %s479 = sphi 0, %s477
      %s480 = sphi 0, %s479
      %s494 = sphi 0, %s480
      %s498 = sphi 0, %s498
      %s500 = sphi 0, %s498
      %s501 = sphi 0, %s500
      %s515 = sphi 0, %s501
      %s519 = sphi 0, %s519
      %s521 = sphi 0, %s519
      %s522 = sphi 0, %s521
      %s536 = sphi 0, %s522
      %s540 = sphi 0, %s540
      %s542 = sphi 0, %s540
      %s543 = sphi 0, %s542
      %s557 = sphi 0, %s543
      %s561 = sphi 0, %s561
      %s563 = sphi 0, %s561
      %s564 = sphi 0, %s563
      %s578 = sphi 0, %s564
      %s582 = sphi 0, %s582
      %s584 = sphi 0, %s582
      %s585 = sphi 0, %s584
      %s599 = sphi 0, %s585
      %s603 = sphi 0, %s603
      %s605 = sphi 0, %s603
      %s606 = sphi 0, %s605
      %s620 = sphi 0, %s606
      %s624 = sphi 0, %s624
      %s626 = sphi 0, %s624
      %s627 = sphi 0, %s626
      %s641 = sphi 0, %s627
      %s645 = sphi 0, %s645
      %s647 = sphi 0, %s645
      %s648 = sphi 0, %s647
      %s662 = sphi 0, %s648
      %s666 = sphi 0, %s666
      %s668 = sphi 0, %s666
      %s669 = sphi 0, %s668
      %s683 = sphi 0, %s669
      %s687 = sphi 0, %s687
      %s689 = sphi 0, %s687
      %s690 = sphi 0, %s689
      %s704 = sphi 0, %s690
      %s710 = sphi 0, %s712
      %s713 = sphi 0, %s710
      %s714 = sphi 0, %s713
      %s730 = sphi 0, %s714
    $region4: #{tam_forward.1} parent=1 // loop_header_branch
      %79 = sbr.rel (%p77) target = $region8
    $region5: #{tam_forward.1} parent=1 // loop_body
      %s81 = ssub.s32 %s76, 1
      %s82 = ssub.s32 %s76, 2
      %s83 = sadd.s32 %s76, 1
      %s84 = ssub.s32 %s76, %s83
      %p85 = scmp.eq.s32.totalorder %s84, 0
      %s87 = sadd.s32 %s86, 1
      %s88 = scalar_select %p85, %s86, %s87
      %p91 = pneg %p85
      %p92 = scmp.eq.s32.totalorder %s76, 1
      %p93 = por %p91, %p92
      %p94 = scmp.ne.s32.totalorder %s86, %s89
      %p95 = scmp.eq.s32.totalorder %s76, 0
      %p96 = por %p94, %p95
      %p97 = scmp.ne.s32.totalorder %s86, %s89
      %p98 = scmp.eq.s32.totalorder %s81, 1
      %p99 = por %p97, %p98
      %p100 = scmp.ne.s32.totalorder %s89, %s90
      %p101 = scmp.eq.s32.totalorder %s81, 0
      %p102 = por %p100, %p101
      %p103 = scmp.ne.s32.totalorder %s89, %s90
      %p104 = scmp.eq.s32.totalorder %s82, 1
      %p105 = por %p103, %p104
      %p107 = scmp.ne.s32.totalorder %s90, %s106
      %p108 = scmp.eq.s32.totalorder %s82, 0
      %p109 = por %p107, %p108
      %s110 = ssub.s32 %s76, %s83
      %p111 = scmp.eq.s32.totalorder %s110, 0
      %s113 = sadd.s32 %s112, 1
      %s114 = scalar_select %p111, %s112, %s113
      %p117 = pneg %p111
      %p118 = scmp.eq.s32.totalorder %s76, 1
      %p119 = por %p117, %p118
      %p120 = scmp.ne.s32.totalorder %s112, %s115
      %p121 = scmp.eq.s32.totalorder %s76, 0
      %p122 = por %p120, %p121
      %p123 = scmp.ne.s32.totalorder %s112, %s115
      %p124 = scmp.eq.s32.totalorder %s81, 1
      %p125 = por %p123, %p124
      %p126 = scmp.ne.s32.totalorder %s115, %s116
      %p127 = scmp.eq.s32.totalorder %s81, 0
      %p128 = por %p126, %p127
      %p129 = scmp.ne.s32.totalorder %s115, %s116
      %p130 = scmp.eq.s32.totalorder %s82, 1
      %p131 = por %p129, %p130
      %p133 = scmp.ne.s32.totalorder %s116, %s132
      %p134 = scmp.eq.s32.totalorder %s82, 0
      %p135 = por %p133, %p134
      %s136 = ssub.s32 %s76, %s83
      %p137 = scmp.eq.s32.totalorder %s136, 0
      %s139 = sadd.s32 %s138, 1
      %s140 = scalar_select %p137, %s138, %s139
      %p143 = pneg %p137
      %p144 = scmp.eq.s32.totalorder %s76, 1
      %p145 = por %p143, %p144
      %p146 = scmp.ne.s32.totalorder %s138, %s141
      %p147 = scmp.eq.s32.totalorder %s76, 0
      %p148 = por %p146, %p147
      %p149 = scmp.ne.s32.totalorder %s138, %s141
      %p150 = scmp.eq.s32.totalorder %s81, 1
      %p151 = por %p149, %p150
      %p152 = scmp.ne.s32.totalorder %s141, %s142
      %p153 = scmp.eq.s32.totalorder %s81, 0
      %p154 = por %p152, %p153
      %p155 = scmp.ne.s32.totalorder %s141, %s142
      %p156 = scmp.eq.s32.totalorder %s82, 1
      %p157 = por %p155, %p156
      %p159 = scmp.ne.s32.totalorder %s142, %s158
      %p160 = scmp.eq.s32.totalorder %s82, 0
      %p161 = por %p159, %p160
      %s163 = sadd.s32 %s162, 1
      %p166 = scmp.eq.s32.totalorder %s76, 1
      %p167 = scmp.ne.s32.totalorder %s162, %s164
      %p168 = scmp.eq.s32.totalorder %s76, 0
      %p169 = por %p167, %p168
      %p170 = scmp.ne.s32.totalorder %s162, %s164
      %p171 = scmp.eq.s32.totalorder %s81, 1
      %p172 = por %p170, %p171
      %p173 = scmp.ne.s32.totalorder %s164, %s165
      %p174 = scmp.eq.s32.totalorder %s81, 0
      %p175 = por %p173, %p174
      %p176 = scmp.ne.s32.totalorder %s164, %s165
      %p177 = scmp.eq.s32.totalorder %s82, 1
      %p178 = por %p176, %p177
      %p180 = scmp.ne.s32.totalorder %s165, %s179
      %p181 = scmp.eq.s32.totalorder %s82, 0
      %p182 = por %p180, %p181
      %s184 = sadd.s32 %s183, 1
      %p187 = scmp.eq.s32.totalorder %s76, 1
      %p188 = scmp.ne.s32.totalorder %s183, %s185
      %p189 = scmp.eq.s32.totalorder %s76, 0
      %p190 = por %p188, %p189
      %p191 = scmp.ne.s32.totalorder %s183, %s185
      %p192 = scmp.eq.s32.totalorder %s81, 1
      %p193 = por %p191, %p192
      %p194 = scmp.ne.s32.totalorder %s185, %s186
      %p195 = scmp.eq.s32.totalorder %s81, 0
      %p196 = por %p194, %p195
      %p197 = scmp.ne.s32.totalorder %s185, %s186
      %p198 = scmp.eq.s32.totalorder %s82, 1
      %p199 = por %p197, %p198
      %p201 = scmp.ne.s32.totalorder %s186, %s200
      %p202 = scmp.eq.s32.totalorder %s82, 0
      %p203 = por %p201, %p202
      %s205 = sadd.s32 %s204, 1
      %p208 = scmp.eq.s32.totalorder %s76, 1
      %p209 = scmp.ne.s32.totalorder %s204, %s206
      %p210 = scmp.eq.s32.totalorder %s76, 0
      %p211 = por %p209, %p210
      %p212 = scmp.ne.s32.totalorder %s204, %s206
      %p213 = scmp.eq.s32.totalorder %s81, 1
      %p214 = por %p212, %p213
      %p215 = scmp.ne.s32.totalorder %s206, %s207
      %p216 = scmp.eq.s32.totalorder %s81, 0
      %p217 = por %p215, %p216
      %p218 = scmp.ne.s32.totalorder %s206, %s207
      %p219 = scmp.eq.s32.totalorder %s82, 1
      %p220 = por %p218, %p219
      %p222 = scmp.ne.s32.totalorder %s207, %s221
      %p223 = scmp.eq.s32.totalorder %s82, 0
      %p224 = por %p222, %p223
      %s226 = sadd.s32 %s225, 1
      %p229 = scmp.eq.s32.totalorder %s76, 1
      %p230 = scmp.ne.s32.totalorder %s225, %s227
      %p231 = scmp.eq.s32.totalorder %s76, 0
      %p232 = por %p230, %p231
      %p233 = scmp.ne.s32.totalorder %s225, %s227
      %p234 = scmp.eq.s32.totalorder %s81, 1
      %p235 = por %p233, %p234
      %p236 = scmp.ne.s32.totalorder %s227, %s228
      %p237 = scmp.eq.s32.totalorder %s81, 0
      %p238 = por %p236, %p237
      %p239 = scmp.ne.s32.totalorder %s227, %s228
      %p240 = scmp.eq.s32.totalorder %s82, 1
      %p241 = por %p239, %p240
      %p243 = scmp.ne.s32.totalorder %s228, %s242
      %p244 = scmp.eq.s32.totalorder %s82, 0
      %p245 = por %p243, %p244
      %s247 = sadd.s32 %s246, 1
      %p250 = scmp.eq.s32.totalorder %s76, 1
      %p251 = scmp.ne.s32.totalorder %s246, %s248
      %p252 = scmp.eq.s32.totalorder %s76, 0
      %p253 = por %p251, %p252
      %p254 = scmp.ne.s32.totalorder %s246, %s248
      %p255 = scmp.eq.s32.totalorder %s81, 1
      %p256 = por %p254, %p255
      %p257 = scmp.ne.s32.totalorder %s248, %s249
      %p258 = scmp.eq.s32.totalorder %s81, 0
      %p259 = por %p257, %p258
      %p260 = scmp.ne.s32.totalorder %s248, %s249
      %p261 = scmp.eq.s32.totalorder %s82, 1
      %p262 = por %p260, %p261
      %p264 = scmp.ne.s32.totalorder %s249, %s263
      %p265 = scmp.eq.s32.totalorder %s82, 0
      %p266 = por %p264, %p265
      %s268 = sadd.s32 %s267, 1
      %p271 = scmp.eq.s32.totalorder %s76, 1
      %p272 = scmp.ne.s32.totalorder %s267, %s269
      %p273 = scmp.eq.s32.totalorder %s76, 0
      %p274 = por %p272, %p273
      %p275 = scmp.ne.s32.totalorder %s267, %s269
      %p276 = scmp.eq.s32.totalorder %s81, 1
      %p277 = por %p275, %p276
      %p278 = scmp.ne.s32.totalorder %s269, %s270
      %p279 = scmp.eq.s32.totalorder %s81, 0
      %p280 = por %p278, %p279
      %p281 = scmp.ne.s32.totalorder %s269, %s270
      %p282 = scmp.eq.s32.totalorder %s82, 1
      %p283 = por %p281, %p282
      %p285 = scmp.ne.s32.totalorder %s270, %s284
      %p286 = scmp.eq.s32.totalorder %s82, 0
      %p287 = por %p285, %p286
      %s289 = sadd.s32 %s288, 1
      %p292 = scmp.eq.s32.totalorder %s76, 1
      %p293 = scmp.ne.s32.totalorder %s288, %s290
      %p294 = scmp.eq.s32.totalorder %s76, 0
      %p295 = por %p293, %p294
      %p296 = scmp.ne.s32.totalorder %s288, %s290
      %p297 = scmp.eq.s32.totalorder %s81, 1
      %p298 = por %p296, %p297
      %p299 = scmp.ne.s32.totalorder %s290, %s291
      %p300 = scmp.eq.s32.totalorder %s81, 0
      %p301 = por %p299, %p300
      %p302 = scmp.ne.s32.totalorder %s290, %s291
      %p303 = scmp.eq.s32.totalorder %s82, 1
      %p304 = por %p302, %p303
      %p306 = scmp.ne.s32.totalorder %s291, %s305
      %p307 = scmp.eq.s32.totalorder %s82, 0
      %p308 = por %p306, %p307
      %s310 = sadd.s32 %s309, 1
      %p313 = scmp.eq.s32.totalorder %s76, 1
      %p314 = scmp.ne.s32.totalorder %s309, %s311
      %p315 = scmp.eq.s32.totalorder %s76, 0
      %p316 = por %p314, %p315
      %p317 = scmp.ne.s32.totalorder %s309, %s311
      %p318 = scmp.eq.s32.totalorder %s81, 1
      %p319 = por %p317, %p318
      %p320 = scmp.ne.s32.totalorder %s311, %s312
      %p321 = scmp.eq.s32.totalorder %s81, 0
      %p322 = por %p320, %p321
      %p323 = scmp.ne.s32.totalorder %s311, %s312
      %p324 = scmp.eq.s32.totalorder %s82, 1
      %p325 = por %p323, %p324
      %p327 = scmp.ne.s32.totalorder %s312, %s326
      %p328 = scmp.eq.s32.totalorder %s82, 0
      %p329 = por %p327, %p328
      %s331 = sadd.s32 %s330, 1
      %p334 = scmp.eq.s32.totalorder %s76, 1
      %p335 = scmp.ne.s32.totalorder %s330, %s332
      %p336 = scmp.eq.s32.totalorder %s76, 0
      %p337 = por %p335, %p336
      %p338 = scmp.ne.s32.totalorder %s330, %s332
      %p339 = scmp.eq.s32.totalorder %s81, 1
      %p340 = por %p338, %p339
      %p341 = scmp.ne.s32.totalorder %s332, %s333
      %p342 = scmp.eq.s32.totalorder %s81, 0
      %p343 = por %p341, %p342
      %p344 = scmp.ne.s32.totalorder %s332, %s333
      %p345 = scmp.eq.s32.totalorder %s82, 1
      %p346 = por %p344, %p345
      %p348 = scmp.ne.s32.totalorder %s333, %s347
      %p349 = scmp.eq.s32.totalorder %s82, 0
      %p350 = por %p348, %p349
      %s352 = sadd.s32 %s351, 1
      %p355 = scmp.eq.s32.totalorder %s76, 1
      %p356 = scmp.ne.s32.totalorder %s351, %s353
      %p357 = scmp.eq.s32.totalorder %s76, 0
      %p358 = por %p356, %p357
      %p359 = scmp.ne.s32.totalorder %s351, %s353
      %p360 = scmp.eq.s32.totalorder %s81, 1
      %p361 = por %p359, %p360
      %p362 = scmp.ne.s32.totalorder %s353, %s354
      %p363 = scmp.eq.s32.totalorder %s81, 0
      %p364 = por %p362, %p363
      %p365 = scmp.ne.s32.totalorder %s353, %s354
      %p366 = scmp.eq.s32.totalorder %s82, 1
      %p367 = por %p365, %p366
      %p369 = scmp.ne.s32.totalorder %s354, %s368
      %p370 = scmp.eq.s32.totalorder %s82, 0
      %p371 = por %p369, %p370
      %s373 = sadd.s32 %s372, 1
      %p376 = scmp.eq.s32.totalorder %s76, 1
      %p377 = scmp.ne.s32.totalorder %s372, %s374
      %p378 = scmp.eq.s32.totalorder %s76, 0
      %p379 = por %p377, %p378
      %p380 = scmp.ne.s32.totalorder %s372, %s374
      %p381 = scmp.eq.s32.totalorder %s81, 1
      %p382 = por %p380, %p381
      %p383 = scmp.ne.s32.totalorder %s374, %s375
      %p384 = scmp.eq.s32.totalorder %s81, 0
      %p385 = por %p383, %p384
      %p386 = scmp.ne.s32.totalorder %s374, %s375
      %p387 = scmp.eq.s32.totalorder %s82, 1
      %p388 = por %p386, %p387
      %p390 = scmp.ne.s32.totalorder %s375, %s389
      %p391 = scmp.eq.s32.totalorder %s82, 0
      %p392 = por %p390, %p391
      %s394 = sadd.s32 %s393, 1
      %p397 = scmp.eq.s32.totalorder %s76, 1
      %p398 = scmp.ne.s32.totalorder %s393, %s395
      %p399 = scmp.eq.s32.totalorder %s76, 0
      %p400 = por %p398, %p399
      %p401 = scmp.ne.s32.totalorder %s393, %s395
      %p402 = scmp.eq.s32.totalorder %s81, 1
      %p403 = por %p401, %p402
      %p404 = scmp.ne.s32.totalorder %s395, %s396
      %p405 = scmp.eq.s32.totalorder %s81, 0
      %p406 = por %p404, %p405
      %p407 = scmp.ne.s32.totalorder %s395, %s396
      %p408 = scmp.eq.s32.totalorder %s82, 1
      %p409 = por %p407, %p408
      %p411 = scmp.ne.s32.totalorder %s396, %s410
      %p412 = scmp.eq.s32.totalorder %s82, 0
      %p413 = por %p411, %p412
      %s415 = sadd.s32 %s414, 1
      %p418 = scmp.eq.s32.totalorder %s76, 1
      %p419 = scmp.ne.s32.totalorder %s414, %s416
      %p420 = scmp.eq.s32.totalorder %s76, 0
      %p421 = por %p419, %p420
      %p422 = scmp.ne.s32.totalorder %s414, %s416
      %p423 = scmp.eq.s32.totalorder %s81, 1
      %p424 = por %p422, %p423
      %p425 = scmp.ne.s32.totalorder %s416, %s417
      %p426 = scmp.eq.s32.totalorder %s81, 0
      %p427 = por %p425, %p426
      %p428 = scmp.ne.s32.totalorder %s416, %s417
      %p429 = scmp.eq.s32.totalorder %s82, 1
      %p430 = por %p428, %p429
      %p432 = scmp.ne.s32.totalorder %s417, %s431
      %p433 = scmp.eq.s32.totalorder %s82, 0
      %p434 = por %p432, %p433
      %s436 = sadd.s32 %s435, 1
      %p439 = scmp.eq.s32.totalorder %s76, 1
      %p440 = scmp.ne.s32.totalorder %s435, %s437
      %p441 = scmp.eq.s32.totalorder %s76, 0
      %p442 = por %p440, %p441
      %p443 = scmp.ne.s32.totalorder %s435, %s437
      %p444 = scmp.eq.s32.totalorder %s81, 1
      %p445 = por %p443, %p444
      %p446 = scmp.ne.s32.totalorder %s437, %s438
      %p447 = scmp.eq.s32.totalorder %s81, 0
      %p448 = por %p446, %p447
      %p449 = scmp.ne.s32.totalorder %s437, %s438
      %p450 = scmp.eq.s32.totalorder %s82, 1
      %p451 = por %p449, %p450
      %p453 = scmp.ne.s32.totalorder %s438, %s452
      %p454 = scmp.eq.s32.totalorder %s82, 0
      %p455 = por %p453, %p454
      %s457 = sadd.s32 %s456, 1
      %p460 = scmp.eq.s32.totalorder %s76, 1
      %p461 = scmp.ne.s32.totalorder %s456, %s458
      %p462 = scmp.eq.s32.totalorder %s76, 0
      %p463 = por %p461, %p462
      %p464 = scmp.ne.s32.totalorder %s456, %s458
      %p465 = scmp.eq.s32.totalorder %s81, 1
      %p466 = por %p464, %p465
      %p467 = scmp.ne.s32.totalorder %s458, %s459
      %p468 = scmp.eq.s32.totalorder %s81, 0
      %p469 = por %p467, %p468
      %p470 = scmp.ne.s32.totalorder %s458, %s459
      %p471 = scmp.eq.s32.totalorder %s82, 1
      %p472 = por %p470, %p471
      %p474 = scmp.ne.s32.totalorder %s459, %s473
      %p475 = scmp.eq.s32.totalorder %s82, 0
      %p476 = por %p474, %p475
      %s478 = sadd.s32 %s477, 1
      %p481 = scmp.eq.s32.totalorder %s76, 1
      %p482 = scmp.ne.s32.totalorder %s477, %s479
      %p483 = scmp.eq.s32.totalorder %s76, 0
      %p484 = por %p482, %p483
      %p485 = scmp.ne.s32.totalorder %s477, %s479
      %p486 = scmp.eq.s32.totalorder %s81, 1
      %p487 = por %p485, %p486
      %p488 = scmp.ne.s32.totalorder %s479, %s480
      %p489 = scmp.eq.s32.totalorder %s81, 0
      %p490 = por %p488, %p489
      %p491 = scmp.ne.s32.totalorder %s479, %s480
      %p492 = scmp.eq.s32.totalorder %s82, 1
      %p493 = por %p491, %p492
      %p495 = scmp.ne.s32.totalorder %s480, %s494
      %p496 = scmp.eq.s32.totalorder %s82, 0
      %p497 = por %p495, %p496
      %s499 = sadd.s32 %s498, 1
      %p502 = scmp.eq.s32.totalorder %s76, 1
      %p503 = scmp.ne.s32.totalorder %s498, %s500
      %p504 = scmp.eq.s32.totalorder %s76, 0
      %p505 = por %p503, %p504
      %p506 = scmp.ne.s32.totalorder %s498, %s500
      %p507 = scmp.eq.s32.totalorder %s81, 1
      %p508 = por %p506, %p507
      %p509 = scmp.ne.s32.totalorder %s500, %s501
      %p510 = scmp.eq.s32.totalorder %s81, 0
      %p511 = por %p509, %p510
      %p512 = scmp.ne.s32.totalorder %s500, %s501
      %p513 = scmp.eq.s32.totalorder %s82, 1
      %p514 = por %p512, %p513
      %p516 = scmp.ne.s32.totalorder %s501, %s515
      %p517 = scmp.eq.s32.totalorder %s82, 0
      %p518 = por %p516, %p517
      %s520 = sadd.s32 %s519, 1
      %p523 = scmp.eq.s32.totalorder %s76, 1
      %p524 = scmp.ne.s32.totalorder %s519, %s521
      %p525 = scmp.eq.s32.totalorder %s76, 0
      %p526 = por %p524, %p525
      %p527 = scmp.ne.s32.totalorder %s519, %s521
      %p528 = scmp.eq.s32.totalorder %s81, 1
      %p529 = por %p527, %p528
      %p530 = scmp.ne.s32.totalorder %s521, %s522
      %p531 = scmp.eq.s32.totalorder %s81, 0
      %p532 = por %p530, %p531
      %p533 = scmp.ne.s32.totalorder %s521, %s522
      %p534 = scmp.eq.s32.totalorder %s82, 1
      %p535 = por %p533, %p534
      %p537 = scmp.ne.s32.totalorder %s522, %s536
      %p538 = scmp.eq.s32.totalorder %s82, 0
      %p539 = por %p537, %p538
      %s541 = sadd.s32 %s540, 1
      %p544 = scmp.eq.s32.totalorder %s76, 1
      %p545 = scmp.ne.s32.totalorder %s540, %s542
      %p546 = scmp.eq.s32.totalorder %s76, 0
      %p547 = por %p545, %p546
      %p548 = scmp.ne.s32.totalorder %s540, %s542
      %p549 = scmp.eq.s32.totalorder %s81, 1
      %p550 = por %p548, %p549
      %p551 = scmp.ne.s32.totalorder %s542, %s543
      %p552 = scmp.eq.s32.totalorder %s81, 0
      %p553 = por %p551, %p552
      %p554 = scmp.ne.s32.totalorder %s542, %s543
      %p555 = scmp.eq.s32.totalorder %s82, 1
      %p556 = por %p554, %p555
      %p558 = scmp.ne.s32.totalorder %s543, %s557
      %p559 = scmp.eq.s32.totalorder %s82, 0
      %p560 = por %p558, %p559
      %s562 = sadd.s32 %s561, 1
      %p565 = scmp.eq.s32.totalorder %s76, 1
      %p566 = scmp.ne.s32.totalorder %s561, %s563
      %p567 = scmp.eq.s32.totalorder %s76, 0
      %p568 = por %p566, %p567
      %p569 = scmp.ne.s32.totalorder %s561, %s563
      %p570 = scmp.eq.s32.totalorder %s81, 1
      %p571 = por %p569, %p570
      %p572 = scmp.ne.s32.totalorder %s563, %s564
      %p573 = scmp.eq.s32.totalorder %s81, 0
      %p574 = por %p572, %p573
      %p575 = scmp.ne.s32.totalorder %s563, %s564
      %p576 = scmp.eq.s32.totalorder %s82, 1
      %p577 = por %p575, %p576
      %p579 = scmp.ne.s32.totalorder %s564, %s578
      %p580 = scmp.eq.s32.totalorder %s82, 0
      %p581 = por %p579, %p580
      %s583 = sadd.s32 %s582, 1
      %p586 = scmp.eq.s32.totalorder %s76, 1
      %p587 = scmp.ne.s32.totalorder %s582, %s584
      %p588 = scmp.eq.s32.totalorder %s76, 0
      %p589 = por %p587, %p588
      %p590 = scmp.ne.s32.totalorder %s582, %s584
      %p591 = scmp.eq.s32.totalorder %s81, 1
      %p592 = por %p590, %p591
      %p593 = scmp.ne.s32.totalorder %s584, %s585
      %p594 = scmp.eq.s32.totalorder %s81, 0
      %p595 = por %p593, %p594
      %p596 = scmp.ne.s32.totalorder %s584, %s585
      %p597 = scmp.eq.s32.totalorder %s82, 1
      %p598 = por %p596, %p597
      %p600 = scmp.ne.s32.totalorder %s585, %s599
      %p601 = scmp.eq.s32.totalorder %s82, 0
      %p602 = por %p600, %p601
      %s604 = sadd.s32 %s603, 1
      %p607 = scmp.eq.s32.totalorder %s76, 1
      %p608 = scmp.ne.s32.totalorder %s603, %s605
      %p609 = scmp.eq.s32.totalorder %s76, 0
      %p610 = por %p608, %p609
      %p611 = scmp.ne.s32.totalorder %s603, %s605
      %p612 = scmp.eq.s32.totalorder %s81, 1
      %p613 = por %p611, %p612
      %p614 = scmp.ne.s32.totalorder %s605, %s606
      %p615 = scmp.eq.s32.totalorder %s81, 0
      %p616 = por %p614, %p615
      %p617 = scmp.ne.s32.totalorder %s605, %s606
      %p618 = scmp.eq.s32.totalorder %s82, 1
      %p619 = por %p617, %p618
      %p621 = scmp.ne.s32.totalorder %s606, %s620
      %p622 = scmp.eq.s32.totalorder %s82, 0
      %p623 = por %p621, %p622
      %s625 = sadd.s32 %s624, 1
      %p628 = scmp.eq.s32.totalorder %s76, 1
      %p629 = scmp.ne.s32.totalorder %s624, %s626
      %p630 = scmp.eq.s32.totalorder %s76, 0
      %p631 = por %p629, %p630
      %p632 = scmp.ne.s32.totalorder %s624, %s626
      %p633 = scmp.eq.s32.totalorder %s81, 1
      %p634 = por %p632, %p633
      %p635 = scmp.ne.s32.totalorder %s626, %s627
      %p636 = scmp.eq.s32.totalorder %s81, 0
      %p637 = por %p635, %p636
      %p638 = scmp.ne.s32.totalorder %s626, %s627
      %p639 = scmp.eq.s32.totalorder %s82, 1
      %p640 = por %p638, %p639
      %p642 = scmp.ne.s32.totalorder %s627, %s641
      %p643 = scmp.eq.s32.totalorder %s82, 0
      %p644 = por %p642, %p643
      %s646 = sadd.s32 %s645, 1
      %p649 = scmp.eq.s32.totalorder %s76, 1
      %p650 = scmp.ne.s32.totalorder %s645, %s647
      %p651 = scmp.eq.s32.totalorder %s76, 0
      %p652 = por %p650, %p651
      %p653 = scmp.ne.s32.totalorder %s645, %s647
      %p654 = scmp.eq.s32.totalorder %s81, 1
      %p655 = por %p653, %p654
      %p656 = scmp.ne.s32.totalorder %s647, %s648
      %p657 = scmp.eq.s32.totalorder %s81, 0
      %p658 = por %p656, %p657
      %p659 = scmp.ne.s32.totalorder %s647, %s648
      %p660 = scmp.eq.s32.totalorder %s82, 1
      %p661 = por %p659, %p660
      %p663 = scmp.ne.s32.totalorder %s648, %s662
      %p664 = scmp.eq.s32.totalorder %s82, 0
      %p665 = por %p663, %p664
      %s667 = sadd.s32 %s666, 1
      %p670 = scmp.eq.s32.totalorder %s76, 1
      %p671 = scmp.ne.s32.totalorder %s666, %s668
      %p672 = scmp.eq.s32.totalorder %s76, 0
      %p673 = por %p671, %p672
      %p674 = scmp.ne.s32.totalorder %s666, %s668
      %p675 = scmp.eq.s32.totalorder %s81, 1
      %p676 = por %p674, %p675
      %p677 = scmp.ne.s32.totalorder %s668, %s669
      %p678 = scmp.eq.s32.totalorder %s81, 0
      %p679 = por %p677, %p678
      %p680 = scmp.ne.s32.totalorder %s668, %s669
      %p681 = scmp.eq.s32.totalorder %s82, 1
      %p682 = por %p680, %p681
      %p684 = scmp.ne.s32.totalorder %s669, %s683
      %p685 = scmp.eq.s32.totalorder %s82, 0
      %p686 = por %p684, %p685
      %s688 = sadd.s32 %s687, 1
      %p691 = scmp.eq.s32.totalorder %s76, 1
      %p692 = scmp.ne.s32.totalorder %s687, %s689
      %p693 = scmp.eq.s32.totalorder %s76, 0
      %p694 = por %p692, %p693
      %p695 = scmp.ne.s32.totalorder %s687, %s689
      %p696 = scmp.eq.s32.totalorder %s81, 1
      %p697 = por %p695, %p696
      %p698 = scmp.ne.s32.totalorder %s689, %s690
      %p699 = scmp.eq.s32.totalorder %s81, 0
      %p700 = por %p698, %p699
      %p701 = scmp.ne.s32.totalorder %s689, %s690
      %p702 = scmp.eq.s32.totalorder %s82, 1
      %p703 = por %p701, %p702
      %p705 = scmp.ne.s32.totalorder %s690, %s704
      %p706 = scmp.eq.s32.totalorder %s82, 0
      %p707 = por %p705, %p706
      %s708 = ssub.s32 %s76, %s83
      %p709 = scmp.eq.s32.totalorder %s708, 0
      %s711 = sadd.s32 %s710, 1
      %s712 = scalar_select %p709, %s710, %s711
      %p715 = pneg %p709
      %p716 = scmp.eq.s32.totalorder %s76, 1
      %p717 = por %p715, %p716
      %p718 = scmp.ne.s32.totalorder %s710, %s713
      %p719 = scmp.eq.s32.totalorder %s76, 0
      %p720 = por %p718, %p719
      %p721 = scmp.ne.s32.totalorder %s710, %s713
      %p722 = scmp.eq.s32.totalorder %s81, 1
      %p723 = por %p721, %p722
      %p724 = scmp.ne.s32.totalorder %s713, %s714
      %p725 = scmp.eq.s32.totalorder %s81, 0
      %p726 = por %p724, %p725
      %p727 = scmp.ne.s32.totalorder %s713, %s714
      %p728 = scmp.eq.s32.totalorder %s82, 1
      %p729 = por %p727, %p728
      %p731 = scmp.ne.s32.totalorder %s714, %s730
      %p732 = scmp.eq.s32.totalorder %s82, 0
      %p733 = por %p731, %p732
      %p734 = scmp.le.s32.totalorder 1, %s76
      %p735 = scmp.lt.s32.totalorder %s76, 3
      %p736 = pnand %p734, %p735
      %p737 = pneg %p736
      // Predicated region
      $region9: #{tam_forward.1} parent=5 // pred_check
        _
      $region10: #{tam_forward.1} parent=5 // pred_check_branch
        %739 = sbr.rel (%p736) target = $region12
      $region11: #{tam_forward.1} parent=5 // pred_region
        %s740 = ssub.s32 %s76, 1
        // Predicated region
        $region13: #{tam_forward.1} parent=11 // pred_check
          %p741 = pneg %p175
        $region14: #{tam_forward.1} parent=11 // pred_check_branch
          %743 = sbr.rel (%p741) target = $region16
        $region15: #{tam_forward.1} parent=11 // pred_region
          _
        $region16: #{tam_forward.1} parent=11 // pred_fallthru
          _
        // Predicated region
        $region17: #{tam_forward.1} parent=11 // pred_check
          %p744 = pneg %p196
        $region18: #{tam_forward.1} parent=11 // pred_check_branch
          %746 = sbr.rel (%p744) target = $region20
        $region19: #{tam_forward.1} parent=11 // pred_region
          _
        $region20: #{tam_forward.1} parent=11 // pred_fallthru
          _
        // Predicated region
        $region21: #{tam_forward.1} parent=11 // pred_check
          %p747 = pneg %p217
        $region22: #{tam_forward.1} parent=11 // pred_check_branch
          %749 = sbr.rel (%p747) target = $region24
        $region23: #{tam_forward.1} parent=11 // pred_region
          _
        $region24: #{tam_forward.1} parent=11 // pred_fallthru
          _
        // Predicated region
        $region25: #{tam_forward.1} parent=11 // pred_check
          %p750 = pneg %p238
        $region26: #{tam_forward.1} parent=11 // pred_check_branch
          %752 = sbr.rel (%p750) target = $region28
        $region27: #{tam_forward.1} parent=11 // pred_region
          _
        $region28: #{tam_forward.1} parent=11 // pred_fallthru
          _
        // Predicated region
        $region29: #{tam_forward.1} parent=11 // pred_check
          %p753 = pneg %p259
        $region30: #{tam_forward.1} parent=11 // pred_check_branch
          %755 = sbr.rel (%p753) target = $region32
        $region31: #{tam_forward.1} parent=11 // pred_region
          _
        $region32: #{tam_forward.1} parent=11 // pred_fallthru
          _
        // Predicated region
        $region33: #{tam_forward.1} parent=11 // pred_check
          %p756 = pneg %p280
        $region34: #{tam_forward.1} parent=11 // pred_check_branch
          %758 = sbr.rel (%p756) target = $region36
        $region35: #{tam_forward.1} parent=11 // pred_region
          _
        $region36: #{tam_forward.1} parent=11 // pred_fallthru
          _
        // Predicated region
        $region37: #{tam_forward.1} parent=11 // pred_check
          %p759 = pneg %p301
        $region38: #{tam_forward.1} parent=11 // pred_check_branch
          %761 = sbr.rel (%p759) target = $region40
        $region39: #{tam_forward.1} parent=11 // pred_region
          _
        $region40: #{tam_forward.1} parent=11 // pred_fallthru
          _
        // Predicated region
        $region41: #{tam_forward.1} parent=11 // pred_check
          %p762 = pneg %p322
        $region42: #{tam_forward.1} parent=11 // pred_check_branch
          %764 = sbr.rel (%p762) target = $region44
        $region43: #{tam_forward.1} parent=11 // pred_region
          _
        $region44: #{tam_forward.1} parent=11 // pred_fallthru
          _
        // Predicated region
        $region45: #{tam_forward.1} parent=11 // pred_check
          %p765 = pneg %p343
        $region46: #{tam_forward.1} parent=11 // pred_check_branch
          %767 = sbr.rel (%p765) target = $region48
        $region47: #{tam_forward.1} parent=11 // pred_region
          _
        $region48: #{tam_forward.1} parent=11 // pred_fallthru
          _
        // Predicated region
        $region49: #{tam_forward.1} parent=11 // pred_check
          %p768 = pneg %p364
        $region50: #{tam_forward.1} parent=11 // pred_check_branch
          %770 = sbr.rel (%p768) target = $region52
        $region51: #{tam_forward.1} parent=11 // pred_region
          _
        $region52: #{tam_forward.1} parent=11 // pred_fallthru
          _
        // Predicated region
        $region53: #{tam_forward.1} parent=11 // pred_check
          %p771 = pneg %p385
        $region54: #{tam_forward.1} parent=11 // pred_check_branch
          %773 = sbr.rel (%p771) target = $region56
        $region55: #{tam_forward.1} parent=11 // pred_region
          _
        $region56: #{tam_forward.1} parent=11 // pred_fallthru
          _
        // Predicated region
        $region57: #{tam_forward.1} parent=11 // pred_check
          %p774 = pneg %p406
        $region58: #{tam_forward.1} parent=11 // pred_check_branch
          %776 = sbr.rel (%p774) target = $region60
        $region59: #{tam_forward.1} parent=11 // pred_region
          _
        $region60: #{tam_forward.1} parent=11 // pred_fallthru
          _
        // Predicated region
        $region61: #{tam_forward.1} parent=11 // pred_check
          %p777 = pneg %p427
        $region62: #{tam_forward.1} parent=11 // pred_check_branch
          %779 = sbr.rel (%p777) target = $region64
        $region63: #{tam_forward.1} parent=11 // pred_region
          _
        $region64: #{tam_forward.1} parent=11 // pred_fallthru
          _
        // Predicated region
        $region65: #{tam_forward.1} parent=11 // pred_check
          %p780 = pneg %p448
        $region66: #{tam_forward.1} parent=11 // pred_check_branch
          %782 = sbr.rel (%p780) target = $region68
        $region67: #{tam_forward.1} parent=11 // pred_region
          _
        $region68: #{tam_forward.1} parent=11 // pred_fallthru
          _
        // Predicated region
        $region69: #{tam_forward.1} parent=11 // pred_check
          %p783 = pneg %p469
        $region70: #{tam_forward.1} parent=11 // pred_check_branch
          %785 = sbr.rel (%p783) target = $region72
        $region71: #{tam_forward.1} parent=11 // pred_region
          _
        $region72: #{tam_forward.1} parent=11 // pred_fallthru
          _
        // Predicated region
        $region73: #{tam_forward.1} parent=11 // pred_check
          %p786 = pneg %p490
        $region74: #{tam_forward.1} parent=11 // pred_check_branch
          %788 = sbr.rel (%p786) target = $region76
        $region75: #{tam_forward.1} parent=11 // pred_region
          _
        $region76: #{tam_forward.1} parent=11 // pred_fallthru
          _
        // Predicated region
        $region77: #{tam_forward.1} parent=11 // pred_check
          %p789 = pneg %p511
        $region78: #{tam_forward.1} parent=11 // pred_check_branch
          %791 = sbr.rel (%p789) target = $region80
        $region79: #{tam_forward.1} parent=11 // pred_region
          _
        $region80: #{tam_forward.1} parent=11 // pred_fallthru
          _
        // Predicated region
        $region81: #{tam_forward.1} parent=11 // pred_check
          %p792 = pneg %p532
        $region82: #{tam_forward.1} parent=11 // pred_check_branch
          %794 = sbr.rel (%p792) target = $region84
        $region83: #{tam_forward.1} parent=11 // pred_region
          _
        $region84: #{tam_forward.1} parent=11 // pred_fallthru
          _
        // Predicated region
        $region85: #{tam_forward.1} parent=11 // pred_check
          %p795 = pneg %p553
        $region86: #{tam_forward.1} parent=11 // pred_check_branch
          %797 = sbr.rel (%p795) target = $region88
        $region87: #{tam_forward.1} parent=11 // pred_region
          _
        $region88: #{tam_forward.1} parent=11 // pred_fallthru
          _
        // Predicated region
        $region89: #{tam_forward.1} parent=11 // pred_check
          %p798 = pneg %p574
        $region90: #{tam_forward.1} parent=11 // pred_check_branch
          %800 = sbr.rel (%p798) target = $region92
        $region91: #{tam_forward.1} parent=11 // pred_region
          _
        $region92: #{tam_forward.1} parent=11 // pred_fallthru
          _
        // Predicated region
        $region93: #{tam_forward.1} parent=11 // pred_check
          %p801 = pneg %p595
        $region94: #{tam_forward.1} parent=11 // pred_check_branch
          %803 = sbr.rel (%p801) target = $region96
        $region95: #{tam_forward.1} parent=11 // pred_region
          _
        $region96: #{tam_forward.1} parent=11 // pred_fallthru
          _
        // Predicated region
        $region97: #{tam_forward.1} parent=11 // pred_check
          %p804 = pneg %p616
        $region98: #{tam_forward.1} parent=11 // pred_check_branch
          %806 = sbr.rel (%p804) target = $region100
        $region99: #{tam_forward.1} parent=11 // pred_region
          _
        $region100: #{tam_forward.1} parent=11 // pred_fallthru
          _
        // Predicated region
        $region101: #{tam_forward.1} parent=11 // pred_check
          %p807 = pneg %p637
        $region102: #{tam_forward.1} parent=11 // pred_check_branch
          %809 = sbr.rel (%p807) target = $region104
        $region103: #{tam_forward.1} parent=11 // pred_region
          _
        $region104: #{tam_forward.1} parent=11 // pred_fallthru
          _
        // Predicated region
        $region105: #{tam_forward.1} parent=11 // pred_check
          %p810 = pneg %p658
        $region106: #{tam_forward.1} parent=11 // pred_check_branch
          %812 = sbr.rel (%p810) target = $region108
        $region107: #{tam_forward.1} parent=11 // pred_region
          _
        $region108: #{tam_forward.1} parent=11 // pred_fallthru
          _
        // Predicated region
        $region109: #{tam_forward.1} parent=11 // pred_check
          %p813 = pneg %p679
        $region110: #{tam_forward.1} parent=11 // pred_check_branch
          %815 = sbr.rel (%p813) target = $region112
        $region111: #{tam_forward.1} parent=11 // pred_region
          _
        $region112: #{tam_forward.1} parent=11 // pred_fallthru
          _
        // Predicated region
        $region113: #{tam_forward.1} parent=11 // pred_check
          %p816 = pneg %p700
        $region114: #{tam_forward.1} parent=11 // pred_check_branch
          %818 = sbr.rel (%p816) target = $region116
        $region115: #{tam_forward.1} parent=11 // pred_region
          _
        $region116: #{tam_forward.1} parent=11 // pred_fallthru
          _
      $region12: #{tam_forward.1} parent=5 // pred_fallthru
        _
      %p819 = scmp.lt.s32.totalorder %s76, 2
      // Predicated region
      $region117: #{tam_forward.1} parent=5 // pred_check
        %p820 = pneg %p819
      $region118: #{tam_forward.1} parent=5 // pred_check_branch
        %822 = sbr.rel (%p820) target = $region120
      $region119: #{tam_forward.1} parent=5 // pred_region
        // Predicated region
        $region121: #{tam_forward.1} parent=119 // pred_check
          %p823 = pneg %p96
        $region122: #{tam_forward.1} parent=119 // pred_check_branch
          %825 = sbr.rel (%p823) target = $region124
        $region123: #{tam_forward.1} parent=119 // pred_region
          %p826 = scmp.lt.s32.totalorder %s76, 1
          %s827 = scalar_select %p826, %s76, 1
          %s828 = smul.addr %s827, 32
          %s829 = smul.addr %s828, 8
          %s830 = scalar_lea.vmem %s1, %s829
        $region124: #{tam_forward.1} parent=119 // pred_fallthru
          _
        // Predicated region
        $region125: #{tam_forward.1} parent=119 // pred_check
          %p831 = pneg %p122
        $region126: #{tam_forward.1} parent=119 // pred_check_branch
          %833 = sbr.rel (%p831) target = $region128
        $region127: #{tam_forward.1} parent=119 // pred_region
          %s834 = sand.u32 %s112, 1
          %s835 = scalar_lea.sflag [#allocation4], %s834
          %s836 = sand.u32 %s112, 1
          %s837 = smul.addr %s836, 256
          %s838 = scalar_lea.vmem [#allocation3], %s837
          %840 = vsyncadd %s835, 0
          %s841 = smul.addr %s76, 32
          %s842 = smul.addr %s841, 8
          %s843 = scalar_lea.hbm %s3, %s842
          %s844 = sshll.u32 %s843, 4
          %s845 = int_to_ptr.hbm [resolvable:$true] %s844
          %s846 = sshll.u32 %s838, 4
          %s847 = int_to_ptr.vmem [resolvable:$true] %s846
          %852 = dma.hbm_to_vmem [thread:$0]  %s845, 4096, %s847, %s835, 128, 128, 8
        $region128: #{tam_forward.1} parent=119 // pred_fallthru
          _
        // Predicated region
        $region129: #{tam_forward.1} parent=119 // pred_check
          %p853 = pneg %p148
        $region130: #{tam_forward.1} parent=119 // pred_check_branch
          %855 = sbr.rel (%p853) target = $region132
        $region131: #{tam_forward.1} parent=119 // pred_region
          %s856 = sand.u32 %s138, 1
          %s857 = scalar_lea.sflag [#allocation7], %s856
          %s858 = sand.u32 %s138, 1
          %s859 = smul.addr %s858, 256
          %s860 = scalar_lea.vmem [#allocation6], %s859
          %862 = vsyncadd %s857, 0
          %s863 = smul.addr %s76, 32
          %s864 = smul.addr %s863, 8
          %s865 = scalar_lea.hbm %s5, %s864
          %s866 = sshll.u32 %s865, 4
          %s867 = int_to_ptr.hbm [resolvable:$true] %s866
          %s868 = sshll.u32 %s860, 4
          %s869 = int_to_ptr.vmem [resolvable:$true] %s868
          %874 = dma.hbm_to_vmem [thread:$0]  %s867, 4096, %s869, %s857, 128, 128, 8
        $region132: #{tam_forward.1} parent=119 // pred_fallthru
          _
      $region120: #{tam_forward.1} parent=5 // pred_fallthru
        _
      %p875 = scmp.le.s32.totalorder 1, %s76
      %p876 = scmp.lt.s32.totalorder %s76, 3
      %p877 = pnand %p875, %p876
      %p878 = pneg %p877
      // Predicated region
      $region133: #{tam_forward.1} parent=5 // pred_check
        _
      $region134: #{tam_forward.1} parent=5 // pred_check_branch
        %880 = sbr.rel (%p877) target = $region136
      $region135: #{tam_forward.1} parent=5 // pred_region
        %s881 = ssub.s32 %s76, 1
        %s882 = sand.u32 %s115, 1
        %s883 = scalar_lea.sflag [#allocation4], %s882
        %s884 = sand.u32 %s115, 1
        %s885 = smul.addr %s884, 256
        %s886 = scalar_lea.vmem [#allocation3], %s885
        // Predicated region
        $region137: #{tam_forward.1} parent=135 // pred_check
          %p887 = pneg %p128
        $region138: #{tam_forward.1} parent=135 // pred_check_branch
          %889 = sbr.rel (%p887) target = $region140
        $region139: #{tam_forward.1} parent=135 // pred_region
          %891 = dma.done %s883, 4096
        $region140: #{tam_forward.1} parent=135 // pred_fallthru
          _
        %s892 = sand.u32 %s141, 1
        %s893 = scalar_lea.sflag [#allocation7], %s892
        %s894 = sand.u32 %s141, 1
        %s895 = smul.addr %s894, 256
        %s896 = scalar_lea.vmem [#allocation6], %s895
        // Predicated region
        $region141: #{tam_forward.1} parent=135 // pred_check
          %p897 = pneg %p154
        $region142: #{tam_forward.1} parent=135 // pred_check_branch
          %899 = sbr.rel (%p897) target = $region144
        $region143: #{tam_forward.1} parent=135 // pred_region
          %901 = dma.done %s893, 4096
        $region144: #{tam_forward.1} parent=135 // pred_fallthru
          _
        %p902 = scmp.lt.s32.totalorder %s81, 1
        %s903 = scalar_select %p902, %s81, 1
        %s904 = smul.addr %s903, 32
        %s905 = smul.addr %s904, 8
        %s906 = scalar_lea.vmem %s1, %s905
        %p907 = pneg %p102
        %p908 = pneg %p99
        %s909 = sand.u32 %s115, 1
        %s910 = scalar_lea.sflag [#allocation4], %s909
        %s911 = sand.u32 %s115, 1
        %s912 = smul.addr %s911, 256
        %s913 = scalar_lea.vmem [#allocation3], %s912
        %p914 = pneg %p128
        %p915 = pneg %p125
        %s916 = sand.u32 %s141, 1
        %s917 = scalar_lea.sflag [#allocation7], %s916
        %s918 = sand.u32 %s141, 1
        %s919 = smul.addr %s918, 256
        %s920 = scalar_lea.vmem [#allocation6], %s919
        %p921 = pneg %p154
        %p922 = pneg %p151
        %p923 = pneg %p175
        %p924 = pneg %p172
        %p925 = pneg %p196
        %p926 = pneg %p193
        %p927 = pneg %p217
        %p928 = pneg %p214
        %p929 = pneg %p238
        %p930 = pneg %p235
        %p931 = pneg %p259
        %p932 = pneg %p256
        %p933 = pneg %p280
        %p934 = pneg %p277
        %p935 = pneg %p301
        %p936 = pneg %p298
        %p937 = pneg %p322
        %p938 = pneg %p319
        %p939 = pneg %p343
        %p940 = pneg %p340
        %p941 = pneg %p364
        %p942 = pneg %p361
        %p943 = pneg %p385
        %p944 = pneg %p382
        %p945 = pneg %p406
        %p946 = pneg %p403
        %p947 = pneg %p427
        %p948 = pneg %p424
        %p949 = pneg %p448
        %p950 = pneg %p445
        %p951 = pneg %p469
        %p952 = pneg %p466
        %p953 = pneg %p490
        %p954 = pneg %p487
        %p955 = pneg %p511
        %p956 = pneg %p508
        %p957 = pneg %p532
        %p958 = pneg %p529
        %p959 = pneg %p553
        %p960 = pneg %p550
        %p961 = pneg %p574
        %p962 = pneg %p571
        %p963 = pneg %p595
        %p964 = pneg %p592
        %p965 = pneg %p616
        %p966 = pneg %p613
        %p967 = pneg %p637
        %p968 = pneg %p634
        %p969 = pneg %p658
        %p970 = pneg %p655
        %p971 = pneg %p679
        %p972 = pneg %p676
        %p973 = pneg %p700
        %p974 = pneg %p697
        %p975 = pneg %p726
        %p976 = pneg %p723
        %s977 = sand.u32 %s713, 1
        %s978 = scalar_lea.sflag [#allocation5], %s977
        %s979 = sand.u32 %s713, 1
        %s980 = smul.addr %s979, 256
        %s981 = scalar_lea.vmem [#allocation8], %s980
        %p982 = scmp.lt.s32.totalorder %s81, 1
        %s983 = scalar_select %p982, %s81, 1
        %s984 = smul.addr %s983, 32
        %s985 = smul.addr %s984, 8
        %s986 = scalar_lea.vmem %s1, %s985
        %v988 = vld [vmem:[%s986] sm:$0xff]
        %v989 = vld [vmem:[%s986 + $0x8] sm:$0xff]
        %v990 = vld [vmem:[%s986 + $0x10] sm:$0xff]
        %v991 = vld [vmem:[%s986 + $0x18] sm:$0xff]
        %v992 = vld [vmem:[%s986 + $0x20] sm:$0xff]
        %v993 = vld [vmem:[%s986 + $0x28] sm:$0xff]
        %v994 = vld [vmem:[%s986 + $0x30] sm:$0xff]
        %v995 = vld [vmem:[%s986 + $0x38] sm:$0xff]
        %v996 = vld [vmem:[%s986 + $0x40] sm:$0xff]
        %v997 = vld [vmem:[%s986 + $0x48] sm:$0xff]
        %v998 = vld [vmem:[%s986 + $0x50] sm:$0xff]
        %v999 = vld [vmem:[%s986 + $0x58] sm:$0xff]
        %v1000 = vld [vmem:[%s986 + $0x60] sm:$0xff]
        %v1001 = vld [vmem:[%s986 + $0x68] sm:$0xff]
        %v1002 = vld [vmem:[%s986 + $0x70] sm:$0xff]
        %v1003 = vld [vmem:[%s986 + $0x78] sm:$0xff]
        %v1004 = vld [vmem:[%s986 + $0x80] sm:$0xff]
        %v1005 = vld [vmem:[%s986 + $0x88] sm:$0xff]
        %v1006 = vld [vmem:[%s986 + $0x90] sm:$0xff]
        %v1007 = vld [vmem:[%s986 + $0x98] sm:$0xff]
        %v1008 = vld [vmem:[%s986 + $0xa0] sm:$0xff]
        %v1009 = vld [vmem:[%s986 + $0xa8] sm:$0xff]
        %v1010 = vld [vmem:[%s986 + $0xb0] sm:$0xff]
        %v1011 = vld [vmem:[%s986 + $0xb8] sm:$0xff]
        %v1012 = vld [vmem:[%s986 + $0xc0] sm:$0xff]
        %v1013 = vld [vmem:[%s986 + $0xc8] sm:$0xff]
        %v1014 = vld [vmem:[%s986 + $0xd0] sm:$0xff]
        %v1015 = vld [vmem:[%s986 + $0xd8] sm:$0xff]
        %v1016 = vld [vmem:[%s986 + $0xe0] sm:$0xff]
        %v1017 = vld [vmem:[%s986 + $0xe8] sm:$0xff]
        %v1018 = vld [vmem:[%s986 + $0xf0] sm:$0xff]
        %v1019 = vld [vmem:[%s986 + $0xf8] sm:$0xff]
        %v1020 = vld [vmem:[%s886] sm:$0xff]
        %v1021 = vld [vmem:[%s886 + $0x8] sm:$0xff]
        %v1022 = vld [vmem:[%s886 + $0x10] sm:$0xff]
        %v1023 = vld [vmem:[%s886 + $0x18] sm:$0xff]
        %v1024 = vld [vmem:[%s886 + $0x20] sm:$0xff]
        %v1025 = vld [vmem:[%s886 + $0x28] sm:$0xff]
        %v1026 = vld [vmem:[%s886 + $0x30] sm:$0xff]
        %v1027 = vld [vmem:[%s886 + $0x38] sm:$0xff]
        %v1028 = vld [vmem:[%s886 + $0x40] sm:$0xff]
        %v1029 = vld [vmem:[%s886 + $0x48] sm:$0xff]
        %v1030 = vld [vmem:[%s886 + $0x50] sm:$0xff]
        %v1031 = vld [vmem:[%s886 + $0x58] sm:$0xff]
        %v1032 = vld [vmem:[%s886 + $0x60] sm:$0xff]
        %v1033 = vld [vmem:[%s886 + $0x68] sm:$0xff]
        %v1034 = vld [vmem:[%s886 + $0x70] sm:$0xff]
        %v1035 = vld [vmem:[%s886 + $0x78] sm:$0xff]
        %v1036 = vld [vmem:[%s886 + $0x80] sm:$0xff]
        %v1037 = vld [vmem:[%s886 + $0x88] sm:$0xff]
        %v1038 = vld [vmem:[%s886 + $0x90] sm:$0xff]
        %v1039 = vld [vmem:[%s886 + $0x98] sm:$0xff]
        %v1040 = vld [vmem:[%s886 + $0xa0] sm:$0xff]
        %v1041 = vld [vmem:[%s886 + $0xa8] sm:$0xff]
        %v1042 = vld [vmem:[%s886 + $0xb0] sm:$0xff]
        %v1043 = vld [vmem:[%s886 + $0xb8] sm:$0xff]
        %v1044 = vld [vmem:[%s886 + $0xc0] sm:$0xff]
        %v1045 = vld [vmem:[%s886 + $0xc8] sm:$0xff]
        %v1046 = vld [vmem:[%s886 + $0xd0] sm:$0xff]
        %v1047 = vld [vmem:[%s886 + $0xd8] sm:$0xff]
        %v1048 = vld [vmem:[%s886 + $0xe0] sm:$0xff]
        %v1049 = vld [vmem:[%s886 + $0xe8] sm:$0xff]
        %v1050 = vld [vmem:[%s886 + $0xf0] sm:$0xff]
        %v1051 = vld [vmem:[%s886 + $0xf8] sm:$0xff]
        %v1052 = vld [vmem:[%s896] sm:$0xff]
        %v1053 = vld [vmem:[%s896 + $0x8] sm:$0xff]
        %v1054 = vld [vmem:[%s896 + $0x10] sm:$0xff]
        %v1055 = vld [vmem:[%s896 + $0x18] sm:$0xff]
        %v1056 = vld [vmem:[%s896 + $0x20] sm:$0xff]
        %v1057 = vld [vmem:[%s896 + $0x28] sm:$0xff]
        %v1058 = vld [vmem:[%s896 + $0x30] sm:$0xff]
        %v1059 = vld [vmem:[%s896 + $0x38] sm:$0xff]
        %v1060 = vld [vmem:[%s896 + $0x40] sm:$0xff]
        %v1061 = vld [vmem:[%s896 + $0x48] sm:$0xff]
        %v1062 = vld [vmem:[%s896 + $0x50] sm:$0xff]
        %v1063 = vld [vmem:[%s896 + $0x58] sm:$0xff]
        %v1064 = vld [vmem:[%s896 + $0x60] sm:$0xff]
        %v1065 = vld [vmem:[%s896 + $0x68] sm:$0xff]
        %v1066 = vld [vmem:[%s896 + $0x70] sm:$0xff]
        %v1067 = vld [vmem:[%s896 + $0x78] sm:$0xff]
        %v1068 = vld [vmem:[%s896 + $0x80] sm:$0xff]
        %v1069 = vld [vmem:[%s896 + $0x88] sm:$0xff]
        %v1070 = vld [vmem:[%s896 + $0x90] sm:$0xff]
        %v1071 = vld [vmem:[%s896 + $0x98] sm:$0xff]
        %v1072 = vld [vmem:[%s896 + $0xa0] sm:$0xff]
        %v1073 = vld [vmem:[%s896 + $0xa8] sm:$0xff]
        %v1074 = vld [vmem:[%s896 + $0xb0] sm:$0xff]
        %v1075 = vld [vmem:[%s896 + $0xb8] sm:$0xff]
        %v1076 = vld [vmem:[%s896 + $0xc0] sm:$0xff]
        %v1077 = vld [vmem:[%s896 + $0xc8] sm:$0xff]
        %v1078 = vld [vmem:[%s896 + $0xd0] sm:$0xff]
        %v1079 = vld [vmem:[%s896 + $0xd8] sm:$0xff]
        %v1080 = vld [vmem:[%s896 + $0xe0] sm:$0xff]
        %v1081 = vld [vmem:[%s896 + $0xe8] sm:$0xff]
        %v1082 = vld [vmem:[%s896 + $0xf0] sm:$0xff]
        %v1083 = vld [vmem:[%s896 + $0xf8] sm:$0xff]
        %v1084 = vld [vmem:[%s7] sm:$0xf]
        %v1085 = vld [vmem:[%s7 + $0x4] sm:$0xf]
        %v1086 = vld [vmem:[%s7 + $0x8] sm:$0xf]
        %v1087 = vld [vmem:[%s7 + $0xc] sm:$0xf]
        %v1088 = vld [vmem:[%s7 + $0x10] sm:$0xf]
        %v1089 = vld [vmem:[%s7 + $0x14] sm:$0xf]
        %v1090 = vld [vmem:[%s7 + $0x18] sm:$0xf]
        %v1091 = vld [vmem:[%s7 + $0x1c] sm:$0xf]
        %v1092 = vld [vmem:[%s7 + $0x20] sm:$0xf]
        %v1093 = vld [vmem:[%s7 + $0x24] sm:$0xf]
        %v1094 = vld [vmem:[%s7 + $0x28] sm:$0xf]
        %v1095 = vld [vmem:[%s7 + $0x2c] sm:$0xf]
        %v1096 = vpack.c.bf16 %v989, %v988
        %v1097 = vpack.c.bf16 %v991, %v990
        %v1098 = vpack.c.bf16 %v993, %v992
        %v1099 = vpack.c.bf16 %v995, %v994
        %v1100 = vpack.c.bf16 %v997, %v996
        %v1101 = vpack.c.bf16 %v999, %v998
        %v1102 = vpack.c.bf16 %v1001, %v1000
        %v1103 = vpack.c.bf16 %v1003, %v1002
        %v1104 = vpack.c.bf16 %v1005, %v1004
        %v1105 = vpack.c.bf16 %v1007, %v1006
        %v1106 = vpack.c.bf16 %v1009, %v1008
        %v1107 = vpack.c.bf16 %v1011, %v1010
        %v1108 = vpack.c.bf16 %v1013, %v1012
        %v1109 = vpack.c.bf16 %v1015, %v1014
        %v1110 = vpack.c.bf16 %v1017, %v1016
        %v1111 = vpack.c.bf16 %v1019, %v1018
        %v1112 = vpack.c.bf16 %v1021, %v1020
        %v1113 = vpack.c.bf16 %v1023, %v1022
        %v1114 = vpack.c.bf16 %v1025, %v1024
        %v1115 = vpack.c.bf16 %v1027, %v1026
        %v1116 = vpack.c.bf16 %v1029, %v1028
        %v1117 = vpack.c.bf16 %v1031, %v1030
        %v1118 = vpack.c.bf16 %v1033, %v1032
        %v1119 = vpack.c.bf16 %v1035, %v1034
        %v1120 = vpack.c.bf16 %v1037, %v1036
        %v1121 = vpack.c.bf16 %v1039, %v1038
        %v1122 = vpack.c.bf16 %v1041, %v1040
        %v1123 = vpack.c.bf16 %v1043, %v1042
        %v1124 = vpack.c.bf16 %v1045, %v1044
        %v1125 = vpack.c.bf16 %v1047, %v1046
        %v1126 = vpack.c.bf16 %v1049, %v1048
        %v1127 = vpack.c.bf16 %v1051, %v1050
        %v1132 = vunpack.c.l.b16 %v1088
        %v1133 = vunpack.c.l.b16 %v1089
        %v1134 = vunpack.c.l.b16 %v1090
        %v1135 = vunpack.c.l.b16 %v1091
        %v1136 = vpack.c.b16 %v1133, %v1132
        %v1137 = vpack.c.b16 %v1135, %v1134
        %vm1140 = vcmask 261120
        %v1142 = vsel %vm1140, %v1112, 0
        %v1145 = vsel %vm1140, %v1113, 0
        %v1148 = vsel %vm1140, %v1114, 0
        %v1151 = vsel %vm1140, %v1115, 0
        %v1154 = vsel %vm1140, %v1116, 0
        %v1157 = vsel %vm1140, %v1117, 0
        %v1160 = vsel %vm1140, %v1118, 0
        %v1163 = vsel %vm1140, %v1119, 0
        %v1166 = vsel %vm1140, %v1120, 0
        %v1169 = vsel %vm1140, %v1121, 0
        %v1172 = vsel %vm1140, %v1122, 0
        %v1175 = vsel %vm1140, %v1123, 0
        %v1178 = vsel %vm1140, %v1124, 0
        %v1181 = vsel %vm1140, %v1125, 0
        %v1184 = vsel %vm1140, %v1126, 0
        %v1187 = vsel %vm1140, %v1127, 0
        %1189 = vmatpush.bf16.msra.mxu0 0
        %1190 = vmatpush.bf16.msra.mxu0 0
        %1191 = vmatpush.bf16.msra.mxu0 0
        %1192 = vmatpush.bf16.msra.mxu0 0
        %1193 = vmatpush.bf16.msra.mxu0 0
        %1194 = vmatpush.bf16.msra.mxu0 0
        %1195 = vmatpush.bf16.msra.mxu0 %v1137
        %1196 = vmatpush.bf16.msra.mxu0 %v1136
        %1197 = vmatmul.bf16.gmra.mxu0 %v1142
        %v1198 = vpop.f32.mrf.mxu0
        %v1199 = vadd.f32 0.0, %v1198
        %v1200 = vpop.f32.mrf.mxu0
        %v1201 = vadd.f32 0.0, %v1200
        %1202 = vmatmul.bf16.gmra.mxu0 %v1145
        %v1203 = vpop.f32.mrf.mxu0
        %v1204 = vadd.f32 0.0, %v1203
        %v1205 = vpop.f32.mrf.mxu0
        %v1206 = vadd.f32 0.0, %v1205
        %1207 = vmatmul.bf16.gmra.mxu0 %v1148
        %v1208 = vpop.f32.mrf.mxu0
        %v1209 = vadd.f32 0.0, %v1208
        %v1210 = vpop.f32.mrf.mxu0
        %v1211 = vadd.f32 0.0, %v1210
        %1212 = vmatmul.bf16.gmra.mxu0 %v1151
        %v1213 = vpop.f32.mrf.mxu0
        %v1214 = vadd.f32 0.0, %v1213
        %v1215 = vpop.f32.mrf.mxu0
        %v1216 = vadd.f32 0.0, %v1215
        %1217 = vmatmul.bf16.gmra.mxu0 %v1154
        %v1218 = vpop.f32.mrf.mxu0
        %v1219 = vadd.f32 0.0, %v1218
        %v1220 = vpop.f32.mrf.mxu0
        %v1221 = vadd.f32 0.0, %v1220
        %1222 = vmatmul.bf16.gmra.mxu0 %v1157
        %v1223 = vpop.f32.mrf.mxu0
        %v1224 = vadd.f32 0.0, %v1223
        %v1225 = vpop.f32.mrf.mxu0
        %v1226 = vadd.f32 0.0, %v1225
        %1227 = vmatmul.bf16.gmra.mxu0 %v1160
        %v1228 = vpop.f32.mrf.mxu0
        %v1229 = vadd.f32 0.0, %v1228
        %v1230 = vpop.f32.mrf.mxu0
        %v1231 = vadd.f32 0.0, %v1230
        %1232 = vmatmul.bf16.gmra.mxu0 %v1163
        %v1233 = vpop.f32.mrf.mxu0
        %v1234 = vadd.f32 0.0, %v1233
        %v1235 = vpop.f32.mrf.mxu0
        %v1236 = vadd.f32 0.0, %v1235
        %1237 = vmatmul.bf16.gmra.mxu0 %v1166
        %v1238 = vpop.f32.mrf.mxu0
        %v1239 = vadd.f32 0.0, %v1238
        %v1240 = vpop.f32.mrf.mxu0
        %v1241 = vadd.f32 0.0, %v1240
        %1242 = vmatmul.bf16.gmra.mxu0 %v1169
        %v1243 = vpop.f32.mrf.mxu0
        %v1244 = vadd.f32 0.0, %v1243
        %v1245 = vpop.f32.mrf.mxu0
        %v1246 = vadd.f32 0.0, %v1245
        %1247 = vmatmul.bf16.gmra.mxu0 %v1172
        %v1248 = vpop.f32.mrf.mxu0
        %v1249 = vadd.f32 0.0, %v1248
        %v1250 = vpop.f32.mrf.mxu0
        %v1251 = vadd.f32 0.0, %v1250
        %1252 = vmatmul.bf16.gmra.mxu0 %v1175
        %v1253 = vpop.f32.mrf.mxu0
        %v1254 = vadd.f32 0.0, %v1253
        %v1255 = vpop.f32.mrf.mxu0
        %v1256 = vadd.f32 0.0, %v1255
        %1257 = vmatmul.bf16.gmra.mxu0 %v1178
        %v1258 = vpop.f32.mrf.mxu0
        %v1259 = vadd.f32 0.0, %v1258
        %v1260 = vpop.f32.mrf.mxu0
        %v1261 = vadd.f32 0.0, %v1260
        %1262 = vmatmul.bf16.gmra.mxu0 %v1181
        %v1263 = vpop.f32.mrf.mxu0
        %v1264 = vadd.f32 0.0, %v1263
        %v1265 = vpop.f32.mrf.mxu0
        %v1266 = vadd.f32 0.0, %v1265
        %1267 = vmatmul.bf16.gmra.mxu0 %v1184
        %v1268 = vpop.f32.mrf.mxu0
        %v1269 = vadd.f32 0.0, %v1268
        %v1270 = vpop.f32.mrf.mxu0
        %v1271 = vadd.f32 0.0, %v1270
        %1272 = vmatmul.bf16.gmra.mxu0 %v1187
        %v1273 = vpop.f32.mrf.mxu0
        %v1274 = vadd.f32 0.0, %v1273
        %v1275 = vpop.f32.mrf.mxu0
        %v1276 = vadd.f32 0.0, %v1275
        %1277 = vdwg.mxu0
        %v1282 = vunpack.c.l.b16 %v1084
        %v1283 = vunpack.c.l.b16 %v1085
        %v1284 = vunpack.c.l.b16 %v1086
        %v1285 = vunpack.c.l.b16 %v1087
        %v1286 = vpack.c.b16 %v1283, %v1282
        %v1287 = vpack.c.b16 %v1285, %v1284
        %v1291 = vsel %vm1140, %v1096, 0
        %v1294 = vsel %vm1140, %v1097, 0
        %v1297 = vsel %vm1140, %v1098, 0
        %v1300 = vsel %vm1140, %v1099, 0
        %v1303 = vsel %vm1140, %v1100, 0
        %v1306 = vsel %vm1140, %v1101, 0
        %v1309 = vsel %vm1140, %v1102, 0
        %v1312 = vsel %vm1140, %v1103, 0
        %v1315 = vsel %vm1140, %v1104, 0
        %v1318 = vsel %vm1140, %v1105, 0
        %v1321 = vsel %vm1140, %v1106, 0
        %v1324 = vsel %vm1140, %v1107, 0
        %v1327 = vsel %vm1140, %v1108, 0
        %v1330 = vsel %vm1140, %v1109, 0
        %v1333 = vsel %vm1140, %v1110, 0
        %v1336 = vsel %vm1140, %v1111, 0
        %1338 = vmatpush.bf16.msra.mxu0 0
        %1339 = vmatpush.bf16.msra.mxu0 0
        %1340 = vmatpush.bf16.msra.mxu0 0
        %1341 = vmatpush.bf16.msra.mxu0 0
        %1342 = vmatpush.bf16.msra.mxu0 0
        %1343 = vmatpush.bf16.msra.mxu0 0
        %1344 = vmatpush.bf16.msra.mxu0 %v1287
        %1345 = vmatpush.bf16.msra.mxu0 %v1286
        %1346 = vmatmul.bf16.gmra.mxu0 %v1291
        %v1347 = vpop.f32.mrf.mxu0
        %v1348 = vadd.f32 %v1199, %v1347
        %v1349 = vpop.f32.mrf.mxu0
        %v1350 = vadd.f32 %v1201, %v1349
        %1351 = vmatmul.bf16.gmra.mxu0 %v1294
        %v1352 = vpop.f32.mrf.mxu0
        %v1353 = vadd.f32 %v1204, %v1352
        %v1354 = vpop.f32.mrf.mxu0
        %v1355 = vadd.f32 %v1206, %v1354
        %1356 = vmatmul.bf16.gmra.mxu0 %v1297
        %v1357 = vpop.f32.mrf.mxu0
        %v1358 = vadd.f32 %v1209, %v1357
        %v1359 = vpop.f32.mrf.mxu0
        %v1360 = vadd.f32 %v1211, %v1359
        %1361 = vmatmul.bf16.gmra.mxu0 %v1300
        %v1362 = vpop.f32.mrf.mxu0
        %v1363 = vadd.f32 %v1214, %v1362
        %v1364 = vpop.f32.mrf.mxu0
        %v1365 = vadd.f32 %v1216, %v1364
        %1366 = vmatmul.bf16.gmra.mxu0 %v1303
        %v1367 = vpop.f32.mrf.mxu0
        %v1368 = vadd.f32 %v1219, %v1367
        %v1369 = vpop.f32.mrf.mxu0
        %v1370 = vadd.f32 %v1221, %v1369
        %1371 = vmatmul.bf16.gmra.mxu0 %v1306
        %v1372 = vpop.f32.mrf.mxu0
        %v1373 = vadd.f32 %v1224, %v1372
        %v1374 = vpop.f32.mrf.mxu0
        %v1375 = vadd.f32 %v1226, %v1374
        %1376 = vmatmul.bf16.gmra.mxu0 %v1309
        %v1377 = vpop.f32.mrf.mxu0
        %v1378 = vadd.f32 %v1229, %v1377
        %v1379 = vpop.f32.mrf.mxu0
        %v1380 = vadd.f32 %v1231, %v1379
        %1381 = vmatmul.bf16.gmra.mxu0 %v1312
        %v1382 = vpop.f32.mrf.mxu0
        %v1383 = vadd.f32 %v1234, %v1382
        %v1384 = vpop.f32.mrf.mxu0
        %v1385 = vadd.f32 %v1236, %v1384
        %1386 = vmatmul.bf16.gmra.mxu0 %v1315
        %v1387 = vpop.f32.mrf.mxu0
        %v1388 = vadd.f32 %v1239, %v1387
        %v1389 = vpop.f32.mrf.mxu0
        %v1390 = vadd.f32 %v1241, %v1389
        %1391 = vmatmul.bf16.gmra.mxu0 %v1318
        %v1392 = vpop.f32.mrf.mxu0
        %v1393 = vadd.f32 %v1244, %v1392
        %v1394 = vpop.f32.mrf.mxu0
        %v1395 = vadd.f32 %v1246, %v1394
        %1396 = vmatmul.bf16.gmra.mxu0 %v1321
        %v1397 = vpop.f32.mrf.mxu0
        %v1398 = vadd.f32 %v1249, %v1397
        %v1399 = vpop.f32.mrf.mxu0
        %v1400 = vadd.f32 %v1251, %v1399
        %1401 = vmatmul.bf16.gmra.mxu0 %v1324
        %v1402 = vpop.f32.mrf.mxu0
        %v1403 = vadd.f32 %v1254, %v1402
        %v1404 = vpop.f32.mrf.mxu0
        %v1405 = vadd.f32 %v1256, %v1404
        %1406 = vmatmul.bf16.gmra.mxu0 %v1327
        %v1407 = vpop.f32.mrf.mxu0
        %v1408 = vadd.f32 %v1259, %v1407
        %v1409 = vpop.f32.mrf.mxu0
        %v1410 = vadd.f32 %v1261, %v1409
        %1411 = vmatmul.bf16.gmra.mxu0 %v1330
        %v1412 = vpop.f32.mrf.mxu0
        %v1413 = vadd.f32 %v1264, %v1412
        %v1414 = vpop.f32.mrf.mxu0
        %v1415 = vadd.f32 %v1266, %v1414
        %1416 = vmatmul.bf16.gmra.mxu0 %v1333
        %v1417 = vpop.f32.mrf.mxu0
        %v1418 = vadd.f32 %v1269, %v1417
        %v1419 = vpop.f32.mrf.mxu0
        %v1420 = vadd.f32 %v1271, %v1419
        %1421 = vmatmul.bf16.gmra.mxu0 %v1336
        %v1422 = vpop.f32.mrf.mxu0
        %v1423 = vadd.f32 %v1274, %v1422
        %v1424 = vpop.f32.mrf.mxu0
        %v1425 = vadd.f32 %v1276, %v1424
        %1426 = vdwg.mxu0
        %v1427 = vpack.c.bf16 %v1053, %v1052
        %v1428 = vpack.c.bf16 %v1055, %v1054
        %v1429 = vpack.c.bf16 %v1057, %v1056
        %v1430 = vpack.c.bf16 %v1059, %v1058
        %v1431 = vpack.c.bf16 %v1061, %v1060
        %v1432 = vpack.c.bf16 %v1063, %v1062
        %v1433 = vpack.c.bf16 %v1065, %v1064
        %v1434 = vpack.c.bf16 %v1067, %v1066
        %v1435 = vpack.c.bf16 %v1069, %v1068
        %v1436 = vpack.c.bf16 %v1071, %v1070
        %v1437 = vpack.c.bf16 %v1073, %v1072
        %v1438 = vpack.c.bf16 %v1075, %v1074
        %v1439 = vpack.c.bf16 %v1077, %v1076
        %v1440 = vpack.c.bf16 %v1079, %v1078
        %v1441 = vpack.c.bf16 %v1081, %v1080
        %v1442 = vpack.c.bf16 %v1083, %v1082
        %v1447 = vunpack.c.l.b16 %v1092
        %v1448 = vunpack.c.l.b16 %v1093
        %v1449 = vunpack.c.l.b16 %v1094
        %v1450 = vunpack.c.l.b16 %v1095
        %v1451 = vpack.c.b16 %v1448, %v1447
        %v1452 = vpack.c.b16 %v1450, %v1449
        %v1456 = vsel %vm1140, %v1427, 0
        %v1459 = vsel %vm1140, %v1428, 0
        %v1462 = vsel %vm1140, %v1429, 0
        %v1465 = vsel %vm1140, %v1430, 0
        %v1468 = vsel %vm1140, %v1431, 0
        %v1471 = vsel %vm1140, %v1432, 0
        %v1474 = vsel %vm1140, %v1433, 0
        %v1477 = vsel %vm1140, %v1434, 0
        %v1480 = vsel %vm1140, %v1435, 0
        %v1483 = vsel %vm1140, %v1436, 0
        %v1486 = vsel %vm1140, %v1437, 0
        %v1489 = vsel %vm1140, %v1438, 0
        %v1492 = vsel %vm1140, %v1439, 0
        %v1495 = vsel %vm1140, %v1440, 0
        %v1498 = vsel %vm1140, %v1441, 0
        %v1501 = vsel %vm1140, %v1442, 0
        %1503 = vmatpush.bf16.msra.mxu0 0
        %1504 = vmatpush.bf16.msra.mxu0 0
        %1505 = vmatpush.bf16.msra.mxu0 0
        %1506 = vmatpush.bf16.msra.mxu0 0
        %1507 = vmatpush.bf16.msra.mxu0 0
        %1508 = vmatpush.bf16.msra.mxu0 0
        %1509 = vmatpush.bf16.msra.mxu0 %v1452
        %1510 = vmatpush.bf16.msra.mxu0 %v1451
        %1511 = vmatmul.bf16.gmra.mxu0 %v1456
        %v1512 = vpop.f32.mrf.mxu0
        %v1513 = vadd.f32 0.0, %v1512
        %v1514 = vpop.f32.mrf.mxu0
        %v1515 = vadd.f32 0.0, %v1514
        %1516 = vmatmul.bf16.gmra.mxu0 %v1459
        %v1517 = vpop.f32.mrf.mxu0
        %v1518 = vadd.f32 0.0, %v1517
        %v1519 = vpop.f32.mrf.mxu0
        %v1520 = vadd.f32 0.0, %v1519
        %1521 = vmatmul.bf16.gmra.mxu0 %v1462
        %v1522 = vpop.f32.mrf.mxu0
        %v1523 = vadd.f32 0.0, %v1522
        %v1524 = vpop.f32.mrf.mxu0
        %v1525 = vadd.f32 0.0, %v1524
        %1526 = vmatmul.bf16.gmra.mxu0 %v1465
        %v1527 = vpop.f32.mrf.mxu0
        %v1528 = vadd.f32 0.0, %v1527
        %v1529 = vpop.f32.mrf.mxu0
        %v1530 = vadd.f32 0.0, %v1529
        %1531 = vmatmul.bf16.gmra.mxu0 %v1468
        %v1532 = vpop.f32.mrf.mxu0
        %v1533 = vadd.f32 0.0, %v1532
        %v1534 = vpop.f32.mrf.mxu0
        %v1535 = vadd.f32 0.0, %v1534
        %1536 = vmatmul.bf16.gmra.mxu0 %v1471
        %v1537 = vpop.f32.mrf.mxu0
        %v1538 = vadd.f32 0.0, %v1537
        %v1539 = vpop.f32.mrf.mxu0
        %v1540 = vadd.f32 0.0, %v1539
        %1541 = vmatmul.bf16.gmra.mxu0 %v1474
        %v1542 = vpop.f32.mrf.mxu0
        %v1543 = vadd.f32 0.0, %v1542
        %v1544 = vpop.f32.mrf.mxu0
        %v1545 = vadd.f32 0.0, %v1544
        %1546 = vmatmul.bf16.gmra.mxu0 %v1477
        %v1547 = vpop.f32.mrf.mxu0
        %v1548 = vadd.f32 0.0, %v1547
        %v1549 = vpop.f32.mrf.mxu0
        %v1550 = vadd.f32 0.0, %v1549
        %1551 = vmatmul.bf16.gmra.mxu0 %v1480
        %v1552 = vpop.f32.mrf.mxu0
        %v1553 = vadd.f32 0.0, %v1552
        %v1554 = vpop.f32.mrf.mxu0
        %v1555 = vadd.f32 0.0, %v1554
        %1556 = vmatmul.bf16.gmra.mxu0 %v1483
        %v1557 = vpop.f32.mrf.mxu0
        %v1558 = vadd.f32 0.0, %v1557
        %v1559 = vpop.f32.mrf.mxu0
        %v1560 = vadd.f32 0.0, %v1559
        %1561 = vmatmul.bf16.gmra.mxu0 %v1486
        %v1562 = vpop.f32.mrf.mxu0
        %v1563 = vadd.f32 0.0, %v1562
        %v1564 = vpop.f32.mrf.mxu0
        %v1565 = vadd.f32 0.0, %v1564
        %1566 = vmatmul.bf16.gmra.mxu0 %v1489
        %v1567 = vpop.f32.mrf.mxu0
        %v1568 = vadd.f32 0.0, %v1567
        %v1569 = vpop.f32.mrf.mxu0
        %v1570 = vadd.f32 0.0, %v1569
        %1571 = vmatmul.bf16.gmra.mxu0 %v1492
        %v1572 = vpop.f32.mrf.mxu0
        %v1573 = vadd.f32 0.0, %v1572
        %v1574 = vpop.f32.mrf.mxu0
        %v1575 = vadd.f32 0.0, %v1574
        %1576 = vmatmul.bf16.gmra.mxu0 %v1495
        %v1577 = vpop.f32.mrf.mxu0
        %v1578 = vadd.f32 0.0, %v1577
        %v1579 = vpop.f32.mrf.mxu0
        %v1580 = vadd.f32 0.0, %v1579
        %1581 = vmatmul.bf16.gmra.mxu0 %v1498
        %v1582 = vpop.f32.mrf.mxu0
        %v1583 = vadd.f32 0.0, %v1582
        %v1584 = vpop.f32.mrf.mxu0
        %v1585 = vadd.f32 0.0, %v1584
        %1586 = vmatmul.bf16.gmra.mxu0 %v1501
        %v1587 = vpop.f32.mrf.mxu0
        %v1588 = vadd.f32 0.0, %v1587
        %v1589 = vpop.f32.mrf.mxu0
        %v1590 = vadd.f32 0.0, %v1589
        %1591 = vdwg.mxu0
        %v1592 = vadd.f32 %v1348, %v1513
        %v1593 = vadd.f32 %v1350, %v1515
        %v1594 = vadd.f32 %v1353, %v1518
        %v1595 = vadd.f32 %v1355, %v1520
        %v1596 = vadd.f32 %v1358, %v1523
        %v1597 = vadd.f32 %v1360, %v1525
        %v1598 = vadd.f32 %v1363, %v1528
        %v1599 = vadd.f32 %v1365, %v1530
        %v1600 = vadd.f32 %v1368, %v1533
        %v1601 = vadd.f32 %v1370, %v1535
        %v1602 = vadd.f32 %v1373, %v1538
        %v1603 = vadd.f32 %v1375, %v1540
        %v1604 = vadd.f32 %v1378, %v1543
        %v1605 = vadd.f32 %v1380, %v1545
        %v1606 = vadd.f32 %v1383, %v1548
        %v1607 = vadd.f32 %v1385, %v1550
        %v1608 = vadd.f32 %v1388, %v1553
        %v1609 = vadd.f32 %v1390, %v1555
        %v1610 = vadd.f32 %v1393, %v1558
        %v1611 = vadd.f32 %v1395, %v1560
        %v1612 = vadd.f32 %v1398, %v1563
        %v1613 = vadd.f32 %v1400, %v1565
        %v1614 = vadd.f32 %v1403, %v1568
        %v1615 = vadd.f32 %v1405, %v1570
        %v1616 = vadd.f32 %v1408, %v1573
        %v1617 = vadd.f32 %v1410, %v1575
        %v1618 = vadd.f32 %v1413, %v1578
        %v1619 = vadd.f32 %v1415, %v1580
        %v1620 = vadd.f32 %v1418, %v1583
        %v1621 = vadd.f32 %v1420, %v1585
        %v1622 = vadd.f32 %v1423, %v1588
        %v1623 = vadd.f32 %v1425, %v1590
        %v1624 = vld [vmem:[%s9] sm:$0x1]
        %v1626 = vperm.slane %v1624, 0
        %v1628 = vadd.f32 %v1592, %v1626
        %v1629 = vadd.f32 %v1593, %v1626
        %v1630 = vadd.f32 %v1594, %v1626
        %v1631 = vadd.f32 %v1595, %v1626
        %v1632 = vadd.f32 %v1596, %v1626
        %v1633 = vadd.f32 %v1597, %v1626
        %v1634 = vadd.f32 %v1598, %v1626
        %v1635 = vadd.f32 %v1599, %v1626
        %v1636 = vadd.f32 %v1600, %v1626
        %v1637 = vadd.f32 %v1601, %v1626
        %v1638 = vadd.f32 %v1602, %v1626
        %v1639 = vadd.f32 %v1603, %v1626
        %v1640 = vadd.f32 %v1604, %v1626
        %v1641 = vadd.f32 %v1605, %v1626
        %v1642 = vadd.f32 %v1606, %v1626
        %v1643 = vadd.f32 %v1607, %v1626
        %v1644 = vadd.f32 %v1608, %v1626
        %v1645 = vadd.f32 %v1609, %v1626
        %v1646 = vadd.f32 %v1610, %v1626
        %v1647 = vadd.f32 %v1611, %v1626
        %v1648 = vadd.f32 %v1612, %v1626
        %v1649 = vadd.f32 %v1613, %v1626
        %v1650 = vadd.f32 %v1614, %v1626
        %v1651 = vadd.f32 %v1615, %v1626
        %v1652 = vadd.f32 %v1616, %v1626
        %v1653 = vadd.f32 %v1617, %v1626
        %v1654 = vadd.f32 %v1618, %v1626
        %v1655 = vadd.f32 %v1619, %v1626
        %v1656 = vadd.f32 %v1620, %v1626
        %v1657 = vadd.f32 %v1621, %v1626
        %v1658 = vadd.f32 %v1622, %v1626
        %v1659 = vadd.f32 %v1623, %v1626
        %v1660 = vadd.f32 %v1628, %v988
        %v1661 = vadd.f32 %v1629, %v989
        %v1662 = vadd.f32 %v1630, %v990
        %v1663 = vadd.f32 %v1631, %v991
        %v1664 = vadd.f32 %v1632, %v992
        %v1665 = vadd.f32 %v1633, %v993
        %v1666 = vadd.f32 %v1634, %v994
        %v1667 = vadd.f32 %v1635, %v995
        %v1668 = vadd.f32 %v1636, %v996
        %v1669 = vadd.f32 %v1637, %v997
        %v1670 = vadd.f32 %v1638, %v998
        %v1671 = vadd.f32 %v1639, %v999
        %v1672 = vadd.f32 %v1640, %v1000
        %v1673 = vadd.f32 %v1641, %v1001
        %v1674 = vadd.f32 %v1642, %v1002
        %v1675 = vadd.f32 %v1643, %v1003
        %v1676 = vadd.f32 %v1644, %v1004
        %v1677 = vadd.f32 %v1645, %v1005
        %v1678 = vadd.f32 %v1646, %v1006
        %v1679 = vadd.f32 %v1647, %v1007
        %v1680 = vadd.f32 %v1648, %v1008
        %v1681 = vadd.f32 %v1649, %v1009
        %v1682 = vadd.f32 %v1650, %v1010
        %v1683 = vadd.f32 %v1651, %v1011
        %v1684 = vadd.f32 %v1652, %v1012
        %v1685 = vadd.f32 %v1653, %v1013
        %v1686 = vadd.f32 %v1654, %v1014
        %v1687 = vadd.f32 %v1655, %v1015
        %v1688 = vadd.f32 %v1656, %v1016
        %v1689 = vadd.f32 %v1657, %v1017
        %v1690 = vadd.f32 %v1658, %v1018
        %v1691 = vadd.f32 %v1659, %v1019
        %v1692 = vxor.u32 %v1660, 2147483648
        %v1693 = vxor.u32 %v1661, 2147483648
        %v1694 = vxor.u32 %v1662, 2147483648
        %v1695 = vxor.u32 %v1663, 2147483648
        %v1696 = vxor.u32 %v1664, 2147483648
        %v1697 = vxor.u32 %v1665, 2147483648
        %v1698 = vxor.u32 %v1666, 2147483648
        %v1699 = vxor.u32 %v1667, 2147483648
        %v1700 = vxor.u32 %v1668, 2147483648
        %v1701 = vxor.u32 %v1669, 2147483648
        %v1702 = vxor.u32 %v1670, 2147483648
        %v1703 = vxor.u32 %v1671, 2147483648
        %v1704 = vxor.u32 %v1672, 2147483648
        %v1705 = vxor.u32 %v1673, 2147483648
        %v1706 = vxor.u32 %v1674, 2147483648
        %v1707 = vxor.u32 %v1675, 2147483648
        %v1708 = vxor.u32 %v1676, 2147483648
        %v1709 = vxor.u32 %v1677, 2147483648
        %v1710 = vxor.u32 %v1678, 2147483648
        %v1711 = vxor.u32 %v1679, 2147483648
        %v1712 = vxor.u32 %v1680, 2147483648
        %v1713 = vxor.u32 %v1681, 2147483648
        %v1714 = vxor.u32 %v1682, 2147483648
        %v1715 = vxor.u32 %v1683, 2147483648
        %v1716 = vxor.u32 %v1684, 2147483648
        %v1717 = vxor.u32 %v1685, 2147483648
        %v1718 = vxor.u32 %v1686, 2147483648
        %v1719 = vxor.u32 %v1687, 2147483648
        %v1720 = vxor.u32 %v1688, 2147483648
        %v1721 = vxor.u32 %v1689, 2147483648
        %v1722 = vxor.u32 %v1690, 2147483648
        %v1723 = vxor.u32 %v1691, 2147483648
        %v1724 = vmul.f32 %v1692, 1.442695
        %v1725 = vpow.pop %v1724
        %v1726 = vmul.f32 %v1693, 1.442695
        %v1727 = vpow.pop %v1726
        %v1728 = vmul.f32 %v1694, 1.442695
        %v1729 = vpow.pop %v1728
        %v1730 = vmul.f32 %v1695, 1.442695
        %v1731 = vpow.pop %v1730
        %v1732 = vmul.f32 %v1696, 1.442695
        %v1733 = vpow.pop %v1732
        %v1734 = vmul.f32 %v1697, 1.442695
        %v1735 = vpow.pop %v1734
        %v1736 = vmul.f32 %v1698, 1.442695
        %v1737 = vpow.pop %v1736
        %v1738 = vmul.f32 %v1699, 1.442695
        %v1739 = vpow.pop %v1738
        %v1740 = vmul.f32 %v1700, 1.442695
        %v1741 = vpow.pop %v1740
        %v1742 = vmul.f32 %v1701, 1.442695
        %v1743 = vpow.pop %v1742
        %v1744 = vmul.f32 %v1702, 1.442695
        %v1745 = vpow.pop %v1744
        %v1746 = vmul.f32 %v1703, 1.442695
        %v1747 = vpow.pop %v1746
        %v1748 = vmul.f32 %v1704, 1.442695
        %v1749 = vpow.pop %v1748
        %v1750 = vmul.f32 %v1705, 1.442695
        %v1751 = vpow.pop %v1750
        %v1752 = vmul.f32 %v1706, 1.442695
        %v1753 = vpow.pop %v1752
        %v1754 = vmul.f32 %v1707, 1.442695
        %v1755 = vpow.pop %v1754
        %v1756 = vmul.f32 %v1708, 1.442695
        %v1757 = vpow.pop %v1756
        %v1758 = vmul.f32 %v1709, 1.442695
        %v1759 = vpow.pop %v1758
        %v1760 = vmul.f32 %v1710, 1.442695
        %v1761 = vpow.pop %v1760
        %v1762 = vmul.f32 %v1711, 1.442695
        %v1763 = vpow.pop %v1762
        %v1764 = vmul.f32 %v1712, 1.442695
        %v1765 = vpow.pop %v1764
        %v1766 = vmul.f32 %v1713, 1.442695
        %v1767 = vpow.pop %v1766
        %v1768 = vmul.f32 %v1714, 1.442695
        %v1769 = vpow.pop %v1768
        %v1770 = vmul.f32 %v1715, 1.442695
        %v1771 = vpow.pop %v1770
        %v1772 = vmul.f32 %v1716, 1.442695
        %v1773 = vpow.pop %v1772
        %v1774 = vmul.f32 %v1717, 1.442695
        %v1775 = vpow.pop %v1774
        %v1776 = vmul.f32 %v1718, 1.442695
        %v1777 = vpow.pop %v1776
        %v1778 = vmul.f32 %v1719, 1.442695
        %v1779 = vpow.pop %v1778
        %v1780 = vmul.f32 %v1720, 1.442695
        %v1781 = vpow.pop %v1780
        %v1782 = vmul.f32 %v1721, 1.442695
        %v1783 = vpow.pop %v1782
        %v1784 = vmul.f32 %v1722, 1.442695
        %v1785 = vpow.pop %v1784
        %v1786 = vmul.f32 %v1723, 1.442695
        %v1787 = vpow.pop %v1786
        %v1788 = vadd.f32 %v1725, 1.0
        %v1789 = vadd.f32 %v1727, 1.0
        %v1790 = vadd.f32 %v1729, 1.0
        %v1791 = vadd.f32 %v1731, 1.0
        %v1792 = vadd.f32 %v1733, 1.0
        %v1793 = vadd.f32 %v1735, 1.0
        %v1794 = vadd.f32 %v1737, 1.0
        %v1795 = vadd.f32 %v1739, 1.0
        %v1796 = vadd.f32 %v1741, 1.0
        %v1797 = vadd.f32 %v1743, 1.0
        %v1798 = vadd.f32 %v1745, 1.0
        %v1799 = vadd.f32 %v1747, 1.0
        %v1800 = vadd.f32 %v1749, 1.0
        %v1801 = vadd.f32 %v1751, 1.0
        %v1802 = vadd.f32 %v1753, 1.0
        %v1803 = vadd.f32 %v1755, 1.0
        %v1804 = vadd.f32 %v1757, 1.0
        %v1805 = vadd.f32 %v1759, 1.0
        %v1806 = vadd.f32 %v1761, 1.0
        %v1807 = vadd.f32 %v1763, 1.0
        %v1808 = vadd.f32 %v1765, 1.0
        %v1809 = vadd.f32 %v1767, 1.0
        %v1810 = vadd.f32 %v1769, 1.0
        %v1811 = vadd.f32 %v1771, 1.0
        %v1812 = vadd.f32 %v1773, 1.0
        %v1813 = vadd.f32 %v1775, 1.0
        %v1814 = vadd.f32 %v1777, 1.0
        %v1815 = vadd.f32 %v1779, 1.0
        %v1816 = vadd.f32 %v1781, 1.0
        %v1817 = vadd.f32 %v1783, 1.0
        %v1818 = vadd.f32 %v1785, 1.0
        %v1819 = vadd.f32 %v1787, 1.0
        %v1820 = vrcp.pop %v1788
        %v1821 = vmul.f32 %v1788, %v1820
        %v1822 = vsub.f32 1.0, %v1821
        %v1823 = vmul.f32 %v1820, %v1822
        %v1824 = vadd.f32 %v1820, %v1823
        %vm1825 = vweird.f32 %v1788
        %vm1826 = vweird.f32 %v1820
        %vm1827 = vmor %vm1825, %vm1826
        %v1828 = vsel %vm1827, %v1820, %v1824
        %v1829 = vand.u32 2147483647, %v1788
        %vm1830 = vcmp.eq.f32.partialorder %v1829, 8.507059e+37
        %v1831 = vand.u32 %v1788, 2147483648
        %v1832 = vor.u32 1.1754944e-38, %v1831
        %v1833 = vsel %vm1830, %v1832, %v1828
        %v1834 = vmul.f32 1.0, %v1833
        %v1835 = vrcp.pop %v1789
        %v1836 = vmul.f32 %v1789, %v1835
        %v1837 = vsub.f32 1.0, %v1836
        %v1838 = vmul.f32 %v1835, %v1837
        %v1839 = vadd.f32 %v1835, %v1838
        %vm1840 = vweird.f32 %v1789
        %vm1841 = vweird.f32 %v1835
        %vm1842 = vmor %vm1840, %vm1841
        %v1843 = vsel %vm1842, %v1835, %v1839
        %v1844 = vand.u32 2147483647, %v1789
        %vm1845 = vcmp.eq.f32.partialorder %v1844, 8.507059e+37
        %v1846 = vand.u32 %v1789, 2147483648
        %v1847 = vor.u32 1.1754944e-38, %v1846
        %v1848 = vsel %vm1845, %v1847, %v1843
        %v1849 = vmul.f32 1.0, %v1848
        %v1850 = vrcp.pop %v1790
        %v1851 = vmul.f32 %v1790, %v1850
        %v1852 = vsub.f32 1.0, %v1851
        %v1853 = vmul.f32 %v1850, %v1852
        %v1854 = vadd.f32 %v1850, %v1853
        %vm1855 = vweird.f32 %v1790
        %vm1856 = vweird.f32 %v1850
        %vm1857 = vmor %vm1855, %vm1856
        %v1858 = vsel %vm1857, %v1850, %v1854
        %v1859 = vand.u32 2147483647, %v1790
        %vm1860 = vcmp.eq.f32.partialorder %v1859, 8.507059e+37
        %v1861 = vand.u32 %v1790, 2147483648
        %v1862 = vor.u32 1.1754944e-38, %v1861
        %v1863 = vsel %vm1860, %v1862, %v1858
        %v1864 = vmul.f32 1.0, %v1863
        %v1865 = vrcp.pop %v1791
        %v1866 = vmul.f32 %v1791, %v1865
        %v1867 = vsub.f32 1.0, %v1866
        %v1868 = vmul.f32 %v1865, %v1867
        %v1869 = vadd.f32 %v1865, %v1868
        %vm1870 = vweird.f32 %v1791
        %vm1871 = vweird.f32 %v1865
        %vm1872 = vmor %vm1870, %vm1871
        %v1873 = vsel %vm1872, %v1865, %v1869
        %v1874 = vand.u32 2147483647, %v1791
        %vm1875 = vcmp.eq.f32.partialorder %v1874, 8.507059e+37
        %v1876 = vand.u32 %v1791, 2147483648
        %v1877 = vor.u32 1.1754944e-38, %v1876
        %v1878 = vsel %vm1875, %v1877, %v1873
        %v1879 = vmul.f32 1.0, %v1878
        %v1880 = vrcp.pop %v1792
        %v1881 = vmul.f32 %v1792, %v1880
        %v1882 = vsub.f32 1.0, %v1881
        %v1883 = vmul.f32 %v1880, %v1882
        %v1884 = vadd.f32 %v1880, %v1883
        %vm1885 = vweird.f32 %v1792
        %vm1886 = vweird.f32 %v1880
        %vm1887 = vmor %vm1885, %vm1886
        %v1888 = vsel %vm1887, %v1880, %v1884
        %v1889 = vand.u32 2147483647, %v1792
        %vm1890 = vcmp.eq.f32.partialorder %v1889, 8.507059e+37
        %v1891 = vand.u32 %v1792, 2147483648
        %v1892 = vor.u32 1.1754944e-38, %v1891
        %v1893 = vsel %vm1890, %v1892, %v1888
        %v1894 = vmul.f32 1.0, %v1893
        %v1895 = vrcp.pop %v1793
        %v1896 = vmul.f32 %v1793, %v1895
        %v1897 = vsub.f32 1.0, %v1896
        %v1898 = vmul.f32 %v1895, %v1897
        %v1899 = vadd.f32 %v1895, %v1898
        %vm1900 = vweird.f32 %v1793
        %vm1901 = vweird.f32 %v1895
        %vm1902 = vmor %vm1900, %vm1901
        %v1903 = vsel %vm1902, %v1895, %v1899
        %v1904 = vand.u32 2147483647, %v1793
        %vm1905 = vcmp.eq.f32.partialorder %v1904, 8.507059e+37
        %v1906 = vand.u32 %v1793, 2147483648
        %v1907 = vor.u32 1.1754944e-38, %v1906
        %v1908 = vsel %vm1905, %v1907, %v1903
        %v1909 = vmul.f32 1.0, %v1908
        %v1910 = vrcp.pop %v1794
        %v1911 = vmul.f32 %v1794, %v1910
        %v1912 = vsub.f32 1.0, %v1911
        %v1913 = vmul.f32 %v1910, %v1912
        %v1914 = vadd.f32 %v1910, %v1913
        %vm1915 = vweird.f32 %v1794
        %vm1916 = vweird.f32 %v1910
        %vm1917 = vmor %vm1915, %vm1916
        %v1918 = vsel %vm1917, %v1910, %v1914
        %v1919 = vand.u32 2147483647, %v1794
        %vm1920 = vcmp.eq.f32.partialorder %v1919, 8.507059e+37
        %v1921 = vand.u32 %v1794, 2147483648
        %v1922 = vor.u32 1.1754944e-38, %v1921
        %v1923 = vsel %vm1920, %v1922, %v1918
        %v1924 = vmul.f32 1.0, %v1923
        %v1925 = vrcp.pop %v1795
        %v1926 = vmul.f32 %v1795, %v1925
        %v1927 = vsub.f32 1.0, %v1926
        %v1928 = vmul.f32 %v1925, %v1927
        %v1929 = vadd.f32 %v1925, %v1928
        %vm1930 = vweird.f32 %v1795
        %vm1931 = vweird.f32 %v1925
        %vm1932 = vmor %vm1930, %vm1931
        %v1933 = vsel %vm1932, %v1925, %v1929
        %v1934 = vand.u32 2147483647, %v1795
        %vm1935 = vcmp.eq.f32.partialorder %v1934, 8.507059e+37
        %v1936 = vand.u32 %v1795, 2147483648
        %v1937 = vor.u32 1.1754944e-38, %v1936
        %v1938 = vsel %vm1935, %v1937, %v1933
        %v1939 = vmul.f32 1.0, %v1938
        %v1940 = vrcp.pop %v1796
        %v1941 = vmul.f32 %v1796, %v1940
        %v1942 = vsub.f32 1.0, %v1941
        %v1943 = vmul.f32 %v1940, %v1942
        %v1944 = vadd.f32 %v1940, %v1943
        %vm1945 = vweird.f32 %v1796
        %vm1946 = vweird.f32 %v1940
        %vm1947 = vmor %vm1945, %vm1946
        %v1948 = vsel %vm1947, %v1940, %v1944
        %v1949 = vand.u32 2147483647, %v1796
        %vm1950 = vcmp.eq.f32.partialorder %v1949, 8.507059e+37
        %v1951 = vand.u32 %v1796, 2147483648
        %v1952 = vor.u32 1.1754944e-38, %v1951
        %v1953 = vsel %vm1950, %v1952, %v1948
        %v1954 = vmul.f32 1.0, %v1953
        %v1955 = vrcp.pop %v1797
        %v1956 = vmul.f32 %v1797, %v1955
        %v1957 = vsub.f32 1.0, %v1956
        %v1958 = vmul.f32 %v1955, %v1957
        %v1959 = vadd.f32 %v1955, %v1958
        %vm1960 = vweird.f32 %v1797
        %vm1961 = vweird.f32 %v1955
        %vm1962 = vmor %vm1960, %vm1961
        %v1963 = vsel %vm1962, %v1955, %v1959
        %v1964 = vand.u32 2147483647, %v1797
        %vm1965 = vcmp.eq.f32.partialorder %v1964, 8.507059e+37
        %v1966 = vand.u32 %v1797, 2147483648
        %v1967 = vor.u32 1.1754944e-38, %v1966
        %v1968 = vsel %vm1965, %v1967, %v1963
        %v1969 = vmul.f32 1.0, %v1968
        %v1970 = vrcp.pop %v1798
        %v1971 = vmul.f32 %v1798, %v1970
        %v1972 = vsub.f32 1.0, %v1971
        %v1973 = vmul.f32 %v1970, %v1972
        %v1974 = vadd.f32 %v1970, %v1973
        %vm1975 = vweird.f32 %v1798
        %vm1976 = vweird.f32 %v1970
        %vm1977 = vmor %vm1975, %vm1976
        %v1978 = vsel %vm1977, %v1970, %v1974
        %v1979 = vand.u32 2147483647, %v1798
        %vm1980 = vcmp.eq.f32.partialorder %v1979, 8.507059e+37
        %v1981 = vand.u32 %v1798, 2147483648
        %v1982 = vor.u32 1.1754944e-38, %v1981
        %v1983 = vsel %vm1980, %v1982, %v1978
        %v1984 = vmul.f32 1.0, %v1983
        %v1985 = vrcp.pop %v1799
        %v1986 = vmul.f32 %v1799, %v1985
        %v1987 = vsub.f32 1.0, %v1986
        %v1988 = vmul.f32 %v1985, %v1987
        %v1989 = vadd.f32 %v1985, %v1988
        %vm1990 = vweird.f32 %v1799
        %vm1991 = vweird.f32 %v1985
        %vm1992 = vmor %vm1990, %vm1991
        %v1993 = vsel %vm1992, %v1985, %v1989
        %v1994 = vand.u32 2147483647, %v1799
        %vm1995 = vcmp.eq.f32.partialorder %v1994, 8.507059e+37
        %v1996 = vand.u32 %v1799, 2147483648
        %v1997 = vor.u32 1.1754944e-38, %v1996
        %v1998 = vsel %vm1995, %v1997, %v1993
        %v1999 = vmul.f32 1.0, %v1998
        %v2000 = vrcp.pop %v1800
        %v2001 = vmul.f32 %v1800, %v2000
        %v2002 = vsub.f32 1.0, %v2001
        %v2003 = vmul.f32 %v2000, %v2002
        %v2004 = vadd.f32 %v2000, %v2003
        %vm2005 = vweird.f32 %v1800
        %vm2006 = vweird.f32 %v2000
        %vm2007 = vmor %vm2005, %vm2006
        %v2008 = vsel %vm2007, %v2000, %v2004
        %v2009 = vand.u32 2147483647, %v1800
        %vm2010 = vcmp.eq.f32.partialorder %v2009, 8.507059e+37
        %v2011 = vand.u32 %v1800, 2147483648
        %v2012 = vor.u32 1.1754944e-38, %v2011
        %v2013 = vsel %vm2010, %v2012, %v2008
        %v2014 = vmul.f32 1.0, %v2013
        %v2015 = vrcp.pop %v1801
        %v2016 = vmul.f32 %v1801, %v2015
        %v2017 = vsub.f32 1.0, %v2016
        %v2018 = vmul.f32 %v2015, %v2017
        %v2019 = vadd.f32 %v2015, %v2018
        %vm2020 = vweird.f32 %v1801
        %vm2021 = vweird.f32 %v2015
        %vm2022 = vmor %vm2020, %vm2021
        %v2023 = vsel %vm2022, %v2015, %v2019
        %v2024 = vand.u32 2147483647, %v1801
        %vm2025 = vcmp.eq.f32.partialorder %v2024, 8.507059e+37
        %v2026 = vand.u32 %v1801, 2147483648
        %v2027 = vor.u32 1.1754944e-38, %v2026
        %v2028 = vsel %vm2025, %v2027, %v2023
        %v2029 = vmul.f32 1.0, %v2028
        %v2030 = vrcp.pop %v1802
        %v2031 = vmul.f32 %v1802, %v2030
        %v2032 = vsub.f32 1.0, %v2031
        %v2033 = vmul.f32 %v2030, %v2032
        %v2034 = vadd.f32 %v2030, %v2033
        %vm2035 = vweird.f32 %v1802
        %vm2036 = vweird.f32 %v2030
        %vm2037 = vmor %vm2035, %vm2036
        %v2038 = vsel %vm2037, %v2030, %v2034
        %v2039 = vand.u32 2147483647, %v1802
        %vm2040 = vcmp.eq.f32.partialorder %v2039, 8.507059e+37
        %v2041 = vand.u32 %v1802, 2147483648
        %v2042 = vor.u32 1.1754944e-38, %v2041
        %v2043 = vsel %vm2040, %v2042, %v2038
        %v2044 = vmul.f32 1.0, %v2043
        %v2045 = vrcp.pop %v1803
        %v2046 = vmul.f32 %v1803, %v2045
        %v2047 = vsub.f32 1.0, %v2046
        %v2048 = vmul.f32 %v2045, %v2047
        %v2049 = vadd.f32 %v2045, %v2048
        %vm2050 = vweird.f32 %v1803
        %vm2051 = vweird.f32 %v2045
        %vm2052 = vmor %vm2050, %vm2051
        %v2053 = vsel %vm2052, %v2045, %v2049
        %v2054 = vand.u32 2147483647, %v1803
        %vm2055 = vcmp.eq.f32.partialorder %v2054, 8.507059e+37
        %v2056 = vand.u32 %v1803, 2147483648
        %v2057 = vor.u32 1.1754944e-38, %v2056
        %v2058 = vsel %vm2055, %v2057, %v2053
        %v2059 = vmul.f32 1.0, %v2058
        %v2060 = vrcp.pop %v1804
        %v2061 = vmul.f32 %v1804, %v2060
        %v2062 = vsub.f32 1.0, %v2061
        %v2063 = vmul.f32 %v2060, %v2062
        %v2064 = vadd.f32 %v2060, %v2063
        %vm2065 = vweird.f32 %v1804
        %vm2066 = vweird.f32 %v2060
        %vm2067 = vmor %vm2065, %vm2066
        %v2068 = vsel %vm2067, %v2060, %v2064
        %v2069 = vand.u32 2147483647, %v1804
        %vm2070 = vcmp.eq.f32.partialorder %v2069, 8.507059e+37
        %v2071 = vand.u32 %v1804, 2147483648
        %v2072 = vor.u32 1.1754944e-38, %v2071
        %v2073 = vsel %vm2070, %v2072, %v2068
        %v2074 = vmul.f32 1.0, %v2073
        %v2075 = vrcp.pop %v1805
        %v2076 = vmul.f32 %v1805, %v2075
        %v2077 = vsub.f32 1.0, %v2076
        %v2078 = vmul.f32 %v2075, %v2077
        %v2079 = vadd.f32 %v2075, %v2078
        %vm2080 = vweird.f32 %v1805
        %vm2081 = vweird.f32 %v2075
        %vm2082 = vmor %vm2080, %vm2081
        %v2083 = vsel %vm2082, %v2075, %v2079
        %v2084 = vand.u32 2147483647, %v1805
        %vm2085 = vcmp.eq.f32.partialorder %v2084, 8.507059e+37
        %v2086 = vand.u32 %v1805, 2147483648
        %v2087 = vor.u32 1.1754944e-38, %v2086
        %v2088 = vsel %vm2085, %v2087, %v2083
        %v2089 = vmul.f32 1.0, %v2088
        %v2090 = vrcp.pop %v1806
        %v2091 = vmul.f32 %v1806, %v2090
        %v2092 = vsub.f32 1.0, %v2091
        %v2093 = vmul.f32 %v2090, %v2092
        %v2094 = vadd.f32 %v2090, %v2093
        %vm2095 = vweird.f32 %v1806
        %vm2096 = vweird.f32 %v2090
        %vm2097 = vmor %vm2095, %vm2096
        %v2098 = vsel %vm2097, %v2090, %v2094
        %v2099 = vand.u32 2147483647, %v1806
        %vm2100 = vcmp.eq.f32.partialorder %v2099, 8.507059e+37
        %v2101 = vand.u32 %v1806, 2147483648
        %v2102 = vor.u32 1.1754944e-38, %v2101
        %v2103 = vsel %vm2100, %v2102, %v2098
        %v2104 = vmul.f32 1.0, %v2103
        %v2105 = vrcp.pop %v1807
        %v2106 = vmul.f32 %v1807, %v2105
        %v2107 = vsub.f32 1.0, %v2106
        %v2108 = vmul.f32 %v2105, %v2107
        %v2109 = vadd.f32 %v2105, %v2108
        %vm2110 = vweird.f32 %v1807
        %vm2111 = vweird.f32 %v2105
        %vm2112 = vmor %vm2110, %vm2111
        %v2113 = vsel %vm2112, %v2105, %v2109
        %v2114 = vand.u32 2147483647, %v1807
        %vm2115 = vcmp.eq.f32.partialorder %v2114, 8.507059e+37
        %v2116 = vand.u32 %v1807, 2147483648
        %v2117 = vor.u32 1.1754944e-38, %v2116
        %v2118 = vsel %vm2115, %v2117, %v2113
        %v2119 = vmul.f32 1.0, %v2118
        %v2120 = vrcp.pop %v1808
        %v2121 = vmul.f32 %v1808, %v2120
        %v2122 = vsub.f32 1.0, %v2121
        %v2123 = vmul.f32 %v2120, %v2122
        %v2124 = vadd.f32 %v2120, %v2123
        %vm2125 = vweird.f32 %v1808
        %vm2126 = vweird.f32 %v2120
        %vm2127 = vmor %vm2125, %vm2126
        %v2128 = vsel %vm2127, %v2120, %v2124
        %v2129 = vand.u32 2147483647, %v1808
        %vm2130 = vcmp.eq.f32.partialorder %v2129, 8.507059e+37
        %v2131 = vand.u32 %v1808, 2147483648
        %v2132 = vor.u32 1.1754944e-38, %v2131
        %v2133 = vsel %vm2130, %v2132, %v2128
        %v2134 = vmul.f32 1.0, %v2133
        %v2135 = vrcp.pop %v1809
        %v2136 = vmul.f32 %v1809, %v2135
        %v2137 = vsub.f32 1.0, %v2136
        %v2138 = vmul.f32 %v2135, %v2137
        %v2139 = vadd.f32 %v2135, %v2138
        %vm2140 = vweird.f32 %v1809
        %vm2141 = vweird.f32 %v2135
        %vm2142 = vmor %vm2140, %vm2141
        %v2143 = vsel %vm2142, %v2135, %v2139
        %v2144 = vand.u32 2147483647, %v1809
        %vm2145 = vcmp.eq.f32.partialorder %v2144, 8.507059e+37
        %v2146 = vand.u32 %v1809, 2147483648
        %v2147 = vor.u32 1.1754944e-38, %v2146
        %v2148 = vsel %vm2145, %v2147, %v2143
        %v2149 = vmul.f32 1.0, %v2148
        %v2150 = vrcp.pop %v1810
        %v2151 = vmul.f32 %v1810, %v2150
        %v2152 = vsub.f32 1.0, %v2151
        %v2153 = vmul.f32 %v2150, %v2152
        %v2154 = vadd.f32 %v2150, %v2153
        %vm2155 = vweird.f32 %v1810
        %vm2156 = vweird.f32 %v2150
        %vm2157 = vmor %vm2155, %vm2156
        %v2158 = vsel %vm2157, %v2150, %v2154
        %v2159 = vand.u32 2147483647, %v1810
        %vm2160 = vcmp.eq.f32.partialorder %v2159, 8.507059e+37
        %v2161 = vand.u32 %v1810, 2147483648
        %v2162 = vor.u32 1.1754944e-38, %v2161
        %v2163 = vsel %vm2160, %v2162, %v2158
        %v2164 = vmul.f32 1.0, %v2163
        %v2165 = vrcp.pop %v1811
        %v2166 = vmul.f32 %v1811, %v2165
        %v2167 = vsub.f32 1.0, %v2166
        %v2168 = vmul.f32 %v2165, %v2167
        %v2169 = vadd.f32 %v2165, %v2168
        %vm2170 = vweird.f32 %v1811
        %vm2171 = vweird.f32 %v2165
        %vm2172 = vmor %vm2170, %vm2171
        %v2173 = vsel %vm2172, %v2165, %v2169
        %v2174 = vand.u32 2147483647, %v1811
        %vm2175 = vcmp.eq.f32.partialorder %v2174, 8.507059e+37
        %v2176 = vand.u32 %v1811, 2147483648
        %v2177 = vor.u32 1.1754944e-38, %v2176
        %v2178 = vsel %vm2175, %v2177, %v2173
        %v2179 = vmul.f32 1.0, %v2178
        %v2180 = vrcp.pop %v1812
        %v2181 = vmul.f32 %v1812, %v2180
        %v2182 = vsub.f32 1.0, %v2181
        %v2183 = vmul.f32 %v2180, %v2182
        %v2184 = vadd.f32 %v2180, %v2183
        %vm2185 = vweird.f32 %v1812
        %vm2186 = vweird.f32 %v2180
        %vm2187 = vmor %vm2185, %vm2186
        %v2188 = vsel %vm2187, %v2180, %v2184
        %v2189 = vand.u32 2147483647, %v1812
        %vm2190 = vcmp.eq.f32.partialorder %v2189, 8.507059e+37
        %v2191 = vand.u32 %v1812, 2147483648
        %v2192 = vor.u32 1.1754944e-38, %v2191
        %v2193 = vsel %vm2190, %v2192, %v2188
        %v2194 = vmul.f32 1.0, %v2193
        %v2195 = vrcp.pop %v1813
        %v2196 = vmul.f32 %v1813, %v2195
        %v2197 = vsub.f32 1.0, %v2196
        %v2198 = vmul.f32 %v2195, %v2197
        %v2199 = vadd.f32 %v2195, %v2198
        %vm2200 = vweird.f32 %v1813
        %vm2201 = vweird.f32 %v2195
        %vm2202 = vmor %vm2200, %vm2201
        %v2203 = vsel %vm2202, %v2195, %v2199
        %v2204 = vand.u32 2147483647, %v1813
        %vm2205 = vcmp.eq.f32.partialorder %v2204, 8.507059e+37
        %v2206 = vand.u32 %v1813, 2147483648
        %v2207 = vor.u32 1.1754944e-38, %v2206
        %v2208 = vsel %vm2205, %v2207, %v2203
        %v2209 = vmul.f32 1.0, %v2208
        %v2210 = vrcp.pop %v1814
        %v2211 = vmul.f32 %v1814, %v2210
        %v2212 = vsub.f32 1.0, %v2211
        %v2213 = vmul.f32 %v2210, %v2212
        %v2214 = vadd.f32 %v2210, %v2213
        %vm2215 = vweird.f32 %v1814
        %vm2216 = vweird.f32 %v2210
        %vm2217 = vmor %vm2215, %vm2216
        %v2218 = vsel %vm2217, %v2210, %v2214
        %v2219 = vand.u32 2147483647, %v1814
        %vm2220 = vcmp.eq.f32.partialorder %v2219, 8.507059e+37
        %v2221 = vand.u32 %v1814, 2147483648
        %v2222 = vor.u32 1.1754944e-38, %v2221
        %v2223 = vsel %vm2220, %v2222, %v2218
        %v2224 = vmul.f32 1.0, %v2223
        %v2225 = vrcp.pop %v1815
        %v2226 = vmul.f32 %v1815, %v2225
        %v2227 = vsub.f32 1.0, %v2226
        %v2228 = vmul.f32 %v2225, %v2227
        %v2229 = vadd.f32 %v2225, %v2228
        %vm2230 = vweird.f32 %v1815
        %vm2231 = vweird.f32 %v2225
        %vm2232 = vmor %vm2230, %vm2231
        %v2233 = vsel %vm2232, %v2225, %v2229
        %v2234 = vand.u32 2147483647, %v1815
        %vm2235 = vcmp.eq.f32.partialorder %v2234, 8.507059e+37
        %v2236 = vand.u32 %v1815, 2147483648
        %v2237 = vor.u32 1.1754944e-38, %v2236
        %v2238 = vsel %vm2235, %v2237, %v2233
        %v2239 = vmul.f32 1.0, %v2238
        %v2240 = vrcp.pop %v1816
        %v2241 = vmul.f32 %v1816, %v2240
        %v2242 = vsub.f32 1.0, %v2241
        %v2243 = vmul.f32 %v2240, %v2242
        %v2244 = vadd.f32 %v2240, %v2243
        %vm2245 = vweird.f32 %v1816
        %vm2246 = vweird.f32 %v2240
        %vm2247 = vmor %vm2245, %vm2246
        %v2248 = vsel %vm2247, %v2240, %v2244
        %v2249 = vand.u32 2147483647, %v1816
        %vm2250 = vcmp.eq.f32.partialorder %v2249, 8.507059e+37
        %v2251 = vand.u32 %v1816, 2147483648
        %v2252 = vor.u32 1.1754944e-38, %v2251
        %v2253 = vsel %vm2250, %v2252, %v2248
        %v2254 = vmul.f32 1.0, %v2253
        %v2255 = vrcp.pop %v1817
        %v2256 = vmul.f32 %v1817, %v2255
        %v2257 = vsub.f32 1.0, %v2256
        %v2258 = vmul.f32 %v2255, %v2257
        %v2259 = vadd.f32 %v2255, %v2258
        %vm2260 = vweird.f32 %v1817
        %vm2261 = vweird.f32 %v2255
        %vm2262 = vmor %vm2260, %vm2261
        %v2263 = vsel %vm2262, %v2255, %v2259
        %v2264 = vand.u32 2147483647, %v1817
        %vm2265 = vcmp.eq.f32.partialorder %v2264, 8.507059e+37
        %v2266 = vand.u32 %v1817, 2147483648
        %v2267 = vor.u32 1.1754944e-38, %v2266
        %v2268 = vsel %vm2265, %v2267, %v2263
        %v2269 = vmul.f32 1.0, %v2268
        %v2270 = vrcp.pop %v1818
        %v2271 = vmul.f32 %v1818, %v2270
        %v2272 = vsub.f32 1.0, %v2271
        %v2273 = vmul.f32 %v2270, %v2272
        %v2274 = vadd.f32 %v2270, %v2273
        %vm2275 = vweird.f32 %v1818
        %vm2276 = vweird.f32 %v2270
        %vm2277 = vmor %vm2275, %vm2276
        %v2278 = vsel %vm2277, %v2270, %v2274
        %v2279 = vand.u32 2147483647, %v1818
        %vm2280 = vcmp.eq.f32.partialorder %v2279, 8.507059e+37
        %v2281 = vand.u32 %v1818, 2147483648
        %v2282 = vor.u32 1.1754944e-38, %v2281
        %v2283 = vsel %vm2280, %v2282, %v2278
        %v2284 = vmul.f32 1.0, %v2283
        %v2285 = vrcp.pop %v1819
        %v2286 = vmul.f32 %v1819, %v2285
        %v2287 = vsub.f32 1.0, %v2286
        %v2288 = vmul.f32 %v2285, %v2287
        %v2289 = vadd.f32 %v2285, %v2288
        %vm2290 = vweird.f32 %v1819
        %vm2291 = vweird.f32 %v2285
        %vm2292 = vmor %vm2290, %vm2291
        %v2293 = vsel %vm2292, %v2285, %v2289
        %v2294 = vand.u32 2147483647, %v1819
        %vm2295 = vcmp.eq.f32.partialorder %v2294, 8.507059e+37
        %v2296 = vand.u32 %v1819, 2147483648
        %v2297 = vor.u32 1.1754944e-38, %v2296
        %v2298 = vsel %vm2295, %v2297, %v2293
        %v2299 = vmul.f32 1.0, %v2298
        %v2300 = vsub.f32 1.0, %v1834
        %v2301 = vsub.f32 1.0, %v1849
        %v2302 = vsub.f32 1.0, %v1864
        %v2303 = vsub.f32 1.0, %v1879
        %v2304 = vsub.f32 1.0, %v1894
        %v2305 = vsub.f32 1.0, %v1909
        %v2306 = vsub.f32 1.0, %v1924
        %v2307 = vsub.f32 1.0, %v1939
        %v2308 = vsub.f32 1.0, %v1954
        %v2309 = vsub.f32 1.0, %v1969
        %v2310 = vsub.f32 1.0, %v1984
        %v2311 = vsub.f32 1.0, %v1999
        %v2312 = vsub.f32 1.0, %v2014
        %v2313 = vsub.f32 1.0, %v2029
        %v2314 = vsub.f32 1.0, %v2044
        %v2315 = vsub.f32 1.0, %v2059
        %v2316 = vsub.f32 1.0, %v2074
        %v2317 = vsub.f32 1.0, %v2089
        %v2318 = vsub.f32 1.0, %v2104
        %v2319 = vsub.f32 1.0, %v2119
        %v2320 = vsub.f32 1.0, %v2134
        %v2321 = vsub.f32 1.0, %v2149
        %v2322 = vsub.f32 1.0, %v2164
        %v2323 = vsub.f32 1.0, %v2179
        %v2324 = vsub.f32 1.0, %v2194
        %v2325 = vsub.f32 1.0, %v2209
        %v2326 = vsub.f32 1.0, %v2224
        %v2327 = vsub.f32 1.0, %v2239
        %v2328 = vsub.f32 1.0, %v2254
        %v2329 = vsub.f32 1.0, %v2269
        %v2330 = vsub.f32 1.0, %v2284
        %v2331 = vsub.f32 1.0, %v2299
        %v2332 = vmul.f32 %v2300, %v988
        %v2333 = vmul.f32 %v2301, %v989
        %v2334 = vmul.f32 %v2302, %v990
        %v2335 = vmul.f32 %v2303, %v991
        %v2336 = vmul.f32 %v2304, %v992
        %v2337 = vmul.f32 %v2305, %v993
        %v2338 = vmul.f32 %v2306, %v994
        %v2339 = vmul.f32 %v2307, %v995
        %v2340 = vmul.f32 %v2308, %v996
        %v2341 = vmul.f32 %v2309, %v997
        %v2342 = vmul.f32 %v2310, %v998
        %v2343 = vmul.f32 %v2311, %v999
        %v2344 = vmul.f32 %v2312, %v1000
        %v2345 = vmul.f32 %v2313, %v1001
        %v2346 = vmul.f32 %v2314, %v1002
        %v2347 = vmul.f32 %v2315, %v1003
        %v2348 = vmul.f32 %v2316, %v1004
        %v2349 = vmul.f32 %v2317, %v1005
        %v2350 = vmul.f32 %v2318, %v1006
        %v2351 = vmul.f32 %v2319, %v1007
        %v2352 = vmul.f32 %v2320, %v1008
        %v2353 = vmul.f32 %v2321, %v1009
        %v2354 = vmul.f32 %v2322, %v1010
        %v2355 = vmul.f32 %v2323, %v1011
        %v2356 = vmul.f32 %v2324, %v1012
        %v2357 = vmul.f32 %v2325, %v1013
        %v2358 = vmul.f32 %v2326, %v1014
        %v2359 = vmul.f32 %v2327, %v1015
        %v2360 = vmul.f32 %v2328, %v1016
        %v2361 = vmul.f32 %v2329, %v1017
        %v2362 = vmul.f32 %v2330, %v1018
        %v2363 = vmul.f32 %v2331, %v1019
        %v2364 = vld [vmem:[%s11] sm:$0xf]
        %v2365 = vld [vmem:[%s11 + $0x4] sm:$0xf]
        %v2366 = vld [vmem:[%s11 + $0x8] sm:$0xf]
        %v2367 = vld [vmem:[%s11 + $0xc] sm:$0xf]
        %v2368 = vpack.c.bf16 %v1661, %v1660
        %v2369 = vpack.c.bf16 %v1663, %v1662
        %v2370 = vpack.c.bf16 %v1665, %v1664
        %v2371 = vpack.c.bf16 %v1667, %v1666
        %v2372 = vpack.c.bf16 %v1669, %v1668
        %v2373 = vpack.c.bf16 %v1671, %v1670
        %v2374 = vpack.c.bf16 %v1673, %v1672
        %v2375 = vpack.c.bf16 %v1675, %v1674
        %v2376 = vpack.c.bf16 %v1677, %v1676
        %v2377 = vpack.c.bf16 %v1679, %v1678
        %v2378 = vpack.c.bf16 %v1681, %v1680
        %v2379 = vpack.c.bf16 %v1683, %v1682
        %v2380 = vpack.c.bf16 %v1685, %v1684
        %v2381 = vpack.c.bf16 %v1687, %v1686
        %v2382 = vpack.c.bf16 %v1689, %v1688
        %v2383 = vpack.c.bf16 %v1691, %v1690
        %v2388 = vunpack.c.l.b16 %v2364
        %v2389 = vunpack.c.l.b16 %v2365
        %v2390 = vunpack.c.l.b16 %v2366
        %v2391 = vunpack.c.l.b16 %v2367
        %v2392 = vpack.c.b16 %v2389, %v2388
        %v2393 = vpack.c.b16 %v2391, %v2390
        %v2397 = vsel %vm1140, %v2368, 0
        %v2400 = vsel %vm1140, %v2369, 0
        %v2403 = vsel %vm1140, %v2370, 0
        %v2406 = vsel %vm1140, %v2371, 0
        %v2409 = vsel %vm1140, %v2372, 0
        %v2412 = vsel %vm1140, %v2373, 0
        %v2415 = vsel %vm1140, %v2374, 0
        %v2418 = vsel %vm1140, %v2375, 0
        %v2421 = vsel %vm1140, %v2376, 0
        %v2424 = vsel %vm1140, %v2377, 0
        %v2427 = vsel %vm1140, %v2378, 0
        %v2430 = vsel %vm1140, %v2379, 0
        %v2433 = vsel %vm1140, %v2380, 0
        %v2436 = vsel %vm1140, %v2381, 0
        %v2439 = vsel %vm1140, %v2382, 0
        %v2442 = vsel %vm1140, %v2383, 0
        %2444 = vmatpush.bf16.msra.mxu0 0
        %2445 = vmatpush.bf16.msra.mxu0 0
        %2446 = vmatpush.bf16.msra.mxu0 0
        %2447 = vmatpush.bf16.msra.mxu0 0
        %2448 = vmatpush.bf16.msra.mxu0 0
        %2449 = vmatpush.bf16.msra.mxu0 0
        %2450 = vmatpush.bf16.msra.mxu0 %v2393
        %2451 = vmatpush.bf16.msra.mxu0 %v2392
        %2452 = vmatmul.bf16.gmra.mxu0 %v2397
        %v2453 = vpop.f32.mrf.mxu0
        %v2454 = vadd.f32 0.0, %v2453
        %v2455 = vpop.f32.mrf.mxu0
        %v2456 = vadd.f32 0.0, %v2455
        %2457 = vmatmul.bf16.gmra.mxu0 %v2400
        %v2458 = vpop.f32.mrf.mxu0
        %v2459 = vadd.f32 0.0, %v2458
        %v2460 = vpop.f32.mrf.mxu0
        %v2461 = vadd.f32 0.0, %v2460
        %2462 = vmatmul.bf16.gmra.mxu0 %v2403
        %v2463 = vpop.f32.mrf.mxu0
        %v2464 = vadd.f32 0.0, %v2463
        %v2465 = vpop.f32.mrf.mxu0
        %v2466 = vadd.f32 0.0, %v2465
        %2467 = vmatmul.bf16.gmra.mxu0 %v2406
        %v2468 = vpop.f32.mrf.mxu0
        %v2469 = vadd.f32 0.0, %v2468
        %v2470 = vpop.f32.mrf.mxu0
        %v2471 = vadd.f32 0.0, %v2470
        %2472 = vmatmul.bf16.gmra.mxu0 %v2409
        %v2473 = vpop.f32.mrf.mxu0
        %v2474 = vadd.f32 0.0, %v2473
        %v2475 = vpop.f32.mrf.mxu0
        %v2476 = vadd.f32 0.0, %v2475
        %2477 = vmatmul.bf16.gmra.mxu0 %v2412
        %v2478 = vpop.f32.mrf.mxu0
        %v2479 = vadd.f32 0.0, %v2478
        %v2480 = vpop.f32.mrf.mxu0
        %v2481 = vadd.f32 0.0, %v2480
        %2482 = vmatmul.bf16.gmra.mxu0 %v2415
        %v2483 = vpop.f32.mrf.mxu0
        %v2484 = vadd.f32 0.0, %v2483
        %v2485 = vpop.f32.mrf.mxu0
        %v2486 = vadd.f32 0.0, %v2485
        %2487 = vmatmul.bf16.gmra.mxu0 %v2418
        %v2488 = vpop.f32.mrf.mxu0
        %v2489 = vadd.f32 0.0, %v2488
        %v2490 = vpop.f32.mrf.mxu0
        %v2491 = vadd.f32 0.0, %v2490
        %2492 = vmatmul.bf16.gmra.mxu0 %v2421
        %v2493 = vpop.f32.mrf.mxu0
        %v2494 = vadd.f32 0.0, %v2493
        %v2495 = vpop.f32.mrf.mxu0
        %v2496 = vadd.f32 0.0, %v2495
        %2497 = vmatmul.bf16.gmra.mxu0 %v2424
        %v2498 = vpop.f32.mrf.mxu0
        %v2499 = vadd.f32 0.0, %v2498
        %v2500 = vpop.f32.mrf.mxu0
        %v2501 = vadd.f32 0.0, %v2500
        %2502 = vmatmul.bf16.gmra.mxu0 %v2427
        %v2503 = vpop.f32.mrf.mxu0
        %v2504 = vadd.f32 0.0, %v2503
        %v2505 = vpop.f32.mrf.mxu0
        %v2506 = vadd.f32 0.0, %v2505
        %2507 = vmatmul.bf16.gmra.mxu0 %v2430
        %v2508 = vpop.f32.mrf.mxu0
        %v2509 = vadd.f32 0.0, %v2508
        %v2510 = vpop.f32.mrf.mxu0
        %v2511 = vadd.f32 0.0, %v2510
        %2512 = vmatmul.bf16.gmra.mxu0 %v2433
        %v2513 = vpop.f32.mrf.mxu0
        %v2514 = vadd.f32 0.0, %v2513
        %v2515 = vpop.f32.mrf.mxu0
        %v2516 = vadd.f32 0.0, %v2515
        %2517 = vmatmul.bf16.gmra.mxu0 %v2436
        %v2518 = vpop.f32.mrf.mxu0
        %v2519 = vadd.f32 0.0, %v2518
        %v2520 = vpop.f32.mrf.mxu0
        %v2521 = vadd.f32 0.0, %v2520
        %2522 = vmatmul.bf16.gmra.mxu0 %v2439
        %v2523 = vpop.f32.mrf.mxu0
        %v2524 = vadd.f32 0.0, %v2523
        %v2525 = vpop.f32.mrf.mxu0
        %v2526 = vadd.f32 0.0, %v2525
        %2527 = vmatmul.bf16.gmra.mxu0 %v2442
        %v2528 = vpop.f32.mrf.mxu0
        %v2529 = vadd.f32 0.0, %v2528
        %v2530 = vpop.f32.mrf.mxu0
        %v2531 = vadd.f32 0.0, %v2530
        %2532 = vdwg.mxu0
        %v2533 = vld [vmem:[%s13] sm:$0x1]
        %v2535 = vperm.slane %v2533, 0
        %v2537 = vmul.f32 %v2454, %v2535
        %v2538 = vmul.f32 %v2456, %v2535
        %v2539 = vmul.f32 %v2459, %v2535
        %v2540 = vmul.f32 %v2461, %v2535
        %v2541 = vmul.f32 %v2464, %v2535
        %v2542 = vmul.f32 %v2466, %v2535
        %v2543 = vmul.f32 %v2469, %v2535
        %v2544 = vmul.f32 %v2471, %v2535
        %v2545 = vmul.f32 %v2474, %v2535
        %v2546 = vmul.f32 %v2476, %v2535
        %v2547 = vmul.f32 %v2479, %v2535
        %v2548 = vmul.f32 %v2481, %v2535
        %v2549 = vmul.f32 %v2484, %v2535
        %v2550 = vmul.f32 %v2486, %v2535
        %v2551 = vmul.f32 %v2489, %v2535
        %v2552 = vmul.f32 %v2491, %v2535
        %v2553 = vmul.f32 %v2494, %v2535
        %v2554 = vmul.f32 %v2496, %v2535
        %v2555 = vmul.f32 %v2499, %v2535
        %v2556 = vmul.f32 %v2501, %v2535
        %v2557 = vmul.f32 %v2504, %v2535
        %v2558 = vmul.f32 %v2506, %v2535
        %v2559 = vmul.f32 %v2509, %v2535
        %v2560 = vmul.f32 %v2511, %v2535
        %v2561 = vmul.f32 %v2514, %v2535
        %v2562 = vmul.f32 %v2516, %v2535
        %v2563 = vmul.f32 %v2519, %v2535
        %v2564 = vmul.f32 %v2521, %v2535
        %v2565 = vmul.f32 %v2524, %v2535
        %v2566 = vmul.f32 %v2526, %v2535
        %v2567 = vmul.f32 %v2529, %v2535
        %v2568 = vmul.f32 %v2531, %v2535
        %v2569 = vld [vmem:[%s15] sm:$0x1]
        %v2571 = vperm.slane %v2569, 0
        %v2573 = vadd.f32 %v2537, %v2571
        %v2574 = vadd.f32 %v2538, %v2571
        %v2575 = vadd.f32 %v2539, %v2571
        %v2576 = vadd.f32 %v2540, %v2571
        %v2577 = vadd.f32 %v2541, %v2571
        %v2578 = vadd.f32 %v2542, %v2571
        %v2579 = vadd.f32 %v2543, %v2571
        %v2580 = vadd.f32 %v2544, %v2571
        %v2581 = vadd.f32 %v2545, %v2571
        %v2582 = vadd.f32 %v2546, %v2571
        %v2583 = vadd.f32 %v2547, %v2571
        %v2584 = vadd.f32 %v2548, %v2571
        %v2585 = vadd.f32 %v2549, %v2571
        %v2586 = vadd.f32 %v2550, %v2571
        %v2587 = vadd.f32 %v2551, %v2571
        %v2588 = vadd.f32 %v2552, %v2571
        %v2589 = vadd.f32 %v2553, %v2571
        %v2590 = vadd.f32 %v2554, %v2571
        %v2591 = vadd.f32 %v2555, %v2571
        %v2592 = vadd.f32 %v2556, %v2571
        %v2593 = vadd.f32 %v2557, %v2571
        %v2594 = vadd.f32 %v2558, %v2571
        %v2595 = vadd.f32 %v2559, %v2571
        %v2596 = vadd.f32 %v2560, %v2571
        %v2597 = vadd.f32 %v2561, %v2571
        %v2598 = vadd.f32 %v2562, %v2571
        %v2599 = vadd.f32 %v2563, %v2571
        %v2600 = vadd.f32 %v2564, %v2571
        %v2601 = vadd.f32 %v2565, %v2571
        %v2602 = vadd.f32 %v2566, %v2571
        %v2603 = vadd.f32 %v2567, %v2571
        %v2604 = vadd.f32 %v2568, %v2571
        %v2605 = vmax.f32 %v2573, 0.0
        %v2606 = vmax.f32 %v2574, 0.0
        %v2607 = vmax.f32 %v2575, 0.0
        %v2608 = vmax.f32 %v2576, 0.0
        %v2609 = vmax.f32 %v2577, 0.0
        %v2610 = vmax.f32 %v2578, 0.0
        %v2611 = vmax.f32 %v2579, 0.0
        %v2612 = vmax.f32 %v2580, 0.0
        %v2613 = vmax.f32 %v2581, 0.0
        %v2614 = vmax.f32 %v2582, 0.0
        %v2615 = vmax.f32 %v2583, 0.0
        %v2616 = vmax.f32 %v2584, 0.0
        %v2617 = vmax.f32 %v2585, 0.0
        %v2618 = vmax.f32 %v2586, 0.0
        %v2619 = vmax.f32 %v2587, 0.0
        %v2620 = vmax.f32 %v2588, 0.0
        %v2621 = vmax.f32 %v2589, 0.0
        %v2622 = vmax.f32 %v2590, 0.0
        %v2623 = vmax.f32 %v2591, 0.0
        %v2624 = vmax.f32 %v2592, 0.0
        %v2625 = vmax.f32 %v2593, 0.0
        %v2626 = vmax.f32 %v2594, 0.0
        %v2627 = vmax.f32 %v2595, 0.0
        %v2628 = vmax.f32 %v2596, 0.0
        %v2629 = vmax.f32 %v2597, 0.0
        %v2630 = vmax.f32 %v2598, 0.0
        %v2631 = vmax.f32 %v2599, 0.0
        %v2632 = vmax.f32 %v2600, 0.0
        %v2633 = vmax.f32 %v2601, 0.0
        %v2634 = vmax.f32 %v2602, 0.0
        %v2635 = vmax.f32 %v2603, 0.0
        %v2636 = vmax.f32 %v2604, 0.0
        %v2637 = vld [vmem:[%s17] sm:$0xf]
        %v2638 = vpack.c.bf16 %v2606, %v2605
        %v2639 = vpack.c.bf16 %v2608, %v2607
        %v2640 = vpack.c.bf16 %v2610, %v2609
        %v2641 = vpack.c.bf16 %v2612, %v2611
        %v2642 = vpack.c.bf16 %v2614, %v2613
        %v2643 = vpack.c.bf16 %v2616, %v2615
        %v2644 = vpack.c.bf16 %v2618, %v2617
        %v2645 = vpack.c.bf16 %v2620, %v2619
        %v2646 = vpack.c.bf16 %v2622, %v2621
        %v2647 = vpack.c.bf16 %v2624, %v2623
        %v2648 = vpack.c.bf16 %v2626, %v2625
        %v2649 = vpack.c.bf16 %v2628, %v2627
        %v2650 = vpack.c.bf16 %v2630, %v2629
        %v2651 = vpack.c.bf16 %v2632, %v2631
        %v2652 = vpack.c.bf16 %v2634, %v2633
        %v2653 = vpack.c.bf16 %v2636, %v2635
        %v2654 = vld [vmem:[#allocation2] sm:$0x1]
        %v2656 = vperm.slane %v2654, 0
        %vm2658 = vcmask 64512
        %v2660 = vsel %vm2658, %v2638, 0
        %v2663 = vsel %vm2658, %v2639, 0
        %v2666 = vsel %vm2658, %v2640, 0
        %v2669 = vsel %vm2658, %v2641, 0
        %v2672 = vsel %vm2658, %v2642, 0
        %v2675 = vsel %vm2658, %v2643, 0
        %v2678 = vsel %vm2658, %v2644, 0
        %v2681 = vsel %vm2658, %v2645, 0
        %v2684 = vsel %vm2658, %v2646, 0
        %v2687 = vsel %vm2658, %v2647, 0
        %v2690 = vsel %vm2658, %v2648, 0
        %v2693 = vsel %vm2658, %v2649, 0
        %v2696 = vsel %vm2658, %v2650, 0
        %v2699 = vsel %vm2658, %v2651, 0
        %v2702 = vsel %vm2658, %v2652, 0
        %v2705 = vsel %vm2658, %v2653, 0
        %vm2707 = vcmask 1043456
        %v2709 = vsel %vm2707, %v2637, 0
        %2711 = vmatpush.bf16.msra.mxu0 0
        %2712 = vmatpush.bf16.msra.mxu0 0
        %2713 = vmatpush.bf16.msra.mxu0 0
        %2714 = vmatpush.bf16.msra.mxu0 0
        %2715 = vmatpush.bf16.msra.mxu0 0
        %2716 = vmatpush.bf16.msra.mxu0 0
        %2717 = vmatpush.bf16.msra.mxu0 0
        %2718 = vmatpush.bf16.msra.mxu0 %v2709
        %2719 = vmatmul.bf16.gmra.mxu0 %v2660
        %v2720 = vpop.f32.mrf.mxu0
        %v2721 = vadd.f32 %v2656, %v2720
        %v2722 = vpop.f32.mrf.mxu0
        %v2723 = vadd.f32 %v2656, %v2722
        %2724 = vmatmul.bf16.gmra.mxu0 %v2663
        %v2725 = vpop.f32.mrf.mxu0
        %v2726 = vadd.f32 %v2656, %v2725
        %v2727 = vpop.f32.mrf.mxu0
        %v2728 = vadd.f32 %v2656, %v2727
        %2729 = vmatmul.bf16.gmra.mxu0 %v2666
        %v2730 = vpop.f32.mrf.mxu0
        %v2731 = vadd.f32 %v2656, %v2730
        %v2732 = vpop.f32.mrf.mxu0
        %v2733 = vadd.f32 %v2656, %v2732
        %2734 = vmatmul.bf16.gmra.mxu0 %v2669
        %v2735 = vpop.f32.mrf.mxu0
        %v2736 = vadd.f32 %v2656, %v2735
        %v2737 = vpop.f32.mrf.mxu0
        %v2738 = vadd.f32 %v2656, %v2737
        %2739 = vmatmul.bf16.gmra.mxu0 %v2672
        %v2740 = vpop.f32.mrf.mxu0
        %v2741 = vadd.f32 %v2656, %v2740
        %v2742 = vpop.f32.mrf.mxu0
        %v2743 = vadd.f32 %v2656, %v2742
        %2744 = vmatmul.bf16.gmra.mxu0 %v2675
        %v2745 = vpop.f32.mrf.mxu0
        %v2746 = vadd.f32 %v2656, %v2745
        %v2747 = vpop.f32.mrf.mxu0
        %v2748 = vadd.f32 %v2656, %v2747
        %2749 = vmatmul.bf16.gmra.mxu0 %v2678
        %v2750 = vpop.f32.mrf.mxu0
        %v2751 = vadd.f32 %v2656, %v2750
        %v2752 = vpop.f32.mrf.mxu0
        %v2753 = vadd.f32 %v2656, %v2752
        %2754 = vmatmul.bf16.gmra.mxu0 %v2681
        %v2755 = vpop.f32.mrf.mxu0
        %v2756 = vadd.f32 %v2656, %v2755
        %v2757 = vpop.f32.mrf.mxu0
        %v2758 = vadd.f32 %v2656, %v2757
        %2759 = vmatmul.bf16.gmra.mxu0 %v2684
        %v2760 = vpop.f32.mrf.mxu0
        %v2761 = vadd.f32 %v2656, %v2760
        %v2762 = vpop.f32.mrf.mxu0
        %v2763 = vadd.f32 %v2656, %v2762
        %2764 = vmatmul.bf16.gmra.mxu0 %v2687
        %v2765 = vpop.f32.mrf.mxu0
        %v2766 = vadd.f32 %v2656, %v2765
        %v2767 = vpop.f32.mrf.mxu0
        %v2768 = vadd.f32 %v2656, %v2767
        %2769 = vmatmul.bf16.gmra.mxu0 %v2690
        %v2770 = vpop.f32.mrf.mxu0
        %v2771 = vadd.f32 %v2656, %v2770
        %v2772 = vpop.f32.mrf.mxu0
        %v2773 = vadd.f32 %v2656, %v2772
        %2774 = vmatmul.bf16.gmra.mxu0 %v2693
        %v2775 = vpop.f32.mrf.mxu0
        %v2776 = vadd.f32 %v2656, %v2775
        %v2777 = vpop.f32.mrf.mxu0
        %v2778 = vadd.f32 %v2656, %v2777
        %2779 = vmatmul.bf16.gmra.mxu0 %v2696
        %v2780 = vpop.f32.mrf.mxu0
        %v2781 = vadd.f32 %v2656, %v2780
        %v2782 = vpop.f32.mrf.mxu0
        %v2783 = vadd.f32 %v2656, %v2782
        %2784 = vmatmul.bf16.gmra.mxu0 %v2699
        %v2785 = vpop.f32.mrf.mxu0
        %v2786 = vadd.f32 %v2656, %v2785
        %v2787 = vpop.f32.mrf.mxu0
        %v2788 = vadd.f32 %v2656, %v2787
        %2789 = vmatmul.bf16.gmra.mxu0 %v2702
        %v2790 = vpop.f32.mrf.mxu0
        %v2791 = vadd.f32 %v2656, %v2790
        %v2792 = vpop.f32.mrf.mxu0
        %v2793 = vadd.f32 %v2656, %v2792
        %2794 = vmatmul.bf16.gmra.mxu0 %v2705
        %v2795 = vpop.f32.mrf.mxu0
        %v2796 = vadd.f32 %v2656, %v2795
        %v2797 = vpop.f32.mrf.mxu0
        %v2798 = vadd.f32 %v2656, %v2797
        %2799 = vdwg.mxu0
        %v2800 = vxor.u32 %v2721, 2147483648
        %v2801 = vxor.u32 %v2723, 2147483648
        %v2802 = vxor.u32 %v2726, 2147483648
        %v2803 = vxor.u32 %v2728, 2147483648
        %v2804 = vxor.u32 %v2731, 2147483648
        %v2805 = vxor.u32 %v2733, 2147483648
        %v2806 = vxor.u32 %v2736, 2147483648
        %v2807 = vxor.u32 %v2738, 2147483648
        %v2808 = vxor.u32 %v2741, 2147483648
        %v2809 = vxor.u32 %v2743, 2147483648
        %v2810 = vxor.u32 %v2746, 2147483648
        %v2811 = vxor.u32 %v2748, 2147483648
        %v2812 = vxor.u32 %v2751, 2147483648
        %v2813 = vxor.u32 %v2753, 2147483648
        %v2814 = vxor.u32 %v2756, 2147483648
        %v2815 = vxor.u32 %v2758, 2147483648
        %v2816 = vxor.u32 %v2761, 2147483648
        %v2817 = vxor.u32 %v2763, 2147483648
        %v2818 = vxor.u32 %v2766, 2147483648
        %v2819 = vxor.u32 %v2768, 2147483648
        %v2820 = vxor.u32 %v2771, 2147483648
        %v2821 = vxor.u32 %v2773, 2147483648
        %v2822 = vxor.u32 %v2776, 2147483648
        %v2823 = vxor.u32 %v2778, 2147483648
        %v2824 = vxor.u32 %v2781, 2147483648
        %v2825 = vxor.u32 %v2783, 2147483648
        %v2826 = vxor.u32 %v2786, 2147483648
        %v2827 = vxor.u32 %v2788, 2147483648
        %v2828 = vxor.u32 %v2791, 2147483648
        %v2829 = vxor.u32 %v2793, 2147483648
        %v2830 = vxor.u32 %v2796, 2147483648
        %v2831 = vxor.u32 %v2798, 2147483648
        %v2832 = vmul.f32 %v2800, 1.442695
        %v2833 = vpow.pop %v2832
        %v2834 = vmul.f32 %v2801, 1.442695
        %v2835 = vpow.pop %v2834
        %v2836 = vmul.f32 %v2802, 1.442695
        %v2837 = vpow.pop %v2836
        %v2838 = vmul.f32 %v2803, 1.442695
        %v2839 = vpow.pop %v2838
        %v2840 = vmul.f32 %v2804, 1.442695
        %v2841 = vpow.pop %v2840
        %v2842 = vmul.f32 %v2805, 1.442695
        %v2843 = vpow.pop %v2842
        %v2844 = vmul.f32 %v2806, 1.442695
        %v2845 = vpow.pop %v2844
        %v2846 = vmul.f32 %v2807, 1.442695
        %v2847 = vpow.pop %v2846
        %v2848 = vmul.f32 %v2808, 1.442695
        %v2849 = vpow.pop %v2848
        %v2850 = vmul.f32 %v2809, 1.442695
        %v2851 = vpow.pop %v2850
        %v2852 = vmul.f32 %v2810, 1.442695
        %v2853 = vpow.pop %v2852
        %v2854 = vmul.f32 %v2811, 1.442695
        %v2855 = vpow.pop %v2854
        %v2856 = vmul.f32 %v2812, 1.442695
        %v2857 = vpow.pop %v2856
        %v2858 = vmul.f32 %v2813, 1.442695
        %v2859 = vpow.pop %v2858
        %v2860 = vmul.f32 %v2814, 1.442695
        %v2861 = vpow.pop %v2860
        %v2862 = vmul.f32 %v2815, 1.442695
        %v2863 = vpow.pop %v2862
        %v2864 = vmul.f32 %v2816, 1.442695
        %v2865 = vpow.pop %v2864
        %v2866 = vmul.f32 %v2817, 1.442695
        %v2867 = vpow.pop %v2866
        %v2868 = vmul.f32 %v2818, 1.442695
        %v2869 = vpow.pop %v2868
        %v2870 = vmul.f32 %v2819, 1.442695
        %v2871 = vpow.pop %v2870
        %v2872 = vmul.f32 %v2820, 1.442695
        %v2873 = vpow.pop %v2872
        %v2874 = vmul.f32 %v2821, 1.442695
        %v2875 = vpow.pop %v2874
        %v2876 = vmul.f32 %v2822, 1.442695
        %v2877 = vpow.pop %v2876
        %v2878 = vmul.f32 %v2823, 1.442695
        %v2879 = vpow.pop %v2878
        %v2880 = vmul.f32 %v2824, 1.442695
        %v2881 = vpow.pop %v2880
        %v2882 = vmul.f32 %v2825, 1.442695
        %v2883 = vpow.pop %v2882
        %v2884 = vmul.f32 %v2826, 1.442695
        %v2885 = vpow.pop %v2884
        %v2886 = vmul.f32 %v2827, 1.442695
        %v2887 = vpow.pop %v2886
        %v2888 = vmul.f32 %v2828, 1.442695
        %v2889 = vpow.pop %v2888
        %v2890 = vmul.f32 %v2829, 1.442695
        %v2891 = vpow.pop %v2890
        %v2892 = vmul.f32 %v2830, 1.442695
        %v2893 = vpow.pop %v2892
        %v2894 = vmul.f32 %v2831, 1.442695
        %v2895 = vpow.pop %v2894
        %v2896 = vadd.f32 %v2833, 1.0
        %v2897 = vadd.f32 %v2835, 1.0
        %v2898 = vadd.f32 %v2837, 1.0
        %v2899 = vadd.f32 %v2839, 1.0
        %v2900 = vadd.f32 %v2841, 1.0
        %v2901 = vadd.f32 %v2843, 1.0
        %v2902 = vadd.f32 %v2845, 1.0
        %v2903 = vadd.f32 %v2847, 1.0
        %v2904 = vadd.f32 %v2849, 1.0
        %v2905 = vadd.f32 %v2851, 1.0
        %v2906 = vadd.f32 %v2853, 1.0
        %v2907 = vadd.f32 %v2855, 1.0
        %v2908 = vadd.f32 %v2857, 1.0
        %v2909 = vadd.f32 %v2859, 1.0
        %v2910 = vadd.f32 %v2861, 1.0
        %v2911 = vadd.f32 %v2863, 1.0
        %v2912 = vadd.f32 %v2865, 1.0
        %v2913 = vadd.f32 %v2867, 1.0
        %v2914 = vadd.f32 %v2869, 1.0
        %v2915 = vadd.f32 %v2871, 1.0
        %v2916 = vadd.f32 %v2873, 1.0
        %v2917 = vadd.f32 %v2875, 1.0
        %v2918 = vadd.f32 %v2877, 1.0
        %v2919 = vadd.f32 %v2879, 1.0
        %v2920 = vadd.f32 %v2881, 1.0
        %v2921 = vadd.f32 %v2883, 1.0
        %v2922 = vadd.f32 %v2885, 1.0
        %v2923 = vadd.f32 %v2887, 1.0
        %v2924 = vadd.f32 %v2889, 1.0
        %v2925 = vadd.f32 %v2891, 1.0
        %v2926 = vadd.f32 %v2893, 1.0
        %v2927 = vadd.f32 %v2895, 1.0
        %v2928 = vrcp.pop %v2896
        %v2929 = vmul.f32 %v2896, %v2928
        %v2930 = vsub.f32 1.0, %v2929
        %v2931 = vmul.f32 %v2928, %v2930
        %v2932 = vadd.f32 %v2928, %v2931
        %vm2933 = vweird.f32 %v2896
        %vm2934 = vweird.f32 %v2928
        %vm2935 = vmor %vm2933, %vm2934
        %v2936 = vsel %vm2935, %v2928, %v2932
        %v2937 = vand.u32 2147483647, %v2896
        %vm2938 = vcmp.eq.f32.partialorder %v2937, 8.507059e+37
        %v2939 = vand.u32 %v2896, 2147483648
        %v2940 = vor.u32 1.1754944e-38, %v2939
        %v2941 = vsel %vm2938, %v2940, %v2936
        %v2942 = vmul.f32 1.0, %v2941
        %v2943 = vrcp.pop %v2897
        %v2944 = vmul.f32 %v2897, %v2943
        %v2945 = vsub.f32 1.0, %v2944
        %v2946 = vmul.f32 %v2943, %v2945
        %v2947 = vadd.f32 %v2943, %v2946
        %vm2948 = vweird.f32 %v2897
        %vm2949 = vweird.f32 %v2943
        %vm2950 = vmor %vm2948, %vm2949
        %v2951 = vsel %vm2950, %v2943, %v2947
        %v2952 = vand.u32 2147483647, %v2897
        %vm2953 = vcmp.eq.f32.partialorder %v2952, 8.507059e+37
        %v2954 = vand.u32 %v2897, 2147483648
        %v2955 = vor.u32 1.1754944e-38, %v2954
        %v2956 = vsel %vm2953, %v2955, %v2951
        %v2957 = vmul.f32 1.0, %v2956
        %v2958 = vrcp.pop %v2898
        %v2959 = vmul.f32 %v2898, %v2958
        %v2960 = vsub.f32 1.0, %v2959
        %v2961 = vmul.f32 %v2958, %v2960
        %v2962 = vadd.f32 %v2958, %v2961
        %vm2963 = vweird.f32 %v2898
        %vm2964 = vweird.f32 %v2958
        %vm2965 = vmor %vm2963, %vm2964
        %v2966 = vsel %vm2965, %v2958, %v2962
        %v2967 = vand.u32 2147483647, %v2898
        %vm2968 = vcmp.eq.f32.partialorder %v2967, 8.507059e+37
        %v2969 = vand.u32 %v2898, 2147483648
        %v2970 = vor.u32 1.1754944e-38, %v2969
        %v2971 = vsel %vm2968, %v2970, %v2966
        %v2972 = vmul.f32 1.0, %v2971
        %v2973 = vrcp.pop %v2899
        %v2974 = vmul.f32 %v2899, %v2973
        %v2975 = vsub.f32 1.0, %v2974
        %v2976 = vmul.f32 %v2973, %v2975
        %v2977 = vadd.f32 %v2973, %v2976
        %vm2978 = vweird.f32 %v2899
        %vm2979 = vweird.f32 %v2973
        %vm2980 = vmor %vm2978, %vm2979
        %v2981 = vsel %vm2980, %v2973, %v2977
        %v2982 = vand.u32 2147483647, %v2899
        %vm2983 = vcmp.eq.f32.partialorder %v2982, 8.507059e+37
        %v2984 = vand.u32 %v2899, 2147483648
        %v2985 = vor.u32 1.1754944e-38, %v2984
        %v2986 = vsel %vm2983, %v2985, %v2981
        %v2987 = vmul.f32 1.0, %v2986
        %v2988 = vrcp.pop %v2900
        %v2989 = vmul.f32 %v2900, %v2988
        %v2990 = vsub.f32 1.0, %v2989
        %v2991 = vmul.f32 %v2988, %v2990
        %v2992 = vadd.f32 %v2988, %v2991
        %vm2993 = vweird.f32 %v2900
        %vm2994 = vweird.f32 %v2988
        %vm2995 = vmor %vm2993, %vm2994
        %v2996 = vsel %vm2995, %v2988, %v2992
        %v2997 = vand.u32 2147483647, %v2900
        %vm2998 = vcmp.eq.f32.partialorder %v2997, 8.507059e+37
        %v2999 = vand.u32 %v2900, 2147483648
        %v3000 = vor.u32 1.1754944e-38, %v2999
        %v3001 = vsel %vm2998, %v3000, %v2996
        %v3002 = vmul.f32 1.0, %v3001
        %v3003 = vrcp.pop %v2901
        %v3004 = vmul.f32 %v2901, %v3003
        %v3005 = vsub.f32 1.0, %v3004
        %v3006 = vmul.f32 %v3003, %v3005
        %v3007 = vadd.f32 %v3003, %v3006
        %vm3008 = vweird.f32 %v2901
        %vm3009 = vweird.f32 %v3003
        %vm3010 = vmor %vm3008, %vm3009
        %v3011 = vsel %vm3010, %v3003, %v3007
        %v3012 = vand.u32 2147483647, %v2901
        %vm3013 = vcmp.eq.f32.partialorder %v3012, 8.507059e+37
        %v3014 = vand.u32 %v2901, 2147483648
        %v3015 = vor.u32 1.1754944e-38, %v3014
        %v3016 = vsel %vm3013, %v3015, %v3011
        %v3017 = vmul.f32 1.0, %v3016
        %v3018 = vrcp.pop %v2902
        %v3019 = vmul.f32 %v2902, %v3018
        %v3020 = vsub.f32 1.0, %v3019
        %v3021 = vmul.f32 %v3018, %v3020
        %v3022 = vadd.f32 %v3018, %v3021
        %vm3023 = vweird.f32 %v2902
        %vm3024 = vweird.f32 %v3018
        %vm3025 = vmor %vm3023, %vm3024
        %v3026 = vsel %vm3025, %v3018, %v3022
        %v3027 = vand.u32 2147483647, %v2902
        %vm3028 = vcmp.eq.f32.partialorder %v3027, 8.507059e+37
        %v3029 = vand.u32 %v2902, 2147483648
        %v3030 = vor.u32 1.1754944e-38, %v3029
        %v3031 = vsel %vm3028, %v3030, %v3026
        %v3032 = vmul.f32 1.0, %v3031
        %v3033 = vrcp.pop %v2903
        %v3034 = vmul.f32 %v2903, %v3033
        %v3035 = vsub.f32 1.0, %v3034
        %v3036 = vmul.f32 %v3033, %v3035
        %v3037 = vadd.f32 %v3033, %v3036
        %vm3038 = vweird.f32 %v2903
        %vm3039 = vweird.f32 %v3033
        %vm3040 = vmor %vm3038, %vm3039
        %v3041 = vsel %vm3040, %v3033, %v3037
        %v3042 = vand.u32 2147483647, %v2903
        %vm3043 = vcmp.eq.f32.partialorder %v3042, 8.507059e+37
        %v3044 = vand.u32 %v2903, 2147483648
        %v3045 = vor.u32 1.1754944e-38, %v3044
        %v3046 = vsel %vm3043, %v3045, %v3041
        %v3047 = vmul.f32 1.0, %v3046
        %v3048 = vrcp.pop %v2904
        %v3049 = vmul.f32 %v2904, %v3048
        %v3050 = vsub.f32 1.0, %v3049
        %v3051 = vmul.f32 %v3048, %v3050
        %v3052 = vadd.f32 %v3048, %v3051
        %vm3053 = vweird.f32 %v2904
        %vm3054 = vweird.f32 %v3048
        %vm3055 = vmor %vm3053, %vm3054
        %v3056 = vsel %vm3055, %v3048, %v3052
        %v3057 = vand.u32 2147483647, %v2904
        %vm3058 = vcmp.eq.f32.partialorder %v3057, 8.507059e+37
        %v3059 = vand.u32 %v2904, 2147483648
        %v3060 = vor.u32 1.1754944e-38, %v3059
        %v3061 = vsel %vm3058, %v3060, %v3056
        %v3062 = vmul.f32 1.0, %v3061
        %v3063 = vrcp.pop %v2905
        %v3064 = vmul.f32 %v2905, %v3063
        %v3065 = vsub.f32 1.0, %v3064
        %v3066 = vmul.f32 %v3063, %v3065
        %v3067 = vadd.f32 %v3063, %v3066
        %vm3068 = vweird.f32 %v2905
        %vm3069 = vweird.f32 %v3063
        %vm3070 = vmor %vm3068, %vm3069
        %v3071 = vsel %vm3070, %v3063, %v3067
        %v3072 = vand.u32 2147483647, %v2905
        %vm3073 = vcmp.eq.f32.partialorder %v3072, 8.507059e+37
        %v3074 = vand.u32 %v2905, 2147483648
        %v3075 = vor.u32 1.1754944e-38, %v3074
        %v3076 = vsel %vm3073, %v3075, %v3071
        %v3077 = vmul.f32 1.0, %v3076
        %v3078 = vrcp.pop %v2906
        %v3079 = vmul.f32 %v2906, %v3078
        %v3080 = vsub.f32 1.0, %v3079
        %v3081 = vmul.f32 %v3078, %v3080
        %v3082 = vadd.f32 %v3078, %v3081
        %vm3083 = vweird.f32 %v2906
        %vm3084 = vweird.f32 %v3078
        %vm3085 = vmor %vm3083, %vm3084
        %v3086 = vsel %vm3085, %v3078, %v3082
        %v3087 = vand.u32 2147483647, %v2906
        %vm3088 = vcmp.eq.f32.partialorder %v3087, 8.507059e+37
        %v3089 = vand.u32 %v2906, 2147483648
        %v3090 = vor.u32 1.1754944e-38, %v3089
        %v3091 = vsel %vm3088, %v3090, %v3086
        %v3092 = vmul.f32 1.0, %v3091
        %v3093 = vrcp.pop %v2907
        %v3094 = vmul.f32 %v2907, %v3093
        %v3095 = vsub.f32 1.0, %v3094
        %v3096 = vmul.f32 %v3093, %v3095
        %v3097 = vadd.f32 %v3093, %v3096
        %vm3098 = vweird.f32 %v2907
        %vm3099 = vweird.f32 %v3093
        %vm3100 = vmor %vm3098, %vm3099
        %v3101 = vsel %vm3100, %v3093, %v3097
        %v3102 = vand.u32 2147483647, %v2907
        %vm3103 = vcmp.eq.f32.partialorder %v3102, 8.507059e+37
        %v3104 = vand.u32 %v2907, 2147483648
        %v3105 = vor.u32 1.1754944e-38, %v3104
        %v3106 = vsel %vm3103, %v3105, %v3101
        %v3107 = vmul.f32 1.0, %v3106
        %v3108 = vrcp.pop %v2908
        %v3109 = vmul.f32 %v2908, %v3108
        %v3110 = vsub.f32 1.0, %v3109
        %v3111 = vmul.f32 %v3108, %v3110
        %v3112 = vadd.f32 %v3108, %v3111
        %vm3113 = vweird.f32 %v2908
        %vm3114 = vweird.f32 %v3108
        %vm3115 = vmor %vm3113, %vm3114
        %v3116 = vsel %vm3115, %v3108, %v3112
        %v3117 = vand.u32 2147483647, %v2908
        %vm3118 = vcmp.eq.f32.partialorder %v3117, 8.507059e+37
        %v3119 = vand.u32 %v2908, 2147483648
        %v3120 = vor.u32 1.1754944e-38, %v3119
        %v3121 = vsel %vm3118, %v3120, %v3116
        %v3122 = vmul.f32 1.0, %v3121
        %v3123 = vrcp.pop %v2909
        %v3124 = vmul.f32 %v2909, %v3123
        %v3125 = vsub.f32 1.0, %v3124
        %v3126 = vmul.f32 %v3123, %v3125
        %v3127 = vadd.f32 %v3123, %v3126
        %vm3128 = vweird.f32 %v2909
        %vm3129 = vweird.f32 %v3123
        %vm3130 = vmor %vm3128, %vm3129
        %v3131 = vsel %vm3130, %v3123, %v3127
        %v3132 = vand.u32 2147483647, %v2909
        %vm3133 = vcmp.eq.f32.partialorder %v3132, 8.507059e+37
        %v3134 = vand.u32 %v2909, 2147483648
        %v3135 = vor.u32 1.1754944e-38, %v3134
        %v3136 = vsel %vm3133, %v3135, %v3131
        %v3137 = vmul.f32 1.0, %v3136
        %v3138 = vrcp.pop %v2910
        %v3139 = vmul.f32 %v2910, %v3138
        %v3140 = vsub.f32 1.0, %v3139
        %v3141 = vmul.f32 %v3138, %v3140
        %v3142 = vadd.f32 %v3138, %v3141
        %vm3143 = vweird.f32 %v2910
        %vm3144 = vweird.f32 %v3138
        %vm3145 = vmor %vm3143, %vm3144
        %v3146 = vsel %vm3145, %v3138, %v3142
        %v3147 = vand.u32 2147483647, %v2910
        %vm3148 = vcmp.eq.f32.partialorder %v3147, 8.507059e+37
        %v3149 = vand.u32 %v2910, 2147483648
        %v3150 = vor.u32 1.1754944e-38, %v3149
        %v3151 = vsel %vm3148, %v3150, %v3146
        %v3152 = vmul.f32 1.0, %v3151
        %v3153 = vrcp.pop %v2911
        %v3154 = vmul.f32 %v2911, %v3153
        %v3155 = vsub.f32 1.0, %v3154
        %v3156 = vmul.f32 %v3153, %v3155
        %v3157 = vadd.f32 %v3153, %v3156
        %vm3158 = vweird.f32 %v2911
        %vm3159 = vweird.f32 %v3153
        %vm3160 = vmor %vm3158, %vm3159
        %v3161 = vsel %vm3160, %v3153, %v3157
        %v3162 = vand.u32 2147483647, %v2911
        %vm3163 = vcmp.eq.f32.partialorder %v3162, 8.507059e+37
        %v3164 = vand.u32 %v2911, 2147483648
        %v3165 = vor.u32 1.1754944e-38, %v3164
        %v3166 = vsel %vm3163, %v3165, %v3161
        %v3167 = vmul.f32 1.0, %v3166
        %v3168 = vrcp.pop %v2912
        %v3169 = vmul.f32 %v2912, %v3168
        %v3170 = vsub.f32 1.0, %v3169
        %v3171 = vmul.f32 %v3168, %v3170
        %v3172 = vadd.f32 %v3168, %v3171
        %vm3173 = vweird.f32 %v2912
        %vm3174 = vweird.f32 %v3168
        %vm3175 = vmor %vm3173, %vm3174
        %v3176 = vsel %vm3175, %v3168, %v3172
        %v3177 = vand.u32 2147483647, %v2912
        %vm3178 = vcmp.eq.f32.partialorder %v3177, 8.507059e+37
        %v3179 = vand.u32 %v2912, 2147483648
        %v3180 = vor.u32 1.1754944e-38, %v3179
        %v3181 = vsel %vm3178, %v3180, %v3176
        %v3182 = vmul.f32 1.0, %v3181
        %v3183 = vrcp.pop %v2913
        %v3184 = vmul.f32 %v2913, %v3183
        %v3185 = vsub.f32 1.0, %v3184
        %v3186 = vmul.f32 %v3183, %v3185
        %v3187 = vadd.f32 %v3183, %v3186
        %vm3188 = vweird.f32 %v2913
        %vm3189 = vweird.f32 %v3183
        %vm3190 = vmor %vm3188, %vm3189
        %v3191 = vsel %vm3190, %v3183, %v3187
        %v3192 = vand.u32 2147483647, %v2913
        %vm3193 = vcmp.eq.f32.partialorder %v3192, 8.507059e+37
        %v3194 = vand.u32 %v2913, 2147483648
        %v3195 = vor.u32 1.1754944e-38, %v3194
        %v3196 = vsel %vm3193, %v3195, %v3191
        %v3197 = vmul.f32 1.0, %v3196
        %v3198 = vrcp.pop %v2914
        %v3199 = vmul.f32 %v2914, %v3198
        %v3200 = vsub.f32 1.0, %v3199
        %v3201 = vmul.f32 %v3198, %v3200
        %v3202 = vadd.f32 %v3198, %v3201
        %vm3203 = vweird.f32 %v2914
        %vm3204 = vweird.f32 %v3198
        %vm3205 = vmor %vm3203, %vm3204
        %v3206 = vsel %vm3205, %v3198, %v3202
        %v3207 = vand.u32 2147483647, %v2914
        %vm3208 = vcmp.eq.f32.partialorder %v3207, 8.507059e+37
        %v3209 = vand.u32 %v2914, 2147483648
        %v3210 = vor.u32 1.1754944e-38, %v3209
        %v3211 = vsel %vm3208, %v3210, %v3206
        %v3212 = vmul.f32 1.0, %v3211
        %v3213 = vrcp.pop %v2915
        %v3214 = vmul.f32 %v2915, %v3213
        %v3215 = vsub.f32 1.0, %v3214
        %v3216 = vmul.f32 %v3213, %v3215
        %v3217 = vadd.f32 %v3213, %v3216
        %vm3218 = vweird.f32 %v2915
        %vm3219 = vweird.f32 %v3213
        %vm3220 = vmor %vm3218, %vm3219
        %v3221 = vsel %vm3220, %v3213, %v3217
        %v3222 = vand.u32 2147483647, %v2915
        %vm3223 = vcmp.eq.f32.partialorder %v3222, 8.507059e+37
        %v3224 = vand.u32 %v2915, 2147483648
        %v3225 = vor.u32 1.1754944e-38, %v3224
        %v3226 = vsel %vm3223, %v3225, %v3221
        %v3227 = vmul.f32 1.0, %v3226
        %v3228 = vrcp.pop %v2916
        %v3229 = vmul.f32 %v2916, %v3228
        %v3230 = vsub.f32 1.0, %v3229
        %v3231 = vmul.f32 %v3228, %v3230
        %v3232 = vadd.f32 %v3228, %v3231
        %vm3233 = vweird.f32 %v2916
        %vm3234 = vweird.f32 %v3228
        %vm3235 = vmor %vm3233, %vm3234
        %v3236 = vsel %vm3235, %v3228, %v3232
        %v3237 = vand.u32 2147483647, %v2916
        %vm3238 = vcmp.eq.f32.partialorder %v3237, 8.507059e+37
        %v3239 = vand.u32 %v2916, 2147483648
        %v3240 = vor.u32 1.1754944e-38, %v3239
        %v3241 = vsel %vm3238, %v3240, %v3236
        %v3242 = vmul.f32 1.0, %v3241
        %v3243 = vrcp.pop %v2917
        %v3244 = vmul.f32 %v2917, %v3243
        %v3245 = vsub.f32 1.0, %v3244
        %v3246 = vmul.f32 %v3243, %v3245
        %v3247 = vadd.f32 %v3243, %v3246
        %vm3248 = vweird.f32 %v2917
        %vm3249 = vweird.f32 %v3243
        %vm3250 = vmor %vm3248, %vm3249
        %v3251 = vsel %vm3250, %v3243, %v3247
        %v3252 = vand.u32 2147483647, %v2917
        %vm3253 = vcmp.eq.f32.partialorder %v3252, 8.507059e+37
        %v3254 = vand.u32 %v2917, 2147483648
        %v3255 = vor.u32 1.1754944e-38, %v3254
        %v3256 = vsel %vm3253, %v3255, %v3251
        %v3257 = vmul.f32 1.0, %v3256
        %v3258 = vrcp.pop %v2918
        %v3259 = vmul.f32 %v2918, %v3258
        %v3260 = vsub.f32 1.0, %v3259
        %v3261 = vmul.f32 %v3258, %v3260
        %v3262 = vadd.f32 %v3258, %v3261
        %vm3263 = vweird.f32 %v2918
        %vm3264 = vweird.f32 %v3258
        %vm3265 = vmor %vm3263, %vm3264
        %v3266 = vsel %vm3265, %v3258, %v3262
        %v3267 = vand.u32 2147483647, %v2918
        %vm3268 = vcmp.eq.f32.partialorder %v3267, 8.507059e+37
        %v3269 = vand.u32 %v2918, 2147483648
        %v3270 = vor.u32 1.1754944e-38, %v3269
        %v3271 = vsel %vm3268, %v3270, %v3266
        %v3272 = vmul.f32 1.0, %v3271
        %v3273 = vrcp.pop %v2919
        %v3274 = vmul.f32 %v2919, %v3273
        %v3275 = vsub.f32 1.0, %v3274
        %v3276 = vmul.f32 %v3273, %v3275
        %v3277 = vadd.f32 %v3273, %v3276
        %vm3278 = vweird.f32 %v2919
        %vm3279 = vweird.f32 %v3273
        %vm3280 = vmor %vm3278, %vm3279
        %v3281 = vsel %vm3280, %v3273, %v3277
        %v3282 = vand.u32 2147483647, %v2919
        %vm3283 = vcmp.eq.f32.partialorder %v3282, 8.507059e+37
        %v3284 = vand.u32 %v2919, 2147483648
        %v3285 = vor.u32 1.1754944e-38, %v3284
        %v3286 = vsel %vm3283, %v3285, %v3281
        %v3287 = vmul.f32 1.0, %v3286
        %v3288 = vrcp.pop %v2920
        %v3289 = vmul.f32 %v2920, %v3288
        %v3290 = vsub.f32 1.0, %v3289
        %v3291 = vmul.f32 %v3288, %v3290
        %v3292 = vadd.f32 %v3288, %v3291
        %vm3293 = vweird.f32 %v2920
        %vm3294 = vweird.f32 %v3288
        %vm3295 = vmor %vm3293, %vm3294
        %v3296 = vsel %vm3295, %v3288, %v3292
        %v3297 = vand.u32 2147483647, %v2920
        %vm3298 = vcmp.eq.f32.partialorder %v3297, 8.507059e+37
        %v3299 = vand.u32 %v2920, 2147483648
        %v3300 = vor.u32 1.1754944e-38, %v3299
        %v3301 = vsel %vm3298, %v3300, %v3296
        %v3302 = vmul.f32 1.0, %v3301
        %v3303 = vrcp.pop %v2921
        %v3304 = vmul.f32 %v2921, %v3303
        %v3305 = vsub.f32 1.0, %v3304
        %v3306 = vmul.f32 %v3303, %v3305
        %v3307 = vadd.f32 %v3303, %v3306
        %vm3308 = vweird.f32 %v2921
        %vm3309 = vweird.f32 %v3303
        %vm3310 = vmor %vm3308, %vm3309
        %v3311 = vsel %vm3310, %v3303, %v3307
        %v3312 = vand.u32 2147483647, %v2921
        %vm3313 = vcmp.eq.f32.partialorder %v3312, 8.507059e+37
        %v3314 = vand.u32 %v2921, 2147483648
        %v3315 = vor.u32 1.1754944e-38, %v3314
        %v3316 = vsel %vm3313, %v3315, %v3311
        %v3317 = vmul.f32 1.0, %v3316
        %v3318 = vrcp.pop %v2922
        %v3319 = vmul.f32 %v2922, %v3318
        %v3320 = vsub.f32 1.0, %v3319
        %v3321 = vmul.f32 %v3318, %v3320
        %v3322 = vadd.f32 %v3318, %v3321
        %vm3323 = vweird.f32 %v2922
        %vm3324 = vweird.f32 %v3318
        %vm3325 = vmor %vm3323, %vm3324
        %v3326 = vsel %vm3325, %v3318, %v3322
        %v3327 = vand.u32 2147483647, %v2922
        %vm3328 = vcmp.eq.f32.partialorder %v3327, 8.507059e+37
        %v3329 = vand.u32 %v2922, 2147483648
        %v3330 = vor.u32 1.1754944e-38, %v3329
        %v3331 = vsel %vm3328, %v3330, %v3326
        %v3332 = vmul.f32 1.0, %v3331
        %v3333 = vrcp.pop %v2923
        %v3334 = vmul.f32 %v2923, %v3333
        %v3335 = vsub.f32 1.0, %v3334
        %v3336 = vmul.f32 %v3333, %v3335
        %v3337 = vadd.f32 %v3333, %v3336
        %vm3338 = vweird.f32 %v2923
        %vm3339 = vweird.f32 %v3333
        %vm3340 = vmor %vm3338, %vm3339
        %v3341 = vsel %vm3340, %v3333, %v3337
        %v3342 = vand.u32 2147483647, %v2923
        %vm3343 = vcmp.eq.f32.partialorder %v3342, 8.507059e+37
        %v3344 = vand.u32 %v2923, 2147483648
        %v3345 = vor.u32 1.1754944e-38, %v3344
        %v3346 = vsel %vm3343, %v3345, %v3341
        %v3347 = vmul.f32 1.0, %v3346
        %v3348 = vrcp.pop %v2924
        %v3349 = vmul.f32 %v2924, %v3348
        %v3350 = vsub.f32 1.0, %v3349
        %v3351 = vmul.f32 %v3348, %v3350
        %v3352 = vadd.f32 %v3348, %v3351
        %vm3353 = vweird.f32 %v2924
        %vm3354 = vweird.f32 %v3348
        %vm3355 = vmor %vm3353, %vm3354
        %v3356 = vsel %vm3355, %v3348, %v3352
        %v3357 = vand.u32 2147483647, %v2924
        %vm3358 = vcmp.eq.f32.partialorder %v3357, 8.507059e+37
        %v3359 = vand.u32 %v2924, 2147483648
        %v3360 = vor.u32 1.1754944e-38, %v3359
        %v3361 = vsel %vm3358, %v3360, %v3356
        %v3362 = vmul.f32 1.0, %v3361
        %v3363 = vrcp.pop %v2925
        %v3364 = vmul.f32 %v2925, %v3363
        %v3365 = vsub.f32 1.0, %v3364
        %v3366 = vmul.f32 %v3363, %v3365
        %v3367 = vadd.f32 %v3363, %v3366
        %vm3368 = vweird.f32 %v2925
        %vm3369 = vweird.f32 %v3363
        %vm3370 = vmor %vm3368, %vm3369
        %v3371 = vsel %vm3370, %v3363, %v3367
        %v3372 = vand.u32 2147483647, %v2925
        %vm3373 = vcmp.eq.f32.partialorder %v3372, 8.507059e+37
        %v3374 = vand.u32 %v2925, 2147483648
        %v3375 = vor.u32 1.1754944e-38, %v3374
        %v3376 = vsel %vm3373, %v3375, %v3371
        %v3377 = vmul.f32 1.0, %v3376
        %v3378 = vrcp.pop %v2926
        %v3379 = vmul.f32 %v2926, %v3378
        %v3380 = vsub.f32 1.0, %v3379
        %v3381 = vmul.f32 %v3378, %v3380
        %v3382 = vadd.f32 %v3378, %v3381
        %vm3383 = vweird.f32 %v2926
        %vm3384 = vweird.f32 %v3378
        %vm3385 = vmor %vm3383, %vm3384
        %v3386 = vsel %vm3385, %v3378, %v3382
        %v3387 = vand.u32 2147483647, %v2926
        %vm3388 = vcmp.eq.f32.partialorder %v3387, 8.507059e+37
        %v3389 = vand.u32 %v2926, 2147483648
        %v3390 = vor.u32 1.1754944e-38, %v3389
        %v3391 = vsel %vm3388, %v3390, %v3386
        %v3392 = vmul.f32 1.0, %v3391
        %v3393 = vrcp.pop %v2927
        %v3394 = vmul.f32 %v2927, %v3393
        %v3395 = vsub.f32 1.0, %v3394
        %v3396 = vmul.f32 %v3393, %v3395
        %v3397 = vadd.f32 %v3393, %v3396
        %vm3398 = vweird.f32 %v2927
        %vm3399 = vweird.f32 %v3393
        %vm3400 = vmor %vm3398, %vm3399
        %v3401 = vsel %vm3400, %v3393, %v3397
        %v3402 = vand.u32 2147483647, %v2927
        %vm3403 = vcmp.eq.f32.partialorder %v3402, 8.507059e+37
        %v3404 = vand.u32 %v2927, 2147483648
        %v3405 = vor.u32 1.1754944e-38, %v3404
        %v3406 = vsel %vm3403, %v3405, %v3401
        %v3407 = vmul.f32 1.0, %v3406
        %v3408 = vld [vmem:[%s21] sm:$0xff]
        %v3409 = vld [vmem:[%s21 + $0x8] sm:$0xff]
        %v3410 = vld [vmem:[%s21 + $0x10] sm:$0xff]
        %v3411 = vld [vmem:[%s21 + $0x18] sm:$0xff]
        %v3412 = vld [vmem:[%s21 + $0x20] sm:$0xff]
        %v3413 = vld [vmem:[%s21 + $0x28] sm:$0xff]
        %v3414 = vld [vmem:[%s21 + $0x30] sm:$0xff]
        %v3415 = vld [vmem:[%s21 + $0x38] sm:$0xff]
        %v3416 = vld [vmem:[%s21 + $0x40] sm:$0xff]
        %v3417 = vld [vmem:[%s21 + $0x48] sm:$0xff]
        %v3418 = vld [vmem:[%s21 + $0x50] sm:$0xff]
        %v3419 = vld [vmem:[%s21 + $0x58] sm:$0xff]
        %v3420 = vld [vmem:[%s21 + $0x60] sm:$0xff]
        %v3421 = vld [vmem:[%s21 + $0x68] sm:$0xff]
        %v3422 = vld [vmem:[%s21 + $0x70] sm:$0xff]
        %v3423 = vld [vmem:[%s21 + $0x78] sm:$0xff]
        %v3424 = vld [vmem:[%s21 + $0x80] sm:$0xff]
        %v3425 = vld [vmem:[%s21 + $0x88] sm:$0xff]
        %v3426 = vld [vmem:[%s21 + $0x90] sm:$0xff]
        %v3427 = vld [vmem:[%s21 + $0x98] sm:$0xff]
        %v3428 = vld [vmem:[%s21 + $0xa0] sm:$0xff]
        %v3429 = vld [vmem:[%s21 + $0xa8] sm:$0xff]
        %v3430 = vld [vmem:[%s21 + $0xb0] sm:$0xff]
        %v3431 = vld [vmem:[%s21 + $0xb8] sm:$0xff]
        %v3432 = vld [vmem:[%s21 + $0xc0] sm:$0xff]
        %v3433 = vld [vmem:[%s21 + $0xc8] sm:$0xff]
        %v3434 = vld [vmem:[%s21 + $0xd0] sm:$0xff]
        %v3435 = vld [vmem:[%s21 + $0xd8] sm:$0xff]
        %v3436 = vld [vmem:[%s21 + $0xe0] sm:$0xff]
        %v3437 = vld [vmem:[%s21 + $0xe8] sm:$0xff]
        %v3438 = vld [vmem:[%s21 + $0xf0] sm:$0xff]
        %v3439 = vld [vmem:[%s21 + $0xf8] sm:$0xff]
        %v3440 = vpack.c.bf16 %v2957, %v2942
        %v3441 = vpack.c.bf16 %v2987, %v2972
        %v3442 = vpack.c.bf16 %v3017, %v3002
        %v3443 = vpack.c.bf16 %v3047, %v3032
        %v3444 = vpack.c.bf16 %v3077, %v3062
        %v3445 = vpack.c.bf16 %v3107, %v3092
        %v3446 = vpack.c.bf16 %v3137, %v3122
        %v3447 = vpack.c.bf16 %v3167, %v3152
        %v3448 = vpack.c.bf16 %v3197, %v3182
        %v3449 = vpack.c.bf16 %v3227, %v3212
        %v3450 = vpack.c.bf16 %v3257, %v3242
        %v3451 = vpack.c.bf16 %v3287, %v3272
        %v3452 = vpack.c.bf16 %v3317, %v3302
        %v3453 = vpack.c.bf16 %v3347, %v3332
        %v3454 = vpack.c.bf16 %v3377, %v3362
        %v3455 = vpack.c.bf16 %v3407, %v3392
        %v3488 = vunpack.c.l.b16 %v3408
        %v3489 = vunpack.c.h.b16 %v3408
        %v3490 = vunpack.c.l.b16 %v3409
        %v3491 = vunpack.c.h.b16 %v3409
        %v3492 = vunpack.c.l.b16 %v3410
        %v3493 = vunpack.c.h.b16 %v3410
        %v3494 = vunpack.c.l.b16 %v3411
        %v3495 = vunpack.c.h.b16 %v3411
        %v3496 = vunpack.c.l.b16 %v3412
        %v3497 = vunpack.c.h.b16 %v3412
        %v3498 = vunpack.c.l.b16 %v3413
        %v3499 = vunpack.c.h.b16 %v3413
        %v3500 = vunpack.c.l.b16 %v3414
        %v3501 = vunpack.c.h.b16 %v3414
        %v3502 = vunpack.c.l.b16 %v3415
        %v3503 = vunpack.c.h.b16 %v3415
        %v3504 = vunpack.c.l.b16 %v3416
        %v3505 = vunpack.c.h.b16 %v3416
        %v3506 = vunpack.c.l.b16 %v3417
        %v3507 = vunpack.c.h.b16 %v3417
        %v3508 = vunpack.c.l.b16 %v3418
        %v3509 = vunpack.c.h.b16 %v3418
        %v3510 = vunpack.c.l.b16 %v3419
        %v3511 = vunpack.c.h.b16 %v3419
        %v3512 = vunpack.c.l.b16 %v3420
        %v3513 = vunpack.c.h.b16 %v3420
        %v3514 = vunpack.c.l.b16 %v3421
        %v3515 = vunpack.c.h.b16 %v3421
        %v3516 = vunpack.c.l.b16 %v3422
        %v3517 = vunpack.c.h.b16 %v3422
        %v3518 = vunpack.c.l.b16 %v3423
        %v3519 = vunpack.c.h.b16 %v3423
        %v3520 = vunpack.c.l.b16 %v3424
        %v3521 = vunpack.c.h.b16 %v3424
        %v3522 = vunpack.c.l.b16 %v3425
        %v3523 = vunpack.c.h.b16 %v3425
        %v3524 = vunpack.c.l.b16 %v3426
        %v3525 = vunpack.c.h.b16 %v3426
        %v3526 = vunpack.c.l.b16 %v3427
        %v3527 = vunpack.c.h.b16 %v3427
        %v3528 = vunpack.c.l.b16 %v3428
        %v3529 = vunpack.c.h.b16 %v3428
        %v3530 = vunpack.c.l.b16 %v3429
        %v3531 = vunpack.c.h.b16 %v3429
        %v3532 = vunpack.c.l.b16 %v3430
        %v3533 = vunpack.c.h.b16 %v3430
        %v3534 = vunpack.c.l.b16 %v3431
        %v3535 = vunpack.c.h.b16 %v3431
        %v3536 = vunpack.c.l.b16 %v3432
        %v3537 = vunpack.c.h.b16 %v3432
        %v3538 = vunpack.c.l.b16 %v3433
        %v3539 = vunpack.c.h.b16 %v3433
        %v3540 = vunpack.c.l.b16 %v3434
        %v3541 = vunpack.c.h.b16 %v3434
        %v3542 = vunpack.c.l.b16 %v3435
        %v3543 = vunpack.c.h.b16 %v3435
        %v3544 = vunpack.c.l.b16 %v3436
        %v3545 = vunpack.c.h.b16 %v3436
        %v3546 = vunpack.c.l.b16 %v3437
        %v3547 = vunpack.c.h.b16 %v3437
        %v3548 = vunpack.c.l.b16 %v3438
        %v3549 = vunpack.c.h.b16 %v3438
        %v3550 = vunpack.c.l.b16 %v3439
        %v3551 = vunpack.c.h.b16 %v3439
        %v3552 = vpack.c.b16 %v3490, %v3488
        %v3553 = vpack.c.b16 %v3491, %v3489
        %v3554 = vpack.c.b16 %v3494, %v3492
        %v3555 = vpack.c.b16 %v3495, %v3493
        %v3556 = vpack.c.b16 %v3498, %v3496
        %v3557 = vpack.c.b16 %v3499, %v3497
        %v3558 = vpack.c.b16 %v3502, %v3500
        %v3559 = vpack.c.b16 %v3503, %v3501
        %v3560 = vpack.c.b16 %v3506, %v3504
        %v3561 = vpack.c.b16 %v3507, %v3505
        %v3562 = vpack.c.b16 %v3510, %v3508
        %v3563 = vpack.c.b16 %v3511, %v3509
        %v3564 = vpack.c.b16 %v3514, %v3512
        %v3565 = vpack.c.b16 %v3515, %v3513
        %v3566 = vpack.c.b16 %v3518, %v3516
        %v3567 = vpack.c.b16 %v3519, %v3517
        %v3568 = vpack.c.b16 %v3522, %v3520
        %v3569 = vpack.c.b16 %v3523, %v3521
        %v3570 = vpack.c.b16 %v3526, %v3524
        %v3571 = vpack.c.b16 %v3527, %v3525
        %v3572 = vpack.c.b16 %v3530, %v3528
        %v3573 = vpack.c.b16 %v3531, %v3529
        %v3574 = vpack.c.b16 %v3534, %v3532
        %v3575 = vpack.c.b16 %v3535, %v3533
        %v3576 = vpack.c.b16 %v3538, %v3536
        %v3577 = vpack.c.b16 %v3539, %v3537
        %v3578 = vpack.c.b16 %v3542, %v3540
        %v3579 = vpack.c.b16 %v3543, %v3541
        %v3580 = vpack.c.b16 %v3546, %v3544
        %v3581 = vpack.c.b16 %v3547, %v3545
        %v3582 = vpack.c.b16 %v3550, %v3548
        %v3583 = vpack.c.b16 %v3551, %v3549
        %3616 = vmatpush.bf16.msra.mxu0 %v3447
        %3617 = vmatpush.bf16.msra.mxu0 %v3446
        %3618 = vmatpush.bf16.msra.mxu0 %v3445
        %3619 = vmatpush.bf16.msra.mxu0 %v3444
        %3620 = vmatpush.bf16.msra.mxu0 %v3443
        %3621 = vmatpush.bf16.msra.mxu0 %v3442
        %3622 = vmatpush.bf16.msra.mxu0 %v3441
        %3623 = vmatpush.bf16.msra.mxu0 %v3440
        %3624 = vmatmul.bf16.gmra.mxu0 %v3552
        %v3625 = vpop.f32.mrf.mxu0
        %v3626 = vadd.f32 0.0, %v3625
        %v3627 = vpop.f32.mrf.mxu0
        %v3628 = vadd.f32 0.0, %v3627
        %3629 = vmatmul.bf16.gmra.mxu0 %v3554
        %v3630 = vpop.f32.mrf.mxu0
        %v3631 = vadd.f32 0.0, %v3630
        %v3632 = vpop.f32.mrf.mxu0
        %v3633 = vadd.f32 0.0, %v3632
        %3634 = vmatmul.bf16.gmra.mxu0 %v3556
        %v3635 = vpop.f32.mrf.mxu0
        %v3636 = vadd.f32 0.0, %v3635
        %v3637 = vpop.f32.mrf.mxu0
        %v3638 = vadd.f32 0.0, %v3637
        %3639 = vmatmul.bf16.gmra.mxu0 %v3558
        %v3640 = vpop.f32.mrf.mxu0
        %v3641 = vadd.f32 0.0, %v3640
        %v3642 = vpop.f32.mrf.mxu0
        %v3643 = vadd.f32 0.0, %v3642
        %3644 = vmatmul.bf16.gmra.mxu0 %v3560
        %v3645 = vpop.f32.mrf.mxu0
        %v3646 = vadd.f32 0.0, %v3645
        %v3647 = vpop.f32.mrf.mxu0
        %v3648 = vadd.f32 0.0, %v3647
        %3649 = vmatmul.bf16.gmra.mxu0 %v3562
        %v3650 = vpop.f32.mrf.mxu0
        %v3651 = vadd.f32 0.0, %v3650
        %v3652 = vpop.f32.mrf.mxu0
        %v3653 = vadd.f32 0.0, %v3652
        %3654 = vmatmul.bf16.gmra.mxu0 %v3564
        %v3655 = vpop.f32.mrf.mxu0
        %v3656 = vadd.f32 0.0, %v3655
        %v3657 = vpop.f32.mrf.mxu0
        %v3658 = vadd.f32 0.0, %v3657
        %3659 = vmatmul.bf16.gmra.mxu0 %v3566
        %v3660 = vpop.f32.mrf.mxu0
        %v3661 = vadd.f32 0.0, %v3660
        %v3662 = vpop.f32.mrf.mxu0
        %v3663 = vadd.f32 0.0, %v3662
        %3664 = vmatmul.bf16.gmra.mxu0 %v3568
        %v3665 = vpop.f32.mrf.mxu0
        %v3666 = vadd.f32 0.0, %v3665
        %v3667 = vpop.f32.mrf.mxu0
        %v3668 = vadd.f32 0.0, %v3667
        %3669 = vmatmul.bf16.gmra.mxu0 %v3570
        %v3670 = vpop.f32.mrf.mxu0
        %v3671 = vadd.f32 0.0, %v3670
        %v3672 = vpop.f32.mrf.mxu0
        %v3673 = vadd.f32 0.0, %v3672
        %3674 = vmatmul.bf16.gmra.mxu0 %v3572
        %v3675 = vpop.f32.mrf.mxu0
        %v3676 = vadd.f32 0.0, %v3675
        %v3677 = vpop.f32.mrf.mxu0
        %v3678 = vadd.f32 0.0, %v3677
        %3679 = vmatmul.bf16.gmra.mxu0 %v3574
        %v3680 = vpop.f32.mrf.mxu0
        %v3681 = vadd.f32 0.0, %v3680
        %v3682 = vpop.f32.mrf.mxu0
        %v3683 = vadd.f32 0.0, %v3682
        %3684 = vmatmul.bf16.gmra.mxu0 %v3576
        %v3685 = vpop.f32.mrf.mxu0
        %v3686 = vadd.f32 0.0, %v3685
        %v3687 = vpop.f32.mrf.mxu0
        %v3688 = vadd.f32 0.0, %v3687
        %3689 = vmatmul.bf16.gmra.mxu0 %v3578
        %v3690 = vpop.f32.mrf.mxu0
        %v3691 = vadd.f32 0.0, %v3690
        %v3692 = vpop.f32.mrf.mxu0
        %v3693 = vadd.f32 0.0, %v3692
        %3694 = vmatmul.bf16.gmra.mxu0 %v3580
        %v3695 = vpop.f32.mrf.mxu0
        %v3696 = vadd.f32 0.0, %v3695
        %v3697 = vpop.f32.mrf.mxu0
        %v3698 = vadd.f32 0.0, %v3697
        %3699 = vmatmul.bf16.gmra.mxu0 %v3582
        %v3700 = vpop.f32.mrf.mxu0
        %v3701 = vadd.f32 0.0, %v3700
        %v3702 = vpop.f32.mrf.mxu0
        %v3703 = vadd.f32 0.0, %v3702
        %3704 = vdwg.mxu0
        %3705 = vmatpush.bf16.msra.mxu0 %v3455
        %3706 = vmatpush.bf16.msra.mxu0 %v3454
        %3707 = vmatpush.bf16.msra.mxu0 %v3453
        %3708 = vmatpush.bf16.msra.mxu0 %v3452
        %3709 = vmatpush.bf16.msra.mxu0 %v3451
        %3710 = vmatpush.bf16.msra.mxu0 %v3450
        %3711 = vmatpush.bf16.msra.mxu0 %v3449
        %3712 = vmatpush.bf16.msra.mxu0 %v3448
        %3713 = vmatmul.bf16.gmra.mxu0 %v3553
        %v3714 = vpop.f32.mrf.mxu0
        %v3715 = vadd.f32 %v3626, %v3714
        %v3716 = vpop.f32.mrf.mxu0
        %v3717 = vadd.f32 %v3628, %v3716
        %3718 = vmatmul.bf16.gmra.mxu0 %v3555
        %v3719 = vpop.f32.mrf.mxu0
        %v3720 = vadd.f32 %v3631, %v3719
        %v3721 = vpop.f32.mrf.mxu0
        %v3722 = vadd.f32 %v3633, %v3721
        %3723 = vmatmul.bf16.gmra.mxu0 %v3557
        %v3724 = vpop.f32.mrf.mxu0
        %v3725 = vadd.f32 %v3636, %v3724
        %v3726 = vpop.f32.mrf.mxu0
        %v3727 = vadd.f32 %v3638, %v3726
        %3728 = vmatmul.bf16.gmra.mxu0 %v3559
        %v3729 = vpop.f32.mrf.mxu0
        %v3730 = vadd.f32 %v3641, %v3729
        %v3731 = vpop.f32.mrf.mxu0
        %v3732 = vadd.f32 %v3643, %v3731
        %3733 = vmatmul.bf16.gmra.mxu0 %v3561
        %v3734 = vpop.f32.mrf.mxu0
        %v3735 = vadd.f32 %v3646, %v3734
        %v3736 = vpop.f32.mrf.mxu0
        %v3737 = vadd.f32 %v3648, %v3736
        %3738 = vmatmul.bf16.gmra.mxu0 %v3563
        %v3739 = vpop.f32.mrf.mxu0
        %v3740 = vadd.f32 %v3651, %v3739
        %v3741 = vpop.f32.mrf.mxu0
        %v3742 = vadd.f32 %v3653, %v3741
        %3743 = vmatmul.bf16.gmra.mxu0 %v3565
        %v3744 = vpop.f32.mrf.mxu0
        %v3745 = vadd.f32 %v3656, %v3744
        %v3746 = vpop.f32.mrf.mxu0
        %v3747 = vadd.f32 %v3658, %v3746
        %3748 = vmatmul.bf16.gmra.mxu0 %v3567
        %v3749 = vpop.f32.mrf.mxu0
        %v3750 = vadd.f32 %v3661, %v3749
        %v3751 = vpop.f32.mrf.mxu0
        %v3752 = vadd.f32 %v3663, %v3751
        %3753 = vmatmul.bf16.gmra.mxu0 %v3569
        %v3754 = vpop.f32.mrf.mxu0
        %v3755 = vadd.f32 %v3666, %v3754
        %v3756 = vpop.f32.mrf.mxu0
        %v3757 = vadd.f32 %v3668, %v3756
        %3758 = vmatmul.bf16.gmra.mxu0 %v3571
        %v3759 = vpop.f32.mrf.mxu0
        %v3760 = vadd.f32 %v3671, %v3759
        %v3761 = vpop.f32.mrf.mxu0
        %v3762 = vadd.f32 %v3673, %v3761
        %3763 = vmatmul.bf16.gmra.mxu0 %v3573
        %v3764 = vpop.f32.mrf.mxu0
        %v3765 = vadd.f32 %v3676, %v3764
        %v3766 = vpop.f32.mrf.mxu0
        %v3767 = vadd.f32 %v3678, %v3766
        %3768 = vmatmul.bf16.gmra.mxu0 %v3575
        %v3769 = vpop.f32.mrf.mxu0
        %v3770 = vadd.f32 %v3681, %v3769
        %v3771 = vpop.f32.mrf.mxu0
        %v3772 = vadd.f32 %v3683, %v3771
        %3773 = vmatmul.bf16.gmra.mxu0 %v3577
        %v3774 = vpop.f32.mrf.mxu0
        %v3775 = vadd.f32 %v3686, %v3774
        %v3776 = vpop.f32.mrf.mxu0
        %v3777 = vadd.f32 %v3688, %v3776
        %3778 = vmatmul.bf16.gmra.mxu0 %v3579
        %v3779 = vpop.f32.mrf.mxu0
        %v3780 = vadd.f32 %v3691, %v3779
        %v3781 = vpop.f32.mrf.mxu0
        %v3782 = vadd.f32 %v3693, %v3781
        %3783 = vmatmul.bf16.gmra.mxu0 %v3581
        %v3784 = vpop.f32.mrf.mxu0
        %v3785 = vadd.f32 %v3696, %v3784
        %v3786 = vpop.f32.mrf.mxu0
        %v3787 = vadd.f32 %v3698, %v3786
        %3788 = vmatmul.bf16.gmra.mxu0 %v3583
        %v3789 = vpop.f32.mrf.mxu0
        %v3790 = vadd.f32 %v3701, %v3789
        %v3791 = vpop.f32.mrf.mxu0
        %v3792 = vadd.f32 %v3703, %v3791
        %3793 = vdwg.mxu0
        %v3794 = vsub.f32 %v2942, %v3715
        %v3795 = vsub.f32 %v2957, %v3717
        %v3796 = vsub.f32 %v2972, %v3720
        %v3797 = vsub.f32 %v2987, %v3722
        %v3798 = vsub.f32 %v3002, %v3725
        %v3799 = vsub.f32 %v3017, %v3727
        %v3800 = vsub.f32 %v3032, %v3730
        %v3801 = vsub.f32 %v3047, %v3732
        %v3802 = vsub.f32 %v3062, %v3735
        %v3803 = vsub.f32 %v3077, %v3737
        %v3804 = vsub.f32 %v3092, %v3740
        %v3805 = vsub.f32 %v3107, %v3742
        %v3806 = vsub.f32 %v3122, %v3745
        %v3807 = vsub.f32 %v3137, %v3747
        %v3808 = vsub.f32 %v3152, %v3750
        %v3809 = vsub.f32 %v3167, %v3752
        %v3810 = vsub.f32 %v3182, %v3755
        %v3811 = vsub.f32 %v3197, %v3757
        %v3812 = vsub.f32 %v3212, %v3760
        %v3813 = vsub.f32 %v3227, %v3762
        %v3814 = vsub.f32 %v3242, %v3765
        %v3815 = vsub.f32 %v3257, %v3767
        %v3816 = vsub.f32 %v3272, %v3770
        %v3817 = vsub.f32 %v3287, %v3772
        %v3818 = vsub.f32 %v3302, %v3775
        %v3819 = vsub.f32 %v3317, %v3777
        %v3820 = vsub.f32 %v3332, %v3780
        %v3821 = vsub.f32 %v3347, %v3782
        %v3822 = vsub.f32 %v3362, %v3785
        %v3823 = vsub.f32 %v3377, %v3787
        %v3824 = vsub.f32 %v3392, %v3790
        %v3825 = vsub.f32 %v3407, %v3792
        %v3826 = vadd.f32 %v3794, 1.0
        %v3827 = vadd.f32 %v3795, 1.0
        %v3828 = vadd.f32 %v3796, 1.0
        %v3829 = vadd.f32 %v3797, 1.0
        %v3830 = vadd.f32 %v3798, 1.0
        %v3831 = vadd.f32 %v3799, 1.0
        %v3832 = vadd.f32 %v3800, 1.0
        %v3833 = vadd.f32 %v3801, 1.0
        %v3834 = vadd.f32 %v3802, 1.0
        %v3835 = vadd.f32 %v3803, 1.0
        %v3836 = vadd.f32 %v3804, 1.0
        %v3837 = vadd.f32 %v3805, 1.0
        %v3838 = vadd.f32 %v3806, 1.0
        %v3839 = vadd.f32 %v3807, 1.0
        %v3840 = vadd.f32 %v3808, 1.0
        %v3841 = vadd.f32 %v3809, 1.0
        %v3842 = vadd.f32 %v3810, 1.0
        %v3843 = vadd.f32 %v3811, 1.0
        %v3844 = vadd.f32 %v3812, 1.0
        %v3845 = vadd.f32 %v3813, 1.0
        %v3846 = vadd.f32 %v3814, 1.0
        %v3847 = vadd.f32 %v3815, 1.0
        %v3848 = vadd.f32 %v3816, 1.0
        %v3849 = vadd.f32 %v3817, 1.0
        %v3850 = vadd.f32 %v3818, 1.0
        %v3851 = vadd.f32 %v3819, 1.0
        %v3852 = vadd.f32 %v3820, 1.0
        %v3853 = vadd.f32 %v3821, 1.0
        %v3854 = vadd.f32 %v3822, 1.0
        %v3855 = vadd.f32 %v3823, 1.0
        %v3856 = vadd.f32 %v3824, 1.0
        %v3857 = vadd.f32 %v3825, 1.0
        %3859 = vset.pattern.permute.xlu0 0
        %3860 = vperm.xlu0 %3859, %v3826
        %v3861 = vpop.permute.xlu0 %3860
        %3864 = vset.pattern.permute.xlu0 0
        %3865 = vperm.xlu0 %3864, %v3827
        %v3866 = vpop.permute.xlu0 %3865
        %3869 = vset.pattern.permute.xlu0 0
        %3870 = vperm.xlu0 %3869, %v3828
        %v3871 = vpop.permute.xlu0 %3870
        %3874 = vset.pattern.permute.xlu0 0
        %3875 = vperm.xlu0 %3874, %v3829
        %v3876 = vpop.permute.xlu0 %3875
        %3879 = vset.pattern.permute.xlu0 0
        %3880 = vperm.xlu0 %3879, %v3830
        %v3881 = vpop.permute.xlu0 %3880
        %3884 = vset.pattern.permute.xlu0 0
        %3885 = vperm.xlu0 %3884, %v3831
        %v3886 = vpop.permute.xlu0 %3885
        %3889 = vset.pattern.permute.xlu0 0
        %3890 = vperm.xlu0 %3889, %v3832
        %v3891 = vpop.permute.xlu0 %3890
        %3894 = vset.pattern.permute.xlu0 0
        %3895 = vperm.xlu0 %3894, %v3833
        %v3896 = vpop.permute.xlu0 %3895
        %3899 = vset.pattern.permute.xlu0 0
        %3900 = vperm.xlu0 %3899, %v3834
        %v3901 = vpop.permute.xlu0 %3900
        %3904 = vset.pattern.permute.xlu0 0
        %3905 = vperm.xlu0 %3904, %v3835
        %v3906 = vpop.permute.xlu0 %3905
        %3909 = vset.pattern.permute.xlu0 0
        %3910 = vperm.xlu0 %3909, %v3836
        %v3911 = vpop.permute.xlu0 %3910
        %3914 = vset.pattern.permute.xlu0 0
        %3915 = vperm.xlu0 %3914, %v3837
        %v3916 = vpop.permute.xlu0 %3915
        %3919 = vset.pattern.permute.xlu0 0
        %3920 = vperm.xlu0 %3919, %v3838
        %v3921 = vpop.permute.xlu0 %3920
        %3924 = vset.pattern.permute.xlu0 0
        %3925 = vperm.xlu0 %3924, %v3839
        %v3926 = vpop.permute.xlu0 %3925
        %3929 = vset.pattern.permute.xlu0 0
        %3930 = vperm.xlu0 %3929, %v3840
        %v3931 = vpop.permute.xlu0 %3930
        %3934 = vset.pattern.permute.xlu0 0
        %3935 = vperm.xlu0 %3934, %v3841
        %v3936 = vpop.permute.xlu0 %3935
        %3939 = vset.pattern.permute.xlu0 0
        %3940 = vperm.xlu0 %3939, %v3842
        %v3941 = vpop.permute.xlu0 %3940
        %3944 = vset.pattern.permute.xlu0 0
        %3945 = vperm.xlu0 %3944, %v3843
        %v3946 = vpop.permute.xlu0 %3945
        %3949 = vset.pattern.permute.xlu0 0
        %3950 = vperm.xlu0 %3949, %v3844
        %v3951 = vpop.permute.xlu0 %3950
        %3954 = vset.pattern.permute.xlu0 0
        %3955 = vperm.xlu0 %3954, %v3845
        %v3956 = vpop.permute.xlu0 %3955
        %3959 = vset.pattern.permute.xlu0 0
        %3960 = vperm.xlu0 %3959, %v3846
        %v3961 = vpop.permute.xlu0 %3960
        %3964 = vset.pattern.permute.xlu0 0
        %3965 = vperm.xlu0 %3964, %v3847
        %v3966 = vpop.permute.xlu0 %3965
        %3969 = vset.pattern.permute.xlu0 0
        %3970 = vperm.xlu0 %3969, %v3848
        %v3971 = vpop.permute.xlu0 %3970
        %3974 = vset.pattern.permute.xlu0 0
        %3975 = vperm.xlu0 %3974, %v3849
        %v3976 = vpop.permute.xlu0 %3975
        %3979 = vset.pattern.permute.xlu0 0
        %3980 = vperm.xlu0 %3979, %v3850
        %v3981 = vpop.permute.xlu0 %3980
        %3984 = vset.pattern.permute.xlu0 0
        %3985 = vperm.xlu0 %3984, %v3851
        %v3986 = vpop.permute.xlu0 %3985
        %3989 = vset.pattern.permute.xlu0 0
        %3990 = vperm.xlu0 %3989, %v3852
        %v3991 = vpop.permute.xlu0 %3990
        %3994 = vset.pattern.permute.xlu0 0
        %3995 = vperm.xlu0 %3994, %v3853
        %v3996 = vpop.permute.xlu0 %3995
        %3999 = vset.pattern.permute.xlu0 0
        %4000 = vperm.xlu0 %3999, %v3854
        %v4001 = vpop.permute.xlu0 %4000
        %4004 = vset.pattern.permute.xlu0 0
        %4005 = vperm.xlu0 %4004, %v3855
        %v4006 = vpop.permute.xlu0 %4005
        %4009 = vset.pattern.permute.xlu0 0
        %4010 = vperm.xlu0 %4009, %v3856
        %v4011 = vpop.permute.xlu0 %4010
        %4014 = vset.pattern.permute.xlu0 0
        %4015 = vperm.xlu0 %4014, %v3857
        %v4016 = vpop.permute.xlu0 %4015
        %v4018 = vmul.f32 %v1660, %v3861
        %v4019 = vmul.f32 %v1661, %v3866
        %v4020 = vmul.f32 %v1662, %v3871
        %v4021 = vmul.f32 %v1663, %v3876
        %v4022 = vmul.f32 %v1664, %v3881
        %v4023 = vmul.f32 %v1665, %v3886
        %v4024 = vmul.f32 %v1666, %v3891
        %v4025 = vmul.f32 %v1667, %v3896
        %v4026 = vmul.f32 %v1668, %v3901
        %v4027 = vmul.f32 %v1669, %v3906
        %v4028 = vmul.f32 %v1670, %v3911
        %v4029 = vmul.f32 %v1671, %v3916
        %v4030 = vmul.f32 %v1672, %v3921
        %v4031 = vmul.f32 %v1673, %v3926
        %v4032 = vmul.f32 %v1674, %v3931
        %v4033 = vmul.f32 %v1675, %v3936
        %v4034 = vmul.f32 %v1676, %v3941
        %v4035 = vmul.f32 %v1677, %v3946
        %v4036 = vmul.f32 %v1678, %v3951
        %v4037 = vmul.f32 %v1679, %v3956
        %v4038 = vmul.f32 %v1680, %v3961
        %v4039 = vmul.f32 %v1681, %v3966
        %v4040 = vmul.f32 %v1682, %v3971
        %v4041 = vmul.f32 %v1683, %v3976
        %v4042 = vmul.f32 %v1684, %v3981
        %v4043 = vmul.f32 %v1685, %v3986
        %v4044 = vmul.f32 %v1686, %v3991
        %v4045 = vmul.f32 %v1687, %v3996
        %v4046 = vmul.f32 %v1688, %v4001
        %v4047 = vmul.f32 %v1689, %v4006
        %v4048 = vmul.f32 %v1690, %v4011
        %v4049 = vmul.f32 %v1691, %v4016
        %v4050 = vld [vmem:[%s23] sm:$0xf]
        %v4051 = vld [vmem:[%s23 + $0x4] sm:$0xf]
        %v4052 = vld [vmem:[%s23 + $0x8] sm:$0xf]
        %v4053 = vld [vmem:[%s23 + $0xc] sm:$0xf]
        %v4054 = vld [vmem:[%s23 + $0x10] sm:$0xf]
        %v4055 = vld [vmem:[%s23 + $0x14] sm:$0xf]
        %v4056 = vld [vmem:[%s23 + $0x18] sm:$0xf]
        %v4057 = vld [vmem:[%s23 + $0x1c] sm:$0xf]
        %v4058 = vpack.c.bf16 %v4019, %v4018
        %v4059 = vpack.c.bf16 %v4021, %v4020
        %v4060 = vpack.c.bf16 %v4023, %v4022
        %v4061 = vpack.c.bf16 %v4025, %v4024
        %v4062 = vpack.c.bf16 %v4027, %v4026
        %v4063 = vpack.c.bf16 %v4029, %v4028
        %v4064 = vpack.c.bf16 %v4031, %v4030
        %v4065 = vpack.c.bf16 %v4033, %v4032
        %v4066 = vpack.c.bf16 %v4035, %v4034
        %v4067 = vpack.c.bf16 %v4037, %v4036
        %v4068 = vpack.c.bf16 %v4039, %v4038
        %v4069 = vpack.c.bf16 %v4041, %v4040
        %v4070 = vpack.c.bf16 %v4043, %v4042
        %v4071 = vpack.c.bf16 %v4045, %v4044
        %v4072 = vpack.c.bf16 %v4047, %v4046
        %v4073 = vpack.c.bf16 %v4049, %v4048
        %v4074 = vpack.c.bf16 %v2333, %v2332
        %v4075 = vpack.c.bf16 %v2335, %v2334
        %v4076 = vpack.c.bf16 %v2337, %v2336
        %v4077 = vpack.c.bf16 %v2339, %v2338
        %v4078 = vpack.c.bf16 %v2341, %v2340
        %v4079 = vpack.c.bf16 %v2343, %v2342
        %v4080 = vpack.c.bf16 %v2345, %v2344
        %v4081 = vpack.c.bf16 %v2347, %v2346
        %v4082 = vpack.c.bf16 %v2349, %v2348
        %v4083 = vpack.c.bf16 %v2351, %v2350
        %v4084 = vpack.c.bf16 %v2353, %v2352
        %v4085 = vpack.c.bf16 %v2355, %v2354
        %v4086 = vpack.c.bf16 %v2357, %v2356
        %v4087 = vpack.c.bf16 %v2359, %v2358
        %v4088 = vpack.c.bf16 %v2361, %v2360
        %v4089 = vpack.c.bf16 %v2363, %v2362
        %v4094 = vunpack.c.l.b16 %v4054
        %v4095 = vunpack.c.l.b16 %v4055
        %v4096 = vunpack.c.l.b16 %v4056
        %v4097 = vunpack.c.l.b16 %v4057
        %v4098 = vpack.c.b16 %v4095, %v4094
        %v4099 = vpack.c.b16 %v4097, %v4096
        %v4103 = vsel %vm1140, %v4074, 0
        %v4106 = vsel %vm1140, %v4075, 0
        %v4109 = vsel %vm1140, %v4076, 0
        %v4112 = vsel %vm1140, %v4077, 0
        %v4115 = vsel %vm1140, %v4078, 0
        %v4118 = vsel %vm1140, %v4079, 0
        %v4121 = vsel %vm1140, %v4080, 0
        %v4124 = vsel %vm1140, %v4081, 0
        %v4127 = vsel %vm1140, %v4082, 0
        %v4130 = vsel %vm1140, %v4083, 0
        %v4133 = vsel %vm1140, %v4084, 0
        %v4136 = vsel %vm1140, %v4085, 0
        %v4139 = vsel %vm1140, %v4086, 0
        %v4142 = vsel %vm1140, %v4087, 0
        %v4145 = vsel %vm1140, %v4088, 0
        %v4148 = vsel %vm1140, %v4089, 0
        %4150 = vmatpush.bf16.msra.mxu0 0
        %4151 = vmatpush.bf16.msra.mxu0 0
        %4152 = vmatpush.bf16.msra.mxu0 0
        %4153 = vmatpush.bf16.msra.mxu0 0
        %4154 = vmatpush.bf16.msra.mxu0 0
        %4155 = vmatpush.bf16.msra.mxu0 0
        %4156 = vmatpush.bf16.msra.mxu0 %v4099
        %4157 = vmatpush.bf16.msra.mxu0 %v4098
        %4158 = vmatmul.bf16.gmra.mxu0 %v4103
        %v4159 = vpop.f32.mrf.mxu0
        %v4160 = vadd.f32 0.0, %v4159
        %v4161 = vpop.f32.mrf.mxu0
        %v4162 = vadd.f32 0.0, %v4161
        %4163 = vmatmul.bf16.gmra.mxu0 %v4106
        %v4164 = vpop.f32.mrf.mxu0
        %v4165 = vadd.f32 0.0, %v4164
        %v4166 = vpop.f32.mrf.mxu0
        %v4167 = vadd.f32 0.0, %v4166
        %4168 = vmatmul.bf16.gmra.mxu0 %v4109
        %v4169 = vpop.f32.mrf.mxu0
        %v4170 = vadd.f32 0.0, %v4169
        %v4171 = vpop.f32.mrf.mxu0
        %v4172 = vadd.f32 0.0, %v4171
        %4173 = vmatmul.bf16.gmra.mxu0 %v4112
        %v4174 = vpop.f32.mrf.mxu0
        %v4175 = vadd.f32 0.0, %v4174
        %v4176 = vpop.f32.mrf.mxu0
        %v4177 = vadd.f32 0.0, %v4176
        %4178 = vmatmul.bf16.gmra.mxu0 %v4115
        %v4179 = vpop.f32.mrf.mxu0
        %v4180 = vadd.f32 0.0, %v4179
        %v4181 = vpop.f32.mrf.mxu0
        %v4182 = vadd.f32 0.0, %v4181
        %4183 = vmatmul.bf16.gmra.mxu0 %v4118
        %v4184 = vpop.f32.mrf.mxu0
        %v4185 = vadd.f32 0.0, %v4184
        %v4186 = vpop.f32.mrf.mxu0
        %v4187 = vadd.f32 0.0, %v4186
        %4188 = vmatmul.bf16.gmra.mxu0 %v4121
        %v4189 = vpop.f32.mrf.mxu0
        %v4190 = vadd.f32 0.0, %v4189
        %v4191 = vpop.f32.mrf.mxu0
        %v4192 = vadd.f32 0.0, %v4191
        %4193 = vmatmul.bf16.gmra.mxu0 %v4124
        %v4194 = vpop.f32.mrf.mxu0
        %v4195 = vadd.f32 0.0, %v4194
        %v4196 = vpop.f32.mrf.mxu0
        %v4197 = vadd.f32 0.0, %v4196
        %4198 = vmatmul.bf16.gmra.mxu0 %v4127
        %v4199 = vpop.f32.mrf.mxu0
        %v4200 = vadd.f32 0.0, %v4199
        %v4201 = vpop.f32.mrf.mxu0
        %v4202 = vadd.f32 0.0, %v4201
        %4203 = vmatmul.bf16.gmra.mxu0 %v4130
        %v4204 = vpop.f32.mrf.mxu0
        %v4205 = vadd.f32 0.0, %v4204
        %v4206 = vpop.f32.mrf.mxu0
        %v4207 = vadd.f32 0.0, %v4206
        %4208 = vmatmul.bf16.gmra.mxu0 %v4133
        %v4209 = vpop.f32.mrf.mxu0
        %v4210 = vadd.f32 0.0, %v4209
        %v4211 = vpop.f32.mrf.mxu0
        %v4212 = vadd.f32 0.0, %v4211
        %4213 = vmatmul.bf16.gmra.mxu0 %v4136
        %v4214 = vpop.f32.mrf.mxu0
        %v4215 = vadd.f32 0.0, %v4214
        %v4216 = vpop.f32.mrf.mxu0
        %v4217 = vadd.f32 0.0, %v4216
        %4218 = vmatmul.bf16.gmra.mxu0 %v4139
        %v4219 = vpop.f32.mrf.mxu0
        %v4220 = vadd.f32 0.0, %v4219
        %v4221 = vpop.f32.mrf.mxu0
        %v4222 = vadd.f32 0.0, %v4221
        %4223 = vmatmul.bf16.gmra.mxu0 %v4142
        %v4224 = vpop.f32.mrf.mxu0
        %v4225 = vadd.f32 0.0, %v4224
        %v4226 = vpop.f32.mrf.mxu0
        %v4227 = vadd.f32 0.0, %v4226
        %4228 = vmatmul.bf16.gmra.mxu0 %v4145
        %v4229 = vpop.f32.mrf.mxu0
        %v4230 = vadd.f32 0.0, %v4229
        %v4231 = vpop.f32.mrf.mxu0
        %v4232 = vadd.f32 0.0, %v4231
        %4233 = vmatmul.bf16.gmra.mxu0 %v4148
        %v4234 = vpop.f32.mrf.mxu0
        %v4235 = vadd.f32 0.0, %v4234
        %v4236 = vpop.f32.mrf.mxu0
        %v4237 = vadd.f32 0.0, %v4236
        %4238 = vdwg.mxu0
        %v4243 = vunpack.c.l.b16 %v4050
        %v4244 = vunpack.c.l.b16 %v4051
        %v4245 = vunpack.c.l.b16 %v4052
        %v4246 = vunpack.c.l.b16 %v4053
        %v4247 = vpack.c.b16 %v4244, %v4243
        %v4248 = vpack.c.b16 %v4246, %v4245
        %v4252 = vsel %vm1140, %v4058, 0
        %v4255 = vsel %vm1140, %v4059, 0
        %v4258 = vsel %vm1140, %v4060, 0
        %v4261 = vsel %vm1140, %v4061, 0
        %v4264 = vsel %vm1140, %v4062, 0
        %v4267 = vsel %vm1140, %v4063, 0
        %v4270 = vsel %vm1140, %v4064, 0
        %v4273 = vsel %vm1140, %v4065, 0
        %v4276 = vsel %vm1140, %v4066, 0
        %v4279 = vsel %vm1140, %v4067, 0
        %v4282 = vsel %vm1140, %v4068, 0
        %v4285 = vsel %vm1140, %v4069, 0
        %v4288 = vsel %vm1140, %v4070, 0
        %v4291 = vsel %vm1140, %v4071, 0
        %v4294 = vsel %vm1140, %v4072, 0
        %v4297 = vsel %vm1140, %v4073, 0
        %4299 = vmatpush.bf16.msra.mxu0 0
        %4300 = vmatpush.bf16.msra.mxu0 0
        %4301 = vmatpush.bf16.msra.mxu0 0
        %4302 = vmatpush.bf16.msra.mxu0 0
        %4303 = vmatpush.bf16.msra.mxu0 0
        %4304 = vmatpush.bf16.msra.mxu0 0
        %4305 = vmatpush.bf16.msra.mxu0 %v4248
        %4306 = vmatpush.bf16.msra.mxu0 %v4247
        %4307 = vmatmul.bf16.gmra.mxu0 %v4252
        %v4308 = vpop.f32.mrf.mxu0
        %v4309 = vadd.f32 %v4160, %v4308
        %v4310 = vpop.f32.mrf.mxu0
        %v4311 = vadd.f32 %v4162, %v4310
        %4312 = vmatmul.bf16.gmra.mxu0 %v4255
        %v4313 = vpop.f32.mrf.mxu0
        %v4314 = vadd.f32 %v4165, %v4313
        %v4315 = vpop.f32.mrf.mxu0
        %v4316 = vadd.f32 %v4167, %v4315
        %4317 = vmatmul.bf16.gmra.mxu0 %v4258
        %v4318 = vpop.f32.mrf.mxu0
        %v4319 = vadd.f32 %v4170, %v4318
        %v4320 = vpop.f32.mrf.mxu0
        %v4321 = vadd.f32 %v4172, %v4320
        %4322 = vmatmul.bf16.gmra.mxu0 %v4261
        %v4323 = vpop.f32.mrf.mxu0
        %v4324 = vadd.f32 %v4175, %v4323
        %v4325 = vpop.f32.mrf.mxu0
        %v4326 = vadd.f32 %v4177, %v4325
        %4327 = vmatmul.bf16.gmra.mxu0 %v4264
        %v4328 = vpop.f32.mrf.mxu0
        %v4329 = vadd.f32 %v4180, %v4328
        %v4330 = vpop.f32.mrf.mxu0
        %v4331 = vadd.f32 %v4182, %v4330
        %4332 = vmatmul.bf16.gmra.mxu0 %v4267
        %v4333 = vpop.f32.mrf.mxu0
        %v4334 = vadd.f32 %v4185, %v4333
        %v4335 = vpop.f32.mrf.mxu0
        %v4336 = vadd.f32 %v4187, %v4335
        %4337 = vmatmul.bf16.gmra.mxu0 %v4270
        %v4338 = vpop.f32.mrf.mxu0
        %v4339 = vadd.f32 %v4190, %v4338
        %v4340 = vpop.f32.mrf.mxu0
        %v4341 = vadd.f32 %v4192, %v4340
        %4342 = vmatmul.bf16.gmra.mxu0 %v4273
        %v4343 = vpop.f32.mrf.mxu0
        %v4344 = vadd.f32 %v4195, %v4343
        %v4345 = vpop.f32.mrf.mxu0
        %v4346 = vadd.f32 %v4197, %v4345
        %4347 = vmatmul.bf16.gmra.mxu0 %v4276
        %v4348 = vpop.f32.mrf.mxu0
        %v4349 = vadd.f32 %v4200, %v4348
        %v4350 = vpop.f32.mrf.mxu0
        %v4351 = vadd.f32 %v4202, %v4350
        %4352 = vmatmul.bf16.gmra.mxu0 %v4279
        %v4353 = vpop.f32.mrf.mxu0
        %v4354 = vadd.f32 %v4205, %v4353
        %v4355 = vpop.f32.mrf.mxu0
        %v4356 = vadd.f32 %v4207, %v4355
        %4357 = vmatmul.bf16.gmra.mxu0 %v4282
        %v4358 = vpop.f32.mrf.mxu0
        %v4359 = vadd.f32 %v4210, %v4358
        %v4360 = vpop.f32.mrf.mxu0
        %v4361 = vadd.f32 %v4212, %v4360
        %4362 = vmatmul.bf16.gmra.mxu0 %v4285
        %v4363 = vpop.f32.mrf.mxu0
        %v4364 = vadd.f32 %v4215, %v4363
        %v4365 = vpop.f32.mrf.mxu0
        %v4366 = vadd.f32 %v4217, %v4365
        %4367 = vmatmul.bf16.gmra.mxu0 %v4288
        %v4368 = vpop.f32.mrf.mxu0
        %v4369 = vadd.f32 %v4220, %v4368
        %v4370 = vpop.f32.mrf.mxu0
        %v4371 = vadd.f32 %v4222, %v4370
        %4372 = vmatmul.bf16.gmra.mxu0 %v4291
        %v4373 = vpop.f32.mrf.mxu0
        %v4374 = vadd.f32 %v4225, %v4373
        %v4375 = vpop.f32.mrf.mxu0
        %v4376 = vadd.f32 %v4227, %v4375
        %4377 = vmatmul.bf16.gmra.mxu0 %v4294
        %v4378 = vpop.f32.mrf.mxu0
        %v4379 = vadd.f32 %v4230, %v4378
        %v4380 = vpop.f32.mrf.mxu0
        %v4381 = vadd.f32 %v4232, %v4380
        %4382 = vmatmul.bf16.gmra.mxu0 %v4297
        %v4383 = vpop.f32.mrf.mxu0
        %v4384 = vadd.f32 %v4235, %v4383
        %v4385 = vpop.f32.mrf.mxu0
        %v4386 = vadd.f32 %v4237, %v4385
        %4387 = vdwg.mxu0
        %v4388 = vld [vmem:[%s25] sm:$0x1]
        %v4390 = vperm.slane %v4388, 0
        %v4392 = vmul.f32 %v4309, %v4390
        %v4393 = vmul.f32 %v4311, %v4390
        %v4394 = vmul.f32 %v4314, %v4390
        %v4395 = vmul.f32 %v4316, %v4390
        %v4396 = vmul.f32 %v4319, %v4390
        %v4397 = vmul.f32 %v4321, %v4390
        %v4398 = vmul.f32 %v4324, %v4390
        %v4399 = vmul.f32 %v4326, %v4390
        %v4400 = vmul.f32 %v4329, %v4390
        %v4401 = vmul.f32 %v4331, %v4390
        %v4402 = vmul.f32 %v4334, %v4390
        %v4403 = vmul.f32 %v4336, %v4390
        %v4404 = vmul.f32 %v4339, %v4390
        %v4405 = vmul.f32 %v4341, %v4390
        %v4406 = vmul.f32 %v4344, %v4390
        %v4407 = vmul.f32 %v4346, %v4390
        %v4408 = vmul.f32 %v4349, %v4390
        %v4409 = vmul.f32 %v4351, %v4390
        %v4410 = vmul.f32 %v4354, %v4390
        %v4411 = vmul.f32 %v4356, %v4390
        %v4412 = vmul.f32 %v4359, %v4390
        %v4413 = vmul.f32 %v4361, %v4390
        %v4414 = vmul.f32 %v4364, %v4390
        %v4415 = vmul.f32 %v4366, %v4390
        %v4416 = vmul.f32 %v4369, %v4390
        %v4417 = vmul.f32 %v4371, %v4390
        %v4418 = vmul.f32 %v4374, %v4390
        %v4419 = vmul.f32 %v4376, %v4390
        %v4420 = vmul.f32 %v4379, %v4390
        %v4421 = vmul.f32 %v4381, %v4390
        %v4422 = vmul.f32 %v4384, %v4390
        %v4423 = vmul.f32 %v4386, %v4390
        %v4424 = vld [vmem:[%s27] sm:$0x1]
        %v4426 = vperm.slane %v4424, 0
        %v4428 = vadd.f32 %v4392, %v4426
        %v4429 = vadd.f32 %v4393, %v4426
        %v4430 = vadd.f32 %v4394, %v4426
        %v4431 = vadd.f32 %v4395, %v4426
        %v4432 = vadd.f32 %v4396, %v4426
        %v4433 = vadd.f32 %v4397, %v4426
        %v4434 = vadd.f32 %v4398, %v4426
        %v4435 = vadd.f32 %v4399, %v4426
        %v4436 = vadd.f32 %v4400, %v4426
        %v4437 = vadd.f32 %v4401, %v4426
        %v4438 = vadd.f32 %v4402, %v4426
        %v4439 = vadd.f32 %v4403, %v4426
        %v4440 = vadd.f32 %v4404, %v4426
        %v4441 = vadd.f32 %v4405, %v4426
        %v4442 = vadd.f32 %v4406, %v4426
        %v4443 = vadd.f32 %v4407, %v4426
        %v4444 = vadd.f32 %v4408, %v4426
        %v4445 = vadd.f32 %v4409, %v4426
        %v4446 = vadd.f32 %v4410, %v4426
        %v4447 = vadd.f32 %v4411, %v4426
        %v4448 = vadd.f32 %v4412, %v4426
        %v4449 = vadd.f32 %v4413, %v4426
        %v4450 = vadd.f32 %v4414, %v4426
        %v4451 = vadd.f32 %v4415, %v4426
        %v4452 = vadd.f32 %v4416, %v4426
        %v4453 = vadd.f32 %v4417, %v4426
        %v4454 = vadd.f32 %v4418, %v4426
        %v4455 = vadd.f32 %v4419, %v4426
        %v4456 = vadd.f32 %v4420, %v4426
        %v4457 = vadd.f32 %v4421, %v4426
        %v4458 = vadd.f32 %v4422, %v4426
        %v4459 = vadd.f32 %v4423, %v4426
        %v4460 = vmax.f32 %v4428, 0.0
        %v4461 = vmax.f32 %v4429, 0.0
        %v4462 = vmax.f32 %v4430, 0.0
        %v4463 = vmax.f32 %v4431, 0.0
        %v4464 = vmax.f32 %v4432, 0.0
        %v4465 = vmax.f32 %v4433, 0.0
        %v4466 = vmax.f32 %v4434, 0.0
        %v4467 = vmax.f32 %v4435, 0.0
        %v4468 = vmax.f32 %v4436, 0.0
        %v4469 = vmax.f32 %v4437, 0.0
        %v4470 = vmax.f32 %v4438, 0.0
        %v4471 = vmax.f32 %v4439, 0.0
        %v4472 = vmax.f32 %v4440, 0.0
        %v4473 = vmax.f32 %v4441, 0.0
        %v4474 = vmax.f32 %v4442, 0.0
        %v4475 = vmax.f32 %v4443, 0.0
        %v4476 = vmax.f32 %v4444, 0.0
        %v4477 = vmax.f32 %v4445, 0.0
        %v4478 = vmax.f32 %v4446, 0.0
        %v4479 = vmax.f32 %v4447, 0.0
        %v4480 = vmax.f32 %v4448, 0.0
        %v4481 = vmax.f32 %v4449, 0.0
        %v4482 = vmax.f32 %v4450, 0.0
        %v4483 = vmax.f32 %v4451, 0.0
        %v4484 = vmax.f32 %v4452, 0.0
        %v4485 = vmax.f32 %v4453, 0.0
        %v4486 = vmax.f32 %v4454, 0.0
        %v4487 = vmax.f32 %v4455, 0.0
        %v4488 = vmax.f32 %v4456, 0.0
        %v4489 = vmax.f32 %v4457, 0.0
        %v4490 = vmax.f32 %v4458, 0.0
        %v4491 = vmax.f32 %v4459, 0.0
        %v4492 = vld [vmem:[%s35] sm:$0xff]
        %v4493 = vld [vmem:[%s35 + $0x8] sm:$0xff]
        %v4494 = vld [vmem:[%s35 + $0x10] sm:$0xff]
        %v4495 = vld [vmem:[%s35 + $0x18] sm:$0xff]
        %v4496 = vld [vmem:[%s35 + $0x20] sm:$0xff]
        %v4497 = vld [vmem:[%s35 + $0x28] sm:$0xff]
        %v4498 = vld [vmem:[%s35 + $0x30] sm:$0xff]
        %v4499 = vld [vmem:[%s35 + $0x38] sm:$0xff]
        %v4500 = vld [vmem:[%s35 + $0x40] sm:$0xff]
        %v4501 = vld [vmem:[%s35 + $0x48] sm:$0xff]
        %v4502 = vld [vmem:[%s35 + $0x50] sm:$0xff]
        %v4503 = vld [vmem:[%s35 + $0x58] sm:$0xff]
        %v4504 = vld [vmem:[%s35 + $0x60] sm:$0xff]
        %v4505 = vld [vmem:[%s35 + $0x68] sm:$0xff]
        %v4506 = vld [vmem:[%s35 + $0x70] sm:$0xff]
        %v4507 = vld [vmem:[%s35 + $0x78] sm:$0xff]
        %v4508 = vld [vmem:[%s35 + $0x80] sm:$0xff]
        %v4509 = vld [vmem:[%s35 + $0x88] sm:$0xff]
        %v4510 = vld [vmem:[%s35 + $0x90] sm:$0xff]
        %v4511 = vld [vmem:[%s35 + $0x98] sm:$0xff]
        %v4512 = vld [vmem:[%s35 + $0xa0] sm:$0xff]
        %v4513 = vld [vmem:[%s35 + $0xa8] sm:$0xff]
        %v4514 = vld [vmem:[%s35 + $0xb0] sm:$0xff]
        %v4515 = vld [vmem:[%s35 + $0xb8] sm:$0xff]
        %v4516 = vld [vmem:[%s35 + $0xc0] sm:$0xff]
        %v4517 = vld [vmem:[%s35 + $0xc8] sm:$0xff]
        %v4518 = vld [vmem:[%s35 + $0xd0] sm:$0xff]
        %v4519 = vld [vmem:[%s35 + $0xd8] sm:$0xff]
        %v4520 = vld [vmem:[%s35 + $0xe0] sm:$0xff]
        %v4521 = vld [vmem:[%s35 + $0xe8] sm:$0xff]
        %v4522 = vld [vmem:[%s35 + $0xf0] sm:$0xff]
        %v4523 = vld [vmem:[%s35 + $0xf8] sm:$0xff]
        %v4524 = vld [vmem:[%s37] sm:$0xff]
        %v4525 = vld [vmem:[%s37 + $0x8] sm:$0xff]
        %v4526 = vld [vmem:[%s37 + $0x10] sm:$0xff]
        %v4527 = vld [vmem:[%s37 + $0x18] sm:$0xff]
        %v4528 = vld [vmem:[%s37 + $0x20] sm:$0xff]
        %v4529 = vld [vmem:[%s37 + $0x28] sm:$0xff]
        %v4530 = vld [vmem:[%s37 + $0x30] sm:$0xff]
        %v4531 = vld [vmem:[%s37 + $0x38] sm:$0xff]
        %v4532 = vld [vmem:[%s37 + $0x40] sm:$0xff]
        %v4533 = vld [vmem:[%s37 + $0x48] sm:$0xff]
        %v4534 = vld [vmem:[%s37 + $0x50] sm:$0xff]
        %v4535 = vld [vmem:[%s37 + $0x58] sm:$0xff]
        %v4536 = vld [vmem:[%s37 + $0x60] sm:$0xff]
        %v4537 = vld [vmem:[%s37 + $0x68] sm:$0xff]
        %v4538 = vld [vmem:[%s37 + $0x70] sm:$0xff]
        %v4539 = vld [vmem:[%s37 + $0x78] sm:$0xff]
        %v4540 = vld [vmem:[%s37 + $0x80] sm:$0xff]
        %v4541 = vld [vmem:[%s37 + $0x88] sm:$0xff]
        %v4542 = vld [vmem:[%s37 + $0x90] sm:$0xff]
        %v4543 = vld [vmem:[%s37 + $0x98] sm:$0xff]
        %v4544 = vld [vmem:[%s37 + $0xa0] sm:$0xff]
        %v4545 = vld [vmem:[%s37 + $0xa8] sm:$0xff]
        %v4546 = vld [vmem:[%s37 + $0xb0] sm:$0xff]
        %v4547 = vld [vmem:[%s37 + $0xb8] sm:$0xff]
        %v4548 = vld [vmem:[%s37 + $0xc0] sm:$0xff]
        %v4549 = vld [vmem:[%s37 + $0xc8] sm:$0xff]
        %v4550 = vld [vmem:[%s37 + $0xd0] sm:$0xff]
        %v4551 = vld [vmem:[%s37 + $0xd8] sm:$0xff]
        %v4552 = vld [vmem:[%s37 + $0xe0] sm:$0xff]
        %v4553 = vld [vmem:[%s37 + $0xe8] sm:$0xff]
        %v4554 = vld [vmem:[%s37 + $0xf0] sm:$0xff]
        %v4555 = vld [vmem:[%s37 + $0xf8] sm:$0xff]
        %4557 = vset.pattern.permute.xlu0 0
        %4558 = vperm.xlu0 %4557, %v4492
        %v4559 = vpop.permute.xlu0 %4558
        %4561 = vset.pattern.permute.xlu0 0
        %4562 = vperm.xlu0 %4561, %v4493
        %v4563 = vpop.permute.xlu0 %4562
        %4565 = vset.pattern.permute.xlu0 0
        %4566 = vperm.xlu0 %4565, %v4494
        %v4567 = vpop.permute.xlu0 %4566
        %4569 = vset.pattern.permute.xlu0 0
        %4570 = vperm.xlu0 %4569, %v4495
        %v4571 = vpop.permute.xlu0 %4570
        %4573 = vset.pattern.permute.xlu0 0
        %4574 = vperm.xlu0 %4573, %v4496
        %v4575 = vpop.permute.xlu0 %4574
        %4577 = vset.pattern.permute.xlu0 0
        %4578 = vperm.xlu0 %4577, %v4497
        %v4579 = vpop.permute.xlu0 %4578
        %4581 = vset.pattern.permute.xlu0 0
        %4582 = vperm.xlu0 %4581, %v4498
        %v4583 = vpop.permute.xlu0 %4582
        %4585 = vset.pattern.permute.xlu0 0
        %4586 = vperm.xlu0 %4585, %v4499
        %v4587 = vpop.permute.xlu0 %4586
        %4589 = vset.pattern.permute.xlu0 0
        %4590 = vperm.xlu0 %4589, %v4500
        %v4591 = vpop.permute.xlu0 %4590
        %4593 = vset.pattern.permute.xlu0 0
        %4594 = vperm.xlu0 %4593, %v4501
        %v4595 = vpop.permute.xlu0 %4594
        %4597 = vset.pattern.permute.xlu0 0
        %4598 = vperm.xlu0 %4597, %v4502
        %v4599 = vpop.permute.xlu0 %4598
        %4601 = vset.pattern.permute.xlu0 0
        %4602 = vperm.xlu0 %4601, %v4503
        %v4603 = vpop.permute.xlu0 %4602
        %4605 = vset.pattern.permute.xlu0 0
        %4606 = vperm.xlu0 %4605, %v4504
        %v4607 = vpop.permute.xlu0 %4606
        %4609 = vset.pattern.permute.xlu0 0
        %4610 = vperm.xlu0 %4609, %v4505
        %v4611 = vpop.permute.xlu0 %4610
        %4613 = vset.pattern.permute.xlu0 0
        %4614 = vperm.xlu0 %4613, %v4506
        %v4615 = vpop.permute.xlu0 %4614
        %4617 = vset.pattern.permute.xlu0 0
        %4618 = vperm.xlu0 %4617, %v4507
        %v4619 = vpop.permute.xlu0 %4618
        %4621 = vset.pattern.permute.xlu0 0
        %4622 = vperm.xlu0 %4621, %v4508
        %v4623 = vpop.permute.xlu0 %4622
        %4625 = vset.pattern.permute.xlu0 0
        %4626 = vperm.xlu0 %4625, %v4509
        %v4627 = vpop.permute.xlu0 %4626
        %4629 = vset.pattern.permute.xlu0 0
        %4630 = vperm.xlu0 %4629, %v4510
        %v4631 = vpop.permute.xlu0 %4630
        %4633 = vset.pattern.permute.xlu0 0
        %4634 = vperm.xlu0 %4633, %v4511
        %v4635 = vpop.permute.xlu0 %4634
        %4637 = vset.pattern.permute.xlu0 0
        %4638 = vperm.xlu0 %4637, %v4512
        %v4639 = vpop.permute.xlu0 %4638
        %4641 = vset.pattern.permute.xlu0 0
        %4642 = vperm.xlu0 %4641, %v4513
        %v4643 = vpop.permute.xlu0 %4642
        %4645 = vset.pattern.permute.xlu0 0
        %4646 = vperm.xlu0 %4645, %v4514
        %v4647 = vpop.permute.xlu0 %4646
        %4649 = vset.pattern.permute.xlu0 0
        %4650 = vperm.xlu0 %4649, %v4515
        %v4651 = vpop.permute.xlu0 %4650
        %4653 = vset.pattern.permute.xlu0 0
        %4654 = vperm.xlu0 %4653, %v4516
        %v4655 = vpop.permute.xlu0 %4654
        %4657 = vset.pattern.permute.xlu0 0
        %4658 = vperm.xlu0 %4657, %v4517
        %v4659 = vpop.permute.xlu0 %4658
        %4661 = vset.pattern.permute.xlu0 0
        %4662 = vperm.xlu0 %4661, %v4518
        %v4663 = vpop.permute.xlu0 %4662
        %4665 = vset.pattern.permute.xlu0 0
        %4666 = vperm.xlu0 %4665, %v4519
        %v4667 = vpop.permute.xlu0 %4666
        %4669 = vset.pattern.permute.xlu0 0
        %4670 = vperm.xlu0 %4669, %v4520
        %v4671 = vpop.permute.xlu0 %4670
        %4673 = vset.pattern.permute.xlu0 0
        %4674 = vperm.xlu0 %4673, %v4521
        %v4675 = vpop.permute.xlu0 %4674
        %4677 = vset.pattern.permute.xlu0 0
        %4678 = vperm.xlu0 %4677, %v4522
        %v4679 = vpop.permute.xlu0 %4678
        %4681 = vset.pattern.permute.xlu0 0
        %4682 = vperm.xlu0 %4681, %v4523
        %v4683 = vpop.permute.xlu0 %4682
        %vm4684 = vcmask 1046528
        %v4685 = vrot.slane %v4559, 1
        %v4686 = vrot.slane %v4563, 1
        %v4687 = vsel %vm4684, %v4685, %v4686
        %v4688 = vrot.slane %v4567, 1
        %v4689 = vsel %vm4684, %v4686, %v4688
        %v4690 = vrot.slane %v4571, 1
        %v4691 = vsel %vm4684, %v4688, %v4690
        %v4692 = vrot.slane %v4575, 1
        %v4693 = vsel %vm4684, %v4690, %v4692
        %v4694 = vrot.slane %v4579, 1
        %v4695 = vsel %vm4684, %v4692, %v4694
        %v4696 = vrot.slane %v4583, 1
        %v4697 = vsel %vm4684, %v4694, %v4696
        %v4698 = vrot.slane %v4587, 1
        %v4699 = vsel %vm4684, %v4696, %v4698
        %v4700 = vrot.slane %v4591, 1
        %v4701 = vsel %vm4684, %v4698, %v4700
        %v4702 = vrot.slane %v4595, 1
        %v4703 = vsel %vm4684, %v4700, %v4702
        %v4704 = vrot.slane %v4599, 1
        %v4705 = vsel %vm4684, %v4702, %v4704
        %v4706 = vrot.slane %v4603, 1
        %v4707 = vsel %vm4684, %v4704, %v4706
        %v4708 = vrot.slane %v4607, 1
        %v4709 = vsel %vm4684, %v4706, %v4708
        %v4710 = vrot.slane %v4611, 1
        %v4711 = vsel %vm4684, %v4708, %v4710
        %v4712 = vrot.slane %v4615, 1
        %v4713 = vsel %vm4684, %v4710, %v4712
        %v4714 = vrot.slane %v4619, 1
        %v4715 = vsel %vm4684, %v4712, %v4714
        %v4716 = vrot.slane %v4623, 1
        %v4717 = vsel %vm4684, %v4714, %v4716
        %v4718 = vrot.slane %v4627, 1
        %v4719 = vsel %vm4684, %v4716, %v4718
        %v4720 = vrot.slane %v4631, 1
        %v4721 = vsel %vm4684, %v4718, %v4720
        %v4722 = vrot.slane %v4635, 1
        %v4723 = vsel %vm4684, %v4720, %v4722
        %v4724 = vrot.slane %v4639, 1
        %v4725 = vsel %vm4684, %v4722, %v4724
        %v4726 = vrot.slane %v4643, 1
        %v4727 = vsel %vm4684, %v4724, %v4726
        %v4728 = vrot.slane %v4647, 1
        %v4729 = vsel %vm4684, %v4726, %v4728
        %v4730 = vrot.slane %v4651, 1
        %v4731 = vsel %vm4684, %v4728, %v4730
        %v4732 = vrot.slane %v4655, 1
        %v4733 = vsel %vm4684, %v4730, %v4732
        %v4734 = vrot.slane %v4659, 1
        %v4735 = vsel %vm4684, %v4732, %v4734
        %v4736 = vrot.slane %v4663, 1
        %v4737 = vsel %vm4684, %v4734, %v4736
        %v4738 = vrot.slane %v4667, 1
        %v4739 = vsel %vm4684, %v4736, %v4738
        %v4740 = vrot.slane %v4671, 1
        %v4741 = vsel %vm4684, %v4738, %v4740
        %v4742 = vrot.slane %v4675, 1
        %v4743 = vsel %vm4684, %v4740, %v4742
        %v4744 = vrot.slane %v4679, 1
        %v4745 = vsel %vm4684, %v4742, %v4744
        %v4746 = vrot.slane %v4683, 1
        %v4747 = vsel %vm4684, %v4744, %v4746
        %v4781 = vmul.f32 %v4685, 0.0
        %v4782 = vmul.f32 %v4687, 0.0
        %v4783 = vmul.f32 %v4689, 0.0
        %v4784 = vmul.f32 %v4460, %v4691
        %v4785 = vmul.f32 %v4461, %v4693
        %v4786 = vmul.f32 %v4462, %v4695
        %v4787 = vmul.f32 %v4463, %v4697
        %v4788 = vmul.f32 %v4464, %v4699
        %v4789 = vmul.f32 %v4465, %v4701
        %v4790 = vmul.f32 %v4466, %v4703
        %v4791 = vmul.f32 %v4467, %v4705
        %v4792 = vmul.f32 %v4468, %v4707
        %v4793 = vmul.f32 %v4469, %v4709
        %v4794 = vmul.f32 %v4470, %v4711
        %v4795 = vmul.f32 %v4471, %v4713
        %v4796 = vmul.f32 %v4472, %v4715
        %v4797 = vmul.f32 %v4473, %v4717
        %v4798 = vmul.f32 %v4474, %v4719
        %v4799 = vmul.f32 %v4475, %v4721
        %v4800 = vmul.f32 %v4476, %v4723
        %v4801 = vmul.f32 %v4477, %v4725
        %v4802 = vmul.f32 %v4478, %v4727
        %v4803 = vmul.f32 %v4479, %v4729
        %v4804 = vmul.f32 %v4480, %v4731
        %v4805 = vmul.f32 %v4481, %v4733
        %v4806 = vmul.f32 %v4482, %v4735
        %v4807 = vmul.f32 %v4483, %v4737
        %v4808 = vmul.f32 %v4484, %v4739
        %v4809 = vmul.f32 %v4485, %v4741
        %v4810 = vmul.f32 %v4486, %v4743
        %v4811 = vmul.f32 %v4487, %v4745
        %v4812 = vmul.f32 %v4488, %v4747
        %v4813 = vmul.f32 %v4489, %v4746
        %v4814 = vld [vmem:[%s29] sm:$0xf]
        %v4815 = vld [vmem:[%s29 + $0x4] sm:$0xf]
        %v4816 = vld [vmem:[%s29 + $0x8] sm:$0xf]
        %v4817 = vld [vmem:[%s29 + $0xc] sm:$0xf]
        %v4818 = vpack.c.bf16 %v4782, %v4781
        %v4819 = vpack.c.bf16 %v4784, %v4783
        %v4820 = vpack.c.bf16 %v4786, %v4785
        %v4821 = vpack.c.bf16 %v4788, %v4787
        %v4822 = vpack.c.bf16 %v4790, %v4789
        %v4823 = vpack.c.bf16 %v4792, %v4791
        %v4824 = vpack.c.bf16 %v4794, %v4793
        %v4825 = vpack.c.bf16 %v4796, %v4795
        %v4826 = vpack.c.bf16 %v4798, %v4797
        %v4827 = vpack.c.bf16 %v4800, %v4799
        %v4828 = vpack.c.bf16 %v4802, %v4801
        %v4829 = vpack.c.bf16 %v4804, %v4803
        %v4830 = vpack.c.bf16 %v4806, %v4805
        %v4831 = vpack.c.bf16 %v4808, %v4807
        %v4832 = vpack.c.bf16 %v4810, %v4809
        %v4833 = vpack.c.bf16 %v4812, %v4811
        %v4834 = vpack.c.bf16 %v4813, %v4813
        %v4835 = vld [vmem:[%s29 + $0x10] sm:$0xf]
        %v4836 = vld [vmem:[%s29 + $0x14] sm:$0xf]
        %v4837 = vld [vmem:[%s29 + $0x18] sm:$0xf]
        %v4838 = vld [vmem:[%s29 + $0x1c] sm:$0xf]
        %v4839 = vpack.c.bf16 0.0, 0.0
        %v4840 = vpack.c.bf16 %v4461, %v4460
        %v4841 = vpack.c.bf16 %v4463, %v4462
        %v4842 = vpack.c.bf16 %v4465, %v4464
        %v4843 = vpack.c.bf16 %v4467, %v4466
        %v4844 = vpack.c.bf16 %v4469, %v4468
        %v4845 = vpack.c.bf16 %v4471, %v4470
        %v4846 = vpack.c.bf16 %v4473, %v4472
        %v4847 = vpack.c.bf16 %v4475, %v4474
        %v4848 = vpack.c.bf16 %v4477, %v4476
        %v4849 = vpack.c.bf16 %v4479, %v4478
        %v4850 = vpack.c.bf16 %v4481, %v4480
        %v4851 = vpack.c.bf16 %v4483, %v4482
        %v4852 = vpack.c.bf16 %v4485, %v4484
        %v4853 = vpack.c.bf16 %v4487, %v4486
        %v4854 = vpack.c.bf16 %v4489, %v4488
        %v4859 = vunpack.c.l.b16 %v4835
        %v4860 = vunpack.c.l.b16 %v4836
        %v4861 = vunpack.c.l.b16 %v4837
        %v4862 = vunpack.c.l.b16 %v4838
        %v4863 = vpack.c.b16 %v4860, %v4859
        %v4864 = vpack.c.b16 %v4862, %v4861
        %v4868 = vsel %vm1140, %v4839, 0
        %v4871 = vsel %vm1140, %v4840, 0
        %v4874 = vsel %vm1140, %v4841, 0
        %v4877 = vsel %vm1140, %v4842, 0
        %v4880 = vsel %vm1140, %v4843, 0
        %v4883 = vsel %vm1140, %v4844, 0
        %v4886 = vsel %vm1140, %v4845, 0
        %v4889 = vsel %vm1140, %v4846, 0
        %v4892 = vsel %vm1140, %v4847, 0
        %v4895 = vsel %vm1140, %v4848, 0
        %v4898 = vsel %vm1140, %v4849, 0
        %v4901 = vsel %vm1140, %v4850, 0
        %v4904 = vsel %vm1140, %v4851, 0
        %v4907 = vsel %vm1140, %v4852, 0
        %v4910 = vsel %vm1140, %v4853, 0
        %v4913 = vsel %vm1140, %v4854, 0
        %4915 = vmatpush.bf16.msra.mxu0 0
        %4916 = vmatpush.bf16.msra.mxu0 0
        %4917 = vmatpush.bf16.msra.mxu0 0
        %4918 = vmatpush.bf16.msra.mxu0 0
        %4919 = vmatpush.bf16.msra.mxu0 0
        %4920 = vmatpush.bf16.msra.mxu0 0
        %4921 = vmatpush.bf16.msra.mxu0 %v4864
        %4922 = vmatpush.bf16.msra.mxu0 %v4863
        %4923 = vmatmul.bf16.gmra.mxu0 %v4868
        %v4924 = vpop.f32.mrf.mxu0
        %v4925 = vadd.f32 0.0, %v4924
        %v4926 = vpop.f32.mrf.mxu0
        %v4927 = vadd.f32 0.0, %v4926
        %4928 = vmatmul.bf16.gmra.mxu0 %v4871
        %v4929 = vpop.f32.mrf.mxu0
        %v4930 = vadd.f32 0.0, %v4929
        %v4931 = vpop.f32.mrf.mxu0
        %v4932 = vadd.f32 0.0, %v4931
        %4933 = vmatmul.bf16.gmra.mxu0 %v4874
        %v4934 = vpop.f32.mrf.mxu0
        %v4935 = vadd.f32 0.0, %v4934
        %v4936 = vpop.f32.mrf.mxu0
        %v4937 = vadd.f32 0.0, %v4936
        %4938 = vmatmul.bf16.gmra.mxu0 %v4877
        %v4939 = vpop.f32.mrf.mxu0
        %v4940 = vadd.f32 0.0, %v4939
        %v4941 = vpop.f32.mrf.mxu0
        %v4942 = vadd.f32 0.0, %v4941
        %4943 = vmatmul.bf16.gmra.mxu0 %v4880
        %v4944 = vpop.f32.mrf.mxu0
        %v4945 = vadd.f32 0.0, %v4944
        %v4946 = vpop.f32.mrf.mxu0
        %v4947 = vadd.f32 0.0, %v4946
        %4948 = vmatmul.bf16.gmra.mxu0 %v4883
        %v4949 = vpop.f32.mrf.mxu0
        %v4950 = vadd.f32 0.0, %v4949
        %v4951 = vpop.f32.mrf.mxu0
        %v4952 = vadd.f32 0.0, %v4951
        %4953 = vmatmul.bf16.gmra.mxu0 %v4886
        %v4954 = vpop.f32.mrf.mxu0
        %v4955 = vadd.f32 0.0, %v4954
        %v4956 = vpop.f32.mrf.mxu0
        %v4957 = vadd.f32 0.0, %v4956
        %4958 = vmatmul.bf16.gmra.mxu0 %v4889
        %v4959 = vpop.f32.mrf.mxu0
        %v4960 = vadd.f32 0.0, %v4959
        %v4961 = vpop.f32.mrf.mxu0
        %v4962 = vadd.f32 0.0, %v4961
        %4963 = vmatmul.bf16.gmra.mxu0 %v4892
        %v4964 = vpop.f32.mrf.mxu0
        %v4965 = vadd.f32 0.0, %v4964
        %v4966 = vpop.f32.mrf.mxu0
        %v4967 = vadd.f32 0.0, %v4966
        %4968 = vmatmul.bf16.gmra.mxu0 %v4895
        %v4969 = vpop.f32.mrf.mxu0
        %v4970 = vadd.f32 0.0, %v4969
        %v4971 = vpop.f32.mrf.mxu0
        %v4972 = vadd.f32 0.0, %v4971
        %4973 = vmatmul.bf16.gmra.mxu0 %v4898
        %v4974 = vpop.f32.mrf.mxu0
        %v4975 = vadd.f32 0.0, %v4974
        %v4976 = vpop.f32.mrf.mxu0
        %v4977 = vadd.f32 0.0, %v4976
        %4978 = vmatmul.bf16.gmra.mxu0 %v4901
        %v4979 = vpop.f32.mrf.mxu0
        %v4980 = vadd.f32 0.0, %v4979
        %v4981 = vpop.f32.mrf.mxu0
        %v4982 = vadd.f32 0.0, %v4981
        %4983 = vmatmul.bf16.gmra.mxu0 %v4904
        %v4984 = vpop.f32.mrf.mxu0
        %v4985 = vadd.f32 0.0, %v4984
        %v4986 = vpop.f32.mrf.mxu0
        %v4987 = vadd.f32 0.0, %v4986
        %4988 = vmatmul.bf16.gmra.mxu0 %v4907
        %v4989 = vpop.f32.mrf.mxu0
        %v4990 = vadd.f32 0.0, %v4989
        %v4991 = vpop.f32.mrf.mxu0
        %v4992 = vadd.f32 0.0, %v4991
        %4993 = vmatmul.bf16.gmra.mxu0 %v4910
        %v4994 = vpop.f32.mrf.mxu0
        %v4995 = vadd.f32 0.0, %v4994
        %v4996 = vpop.f32.mrf.mxu0
        %v4997 = vadd.f32 0.0, %v4996
        %4998 = vmatmul.bf16.gmra.mxu0 %v4913
        %v4999 = vpop.f32.mrf.mxu0
        %v5000 = vadd.f32 0.0, %v4999
        %v5001 = vpop.f32.mrf.mxu0
        %v5002 = vadd.f32 0.0, %v5001
        %5003 = vdwg.mxu0
        %vm5004 = vsmask.f32 4352
        %v5006 = vshrl.u32 %v4818, 16
        %v5008 = vrot.slane %v5006, 3
        %v5009 = vshll.u32 %v4818, 16
        %v5011 = vrot.slane %v5009, 4
        %v5012 = vor.u32 %v5008, %v5011
        %v5014 = vshrl.u32 %v4819, 16
        %v5016 = vrot.slane %v5014, 3
        %v5017 = vshll.u32 %v4819, 16
        %v5019 = vrot.slane %v5017, 4
        %v5020 = vor.u32 %v5016, %v5019
        %v5021 = vsel %vm5004, %v5012, %v5020
        %v5023 = vshrl.u32 %v4820, 16
        %v5025 = vrot.slane %v5023, 3
        %v5026 = vshll.u32 %v4820, 16
        %v5028 = vrot.slane %v5026, 4
        %v5029 = vor.u32 %v5025, %v5028
        %v5030 = vsel %vm5004, %v5020, %v5029
        %v5032 = vshrl.u32 %v4821, 16
        %v5034 = vrot.slane %v5032, 3
        %v5035 = vshll.u32 %v4821, 16
        %v5037 = vrot.slane %v5035, 4
        %v5038 = vor.u32 %v5034, %v5037
        %v5039 = vsel %vm5004, %v5029, %v5038
        %v5041 = vshrl.u32 %v4822, 16
        %v5043 = vrot.slane %v5041, 3
        %v5044 = vshll.u32 %v4822, 16
        %v5046 = vrot.slane %v5044, 4
        %v5047 = vor.u32 %v5043, %v5046
        %v5048 = vsel %vm5004, %v5038, %v5047
        %v5050 = vshrl.u32 %v4823, 16
        %v5052 = vrot.slane %v5050, 3
        %v5053 = vshll.u32 %v4823, 16
        %v5055 = vrot.slane %v5053, 4
        %v5056 = vor.u32 %v5052, %v5055
        %v5057 = vsel %vm5004, %v5047, %v5056
        %v5059 = vshrl.u32 %v4824, 16
        %v5061 = vrot.slane %v5059, 3
        %v5062 = vshll.u32 %v4824, 16
        %v5064 = vrot.slane %v5062, 4
        %v5065 = vor.u32 %v5061, %v5064
        %v5066 = vsel %vm5004, %v5056, %v5065
        %v5068 = vshrl.u32 %v4825, 16
        %v5070 = vrot.slane %v5068, 3
        %v5071 = vshll.u32 %v4825, 16
        %v5073 = vrot.slane %v5071, 4
        %v5074 = vor.u32 %v5070, %v5073
        %v5075 = vsel %vm5004, %v5065, %v5074
        %v5077 = vshrl.u32 %v4826, 16
        %v5079 = vrot.slane %v5077, 3
        %v5080 = vshll.u32 %v4826, 16
        %v5082 = vrot.slane %v5080, 4
        %v5083 = vor.u32 %v5079, %v5082
        %v5084 = vsel %vm5004, %v5074, %v5083
        %v5086 = vshrl.u32 %v4827, 16
        %v5088 = vrot.slane %v5086, 3
        %v5089 = vshll.u32 %v4827, 16
        %v5091 = vrot.slane %v5089, 4
        %v5092 = vor.u32 %v5088, %v5091
        %v5093 = vsel %vm5004, %v5083, %v5092
        %v5095 = vshrl.u32 %v4828, 16
        %v5097 = vrot.slane %v5095, 3
        %v5098 = vshll.u32 %v4828, 16
        %v5100 = vrot.slane %v5098, 4
        %v5101 = vor.u32 %v5097, %v5100
        %v5102 = vsel %vm5004, %v5092, %v5101
        %v5104 = vshrl.u32 %v4829, 16
        %v5106 = vrot.slane %v5104, 3
        %v5107 = vshll.u32 %v4829, 16
        %v5109 = vrot.slane %v5107, 4
        %v5110 = vor.u32 %v5106, %v5109
        %v5111 = vsel %vm5004, %v5101, %v5110
        %v5113 = vshrl.u32 %v4830, 16
        %v5115 = vrot.slane %v5113, 3
        %v5116 = vshll.u32 %v4830, 16
        %v5118 = vrot.slane %v5116, 4
        %v5119 = vor.u32 %v5115, %v5118
        %v5120 = vsel %vm5004, %v5110, %v5119
        %v5122 = vshrl.u32 %v4831, 16
        %v5124 = vrot.slane %v5122, 3
        %v5125 = vshll.u32 %v4831, 16
        %v5127 = vrot.slane %v5125, 4
        %v5128 = vor.u32 %v5124, %v5127
        %v5129 = vsel %vm5004, %v5119, %v5128
        %v5131 = vshrl.u32 %v4832, 16
        %v5133 = vrot.slane %v5131, 3
        %v5134 = vshll.u32 %v4832, 16
        %v5136 = vrot.slane %v5134, 4
        %v5137 = vor.u32 %v5133, %v5136
        %v5138 = vsel %vm5004, %v5128, %v5137
        %v5140 = vshrl.u32 %v4833, 16
        %v5142 = vrot.slane %v5140, 3
        %v5143 = vshll.u32 %v4833, 16
        %v5145 = vrot.slane %v5143, 4
        %v5146 = vor.u32 %v5142, %v5145
        %v5147 = vsel %vm5004, %v5137, %v5146
        %v5149 = vshrl.u32 %v4834, 16
        %v5151 = vrot.slane %v5149, 3
        %v5152 = vshll.u32 %v4834, 16
        %v5154 = vrot.slane %v5152, 4
        %v5155 = vor.u32 %v5151, %v5154
        %v5156 = vsel %vm5004, %v5146, %v5155
        %v5161 = vunpack.c.l.b16 %v4814
        %v5162 = vunpack.c.l.b16 %v4815
        %v5163 = vunpack.c.l.b16 %v4816
        %v5164 = vunpack.c.l.b16 %v4817
        %v5165 = vpack.c.b16 %v5162, %v5161
        %v5166 = vpack.c.b16 %v5164, %v5163
        %v5170 = vsel %vm1140, %v5021, 0
        %v5173 = vsel %vm1140, %v5030, 0
        %v5176 = vsel %vm1140, %v5039, 0
        %v5179 = vsel %vm1140, %v5048, 0
        %v5182 = vsel %vm1140, %v5057, 0
        %v5185 = vsel %vm1140, %v5066, 0
        %v5188 = vsel %vm1140, %v5075, 0
        %v5191 = vsel %vm1140, %v5084, 0
        %v5194 = vsel %vm1140, %v5093, 0
        %v5197 = vsel %vm1140, %v5102, 0
        %v5200 = vsel %vm1140, %v5111, 0
        %v5203 = vsel %vm1140, %v5120, 0
        %v5206 = vsel %vm1140, %v5129, 0
        %v5209 = vsel %vm1140, %v5138, 0
        %v5212 = vsel %vm1140, %v5147, 0
        %v5215 = vsel %vm1140, %v5156, 0
        %5217 = vmatpush.bf16.msra.mxu0 0
        %5218 = vmatpush.bf16.msra.mxu0 0
        %5219 = vmatpush.bf16.msra.mxu0 0
        %5220 = vmatpush.bf16.msra.mxu0 0
        %5221 = vmatpush.bf16.msra.mxu0 0
        %5222 = vmatpush.bf16.msra.mxu0 0
        %5223 = vmatpush.bf16.msra.mxu0 %v5166
        %5224 = vmatpush.bf16.msra.mxu0 %v5165
        %5225 = vmatmul.bf16.gmra.mxu0 %v5170
        %v5226 = vpop.f32.mrf.mxu0
        %v5227 = vadd.f32 %v4925, %v5226
        %v5228 = vpop.f32.mrf.mxu0
        %v5229 = vadd.f32 %v4927, %v5228
        %5230 = vmatmul.bf16.gmra.mxu0 %v5173
        %v5231 = vpop.f32.mrf.mxu0
        %v5232 = vadd.f32 %v4930, %v5231
        %v5233 = vpop.f32.mrf.mxu0
        %v5234 = vadd.f32 %v4932, %v5233
        %5235 = vmatmul.bf16.gmra.mxu0 %v5176
        %v5236 = vpop.f32.mrf.mxu0
        %v5237 = vadd.f32 %v4935, %v5236
        %v5238 = vpop.f32.mrf.mxu0
        %v5239 = vadd.f32 %v4937, %v5238
        %5240 = vmatmul.bf16.gmra.mxu0 %v5179
        %v5241 = vpop.f32.mrf.mxu0
        %v5242 = vadd.f32 %v4940, %v5241
        %v5243 = vpop.f32.mrf.mxu0
        %v5244 = vadd.f32 %v4942, %v5243
        %5245 = vmatmul.bf16.gmra.mxu0 %v5182
        %v5246 = vpop.f32.mrf.mxu0
        %v5247 = vadd.f32 %v4945, %v5246
        %v5248 = vpop.f32.mrf.mxu0
        %v5249 = vadd.f32 %v4947, %v5248
        %5250 = vmatmul.bf16.gmra.mxu0 %v5185
        %v5251 = vpop.f32.mrf.mxu0
        %v5252 = vadd.f32 %v4950, %v5251
        %v5253 = vpop.f32.mrf.mxu0
        %v5254 = vadd.f32 %v4952, %v5253
        %5255 = vmatmul.bf16.gmra.mxu0 %v5188
        %v5256 = vpop.f32.mrf.mxu0
        %v5257 = vadd.f32 %v4955, %v5256
        %v5258 = vpop.f32.mrf.mxu0
        %v5259 = vadd.f32 %v4957, %v5258
        %5260 = vmatmul.bf16.gmra.mxu0 %v5191
        %v5261 = vpop.f32.mrf.mxu0
        %v5262 = vadd.f32 %v4960, %v5261
        %v5263 = vpop.f32.mrf.mxu0
        %v5264 = vadd.f32 %v4962, %v5263
        %5265 = vmatmul.bf16.gmra.mxu0 %v5194
        %v5266 = vpop.f32.mrf.mxu0
        %v5267 = vadd.f32 %v4965, %v5266
        %v5268 = vpop.f32.mrf.mxu0
        %v5269 = vadd.f32 %v4967, %v5268
        %5270 = vmatmul.bf16.gmra.mxu0 %v5197
        %v5271 = vpop.f32.mrf.mxu0
        %v5272 = vadd.f32 %v4970, %v5271
        %v5273 = vpop.f32.mrf.mxu0
        %v5274 = vadd.f32 %v4972, %v5273
        %5275 = vmatmul.bf16.gmra.mxu0 %v5200
        %v5276 = vpop.f32.mrf.mxu0
        %v5277 = vadd.f32 %v4975, %v5276
        %v5278 = vpop.f32.mrf.mxu0
        %v5279 = vadd.f32 %v4977, %v5278
        %5280 = vmatmul.bf16.gmra.mxu0 %v5203
        %v5281 = vpop.f32.mrf.mxu0
        %v5282 = vadd.f32 %v4980, %v5281
        %v5283 = vpop.f32.mrf.mxu0
        %v5284 = vadd.f32 %v4982, %v5283
        %5285 = vmatmul.bf16.gmra.mxu0 %v5206
        %v5286 = vpop.f32.mrf.mxu0
        %v5287 = vadd.f32 %v4985, %v5286
        %v5288 = vpop.f32.mrf.mxu0
        %v5289 = vadd.f32 %v4987, %v5288
        %5290 = vmatmul.bf16.gmra.mxu0 %v5209
        %v5291 = vpop.f32.mrf.mxu0
        %v5292 = vadd.f32 %v4990, %v5291
        %v5293 = vpop.f32.mrf.mxu0
        %v5294 = vadd.f32 %v4992, %v5293
        %5295 = vmatmul.bf16.gmra.mxu0 %v5212
        %v5296 = vpop.f32.mrf.mxu0
        %v5297 = vadd.f32 %v4995, %v5296
        %v5298 = vpop.f32.mrf.mxu0
        %v5299 = vadd.f32 %v4997, %v5298
        %5300 = vmatmul.bf16.gmra.mxu0 %v5215
        %v5301 = vpop.f32.mrf.mxu0
        %v5302 = vadd.f32 %v5000, %v5301
        %v5303 = vpop.f32.mrf.mxu0
        %v5304 = vadd.f32 %v5002, %v5303
        %5305 = vdwg.mxu0
        %5307 = vset.pattern.permute.xlu0 0
        %5308 = vperm.xlu0 %5307, %v4524
        %v5309 = vpop.permute.xlu0 %5308
        %5311 = vset.pattern.permute.xlu0 0
        %5312 = vperm.xlu0 %5311, %v4525
        %v5313 = vpop.permute.xlu0 %5312
        %5315 = vset.pattern.permute.xlu0 0
        %5316 = vperm.xlu0 %5315, %v4526
        %v5317 = vpop.permute.xlu0 %5316
        %5319 = vset.pattern.permute.xlu0 0
        %5320 = vperm.xlu0 %5319, %v4527
        %v5321 = vpop.permute.xlu0 %5320
        %5323 = vset.pattern.permute.xlu0 0
        %5324 = vperm.xlu0 %5323, %v4528
        %v5325 = vpop.permute.xlu0 %5324
        %5327 = vset.pattern.permute.xlu0 0
        %5328 = vperm.xlu0 %5327, %v4529
        %v5329 = vpop.permute.xlu0 %5328
        %5331 = vset.pattern.permute.xlu0 0
        %5332 = vperm.xlu0 %5331, %v4530
        %v5333 = vpop.permute.xlu0 %5332
        %5335 = vset.pattern.permute.xlu0 0
        %5336 = vperm.xlu0 %5335, %v4531
        %v5337 = vpop.permute.xlu0 %5336
        %5339 = vset.pattern.permute.xlu0 0
        %5340 = vperm.xlu0 %5339, %v4532
        %v5341 = vpop.permute.xlu0 %5340
        %5343 = vset.pattern.permute.xlu0 0
        %5344 = vperm.xlu0 %5343, %v4533
        %v5345 = vpop.permute.xlu0 %5344
        %5347 = vset.pattern.permute.xlu0 0
        %5348 = vperm.xlu0 %5347, %v4534
        %v5349 = vpop.permute.xlu0 %5348
        %5351 = vset.pattern.permute.xlu0 0
        %5352 = vperm.xlu0 %5351, %v4535
        %v5353 = vpop.permute.xlu0 %5352
        %5355 = vset.pattern.permute.xlu0 0
        %5356 = vperm.xlu0 %5355, %v4536
        %v5357 = vpop.permute.xlu0 %5356
        %5359 = vset.pattern.permute.xlu0 0
        %5360 = vperm.xlu0 %5359, %v4537
        %v5361 = vpop.permute.xlu0 %5360
        %5363 = vset.pattern.permute.xlu0 0
        %5364 = vperm.xlu0 %5363, %v4538
        %v5365 = vpop.permute.xlu0 %5364
        %5367 = vset.pattern.permute.xlu0 0
        %5368 = vperm.xlu0 %5367, %v4539
        %v5369 = vpop.permute.xlu0 %5368
        %5371 = vset.pattern.permute.xlu0 0
        %5372 = vperm.xlu0 %5371, %v4540
        %v5373 = vpop.permute.xlu0 %5372
        %5375 = vset.pattern.permute.xlu0 0
        %5376 = vperm.xlu0 %5375, %v4541
        %v5377 = vpop.permute.xlu0 %5376
        %5379 = vset.pattern.permute.xlu0 0
        %5380 = vperm.xlu0 %5379, %v4542
        %v5381 = vpop.permute.xlu0 %5380
        %5383 = vset.pattern.permute.xlu0 0
        %5384 = vperm.xlu0 %5383, %v4543
        %v5385 = vpop.permute.xlu0 %5384
        %5387 = vset.pattern.permute.xlu0 0
        %5388 = vperm.xlu0 %5387, %v4544
        %v5389 = vpop.permute.xlu0 %5388
        %5391 = vset.pattern.permute.xlu0 0
        %5392 = vperm.xlu0 %5391, %v4545
        %v5393 = vpop.permute.xlu0 %5392
        %5395 = vset.pattern.permute.xlu0 0
        %5396 = vperm.xlu0 %5395, %v4546
        %v5397 = vpop.permute.xlu0 %5396
        %5399 = vset.pattern.permute.xlu0 0
        %5400 = vperm.xlu0 %5399, %v4547
        %v5401 = vpop.permute.xlu0 %5400
        %5403 = vset.pattern.permute.xlu0 0
        %5404 = vperm.xlu0 %5403, %v4548
        %v5405 = vpop.permute.xlu0 %5404
        %5407 = vset.pattern.permute.xlu0 0
        %5408 = vperm.xlu0 %5407, %v4549
        %v5409 = vpop.permute.xlu0 %5408
        %5411 = vset.pattern.permute.xlu0 0
        %5412 = vperm.xlu0 %5411, %v4550
        %v5413 = vpop.permute.xlu0 %5412
        %5415 = vset.pattern.permute.xlu0 0
        %5416 = vperm.xlu0 %5415, %v4551
        %v5417 = vpop.permute.xlu0 %5416
        %5419 = vset.pattern.permute.xlu0 0
        %5420 = vperm.xlu0 %5419, %v4552
        %v5421 = vpop.permute.xlu0 %5420
        %5423 = vset.pattern.permute.xlu0 0
        %5424 = vperm.xlu0 %5423, %v4553
        %v5425 = vpop.permute.xlu0 %5424
        %5427 = vset.pattern.permute.xlu0 0
        %5428 = vperm.xlu0 %5427, %v4554
        %v5429 = vpop.permute.xlu0 %5428
        %5431 = vset.pattern.permute.xlu0 0
        %5432 = vperm.xlu0 %5431, %v4555
        %v5433 = vpop.permute.xlu0 %5432
        %vm5434 = vcmask 1040384
        %v5435 = vrot.slane %v5309, 7
        %v5436 = vrot.slane %v5313, 7
        %v5437 = vsel %vm5434, %v5435, %v5436
        %v5438 = vrot.slane %v5317, 7
        %v5439 = vsel %vm5434, %v5436, %v5438
        %v5440 = vrot.slane %v5321, 7
        %v5441 = vsel %vm5434, %v5438, %v5440
        %v5442 = vrot.slane %v5325, 7
        %v5443 = vsel %vm5434, %v5440, %v5442
        %v5444 = vrot.slane %v5329, 7
        %v5445 = vsel %vm5434, %v5442, %v5444
        %v5446 = vrot.slane %v5333, 7
        %v5447 = vsel %vm5434, %v5444, %v5446
        %v5448 = vrot.slane %v5337, 7
        %v5449 = vsel %vm5434, %v5446, %v5448
        %v5450 = vrot.slane %v5341, 7
        %v5451 = vsel %vm5434, %v5448, %v5450
        %v5452 = vrot.slane %v5345, 7
        %v5453 = vsel %vm5434, %v5450, %v5452
        %v5454 = vrot.slane %v5349, 7
        %v5455 = vsel %vm5434, %v5452, %v5454
        %v5456 = vrot.slane %v5353, 7
        %v5457 = vsel %vm5434, %v5454, %v5456
        %v5458 = vrot.slane %v5357, 7
        %v5459 = vsel %vm5434, %v5456, %v5458
        %v5460 = vrot.slane %v5361, 7
        %v5461 = vsel %vm5434, %v5458, %v5460
        %v5462 = vrot.slane %v5365, 7
        %v5463 = vsel %vm5434, %v5460, %v5462
        %v5464 = vrot.slane %v5369, 7
        %v5465 = vsel %vm5434, %v5462, %v5464
        %v5466 = vrot.slane %v5373, 7
        %v5467 = vsel %vm5434, %v5464, %v5466
        %v5468 = vrot.slane %v5377, 7
        %v5469 = vsel %vm5434, %v5466, %v5468
        %v5470 = vrot.slane %v5381, 7
        %v5471 = vsel %vm5434, %v5468, %v5470
        %v5472 = vrot.slane %v5385, 7
        %v5473 = vsel %vm5434, %v5470, %v5472
        %v5474 = vrot.slane %v5389, 7
        %v5475 = vsel %vm5434, %v5472, %v5474
        %v5476 = vrot.slane %v5393, 7
        %v5477 = vsel %vm5434, %v5474, %v5476
        %v5478 = vrot.slane %v5397, 7
        %v5479 = vsel %vm5434, %v5476, %v5478
        %v5480 = vrot.slane %v5401, 7
        %v5481 = vsel %vm5434, %v5478, %v5480
        %v5482 = vrot.slane %v5405, 7
        %v5483 = vsel %vm5434, %v5480, %v5482
        %v5484 = vrot.slane %v5409, 7
        %v5485 = vsel %vm5434, %v5482, %v5484
        %v5486 = vrot.slane %v5413, 7
        %v5487 = vsel %vm5434, %v5484, %v5486
        %v5488 = vrot.slane %v5417, 7
        %v5489 = vsel %vm5434, %v5486, %v5488
        %v5490 = vrot.slane %v5421, 7
        %v5491 = vsel %vm5434, %v5488, %v5490
        %v5492 = vrot.slane %v5425, 7
        %v5493 = vsel %vm5434, %v5490, %v5492
        %v5494 = vrot.slane %v5429, 7
        %v5495 = vsel %vm5434, %v5492, %v5494
        %v5496 = vrot.slane %v5433, 7
        %v5497 = vsel %vm5434, %v5494, %v5496
        %v5531 = vmul.f32 %v5435, 0.0
        %v5532 = vmul.f32 %v5437, 0.0
        %v5533 = vmul.f32 %v4460, %v5439
        %v5534 = vmul.f32 %v4461, %v5441
        %v5535 = vmul.f32 %v4462, %v5443
        %v5536 = vmul.f32 %v4463, %v5445
        %v5537 = vmul.f32 %v4464, %v5447
        %v5538 = vmul.f32 %v4465, %v5449
        %v5539 = vmul.f32 %v4466, %v5451
        %v5540 = vmul.f32 %v4467, %v5453
        %v5541 = vmul.f32 %v4468, %v5455
        %v5542 = vmul.f32 %v4469, %v5457
        %v5543 = vmul.f32 %v4470, %v5459
        %v5544 = vmul.f32 %v4471, %v5461
        %v5545 = vmul.f32 %v4472, %v5463
        %v5546 = vmul.f32 %v4473, %v5465
        %v5547 = vmul.f32 %v4474, %v5467
        %v5548 = vmul.f32 %v4475, %v5469
        %v5549 = vmul.f32 %v4476, %v5471
        %v5550 = vmul.f32 %v4477, %v5473
        %v5551 = vmul.f32 %v4478, %v5475
        %v5552 = vmul.f32 %v4479, %v5477
        %v5553 = vmul.f32 %v4480, %v5479
        %v5554 = vmul.f32 %v4481, %v5481
        %v5555 = vmul.f32 %v4482, %v5483
        %v5556 = vmul.f32 %v4483, %v5485
        %v5557 = vmul.f32 %v4484, %v5487
        %v5558 = vmul.f32 %v4485, %v5489
        %v5559 = vmul.f32 %v4486, %v5491
        %v5560 = vmul.f32 %v4487, %v5493
        %v5561 = vmul.f32 %v4488, %v5495
        %v5562 = vmul.f32 %v4489, %v5497
        %v5563 = vmul.f32 %v4490, %v5496
        %v5564 = vld [vmem:[%s29 + $0x20] sm:$0xf]
        %v5565 = vld [vmem:[%s29 + $0x24] sm:$0xf]
        %v5566 = vld [vmem:[%s29 + $0x28] sm:$0xf]
        %v5567 = vld [vmem:[%s29 + $0x2c] sm:$0xf]
        %v5568 = vpack.c.bf16 %v5532, %v5531
        %v5569 = vpack.c.bf16 %v5534, %v5533
        %v5570 = vpack.c.bf16 %v5536, %v5535
        %v5571 = vpack.c.bf16 %v5538, %v5537
        %v5572 = vpack.c.bf16 %v5540, %v5539
        %v5573 = vpack.c.bf16 %v5542, %v5541
        %v5574 = vpack.c.bf16 %v5544, %v5543
        %v5575 = vpack.c.bf16 %v5546, %v5545
        %v5576 = vpack.c.bf16 %v5548, %v5547
        %v5577 = vpack.c.bf16 %v5550, %v5549
        %v5578 = vpack.c.bf16 %v5552, %v5551
        %v5579 = vpack.c.bf16 %v5554, %v5553
        %v5580 = vpack.c.bf16 %v5556, %v5555
        %v5581 = vpack.c.bf16 %v5558, %v5557
        %v5582 = vpack.c.bf16 %v5560, %v5559
        %v5583 = vpack.c.bf16 %v5562, %v5561
        %v5584 = vpack.c.bf16 %v5563, %v5563
        %vm5585 = vsmask.f32 7424
        %v5587 = vshrl.u32 %v5568, 16
        %v5589 = vshll.u32 %v5568, 16
        %v5591 = vrot.slane %v5589, 1
        %v5592 = vor.u32 %v5587, %v5591
        %v5594 = vshll.u32 %v5569, 16
        %v5596 = vrot.slane %v5594, 1
        %v5597 = vsel %vm5585, %v5592, %v5596
        %v5598 = vshrl.u32 %v5569, 16
        %v5600 = vor.u32 %v5598, %v5596
        %v5602 = vshll.u32 %v5570, 16
        %v5604 = vrot.slane %v5602, 1
        %v5605 = vsel %vm5585, %v5600, %v5604
        %v5606 = vshrl.u32 %v5570, 16
        %v5608 = vor.u32 %v5606, %v5604
        %v5610 = vshll.u32 %v5571, 16
        %v5612 = vrot.slane %v5610, 1
        %v5613 = vsel %vm5585, %v5608, %v5612
        %v5614 = vshrl.u32 %v5571, 16
        %v5616 = vor.u32 %v5614, %v5612
        %v5618 = vshll.u32 %v5572, 16
        %v5620 = vrot.slane %v5618, 1
        %v5621 = vsel %vm5585, %v5616, %v5620
        %v5622 = vshrl.u32 %v5572, 16
        %v5624 = vor.u32 %v5622, %v5620
        %v5626 = vshll.u32 %v5573, 16
        %v5628 = vrot.slane %v5626, 1
        %v5629 = vsel %vm5585, %v5624, %v5628
        %v5630 = vshrl.u32 %v5573, 16
        %v5632 = vor.u32 %v5630, %v5628
        %v5634 = vshll.u32 %v5574, 16
        %v5636 = vrot.slane %v5634, 1
        %v5637 = vsel %vm5585, %v5632, %v5636
        %v5638 = vshrl.u32 %v5574, 16
        %v5640 = vor.u32 %v5638, %v5636
        %v5642 = vshll.u32 %v5575, 16
        %v5644 = vrot.slane %v5642, 1
        %v5645 = vsel %vm5585, %v5640, %v5644
        %v5646 = vshrl.u32 %v5575, 16
        %v5648 = vor.u32 %v5646, %v5644
        %v5650 = vshll.u32 %v5576, 16
        %v5652 = vrot.slane %v5650, 1
        %v5653 = vsel %vm5585, %v5648, %v5652
        %v5654 = vshrl.u32 %v5576, 16
        %v5656 = vor.u32 %v5654, %v5652
        %v5658 = vshll.u32 %v5577, 16
        %v5660 = vrot.slane %v5658, 1
        %v5661 = vsel %vm5585, %v5656, %v5660
        %v5662 = vshrl.u32 %v5577, 16
        %v5664 = vor.u32 %v5662, %v5660
        %v5666 = vshll.u32 %v5578, 16
        %v5668 = vrot.slane %v5666, 1
        %v5669 = vsel %vm5585, %v5664, %v5668
        %v5670 = vshrl.u32 %v5578, 16
        %v5672 = vor.u32 %v5670, %v5668
        %v5674 = vshll.u32 %v5579, 16
        %v5676 = vrot.slane %v5674, 1
        %v5677 = vsel %vm5585, %v5672, %v5676
        %v5678 = vshrl.u32 %v5579, 16
        %v5680 = vor.u32 %v5678, %v5676
        %v5682 = vshll.u32 %v5580, 16
        %v5684 = vrot.slane %v5682, 1
        %v5685 = vsel %vm5585, %v5680, %v5684
        %v5686 = vshrl.u32 %v5580, 16
        %v5688 = vor.u32 %v5686, %v5684
        %v5690 = vshll.u32 %v5581, 16
        %v5692 = vrot.slane %v5690, 1
        %v5693 = vsel %vm5585, %v5688, %v5692
        %v5694 = vshrl.u32 %v5581, 16
        %v5696 = vor.u32 %v5694, %v5692
        %v5698 = vshll.u32 %v5582, 16
        %v5700 = vrot.slane %v5698, 1
        %v5701 = vsel %vm5585, %v5696, %v5700
        %v5702 = vshrl.u32 %v5582, 16
        %v5704 = vor.u32 %v5702, %v5700
        %v5706 = vshll.u32 %v5583, 16
        %v5708 = vrot.slane %v5706, 1
        %v5709 = vsel %vm5585, %v5704, %v5708
        %v5710 = vshrl.u32 %v5583, 16
        %v5712 = vor.u32 %v5710, %v5708
        %v5714 = vshll.u32 %v5584, 16
        %v5716 = vrot.slane %v5714, 1
        %v5717 = vsel %vm5585, %v5712, %v5716
        %v5722 = vunpack.c.l.b16 %v5564
        %v5723 = vunpack.c.l.b16 %v5565
        %v5724 = vunpack.c.l.b16 %v5566
        %v5725 = vunpack.c.l.b16 %v5567
        %v5726 = vpack.c.b16 %v5723, %v5722
        %v5727 = vpack.c.b16 %v5725, %v5724
        %v5731 = vsel %vm1140, %v5597, 0
        %v5734 = vsel %vm1140, %v5605, 0
        %v5737 = vsel %vm1140, %v5613, 0
        %v5740 = vsel %vm1140, %v5621, 0
        %v5743 = vsel %vm1140, %v5629, 0
        %v5746 = vsel %vm1140, %v5637, 0
        %v5749 = vsel %vm1140, %v5645, 0
        %v5752 = vsel %vm1140, %v5653, 0
        %v5755 = vsel %vm1140, %v5661, 0
        %v5758 = vsel %vm1140, %v5669, 0
        %v5761 = vsel %vm1140, %v5677, 0
        %v5764 = vsel %vm1140, %v5685, 0
        %v5767 = vsel %vm1140, %v5693, 0
        %v5770 = vsel %vm1140, %v5701, 0
        %v5773 = vsel %vm1140, %v5709, 0
        %v5776 = vsel %vm1140, %v5717, 0
        %5778 = vmatpush.bf16.msra.mxu0 0
        %5779 = vmatpush.bf16.msra.mxu0 0
        %5780 = vmatpush.bf16.msra.mxu0 0
        %5781 = vmatpush.bf16.msra.mxu0 0
        %5782 = vmatpush.bf16.msra.mxu0 0
        %5783 = vmatpush.bf16.msra.mxu0 0
        %5784 = vmatpush.bf16.msra.mxu0 %v5727
        %5785 = vmatpush.bf16.msra.mxu0 %v5726
        %5786 = vmatmul.bf16.gmra.mxu0 %v5731
        %v5787 = vpop.f32.mrf.mxu0
        %v5788 = vadd.f32 0.0, %v5787
        %v5789 = vpop.f32.mrf.mxu0
        %v5790 = vadd.f32 0.0, %v5789
        %5791 = vmatmul.bf16.gmra.mxu0 %v5734
        %v5792 = vpop.f32.mrf.mxu0
        %v5793 = vadd.f32 0.0, %v5792
        %v5794 = vpop.f32.mrf.mxu0
        %v5795 = vadd.f32 0.0, %v5794
        %5796 = vmatmul.bf16.gmra.mxu0 %v5737
        %v5797 = vpop.f32.mrf.mxu0
        %v5798 = vadd.f32 0.0, %v5797
        %v5799 = vpop.f32.mrf.mxu0
        %v5800 = vadd.f32 0.0, %v5799
        %5801 = vmatmul.bf16.gmra.mxu0 %v5740
        %v5802 = vpop.f32.mrf.mxu0
        %v5803 = vadd.f32 0.0, %v5802
        %v5804 = vpop.f32.mrf.mxu0
        %v5805 = vadd.f32 0.0, %v5804
        %5806 = vmatmul.bf16.gmra.mxu0 %v5743
        %v5807 = vpop.f32.mrf.mxu0
        %v5808 = vadd.f32 0.0, %v5807
        %v5809 = vpop.f32.mrf.mxu0
        %v5810 = vadd.f32 0.0, %v5809
        %5811 = vmatmul.bf16.gmra.mxu0 %v5746
        %v5812 = vpop.f32.mrf.mxu0
        %v5813 = vadd.f32 0.0, %v5812
        %v5814 = vpop.f32.mrf.mxu0
        %v5815 = vadd.f32 0.0, %v5814
        %5816 = vmatmul.bf16.gmra.mxu0 %v5749
        %v5817 = vpop.f32.mrf.mxu0
        %v5818 = vadd.f32 0.0, %v5817
        %v5819 = vpop.f32.mrf.mxu0
        %v5820 = vadd.f32 0.0, %v5819
        %5821 = vmatmul.bf16.gmra.mxu0 %v5752
        %v5822 = vpop.f32.mrf.mxu0
        %v5823 = vadd.f32 0.0, %v5822
        %v5824 = vpop.f32.mrf.mxu0
        %v5825 = vadd.f32 0.0, %v5824
        %5826 = vmatmul.bf16.gmra.mxu0 %v5755
        %v5827 = vpop.f32.mrf.mxu0
        %v5828 = vadd.f32 0.0, %v5827
        %v5829 = vpop.f32.mrf.mxu0
        %v5830 = vadd.f32 0.0, %v5829
        %5831 = vmatmul.bf16.gmra.mxu0 %v5758
        %v5832 = vpop.f32.mrf.mxu0
        %v5833 = vadd.f32 0.0, %v5832
        %v5834 = vpop.f32.mrf.mxu0
        %v5835 = vadd.f32 0.0, %v5834
        %5836 = vmatmul.bf16.gmra.mxu0 %v5761
        %v5837 = vpop.f32.mrf.mxu0
        %v5838 = vadd.f32 0.0, %v5837
        %v5839 = vpop.f32.mrf.mxu0
        %v5840 = vadd.f32 0.0, %v5839
        %5841 = vmatmul.bf16.gmra.mxu0 %v5764
        %v5842 = vpop.f32.mrf.mxu0
        %v5843 = vadd.f32 0.0, %v5842
        %v5844 = vpop.f32.mrf.mxu0
        %v5845 = vadd.f32 0.0, %v5844
        %5846 = vmatmul.bf16.gmra.mxu0 %v5767
        %v5847 = vpop.f32.mrf.mxu0
        %v5848 = vadd.f32 0.0, %v5847
        %v5849 = vpop.f32.mrf.mxu0
        %v5850 = vadd.f32 0.0, %v5849
        %5851 = vmatmul.bf16.gmra.mxu0 %v5770
        %v5852 = vpop.f32.mrf.mxu0
        %v5853 = vadd.f32 0.0, %v5852
        %v5854 = vpop.f32.mrf.mxu0
        %v5855 = vadd.f32 0.0, %v5854
        %5856 = vmatmul.bf16.gmra.mxu0 %v5773
        %v5857 = vpop.f32.mrf.mxu0
        %v5858 = vadd.f32 0.0, %v5857
        %v5859 = vpop.f32.mrf.mxu0
        %v5860 = vadd.f32 0.0, %v5859
        %5861 = vmatmul.bf16.gmra.mxu0 %v5776
        %v5862 = vpop.f32.mrf.mxu0
        %v5863 = vadd.f32 0.0, %v5862
        %v5864 = vpop.f32.mrf.mxu0
        %v5865 = vadd.f32 0.0, %v5864
        %5866 = vdwg.mxu0
        %v5867 = vadd.f32 %v5227, %v5788
        %v5868 = vadd.f32 %v5229, %v5790
        %v5869 = vadd.f32 %v5232, %v5793
        %v5870 = vadd.f32 %v5234, %v5795
        %v5871 = vadd.f32 %v5237, %v5798
        %v5872 = vadd.f32 %v5239, %v5800
        %v5873 = vadd.f32 %v5242, %v5803
        %v5874 = vadd.f32 %v5244, %v5805
        %v5875 = vadd.f32 %v5247, %v5808
        %v5876 = vadd.f32 %v5249, %v5810
        %v5877 = vadd.f32 %v5252, %v5813
        %v5878 = vadd.f32 %v5254, %v5815
        %v5879 = vadd.f32 %v5257, %v5818
        %v5880 = vadd.f32 %v5259, %v5820
        %v5881 = vadd.f32 %v5262, %v5823
        %v5882 = vadd.f32 %v5264, %v5825
        %v5883 = vadd.f32 %v5267, %v5828
        %v5884 = vadd.f32 %v5269, %v5830
        %v5885 = vadd.f32 %v5272, %v5833
        %v5886 = vadd.f32 %v5274, %v5835
        %v5887 = vadd.f32 %v5277, %v5838
        %v5888 = vadd.f32 %v5279, %v5840
        %v5889 = vadd.f32 %v5282, %v5843
        %v5890 = vadd.f32 %v5284, %v5845
        %v5891 = vadd.f32 %v5287, %v5848
        %v5892 = vadd.f32 %v5289, %v5850
        %v5893 = vadd.f32 %v5292, %v5853
        %v5894 = vadd.f32 %v5294, %v5855
        %v5895 = vadd.f32 %v5297, %v5858
        %v5896 = vadd.f32 %v5299, %v5860
        %v5897 = vadd.f32 %v5302, %v5863
        %v5898 = vadd.f32 %v5304, %v5865
        %v5899 = vmul.f32 %v4460, %v4687
        %v5900 = vmul.f32 %v4461, %v4689
        %v5901 = vmul.f32 %v4462, %v4691
        %v5902 = vmul.f32 %v4463, %v4693
        %v5903 = vmul.f32 %v4464, %v4695
        %v5904 = vmul.f32 %v4465, %v4697
        %v5905 = vmul.f32 %v4466, %v4699
        %v5906 = vmul.f32 %v4467, %v4701
        %v5907 = vmul.f32 %v4468, %v4703
        %v5908 = vmul.f32 %v4469, %v4705
        %v5909 = vmul.f32 %v4470, %v4707
        %v5910 = vmul.f32 %v4471, %v4709
        %v5911 = vmul.f32 %v4472, %v4711
        %v5912 = vmul.f32 %v4473, %v4713
        %v5913 = vmul.f32 %v4474, %v4715
        %v5914 = vmul.f32 %v4475, %v4717
        %v5915 = vmul.f32 %v4476, %v4719
        %v5916 = vmul.f32 %v4477, %v4721
        %v5917 = vmul.f32 %v4478, %v4723
        %v5918 = vmul.f32 %v4479, %v4725
        %v5919 = vmul.f32 %v4480, %v4727
        %v5920 = vmul.f32 %v4481, %v4729
        %v5921 = vmul.f32 %v4482, %v4731
        %v5922 = vmul.f32 %v4483, %v4733
        %v5923 = vmul.f32 %v4484, %v4735
        %v5924 = vmul.f32 %v4485, %v4737
        %v5925 = vmul.f32 %v4486, %v4739
        %v5926 = vmul.f32 %v4487, %v4741
        %v5927 = vmul.f32 %v4488, %v4743
        %v5928 = vmul.f32 %v4489, %v4745
        %v5929 = vmul.f32 %v4490, %v4747
        %v5930 = vmul.f32 %v4491, %v4746
        %v5931 = vld [vmem:[%s29 + $0x30] sm:$0xf]
        %v5932 = vld [vmem:[%s29 + $0x34] sm:$0xf]
        %v5933 = vld [vmem:[%s29 + $0x38] sm:$0xf]
        %v5934 = vld [vmem:[%s29 + $0x3c] sm:$0xf]
        %v5935 = vpack.c.bf16 %v5899, %v4781
        %v5936 = vpack.c.bf16 %v5901, %v5900
        %v5937 = vpack.c.bf16 %v5903, %v5902
        %v5938 = vpack.c.bf16 %v5905, %v5904
        %v5939 = vpack.c.bf16 %v5907, %v5906
        %v5940 = vpack.c.bf16 %v5909, %v5908
        %v5941 = vpack.c.bf16 %v5911, %v5910
        %v5942 = vpack.c.bf16 %v5913, %v5912
        %v5943 = vpack.c.bf16 %v5915, %v5914
        %v5944 = vpack.c.bf16 %v5917, %v5916
        %v5945 = vpack.c.bf16 %v5919, %v5918
        %v5946 = vpack.c.bf16 %v5921, %v5920
        %v5947 = vpack.c.bf16 %v5923, %v5922
        %v5948 = vpack.c.bf16 %v5925, %v5924
        %v5949 = vpack.c.bf16 %v5927, %v5926
        %v5950 = vpack.c.bf16 %v5929, %v5928
        %v5951 = vpack.c.bf16 %v5930, %v5930
        %v5953 = vshrl.u32 %v5935, 16
        %v5955 = vrot.slane %v5953, 3
        %v5956 = vshll.u32 %v5935, 16
        %v5958 = vrot.slane %v5956, 4
        %v5959 = vor.u32 %v5955, %v5958
        %v5961 = vshrl.u32 %v5936, 16
        %v5963 = vrot.slane %v5961, 3
        %v5964 = vshll.u32 %v5936, 16
        %v5966 = vrot.slane %v5964, 4
        %v5967 = vor.u32 %v5963, %v5966
        %v5968 = vsel %vm5004, %v5959, %v5967
        %v5970 = vshrl.u32 %v5937, 16
        %v5972 = vrot.slane %v5970, 3
        %v5973 = vshll.u32 %v5937, 16
        %v5975 = vrot.slane %v5973, 4
        %v5976 = vor.u32 %v5972, %v5975
        %v5977 = vsel %vm5004, %v5967, %v5976
        %v5979 = vshrl.u32 %v5938, 16
        %v5981 = vrot.slane %v5979, 3
        %v5982 = vshll.u32 %v5938, 16
        %v5984 = vrot.slane %v5982, 4
        %v5985 = vor.u32 %v5981, %v5984
        %v5986 = vsel %vm5004, %v5976, %v5985
        %v5988 = vshrl.u32 %v5939, 16
        %v5990 = vrot.slane %v5988, 3
        %v5991 = vshll.u32 %v5939, 16
        %v5993 = vrot.slane %v5991, 4
        %v5994 = vor.u32 %v5990, %v5993
        %v5995 = vsel %vm5004, %v5985, %v5994
        %v5997 = vshrl.u32 %v5940, 16
        %v5999 = vrot.slane %v5997, 3
        %v6000 = vshll.u32 %v5940, 16
        %v6002 = vrot.slane %v6000, 4
        %v6003 = vor.u32 %v5999, %v6002
        %v6004 = vsel %vm5004, %v5994, %v6003
        %v6006 = vshrl.u32 %v5941, 16
        %v6008 = vrot.slane %v6006, 3
        %v6009 = vshll.u32 %v5941, 16
        %v6011 = vrot.slane %v6009, 4
        %v6012 = vor.u32 %v6008, %v6011
        %v6013 = vsel %vm5004, %v6003, %v6012
        %v6015 = vshrl.u32 %v5942, 16
        %v6017 = vrot.slane %v6015, 3
        %v6018 = vshll.u32 %v5942, 16
        %v6020 = vrot.slane %v6018, 4
        %v6021 = vor.u32 %v6017, %v6020
        %v6022 = vsel %vm5004, %v6012, %v6021
        %v6024 = vshrl.u32 %v5943, 16
        %v6026 = vrot.slane %v6024, 3
        %v6027 = vshll.u32 %v5943, 16
        %v6029 = vrot.slane %v6027, 4
        %v6030 = vor.u32 %v6026, %v6029
        %v6031 = vsel %vm5004, %v6021, %v6030
        %v6033 = vshrl.u32 %v5944, 16
        %v6035 = vrot.slane %v6033, 3
        %v6036 = vshll.u32 %v5944, 16
        %v6038 = vrot.slane %v6036, 4
        %v6039 = vor.u32 %v6035, %v6038
        %v6040 = vsel %vm5004, %v6030, %v6039
        %v6042 = vshrl.u32 %v5945, 16
        %v6044 = vrot.slane %v6042, 3
        %v6045 = vshll.u32 %v5945, 16
        %v6047 = vrot.slane %v6045, 4
        %v6048 = vor.u32 %v6044, %v6047
        %v6049 = vsel %vm5004, %v6039, %v6048
        %v6051 = vshrl.u32 %v5946, 16
        %v6053 = vrot.slane %v6051, 3
        %v6054 = vshll.u32 %v5946, 16
        %v6056 = vrot.slane %v6054, 4
        %v6057 = vor.u32 %v6053, %v6056
        %v6058 = vsel %vm5004, %v6048, %v6057
        %v6060 = vshrl.u32 %v5947, 16
        %v6062 = vrot.slane %v6060, 3
        %v6063 = vshll.u32 %v5947, 16
        %v6065 = vrot.slane %v6063, 4
        %v6066 = vor.u32 %v6062, %v6065
        %v6067 = vsel %vm5004, %v6057, %v6066
        %v6069 = vshrl.u32 %v5948, 16
        %v6071 = vrot.slane %v6069, 3
        %v6072 = vshll.u32 %v5948, 16
        %v6074 = vrot.slane %v6072, 4
        %v6075 = vor.u32 %v6071, %v6074
        %v6076 = vsel %vm5004, %v6066, %v6075
        %v6078 = vshrl.u32 %v5949, 16
        %v6080 = vrot.slane %v6078, 3
        %v6081 = vshll.u32 %v5949, 16
        %v6083 = vrot.slane %v6081, 4
        %v6084 = vor.u32 %v6080, %v6083
        %v6085 = vsel %vm5004, %v6075, %v6084
        %v6087 = vshrl.u32 %v5950, 16
        %v6089 = vrot.slane %v6087, 3
        %v6090 = vshll.u32 %v5950, 16
        %v6092 = vrot.slane %v6090, 4
        %v6093 = vor.u32 %v6089, %v6092
        %v6094 = vsel %vm5004, %v6084, %v6093
        %v6096 = vshrl.u32 %v5951, 16
        %v6098 = vrot.slane %v6096, 3
        %v6099 = vshll.u32 %v5951, 16
        %v6101 = vrot.slane %v6099, 4
        %v6102 = vor.u32 %v6098, %v6101
        %v6103 = vsel %vm5004, %v6093, %v6102
        %v6108 = vunpack.c.l.b16 %v5931
        %v6109 = vunpack.c.l.b16 %v5932
        %v6110 = vunpack.c.l.b16 %v5933
        %v6111 = vunpack.c.l.b16 %v5934
        %v6112 = vpack.c.b16 %v6109, %v6108
        %v6113 = vpack.c.b16 %v6111, %v6110
        %v6117 = vsel %vm1140, %v5968, 0
        %v6120 = vsel %vm1140, %v5977, 0
        %v6123 = vsel %vm1140, %v5986, 0
        %v6126 = vsel %vm1140, %v5995, 0
        %v6129 = vsel %vm1140, %v6004, 0
        %v6132 = vsel %vm1140, %v6013, 0
        %v6135 = vsel %vm1140, %v6022, 0
        %v6138 = vsel %vm1140, %v6031, 0
        %v6141 = vsel %vm1140, %v6040, 0
        %v6144 = vsel %vm1140, %v6049, 0
        %v6147 = vsel %vm1140, %v6058, 0
        %v6150 = vsel %vm1140, %v6067, 0
        %v6153 = vsel %vm1140, %v6076, 0
        %v6156 = vsel %vm1140, %v6085, 0
        %v6159 = vsel %vm1140, %v6094, 0
        %v6162 = vsel %vm1140, %v6103, 0
        %6164 = vmatpush.bf16.msra.mxu0 0
        %6165 = vmatpush.bf16.msra.mxu0 0
        %6166 = vmatpush.bf16.msra.mxu0 0
        %6167 = vmatpush.bf16.msra.mxu0 0
        %6168 = vmatpush.bf16.msra.mxu0 0
        %6169 = vmatpush.bf16.msra.mxu0 0
        %6170 = vmatpush.bf16.msra.mxu0 %v6113
        %6171 = vmatpush.bf16.msra.mxu0 %v6112
        %6172 = vmatmul.bf16.gmra.mxu0 %v6117
        %v6173 = vpop.f32.mrf.mxu0
        %v6174 = vadd.f32 0.0, %v6173
        %v6175 = vpop.f32.mrf.mxu0
        %v6176 = vadd.f32 0.0, %v6175
        %6177 = vmatmul.bf16.gmra.mxu0 %v6120
        %v6178 = vpop.f32.mrf.mxu0
        %v6179 = vadd.f32 0.0, %v6178
        %v6180 = vpop.f32.mrf.mxu0
        %v6181 = vadd.f32 0.0, %v6180
        %6182 = vmatmul.bf16.gmra.mxu0 %v6123
        %v6183 = vpop.f32.mrf.mxu0
        %v6184 = vadd.f32 0.0, %v6183
        %v6185 = vpop.f32.mrf.mxu0
        %v6186 = vadd.f32 0.0, %v6185
        %6187 = vmatmul.bf16.gmra.mxu0 %v6126
        %v6188 = vpop.f32.mrf.mxu0
        %v6189 = vadd.f32 0.0, %v6188
        %v6190 = vpop.f32.mrf.mxu0
        %v6191 = vadd.f32 0.0, %v6190
        %6192 = vmatmul.bf16.gmra.mxu0 %v6129
        %v6193 = vpop.f32.mrf.mxu0
        %v6194 = vadd.f32 0.0, %v6193
        %v6195 = vpop.f32.mrf.mxu0
        %v6196 = vadd.f32 0.0, %v6195
        %6197 = vmatmul.bf16.gmra.mxu0 %v6132
        %v6198 = vpop.f32.mrf.mxu0
        %v6199 = vadd.f32 0.0, %v6198
        %v6200 = vpop.f32.mrf.mxu0
        %v6201 = vadd.f32 0.0, %v6200
        %6202 = vmatmul.bf16.gmra.mxu0 %v6135
        %v6203 = vpop.f32.mrf.mxu0
        %v6204 = vadd.f32 0.0, %v6203
        %v6205 = vpop.f32.mrf.mxu0
        %v6206 = vadd.f32 0.0, %v6205
        %6207 = vmatmul.bf16.gmra.mxu0 %v6138
        %v6208 = vpop.f32.mrf.mxu0
        %v6209 = vadd.f32 0.0, %v6208
        %v6210 = vpop.f32.mrf.mxu0
        %v6211 = vadd.f32 0.0, %v6210
        %6212 = vmatmul.bf16.gmra.mxu0 %v6141
        %v6213 = vpop.f32.mrf.mxu0
        %v6214 = vadd.f32 0.0, %v6213
        %v6215 = vpop.f32.mrf.mxu0
        %v6216 = vadd.f32 0.0, %v6215
        %6217 = vmatmul.bf16.gmra.mxu0 %v6144
        %v6218 = vpop.f32.mrf.mxu0
        %v6219 = vadd.f32 0.0, %v6218
        %v6220 = vpop.f32.mrf.mxu0
        %v6221 = vadd.f32 0.0, %v6220
        %6222 = vmatmul.bf16.gmra.mxu0 %v6147
        %v6223 = vpop.f32.mrf.mxu0
        %v6224 = vadd.f32 0.0, %v6223
        %v6225 = vpop.f32.mrf.mxu0
        %v6226 = vadd.f32 0.0, %v6225
        %6227 = vmatmul.bf16.gmra.mxu0 %v6150
        %v6228 = vpop.f32.mrf.mxu0
        %v6229 = vadd.f32 0.0, %v6228
        %v6230 = vpop.f32.mrf.mxu0
        %v6231 = vadd.f32 0.0, %v6230
        %6232 = vmatmul.bf16.gmra.mxu0 %v6153
        %v6233 = vpop.f32.mrf.mxu0
        %v6234 = vadd.f32 0.0, %v6233
        %v6235 = vpop.f32.mrf.mxu0
        %v6236 = vadd.f32 0.0, %v6235
        %6237 = vmatmul.bf16.gmra.mxu0 %v6156
        %v6238 = vpop.f32.mrf.mxu0
        %v6239 = vadd.f32 0.0, %v6238
        %v6240 = vpop.f32.mrf.mxu0
        %v6241 = vadd.f32 0.0, %v6240
        %6242 = vmatmul.bf16.gmra.mxu0 %v6159
        %v6243 = vpop.f32.mrf.mxu0
        %v6244 = vadd.f32 0.0, %v6243
        %v6245 = vpop.f32.mrf.mxu0
        %v6246 = vadd.f32 0.0, %v6245
        %6247 = vmatmul.bf16.gmra.mxu0 %v6162
        %v6248 = vpop.f32.mrf.mxu0
        %v6249 = vadd.f32 0.0, %v6248
        %v6250 = vpop.f32.mrf.mxu0
        %v6251 = vadd.f32 0.0, %v6250
        %6252 = vdwg.mxu0
        %v6253 = vadd.f32 %v5867, %v6174
        %v6254 = vadd.f32 %v5868, %v6176
        %v6255 = vadd.f32 %v5869, %v6179
        %v6256 = vadd.f32 %v5870, %v6181
        %v6257 = vadd.f32 %v5871, %v6184
        %v6258 = vadd.f32 %v5872, %v6186
        %v6259 = vadd.f32 %v5873, %v6189
        %v6260 = vadd.f32 %v5874, %v6191
        %v6261 = vadd.f32 %v5875, %v6194
        %v6262 = vadd.f32 %v5876, %v6196
        %v6263 = vadd.f32 %v5877, %v6199
        %v6264 = vadd.f32 %v5878, %v6201
        %v6265 = vadd.f32 %v5879, %v6204
        %v6266 = vadd.f32 %v5880, %v6206
        %v6267 = vadd.f32 %v5881, %v6209
        %v6268 = vadd.f32 %v5882, %v6211
        %v6269 = vadd.f32 %v5883, %v6214
        %v6270 = vadd.f32 %v5884, %v6216
        %v6271 = vadd.f32 %v5885, %v6219
        %v6272 = vadd.f32 %v5886, %v6221
        %v6273 = vadd.f32 %v5887, %v6224
        %v6274 = vadd.f32 %v5888, %v6226
        %v6275 = vadd.f32 %v5889, %v6229
        %v6276 = vadd.f32 %v5890, %v6231
        %v6277 = vadd.f32 %v5891, %v6234
        %v6278 = vadd.f32 %v5892, %v6236
        %v6279 = vadd.f32 %v5893, %v6239
        %v6280 = vadd.f32 %v5894, %v6241
        %v6281 = vadd.f32 %v5895, %v6244
        %v6282 = vadd.f32 %v5896, %v6246
        %v6283 = vadd.f32 %v5897, %v6249
        %v6284 = vadd.f32 %v5898, %v6251
        %v6285 = vld [vmem:[%s29 + $0x40] sm:$0xf]
        %v6286 = vld [vmem:[%s29 + $0x44] sm:$0xf]
        %v6287 = vld [vmem:[%s29 + $0x48] sm:$0xf]
        %v6288 = vld [vmem:[%s29 + $0x4c] sm:$0xf]
        %v6289 = vpack.c.bf16 %v4491, %v4490
        %v6294 = vunpack.c.l.b16 %v6285
        %v6295 = vunpack.c.l.b16 %v6286
        %v6296 = vunpack.c.l.b16 %v6287
        %v6297 = vunpack.c.l.b16 %v6288
        %v6298 = vpack.c.b16 %v6295, %v6294
        %v6299 = vpack.c.b16 %v6297, %v6296
        %v6303 = vsel %vm1140, %v6289, 0
        %6305 = vmatpush.bf16.msra.mxu0 0
        %6306 = vmatpush.bf16.msra.mxu0 0
        %6307 = vmatpush.bf16.msra.mxu0 0
        %6308 = vmatpush.bf16.msra.mxu0 0
        %6309 = vmatpush.bf16.msra.mxu0 0
        %6310 = vmatpush.bf16.msra.mxu0 0
        %6311 = vmatpush.bf16.msra.mxu0 %v6299
        %6312 = vmatpush.bf16.msra.mxu0 %v6298
        %6313 = vmatmul.bf16.gmra.mxu0 %v4871
        %v6314 = vpop.f32.mrf.mxu0
        %v6315 = vadd.f32 0.0, %v6314
        %v6316 = vpop.f32.mrf.mxu0
        %v6317 = vadd.f32 0.0, %v6316
        %6318 = vmatmul.bf16.gmra.mxu0 %v4874
        %v6319 = vpop.f32.mrf.mxu0
        %v6320 = vadd.f32 0.0, %v6319
        %v6321 = vpop.f32.mrf.mxu0
        %v6322 = vadd.f32 0.0, %v6321
        %6323 = vmatmul.bf16.gmra.mxu0 %v4877
        %v6324 = vpop.f32.mrf.mxu0
        %v6325 = vadd.f32 0.0, %v6324
        %v6326 = vpop.f32.mrf.mxu0
        %v6327 = vadd.f32 0.0, %v6326
        %6328 = vmatmul.bf16.gmra.mxu0 %v4880
        %v6329 = vpop.f32.mrf.mxu0
        %v6330 = vadd.f32 0.0, %v6329
        %v6331 = vpop.f32.mrf.mxu0
        %v6332 = vadd.f32 0.0, %v6331
        %6333 = vmatmul.bf16.gmra.mxu0 %v4883
        %v6334 = vpop.f32.mrf.mxu0
        %v6335 = vadd.f32 0.0, %v6334
        %v6336 = vpop.f32.mrf.mxu0
        %v6337 = vadd.f32 0.0, %v6336
        %6338 = vmatmul.bf16.gmra.mxu0 %v4886
        %v6339 = vpop.f32.mrf.mxu0
        %v6340 = vadd.f32 0.0, %v6339
        %v6341 = vpop.f32.mrf.mxu0
        %v6342 = vadd.f32 0.0, %v6341
        %6343 = vmatmul.bf16.gmra.mxu0 %v4889
        %v6344 = vpop.f32.mrf.mxu0
        %v6345 = vadd.f32 0.0, %v6344
        %v6346 = vpop.f32.mrf.mxu0
        %v6347 = vadd.f32 0.0, %v6346
        %6348 = vmatmul.bf16.gmra.mxu0 %v4892
        %v6349 = vpop.f32.mrf.mxu0
        %v6350 = vadd.f32 0.0, %v6349
        %v6351 = vpop.f32.mrf.mxu0
        %v6352 = vadd.f32 0.0, %v6351
        %6353 = vmatmul.bf16.gmra.mxu0 %v4895
        %v6354 = vpop.f32.mrf.mxu0
        %v6355 = vadd.f32 0.0, %v6354
        %v6356 = vpop.f32.mrf.mxu0
        %v6357 = vadd.f32 0.0, %v6356
        %6358 = vmatmul.bf16.gmra.mxu0 %v4898
        %v6359 = vpop.f32.mrf.mxu0
        %v6360 = vadd.f32 0.0, %v6359
        %v6361 = vpop.f32.mrf.mxu0
        %v6362 = vadd.f32 0.0, %v6361
        %6363 = vmatmul.bf16.gmra.mxu0 %v4901
        %v6364 = vpop.f32.mrf.mxu0
        %v6365 = vadd.f32 0.0, %v6364
        %v6366 = vpop.f32.mrf.mxu0
        %v6367 = vadd.f32 0.0, %v6366
        %6368 = vmatmul.bf16.gmra.mxu0 %v4904
        %v6369 = vpop.f32.mrf.mxu0
        %v6370 = vadd.f32 0.0, %v6369
        %v6371 = vpop.f32.mrf.mxu0
        %v6372 = vadd.f32 0.0, %v6371
        %6373 = vmatmul.bf16.gmra.mxu0 %v4907
        %v6374 = vpop.f32.mrf.mxu0
        %v6375 = vadd.f32 0.0, %v6374
        %v6376 = vpop.f32.mrf.mxu0
        %v6377 = vadd.f32 0.0, %v6376
        %6378 = vmatmul.bf16.gmra.mxu0 %v4910
        %v6379 = vpop.f32.mrf.mxu0
        %v6380 = vadd.f32 0.0, %v6379
        %v6381 = vpop.f32.mrf.mxu0
        %v6382 = vadd.f32 0.0, %v6381
        %6383 = vmatmul.bf16.gmra.mxu0 %v4913
        %v6384 = vpop.f32.mrf.mxu0
        %v6385 = vadd.f32 0.0, %v6384
        %v6386 = vpop.f32.mrf.mxu0
        %v6387 = vadd.f32 0.0, %v6386
        %6388 = vmatmul.bf16.gmra.mxu0 %v6303
        %v6389 = vpop.f32.mrf.mxu0
        %v6390 = vadd.f32 0.0, %v6389
        %v6391 = vpop.f32.mrf.mxu0
        %v6392 = vadd.f32 0.0, %v6391
        %6393 = vdwg.mxu0
        %v6394 = vadd.f32 %v6253, %v6315
        %v6395 = vadd.f32 %v6254, %v6317
        %v6396 = vadd.f32 %v6255, %v6320
        %v6397 = vadd.f32 %v6256, %v6322
        %v6398 = vadd.f32 %v6257, %v6325
        %v6399 = vadd.f32 %v6258, %v6327
        %v6400 = vadd.f32 %v6259, %v6330
        %v6401 = vadd.f32 %v6260, %v6332
        %v6402 = vadd.f32 %v6261, %v6335
        %v6403 = vadd.f32 %v6262, %v6337
        %v6404 = vadd.f32 %v6263, %v6340
        %v6405 = vadd.f32 %v6264, %v6342
        %v6406 = vadd.f32 %v6265, %v6345
        %v6407 = vadd.f32 %v6266, %v6347
        %v6408 = vadd.f32 %v6267, %v6350
        %v6409 = vadd.f32 %v6268, %v6352
        %v6410 = vadd.f32 %v6269, %v6355
        %v6411 = vadd.f32 %v6270, %v6357
        %v6412 = vadd.f32 %v6271, %v6360
        %v6413 = vadd.f32 %v6272, %v6362
        %v6414 = vadd.f32 %v6273, %v6365
        %v6415 = vadd.f32 %v6274, %v6367
        %v6416 = vadd.f32 %v6275, %v6370
        %v6417 = vadd.f32 %v6276, %v6372
        %v6418 = vadd.f32 %v6277, %v6375
        %v6419 = vadd.f32 %v6278, %v6377
        %v6420 = vadd.f32 %v6279, %v6380
        %v6421 = vadd.f32 %v6280, %v6382
        %v6422 = vadd.f32 %v6281, %v6385
        %v6423 = vadd.f32 %v6282, %v6387
        %v6424 = vadd.f32 %v6283, %v6390
        %v6425 = vadd.f32 %v6284, %v6392
        %v6426 = vmul.f32 %v4460, %v5435
        %v6427 = vmul.f32 %v4461, %v5437
        %v6428 = vmul.f32 %v4462, %v5439
        %v6429 = vmul.f32 %v4463, %v5441
        %v6430 = vmul.f32 %v4464, %v5443
        %v6431 = vmul.f32 %v4465, %v5445
        %v6432 = vmul.f32 %v4466, %v5447
        %v6433 = vmul.f32 %v4467, %v5449
        %v6434 = vmul.f32 %v4468, %v5451
        %v6435 = vmul.f32 %v4469, %v5453
        %v6436 = vmul.f32 %v4470, %v5455
        %v6437 = vmul.f32 %v4471, %v5457
        %v6438 = vmul.f32 %v4472, %v5459
        %v6439 = vmul.f32 %v4473, %v5461
        %v6440 = vmul.f32 %v4474, %v5463
        %v6441 = vmul.f32 %v4475, %v5465
        %v6442 = vmul.f32 %v4476, %v5467
        %v6443 = vmul.f32 %v4477, %v5469
        %v6444 = vmul.f32 %v4478, %v5471
        %v6445 = vmul.f32 %v4479, %v5473
        %v6446 = vmul.f32 %v4480, %v5475
        %v6447 = vmul.f32 %v4481, %v5477
        %v6448 = vmul.f32 %v4482, %v5479
        %v6449 = vmul.f32 %v4483, %v5481
        %v6450 = vmul.f32 %v4484, %v5483
        %v6451 = vmul.f32 %v4485, %v5485
        %v6452 = vmul.f32 %v4486, %v5487
        %v6453 = vmul.f32 %v4487, %v5489
        %v6454 = vmul.f32 %v4488, %v5491
        %v6455 = vmul.f32 %v4489, %v5493
        %v6456 = vmul.f32 %v4490, %v5495
        %v6457 = vmul.f32 %v4491, %v5497
        %v6458 = vmul.f32 %v5496, 0.0
        %v6459 = vld [vmem:[%s29 + $0x50] sm:$0xf]
        %v6460 = vld [vmem:[%s29 + $0x54] sm:$0xf]
        %v6461 = vld [vmem:[%s29 + $0x58] sm:$0xf]
        %v6462 = vld [vmem:[%s29 + $0x5c] sm:$0xf]
        %v6463 = vpack.c.bf16 %v6427, %v6426
        %v6464 = vpack.c.bf16 %v6429, %v6428
        %v6465 = vpack.c.bf16 %v6431, %v6430
        %v6466 = vpack.c.bf16 %v6433, %v6432
        %v6467 = vpack.c.bf16 %v6435, %v6434
        %v6468 = vpack.c.bf16 %v6437, %v6436
        %v6469 = vpack.c.bf16 %v6439, %v6438
        %v6470 = vpack.c.bf16 %v6441, %v6440
        %v6471 = vpack.c.bf16 %v6443, %v6442
        %v6472 = vpack.c.bf16 %v6445, %v6444
        %v6473 = vpack.c.bf16 %v6447, %v6446
        %v6474 = vpack.c.bf16 %v6449, %v6448
        %v6475 = vpack.c.bf16 %v6451, %v6450
        %v6476 = vpack.c.bf16 %v6453, %v6452
        %v6477 = vpack.c.bf16 %v6455, %v6454
        %v6478 = vpack.c.bf16 %v6457, %v6456
        %v6479 = vpack.c.bf16 %v6458, %v6458
        %v6481 = vshrl.u32 %v6463, 16
        %v6483 = vshll.u32 %v6463, 16
        %v6485 = vrot.slane %v6483, 1
        %v6486 = vor.u32 %v6481, %v6485
        %v6488 = vshll.u32 %v6464, 16
        %v6490 = vrot.slane %v6488, 1
        %v6491 = vsel %vm5585, %v6486, %v6490
        %v6492 = vshrl.u32 %v6464, 16
        %v6494 = vor.u32 %v6492, %v6490
        %v6496 = vshll.u32 %v6465, 16
        %v6498 = vrot.slane %v6496, 1
        %v6499 = vsel %vm5585, %v6494, %v6498
        %v6500 = vshrl.u32 %v6465, 16
        %v6502 = vor.u32 %v6500, %v6498
        %v6504 = vshll.u32 %v6466, 16
        %v6506 = vrot.slane %v6504, 1
        %v6507 = vsel %vm5585, %v6502, %v6506
        %v6508 = vshrl.u32 %v6466, 16
        %v6510 = vor.u32 %v6508, %v6506
        %v6512 = vshll.u32 %v6467, 16
        %v6514 = vrot.slane %v6512, 1
        %v6515 = vsel %vm5585, %v6510, %v6514
        %v6516 = vshrl.u32 %v6467, 16
        %v6518 = vor.u32 %v6516, %v6514
        %v6520 = vshll.u32 %v6468, 16
        %v6522 = vrot.slane %v6520, 1
        %v6523 = vsel %vm5585, %v6518, %v6522
        %v6524 = vshrl.u32 %v6468, 16
        %v6526 = vor.u32 %v6524, %v6522
        %v6528 = vshll.u32 %v6469, 16
        %v6530 = vrot.slane %v6528, 1
        %v6531 = vsel %vm5585, %v6526, %v6530
        %v6532 = vshrl.u32 %v6469, 16
        %v6534 = vor.u32 %v6532, %v6530
        %v6536 = vshll.u32 %v6470, 16
        %v6538 = vrot.slane %v6536, 1
        %v6539 = vsel %vm5585, %v6534, %v6538
        %v6540 = vshrl.u32 %v6470, 16
        %v6542 = vor.u32 %v6540, %v6538
        %v6544 = vshll.u32 %v6471, 16
        %v6546 = vrot.slane %v6544, 1
        %v6547 = vsel %vm5585, %v6542, %v6546
        %v6548 = vshrl.u32 %v6471, 16
        %v6550 = vor.u32 %v6548, %v6546
        %v6552 = vshll.u32 %v6472, 16
        %v6554 = vrot.slane %v6552, 1
        %v6555 = vsel %vm5585, %v6550, %v6554
        %v6556 = vshrl.u32 %v6472, 16
        %v6558 = vor.u32 %v6556, %v6554
        %v6560 = vshll.u32 %v6473, 16
        %v6562 = vrot.slane %v6560, 1
        %v6563 = vsel %vm5585, %v6558, %v6562
        %v6564 = vshrl.u32 %v6473, 16
        %v6566 = vor.u32 %v6564, %v6562
        %v6568 = vshll.u32 %v6474, 16
        %v6570 = vrot.slane %v6568, 1
        %v6571 = vsel %vm5585, %v6566, %v6570
        %v6572 = vshrl.u32 %v6474, 16
        %v6574 = vor.u32 %v6572, %v6570
        %v6576 = vshll.u32 %v6475, 16
        %v6578 = vrot.slane %v6576, 1
        %v6579 = vsel %vm5585, %v6574, %v6578
        %v6580 = vshrl.u32 %v6475, 16
        %v6582 = vor.u32 %v6580, %v6578
        %v6584 = vshll.u32 %v6476, 16
        %v6586 = vrot.slane %v6584, 1
        %v6587 = vsel %vm5585, %v6582, %v6586
        %v6588 = vshrl.u32 %v6476, 16
        %v6590 = vor.u32 %v6588, %v6586
        %v6592 = vshll.u32 %v6477, 16
        %v6594 = vrot.slane %v6592, 1
        %v6595 = vsel %vm5585, %v6590, %v6594
        %v6596 = vshrl.u32 %v6477, 16
        %v6598 = vor.u32 %v6596, %v6594
        %v6600 = vshll.u32 %v6478, 16
        %v6602 = vrot.slane %v6600, 1
        %v6603 = vsel %vm5585, %v6598, %v6602
        %v6604 = vshrl.u32 %v6478, 16
        %v6606 = vor.u32 %v6604, %v6602
        %v6608 = vshll.u32 %v6479, 16
        %v6610 = vrot.slane %v6608, 1
        %v6611 = vsel %vm5585, %v6606, %v6610
        %v6616 = vunpack.c.l.b16 %v6459
        %v6617 = vunpack.c.l.b16 %v6460
        %v6618 = vunpack.c.l.b16 %v6461
        %v6619 = vunpack.c.l.b16 %v6462
        %v6620 = vpack.c.b16 %v6617, %v6616
        %v6621 = vpack.c.b16 %v6619, %v6618
        %v6625 = vsel %vm1140, %v6491, 0
        %v6628 = vsel %vm1140, %v6499, 0
        %v6631 = vsel %vm1140, %v6507, 0
        %v6634 = vsel %vm1140, %v6515, 0
        %v6637 = vsel %vm1140, %v6523, 0
        %v6640 = vsel %vm1140, %v6531, 0
        %v6643 = vsel %vm1140, %v6539, 0
        %v6646 = vsel %vm1140, %v6547, 0
        %v6649 = vsel %vm1140, %v6555, 0
        %v6652 = vsel %vm1140, %v6563, 0
        %v6655 = vsel %vm1140, %v6571, 0
        %v6658 = vsel %vm1140, %v6579, 0
        %v6661 = vsel %vm1140, %v6587, 0
        %v6664 = vsel %vm1140, %v6595, 0
        %v6667 = vsel %vm1140, %v6603, 0
        %v6670 = vsel %vm1140, %v6611, 0
        %6672 = vmatpush.bf16.msra.mxu0 0
        %6673 = vmatpush.bf16.msra.mxu0 0
        %6674 = vmatpush.bf16.msra.mxu0 0
        %6675 = vmatpush.bf16.msra.mxu0 0
        %6676 = vmatpush.bf16.msra.mxu0 0
        %6677 = vmatpush.bf16.msra.mxu0 0
        %6678 = vmatpush.bf16.msra.mxu0 %v6621
        %6679 = vmatpush.bf16.msra.mxu0 %v6620
        %6680 = vmatmul.bf16.gmra.mxu0 %v6625
        %v6681 = vpop.f32.mrf.mxu0
        %v6682 = vadd.f32 0.0, %v6681
        %v6683 = vpop.f32.mrf.mxu0
        %v6684 = vadd.f32 0.0, %v6683
        %6685 = vmatmul.bf16.gmra.mxu0 %v6628
        %v6686 = vpop.f32.mrf.mxu0
        %v6687 = vadd.f32 0.0, %v6686
        %v6688 = vpop.f32.mrf.mxu0
        %v6689 = vadd.f32 0.0, %v6688
        %6690 = vmatmul.bf16.gmra.mxu0 %v6631
        %v6691 = vpop.f32.mrf.mxu0
        %v6692 = vadd.f32 0.0, %v6691
        %v6693 = vpop.f32.mrf.mxu0
        %v6694 = vadd.f32 0.0, %v6693
        %6695 = vmatmul.bf16.gmra.mxu0 %v6634
        %v6696 = vpop.f32.mrf.mxu0
        %v6697 = vadd.f32 0.0, %v6696
        %v6698 = vpop.f32.mrf.mxu0
        %v6699 = vadd.f32 0.0, %v6698
        %6700 = vmatmul.bf16.gmra.mxu0 %v6637
        %v6701 = vpop.f32.mrf.mxu0
        %v6702 = vadd.f32 0.0, %v6701
        %v6703 = vpop.f32.mrf.mxu0
        %v6704 = vadd.f32 0.0, %v6703
        %6705 = vmatmul.bf16.gmra.mxu0 %v6640
        %v6706 = vpop.f32.mrf.mxu0
        %v6707 = vadd.f32 0.0, %v6706
        %v6708 = vpop.f32.mrf.mxu0
        %v6709 = vadd.f32 0.0, %v6708
        %6710 = vmatmul.bf16.gmra.mxu0 %v6643
        %v6711 = vpop.f32.mrf.mxu0
        %v6712 = vadd.f32 0.0, %v6711
        %v6713 = vpop.f32.mrf.mxu0
        %v6714 = vadd.f32 0.0, %v6713
        %6715 = vmatmul.bf16.gmra.mxu0 %v6646
        %v6716 = vpop.f32.mrf.mxu0
        %v6717 = vadd.f32 0.0, %v6716
        %v6718 = vpop.f32.mrf.mxu0
        %v6719 = vadd.f32 0.0, %v6718
        %6720 = vmatmul.bf16.gmra.mxu0 %v6649
        %v6721 = vpop.f32.mrf.mxu0
        %v6722 = vadd.f32 0.0, %v6721
        %v6723 = vpop.f32.mrf.mxu0
        %v6724 = vadd.f32 0.0, %v6723
        %6725 = vmatmul.bf16.gmra.mxu0 %v6652
        %v6726 = vpop.f32.mrf.mxu0
        %v6727 = vadd.f32 0.0, %v6726
        %v6728 = vpop.f32.mrf.mxu0
        %v6729 = vadd.f32 0.0, %v6728
        %6730 = vmatmul.bf16.gmra.mxu0 %v6655
        %v6731 = vpop.f32.mrf.mxu0
        %v6732 = vadd.f32 0.0, %v6731
        %v6733 = vpop.f32.mrf.mxu0
        %v6734 = vadd.f32 0.0, %v6733
        %6735 = vmatmul.bf16.gmra.mxu0 %v6658
        %v6736 = vpop.f32.mrf.mxu0
        %v6737 = vadd.f32 0.0, %v6736
        %v6738 = vpop.f32.mrf.mxu0
        %v6739 = vadd.f32 0.0, %v6738
        %6740 = vmatmul.bf16.gmra.mxu0 %v6661
        %v6741 = vpop.f32.mrf.mxu0
        %v6742 = vadd.f32 0.0, %v6741
        %v6743 = vpop.f32.mrf.mxu0
        %v6744 = vadd.f32 0.0, %v6743
        %6745 = vmatmul.bf16.gmra.mxu0 %v6664
        %v6746 = vpop.f32.mrf.mxu0
        %v6747 = vadd.f32 0.0, %v6746
        %v6748 = vpop.f32.mrf.mxu0
        %v6749 = vadd.f32 0.0, %v6748
        %6750 = vmatmul.bf16.gmra.mxu0 %v6667
        %v6751 = vpop.f32.mrf.mxu0
        %v6752 = vadd.f32 0.0, %v6751
        %v6753 = vpop.f32.mrf.mxu0
        %v6754 = vadd.f32 0.0, %v6753
        %6755 = vmatmul.bf16.gmra.mxu0 %v6670
        %v6756 = vpop.f32.mrf.mxu0
        %v6757 = vadd.f32 0.0, %v6756
        %v6758 = vpop.f32.mrf.mxu0
        %v6759 = vadd.f32 0.0, %v6758
        %6760 = vdwg.mxu0
        %v6761 = vadd.f32 %v6394, %v6682
        %v6762 = vadd.f32 %v6395, %v6684
        %v6763 = vadd.f32 %v6396, %v6687
        %v6764 = vadd.f32 %v6397, %v6689
        %v6765 = vadd.f32 %v6398, %v6692
        %v6766 = vadd.f32 %v6399, %v6694
        %v6767 = vadd.f32 %v6400, %v6697
        %v6768 = vadd.f32 %v6401, %v6699
        %v6769 = vadd.f32 %v6402, %v6702
        %v6770 = vadd.f32 %v6403, %v6704
        %v6771 = vadd.f32 %v6404, %v6707
        %v6772 = vadd.f32 %v6405, %v6709
        %v6773 = vadd.f32 %v6406, %v6712
        %v6774 = vadd.f32 %v6407, %v6714
        %v6775 = vadd.f32 %v6408, %v6717
        %v6776 = vadd.f32 %v6409, %v6719
        %v6777 = vadd.f32 %v6410, %v6722
        %v6778 = vadd.f32 %v6411, %v6724
        %v6779 = vadd.f32 %v6412, %v6727
        %v6780 = vadd.f32 %v6413, %v6729
        %v6781 = vadd.f32 %v6414, %v6732
        %v6782 = vadd.f32 %v6415, %v6734
        %v6783 = vadd.f32 %v6416, %v6737
        %v6784 = vadd.f32 %v6417, %v6739
        %v6785 = vadd.f32 %v6418, %v6742
        %v6786 = vadd.f32 %v6419, %v6744
        %v6787 = vadd.f32 %v6420, %v6747
        %v6788 = vadd.f32 %v6421, %v6749
        %v6789 = vadd.f32 %v6422, %v6752
        %v6790 = vadd.f32 %v6423, %v6754
        %v6791 = vadd.f32 %v6424, %v6757
        %v6792 = vadd.f32 %v6425, %v6759
        %v6793 = vmul.f32 %v4461, %v4685
        %v6794 = vmul.f32 %v4462, %v4687
        %v6795 = vmul.f32 %v4463, %v4689
        %v6796 = vmul.f32 %v4464, %v4691
        %v6797 = vmul.f32 %v4465, %v4693
        %v6798 = vmul.f32 %v4466, %v4695
        %v6799 = vmul.f32 %v4467, %v4697
        %v6800 = vmul.f32 %v4468, %v4699
        %v6801 = vmul.f32 %v4469, %v4701
        %v6802 = vmul.f32 %v4470, %v4703
        %v6803 = vmul.f32 %v4471, %v4705
        %v6804 = vmul.f32 %v4472, %v4707
        %v6805 = vmul.f32 %v4473, %v4709
        %v6806 = vmul.f32 %v4474, %v4711
        %v6807 = vmul.f32 %v4475, %v4713
        %v6808 = vmul.f32 %v4476, %v4715
        %v6809 = vmul.f32 %v4477, %v4717
        %v6810 = vmul.f32 %v4478, %v4719
        %v6811 = vmul.f32 %v4479, %v4721
        %v6812 = vmul.f32 %v4480, %v4723
        %v6813 = vmul.f32 %v4481, %v4725
        %v6814 = vmul.f32 %v4482, %v4727
        %v6815 = vmul.f32 %v4483, %v4729
        %v6816 = vmul.f32 %v4484, %v4731
        %v6817 = vmul.f32 %v4485, %v4733
        %v6818 = vmul.f32 %v4486, %v4735
        %v6819 = vmul.f32 %v4487, %v4737
        %v6820 = vmul.f32 %v4488, %v4739
        %v6821 = vmul.f32 %v4489, %v4741
        %v6822 = vmul.f32 %v4490, %v4743
        %v6823 = vmul.f32 %v4491, %v4745
        %v6824 = vmul.f32 %v4747, 0.0
        %v6825 = vmul.f32 %v4746, 0.0
        %v6826 = vld [vmem:[%s29 + $0x60] sm:$0xf]
        %v6827 = vld [vmem:[%s29 + $0x64] sm:$0xf]
        %v6828 = vld [vmem:[%s29 + $0x68] sm:$0xf]
        %v6829 = vld [vmem:[%s29 + $0x6c] sm:$0xf]
        %v6830 = vpack.c.bf16 %v6794, %v6793
        %v6831 = vpack.c.bf16 %v6796, %v6795
        %v6832 = vpack.c.bf16 %v6798, %v6797
        %v6833 = vpack.c.bf16 %v6800, %v6799
        %v6834 = vpack.c.bf16 %v6802, %v6801
        %v6835 = vpack.c.bf16 %v6804, %v6803
        %v6836 = vpack.c.bf16 %v6806, %v6805
        %v6837 = vpack.c.bf16 %v6808, %v6807
        %v6838 = vpack.c.bf16 %v6810, %v6809
        %v6839 = vpack.c.bf16 %v6812, %v6811
        %v6840 = vpack.c.bf16 %v6814, %v6813
        %v6841 = vpack.c.bf16 %v6816, %v6815
        %v6842 = vpack.c.bf16 %v6818, %v6817
        %v6843 = vpack.c.bf16 %v6820, %v6819
        %v6844 = vpack.c.bf16 %v6822, %v6821
        %v6845 = vpack.c.bf16 %v6824, %v6823
        %v6846 = vpack.c.bf16 %v6825, %v6825
        %v6848 = vshrl.u32 %v6830, 16
        %v6850 = vrot.slane %v6848, 3
        %v6851 = vshll.u32 %v6830, 16
        %v6853 = vrot.slane %v6851, 4
        %v6854 = vor.u32 %v6850, %v6853
        %v6856 = vshrl.u32 %v6831, 16
        %v6858 = vrot.slane %v6856, 3
        %v6859 = vshll.u32 %v6831, 16
        %v6861 = vrot.slane %v6859, 4
        %v6862 = vor.u32 %v6858, %v6861
        %v6863 = vsel %vm5004, %v6854, %v6862
        %v6865 = vshrl.u32 %v6832, 16
        %v6867 = vrot.slane %v6865, 3
        %v6868 = vshll.u32 %v6832, 16
        %v6870 = vrot.slane %v6868, 4
        %v6871 = vor.u32 %v6867, %v6870
        %v6872 = vsel %vm5004, %v6862, %v6871
        %v6874 = vshrl.u32 %v6833, 16
        %v6876 = vrot.slane %v6874, 3
        %v6877 = vshll.u32 %v6833, 16
        %v6879 = vrot.slane %v6877, 4
        %v6880 = vor.u32 %v6876, %v6879
        %v6881 = vsel %vm5004, %v6871, %v6880
        %v6883 = vshrl.u32 %v6834, 16
        %v6885 = vrot.slane %v6883, 3
        %v6886 = vshll.u32 %v6834, 16
        %v6888 = vrot.slane %v6886, 4
        %v6889 = vor.u32 %v6885, %v6888
        %v6890 = vsel %vm5004, %v6880, %v6889
        %v6892 = vshrl.u32 %v6835, 16
        %v6894 = vrot.slane %v6892, 3
        %v6895 = vshll.u32 %v6835, 16
        %v6897 = vrot.slane %v6895, 4
        %v6898 = vor.u32 %v6894, %v6897
        %v6899 = vsel %vm5004, %v6889, %v6898
        %v6901 = vshrl.u32 %v6836, 16
        %v6903 = vrot.slane %v6901, 3
        %v6904 = vshll.u32 %v6836, 16
        %v6906 = vrot.slane %v6904, 4
        %v6907 = vor.u32 %v6903, %v6906
        %v6908 = vsel %vm5004, %v6898, %v6907
        %v6910 = vshrl.u32 %v6837, 16
        %v6912 = vrot.slane %v6910, 3
        %v6913 = vshll.u32 %v6837, 16
        %v6915 = vrot.slane %v6913, 4
        %v6916 = vor.u32 %v6912, %v6915
        %v6917 = vsel %vm5004, %v6907, %v6916
        %v6919 = vshrl.u32 %v6838, 16
        %v6921 = vrot.slane %v6919, 3
        %v6922 = vshll.u32 %v6838, 16
        %v6924 = vrot.slane %v6922, 4
        %v6925 = vor.u32 %v6921, %v6924
        %v6926 = vsel %vm5004, %v6916, %v6925
        %v6928 = vshrl.u32 %v6839, 16
        %v6930 = vrot.slane %v6928, 3
        %v6931 = vshll.u32 %v6839, 16
        %v6933 = vrot.slane %v6931, 4
        %v6934 = vor.u32 %v6930, %v6933
        %v6935 = vsel %vm5004, %v6925, %v6934
        %v6937 = vshrl.u32 %v6840, 16
        %v6939 = vrot.slane %v6937, 3
        %v6940 = vshll.u32 %v6840, 16
        %v6942 = vrot.slane %v6940, 4
        %v6943 = vor.u32 %v6939, %v6942
        %v6944 = vsel %vm5004, %v6934, %v6943
        %v6946 = vshrl.u32 %v6841, 16
        %v6948 = vrot.slane %v6946, 3
        %v6949 = vshll.u32 %v6841, 16
        %v6951 = vrot.slane %v6949, 4
        %v6952 = vor.u32 %v6948, %v6951
        %v6953 = vsel %vm5004, %v6943, %v6952
        %v6955 = vshrl.u32 %v6842, 16
        %v6957 = vrot.slane %v6955, 3
        %v6958 = vshll.u32 %v6842, 16
        %v6960 = vrot.slane %v6958, 4
        %v6961 = vor.u32 %v6957, %v6960
        %v6962 = vsel %vm5004, %v6952, %v6961
        %v6964 = vshrl.u32 %v6843, 16
        %v6966 = vrot.slane %v6964, 3
        %v6967 = vshll.u32 %v6843, 16
        %v6969 = vrot.slane %v6967, 4
        %v6970 = vor.u32 %v6966, %v6969
        %v6971 = vsel %vm5004, %v6961, %v6970
        %v6973 = vshrl.u32 %v6844, 16
        %v6975 = vrot.slane %v6973, 3
        %v6976 = vshll.u32 %v6844, 16
        %v6978 = vrot.slane %v6976, 4
        %v6979 = vor.u32 %v6975, %v6978
        %v6980 = vsel %vm5004, %v6970, %v6979
        %v6982 = vshrl.u32 %v6845, 16
        %v6984 = vrot.slane %v6982, 3
        %v6985 = vshll.u32 %v6845, 16
        %v6987 = vrot.slane %v6985, 4
        %v6988 = vor.u32 %v6984, %v6987
        %v6989 = vsel %vm5004, %v6979, %v6988
        %v6991 = vshrl.u32 %v6846, 16
        %v6993 = vrot.slane %v6991, 3
        %v6994 = vshll.u32 %v6846, 16
        %v6996 = vrot.slane %v6994, 4
        %v6997 = vor.u32 %v6993, %v6996
        %v6998 = vsel %vm5004, %v6988, %v6997
        %v7003 = vunpack.c.l.b16 %v6826
        %v7004 = vunpack.c.l.b16 %v6827
        %v7005 = vunpack.c.l.b16 %v6828
        %v7006 = vunpack.c.l.b16 %v6829
        %v7007 = vpack.c.b16 %v7004, %v7003
        %v7008 = vpack.c.b16 %v7006, %v7005
        %v7012 = vsel %vm1140, %v6863, 0
        %v7015 = vsel %vm1140, %v6872, 0
        %v7018 = vsel %vm1140, %v6881, 0
        %v7021 = vsel %vm1140, %v6890, 0
        %v7024 = vsel %vm1140, %v6899, 0
        %v7027 = vsel %vm1140, %v6908, 0
        %v7030 = vsel %vm1140, %v6917, 0
        %v7033 = vsel %vm1140, %v6926, 0
        %v7036 = vsel %vm1140, %v6935, 0
        %v7039 = vsel %vm1140, %v6944, 0
        %v7042 = vsel %vm1140, %v6953, 0
        %v7045 = vsel %vm1140, %v6962, 0
        %v7048 = vsel %vm1140, %v6971, 0
        %v7051 = vsel %vm1140, %v6980, 0
        %v7054 = vsel %vm1140, %v6989, 0
        %v7057 = vsel %vm1140, %v6998, 0
        %7059 = vmatpush.bf16.msra.mxu0 0
        %7060 = vmatpush.bf16.msra.mxu0 0
        %7061 = vmatpush.bf16.msra.mxu0 0
        %7062 = vmatpush.bf16.msra.mxu0 0
        %7063 = vmatpush.bf16.msra.mxu0 0
        %7064 = vmatpush.bf16.msra.mxu0 0
        %7065 = vmatpush.bf16.msra.mxu0 %v7008
        %7066 = vmatpush.bf16.msra.mxu0 %v7007
        %7067 = vmatmul.bf16.gmra.mxu0 %v7012
        %v7068 = vpop.f32.mrf.mxu0
        %v7069 = vadd.f32 0.0, %v7068
        %v7070 = vpop.f32.mrf.mxu0
        %v7071 = vadd.f32 0.0, %v7070
        %7072 = vmatmul.bf16.gmra.mxu0 %v7015
        %v7073 = vpop.f32.mrf.mxu0
        %v7074 = vadd.f32 0.0, %v7073
        %v7075 = vpop.f32.mrf.mxu0
        %v7076 = vadd.f32 0.0, %v7075
        %7077 = vmatmul.bf16.gmra.mxu0 %v7018
        %v7078 = vpop.f32.mrf.mxu0
        %v7079 = vadd.f32 0.0, %v7078
        %v7080 = vpop.f32.mrf.mxu0
        %v7081 = vadd.f32 0.0, %v7080
        %7082 = vmatmul.bf16.gmra.mxu0 %v7021
        %v7083 = vpop.f32.mrf.mxu0
        %v7084 = vadd.f32 0.0, %v7083
        %v7085 = vpop.f32.mrf.mxu0
        %v7086 = vadd.f32 0.0, %v7085
        %7087 = vmatmul.bf16.gmra.mxu0 %v7024
        %v7088 = vpop.f32.mrf.mxu0
        %v7089 = vadd.f32 0.0, %v7088
        %v7090 = vpop.f32.mrf.mxu0
        %v7091 = vadd.f32 0.0, %v7090
        %7092 = vmatmul.bf16.gmra.mxu0 %v7027
        %v7093 = vpop.f32.mrf.mxu0
        %v7094 = vadd.f32 0.0, %v7093
        %v7095 = vpop.f32.mrf.mxu0
        %v7096 = vadd.f32 0.0, %v7095
        %7097 = vmatmul.bf16.gmra.mxu0 %v7030
        %v7098 = vpop.f32.mrf.mxu0
        %v7099 = vadd.f32 0.0, %v7098
        %v7100 = vpop.f32.mrf.mxu0
        %v7101 = vadd.f32 0.0, %v7100
        %7102 = vmatmul.bf16.gmra.mxu0 %v7033
        %v7103 = vpop.f32.mrf.mxu0
        %v7104 = vadd.f32 0.0, %v7103
        %v7105 = vpop.f32.mrf.mxu0
        %v7106 = vadd.f32 0.0, %v7105
        %7107 = vmatmul.bf16.gmra.mxu0 %v7036
        %v7108 = vpop.f32.mrf.mxu0
        %v7109 = vadd.f32 0.0, %v7108
        %v7110 = vpop.f32.mrf.mxu0
        %v7111 = vadd.f32 0.0, %v7110
        %7112 = vmatmul.bf16.gmra.mxu0 %v7039
        %v7113 = vpop.f32.mrf.mxu0
        %v7114 = vadd.f32 0.0, %v7113
        %v7115 = vpop.f32.mrf.mxu0
        %v7116 = vadd.f32 0.0, %v7115
        %7117 = vmatmul.bf16.gmra.mxu0 %v7042
        %v7118 = vpop.f32.mrf.mxu0
        %v7119 = vadd.f32 0.0, %v7118
        %v7120 = vpop.f32.mrf.mxu0
        %v7121 = vadd.f32 0.0, %v7120
        %7122 = vmatmul.bf16.gmra.mxu0 %v7045
        %v7123 = vpop.f32.mrf.mxu0
        %v7124 = vadd.f32 0.0, %v7123
        %v7125 = vpop.f32.mrf.mxu0
        %v7126 = vadd.f32 0.0, %v7125
        %7127 = vmatmul.bf16.gmra.mxu0 %v7048
        %v7128 = vpop.f32.mrf.mxu0
        %v7129 = vadd.f32 0.0, %v7128
        %v7130 = vpop.f32.mrf.mxu0
        %v7131 = vadd.f32 0.0, %v7130
        %7132 = vmatmul.bf16.gmra.mxu0 %v7051
        %v7133 = vpop.f32.mrf.mxu0
        %v7134 = vadd.f32 0.0, %v7133
        %v7135 = vpop.f32.mrf.mxu0
        %v7136 = vadd.f32 0.0, %v7135
        %7137 = vmatmul.bf16.gmra.mxu0 %v7054
        %v7138 = vpop.f32.mrf.mxu0
        %v7139 = vadd.f32 0.0, %v7138
        %v7140 = vpop.f32.mrf.mxu0
        %v7141 = vadd.f32 0.0, %v7140
        %7142 = vmatmul.bf16.gmra.mxu0 %v7057
        %v7143 = vpop.f32.mrf.mxu0
        %v7144 = vadd.f32 0.0, %v7143
        %v7145 = vpop.f32.mrf.mxu0
        %v7146 = vadd.f32 0.0, %v7145
        %7147 = vdwg.mxu0
        %v7148 = vadd.f32 %v6761, %v7069
        %v7149 = vadd.f32 %v6762, %v7071
        %v7150 = vadd.f32 %v6763, %v7074
        %v7151 = vadd.f32 %v6764, %v7076
        %v7152 = vadd.f32 %v6765, %v7079
        %v7153 = vadd.f32 %v6766, %v7081
        %v7154 = vadd.f32 %v6767, %v7084
        %v7155 = vadd.f32 %v6768, %v7086
        %v7156 = vadd.f32 %v6769, %v7089
        %v7157 = vadd.f32 %v6770, %v7091
        %v7158 = vadd.f32 %v6771, %v7094
        %v7159 = vadd.f32 %v6772, %v7096
        %v7160 = vadd.f32 %v6773, %v7099
        %v7161 = vadd.f32 %v6774, %v7101
        %v7162 = vadd.f32 %v6775, %v7104
        %v7163 = vadd.f32 %v6776, %v7106
        %v7164 = vadd.f32 %v6777, %v7109
        %v7165 = vadd.f32 %v6778, %v7111
        %v7166 = vadd.f32 %v6779, %v7114
        %v7167 = vadd.f32 %v6780, %v7116
        %v7168 = vadd.f32 %v6781, %v7119
        %v7169 = vadd.f32 %v6782, %v7121
        %v7170 = vadd.f32 %v6783, %v7124
        %v7171 = vadd.f32 %v6784, %v7126
        %v7172 = vadd.f32 %v6785, %v7129
        %v7173 = vadd.f32 %v6786, %v7131
        %v7174 = vadd.f32 %v6787, %v7134
        %v7175 = vadd.f32 %v6788, %v7136
        %v7176 = vadd.f32 %v6789, %v7139
        %v7177 = vadd.f32 %v6790, %v7141
        %v7178 = vadd.f32 %v6791, %v7144
        %v7179 = vadd.f32 %v6792, %v7146
        %v7180 = vld [vmem:[%s29 + $0x70] sm:$0xf]
        %v7181 = vld [vmem:[%s29 + $0x74] sm:$0xf]
        %v7182 = vld [vmem:[%s29 + $0x78] sm:$0xf]
        %v7183 = vld [vmem:[%s29 + $0x7c] sm:$0xf]
        %v7188 = vunpack.c.l.b16 %v7180
        %v7189 = vunpack.c.l.b16 %v7181
        %v7190 = vunpack.c.l.b16 %v7182
        %v7191 = vunpack.c.l.b16 %v7183
        %v7192 = vpack.c.b16 %v7189, %v7188
        %v7193 = vpack.c.b16 %v7191, %v7190
        %7196 = vmatpush.bf16.msra.mxu0 0
        %7197 = vmatpush.bf16.msra.mxu0 0
        %7198 = vmatpush.bf16.msra.mxu0 0
        %7199 = vmatpush.bf16.msra.mxu0 0
        %7200 = vmatpush.bf16.msra.mxu0 0
        %7201 = vmatpush.bf16.msra.mxu0 0
        %7202 = vmatpush.bf16.msra.mxu0 %v7193
        %7203 = vmatpush.bf16.msra.mxu0 %v7192
        %7204 = vmatmul.bf16.gmra.mxu0 %v4874
        %v7205 = vpop.f32.mrf.mxu0
        %v7206 = vadd.f32 0.0, %v7205
        %v7207 = vpop.f32.mrf.mxu0
        %v7208 = vadd.f32 0.0, %v7207
        %7209 = vmatmul.bf16.gmra.mxu0 %v4877
        %v7210 = vpop.f32.mrf.mxu0
        %v7211 = vadd.f32 0.0, %v7210
        %v7212 = vpop.f32.mrf.mxu0
        %v7213 = vadd.f32 0.0, %v7212
        %7214 = vmatmul.bf16.gmra.mxu0 %v4880
        %v7215 = vpop.f32.mrf.mxu0
        %v7216 = vadd.f32 0.0, %v7215
        %v7217 = vpop.f32.mrf.mxu0
        %v7218 = vadd.f32 0.0, %v7217
        %7219 = vmatmul.bf16.gmra.mxu0 %v4883
        %v7220 = vpop.f32.mrf.mxu0
        %v7221 = vadd.f32 0.0, %v7220
        %v7222 = vpop.f32.mrf.mxu0
        %v7223 = vadd.f32 0.0, %v7222
        %7224 = vmatmul.bf16.gmra.mxu0 %v4886
        %v7225 = vpop.f32.mrf.mxu0
        %v7226 = vadd.f32 0.0, %v7225
        %v7227 = vpop.f32.mrf.mxu0
        %v7228 = vadd.f32 0.0, %v7227
        %7229 = vmatmul.bf16.gmra.mxu0 %v4889
        %v7230 = vpop.f32.mrf.mxu0
        %v7231 = vadd.f32 0.0, %v7230
        %v7232 = vpop.f32.mrf.mxu0
        %v7233 = vadd.f32 0.0, %v7232
        %7234 = vmatmul.bf16.gmra.mxu0 %v4892
        %v7235 = vpop.f32.mrf.mxu0
        %v7236 = vadd.f32 0.0, %v7235
        %v7237 = vpop.f32.mrf.mxu0
        %v7238 = vadd.f32 0.0, %v7237
        %7239 = vmatmul.bf16.gmra.mxu0 %v4895
        %v7240 = vpop.f32.mrf.mxu0
        %v7241 = vadd.f32 0.0, %v7240
        %v7242 = vpop.f32.mrf.mxu0
        %v7243 = vadd.f32 0.0, %v7242
        %7244 = vmatmul.bf16.gmra.mxu0 %v4898
        %v7245 = vpop.f32.mrf.mxu0
        %v7246 = vadd.f32 0.0, %v7245
        %v7247 = vpop.f32.mrf.mxu0
        %v7248 = vadd.f32 0.0, %v7247
        %7249 = vmatmul.bf16.gmra.mxu0 %v4901
        %v7250 = vpop.f32.mrf.mxu0
        %v7251 = vadd.f32 0.0, %v7250
        %v7252 = vpop.f32.mrf.mxu0
        %v7253 = vadd.f32 0.0, %v7252
        %7254 = vmatmul.bf16.gmra.mxu0 %v4904
        %v7255 = vpop.f32.mrf.mxu0
        %v7256 = vadd.f32 0.0, %v7255
        %v7257 = vpop.f32.mrf.mxu0
        %v7258 = vadd.f32 0.0, %v7257
        %7259 = vmatmul.bf16.gmra.mxu0 %v4907
        %v7260 = vpop.f32.mrf.mxu0
        %v7261 = vadd.f32 0.0, %v7260
        %v7262 = vpop.f32.mrf.mxu0
        %v7263 = vadd.f32 0.0, %v7262
        %7264 = vmatmul.bf16.gmra.mxu0 %v4910
        %v7265 = vpop.f32.mrf.mxu0
        %v7266 = vadd.f32 0.0, %v7265
        %v7267 = vpop.f32.mrf.mxu0
        %v7268 = vadd.f32 0.0, %v7267
        %7269 = vmatmul.bf16.gmra.mxu0 %v4913
        %v7270 = vpop.f32.mrf.mxu0
        %v7271 = vadd.f32 0.0, %v7270
        %v7272 = vpop.f32.mrf.mxu0
        %v7273 = vadd.f32 0.0, %v7272
        %7274 = vmatmul.bf16.gmra.mxu0 %v6303
        %v7275 = vpop.f32.mrf.mxu0
        %v7276 = vadd.f32 0.0, %v7275
        %v7277 = vpop.f32.mrf.mxu0
        %v7278 = vadd.f32 0.0, %v7277
        %7279 = vmatmul.bf16.gmra.mxu0 %v4868
        %v7280 = vpop.f32.mrf.mxu0
        %v7281 = vadd.f32 0.0, %v7280
        %v7282 = vpop.f32.mrf.mxu0
        %v7283 = vadd.f32 0.0, %v7282
        %7284 = vdwg.mxu0
        %v7285 = vadd.f32 %v7148, %v7206
        %v7286 = vadd.f32 %v7149, %v7208
        %v7287 = vadd.f32 %v7150, %v7211
        %v7288 = vadd.f32 %v7151, %v7213
        %v7289 = vadd.f32 %v7152, %v7216
        %v7290 = vadd.f32 %v7153, %v7218
        %v7291 = vadd.f32 %v7154, %v7221
        %v7292 = vadd.f32 %v7155, %v7223
        %v7293 = vadd.f32 %v7156, %v7226
        %v7294 = vadd.f32 %v7157, %v7228
        %v7295 = vadd.f32 %v7158, %v7231
        %v7296 = vadd.f32 %v7159, %v7233
        %v7297 = vadd.f32 %v7160, %v7236
        %v7298 = vadd.f32 %v7161, %v7238
        %v7299 = vadd.f32 %v7162, %v7241
        %v7300 = vadd.f32 %v7163, %v7243
        %v7301 = vadd.f32 %v7164, %v7246
        %v7302 = vadd.f32 %v7165, %v7248
        %v7303 = vadd.f32 %v7166, %v7251
        %v7304 = vadd.f32 %v7167, %v7253
        %v7305 = vadd.f32 %v7168, %v7256
        %v7306 = vadd.f32 %v7169, %v7258
        %v7307 = vadd.f32 %v7170, %v7261
        %v7308 = vadd.f32 %v7171, %v7263
        %v7309 = vadd.f32 %v7172, %v7266
        %v7310 = vadd.f32 %v7173, %v7268
        %v7311 = vadd.f32 %v7174, %v7271
        %v7312 = vadd.f32 %v7175, %v7273
        %v7313 = vadd.f32 %v7176, %v7276
        %v7314 = vadd.f32 %v7177, %v7278
        %v7315 = vadd.f32 %v7178, %v7281
        %v7316 = vadd.f32 %v7179, %v7283
        %v7317 = vmul.f32 %v4462, %v5435
        %v7318 = vmul.f32 %v4463, %v5437
        %v7319 = vmul.f32 %v4464, %v5439
        %v7320 = vmul.f32 %v4465, %v5441
        %v7321 = vmul.f32 %v4466, %v5443
        %v7322 = vmul.f32 %v4467, %v5445
        %v7323 = vmul.f32 %v4468, %v5447
        %v7324 = vmul.f32 %v4469, %v5449
        %v7325 = vmul.f32 %v4470, %v5451
        %v7326 = vmul.f32 %v4471, %v5453
        %v7327 = vmul.f32 %v4472, %v5455
        %v7328 = vmul.f32 %v4473, %v5457
        %v7329 = vmul.f32 %v4474, %v5459
        %v7330 = vmul.f32 %v4475, %v5461
        %v7331 = vmul.f32 %v4476, %v5463
        %v7332 = vmul.f32 %v4477, %v5465
        %v7333 = vmul.f32 %v4478, %v5467
        %v7334 = vmul.f32 %v4479, %v5469
        %v7335 = vmul.f32 %v4480, %v5471
        %v7336 = vmul.f32 %v4481, %v5473
        %v7337 = vmul.f32 %v4482, %v5475
        %v7338 = vmul.f32 %v4483, %v5477
        %v7339 = vmul.f32 %v4484, %v5479
        %v7340 = vmul.f32 %v4485, %v5481
        %v7341 = vmul.f32 %v4486, %v5483
        %v7342 = vmul.f32 %v4487, %v5485
        %v7343 = vmul.f32 %v4488, %v5487
        %v7344 = vmul.f32 %v4489, %v5489
        %v7345 = vmul.f32 %v4490, %v5491
        %v7346 = vmul.f32 %v4491, %v5493
        %v7347 = vmul.f32 %v5495, 0.0
        %v7348 = vmul.f32 %v5497, 0.0
        %v7349 = vld [vmem:[%s29 + $0x80] sm:$0xf]
        %v7350 = vld [vmem:[%s29 + $0x84] sm:$0xf]
        %v7351 = vld [vmem:[%s29 + $0x88] sm:$0xf]
        %v7352 = vld [vmem:[%s29 + $0x8c] sm:$0xf]
        %v7353 = vpack.c.bf16 %v7318, %v7317
        %v7354 = vpack.c.bf16 %v7320, %v7319
        %v7355 = vpack.c.bf16 %v7322, %v7321
        %v7356 = vpack.c.bf16 %v7324, %v7323
        %v7357 = vpack.c.bf16 %v7326, %v7325
        %v7358 = vpack.c.bf16 %v7328, %v7327
        %v7359 = vpack.c.bf16 %v7330, %v7329
        %v7360 = vpack.c.bf16 %v7332, %v7331
        %v7361 = vpack.c.bf16 %v7334, %v7333
        %v7362 = vpack.c.bf16 %v7336, %v7335
        %v7363 = vpack.c.bf16 %v7338, %v7337
        %v7364 = vpack.c.bf16 %v7340, %v7339
        %v7365 = vpack.c.bf16 %v7342, %v7341
        %v7366 = vpack.c.bf16 %v7344, %v7343
        %v7367 = vpack.c.bf16 %v7346, %v7345
        %v7368 = vpack.c.bf16 %v7348, %v7347
        %v7370 = vshrl.u32 %v7353, 16
        %v7372 = vshll.u32 %v7353, 16
        %v7374 = vrot.slane %v7372, 1
        %v7375 = vor.u32 %v7370, %v7374
        %v7377 = vshll.u32 %v7354, 16
        %v7379 = vrot.slane %v7377, 1
        %v7380 = vsel %vm5585, %v7375, %v7379
        %v7381 = vshrl.u32 %v7354, 16
        %v7383 = vor.u32 %v7381, %v7379
        %v7385 = vshll.u32 %v7355, 16
        %v7387 = vrot.slane %v7385, 1
        %v7388 = vsel %vm5585, %v7383, %v7387
        %v7389 = vshrl.u32 %v7355, 16
        %v7391 = vor.u32 %v7389, %v7387
        %v7393 = vshll.u32 %v7356, 16
        %v7395 = vrot.slane %v7393, 1
        %v7396 = vsel %vm5585, %v7391, %v7395
        %v7397 = vshrl.u32 %v7356, 16
        %v7399 = vor.u32 %v7397, %v7395
        %v7401 = vshll.u32 %v7357, 16
        %v7403 = vrot.slane %v7401, 1
        %v7404 = vsel %vm5585, %v7399, %v7403
        %v7405 = vshrl.u32 %v7357, 16
        %v7407 = vor.u32 %v7405, %v7403
        %v7409 = vshll.u32 %v7358, 16
        %v7411 = vrot.slane %v7409, 1
        %v7412 = vsel %vm5585, %v7407, %v7411
        %v7413 = vshrl.u32 %v7358, 16
        %v7415 = vor.u32 %v7413, %v7411
        %v7417 = vshll.u32 %v7359, 16
        %v7419 = vrot.slane %v7417, 1
        %v7420 = vsel %vm5585, %v7415, %v7419
        %v7421 = vshrl.u32 %v7359, 16
        %v7423 = vor.u32 %v7421, %v7419
        %v7425 = vshll.u32 %v7360, 16
        %v7427 = vrot.slane %v7425, 1
        %v7428 = vsel %vm5585, %v7423, %v7427
        %v7429 = vshrl.u32 %v7360, 16
        %v7431 = vor.u32 %v7429, %v7427
        %v7433 = vshll.u32 %v7361, 16
        %v7435 = vrot.slane %v7433, 1
        %v7436 = vsel %vm5585, %v7431, %v7435
        %v7437 = vshrl.u32 %v7361, 16
        %v7439 = vor.u32 %v7437, %v7435
        %v7441 = vshll.u32 %v7362, 16
        %v7443 = vrot.slane %v7441, 1
        %v7444 = vsel %vm5585, %v7439, %v7443
        %v7445 = vshrl.u32 %v7362, 16
        %v7447 = vor.u32 %v7445, %v7443
        %v7449 = vshll.u32 %v7363, 16
        %v7451 = vrot.slane %v7449, 1
        %v7452 = vsel %vm5585, %v7447, %v7451
        %v7453 = vshrl.u32 %v7363, 16
        %v7455 = vor.u32 %v7453, %v7451
        %v7457 = vshll.u32 %v7364, 16
        %v7459 = vrot.slane %v7457, 1
        %v7460 = vsel %vm5585, %v7455, %v7459
        %v7461 = vshrl.u32 %v7364, 16
        %v7463 = vor.u32 %v7461, %v7459
        %v7465 = vshll.u32 %v7365, 16
        %v7467 = vrot.slane %v7465, 1
        %v7468 = vsel %vm5585, %v7463, %v7467
        %v7469 = vshrl.u32 %v7365, 16
        %v7471 = vor.u32 %v7469, %v7467
        %v7473 = vshll.u32 %v7366, 16
        %v7475 = vrot.slane %v7473, 1
        %v7476 = vsel %vm5585, %v7471, %v7475
        %v7477 = vshrl.u32 %v7366, 16
        %v7479 = vor.u32 %v7477, %v7475
        %v7481 = vshll.u32 %v7367, 16
        %v7483 = vrot.slane %v7481, 1
        %v7484 = vsel %vm5585, %v7479, %v7483
        %v7485 = vshrl.u32 %v7367, 16
        %v7487 = vor.u32 %v7485, %v7483
        %v7489 = vshll.u32 %v7368, 16
        %v7491 = vrot.slane %v7489, 1
        %v7492 = vsel %vm5585, %v7487, %v7491
        %v7493 = vshrl.u32 %v7368, 16
        %v7495 = vor.u32 %v7493, %v7491
        %v7496 = vsel %vm5585, %v7495, %v6610
        %v7501 = vunpack.c.l.b16 %v7349
        %v7502 = vunpack.c.l.b16 %v7350
        %v7503 = vunpack.c.l.b16 %v7351
        %v7504 = vunpack.c.l.b16 %v7352
        %v7505 = vpack.c.b16 %v7502, %v7501
        %v7506 = vpack.c.b16 %v7504, %v7503
        %v7510 = vsel %vm1140, %v7380, 0
        %v7513 = vsel %vm1140, %v7388, 0
        %v7516 = vsel %vm1140, %v7396, 0
        %v7519 = vsel %vm1140, %v7404, 0
        %v7522 = vsel %vm1140, %v7412, 0
        %v7525 = vsel %vm1140, %v7420, 0
        %v7528 = vsel %vm1140, %v7428, 0
        %v7531 = vsel %vm1140, %v7436, 0
        %v7534 = vsel %vm1140, %v7444, 0
        %v7537 = vsel %vm1140, %v7452, 0
        %v7540 = vsel %vm1140, %v7460, 0
        %v7543 = vsel %vm1140, %v7468, 0
        %v7546 = vsel %vm1140, %v7476, 0
        %v7549 = vsel %vm1140, %v7484, 0
        %v7552 = vsel %vm1140, %v7492, 0
        %v7555 = vsel %vm1140, %v7496, 0
        %7557 = vmatpush.bf16.msra.mxu0 0
        %7558 = vmatpush.bf16.msra.mxu0 0
        %7559 = vmatpush.bf16.msra.mxu0 0
        %7560 = vmatpush.bf16.msra.mxu0 0
        %7561 = vmatpush.bf16.msra.mxu0 0
        %7562 = vmatpush.bf16.msra.mxu0 0
        %7563 = vmatpush.bf16.msra.mxu0 %v7506
        %7564 = vmatpush.bf16.msra.mxu0 %v7505
        %7565 = vmatmul.bf16.gmra.mxu0 %v7510
        %v7566 = vpop.f32.mrf.mxu0
        %v7567 = vadd.f32 0.0, %v7566
        %v7568 = vpop.f32.mrf.mxu0
        %v7569 = vadd.f32 0.0, %v7568
        %7570 = vmatmul.bf16.gmra.mxu0 %v7513
        %v7571 = vpop.f32.mrf.mxu0
        %v7572 = vadd.f32 0.0, %v7571
        %v7573 = vpop.f32.mrf.mxu0
        %v7574 = vadd.f32 0.0, %v7573
        %7575 = vmatmul.bf16.gmra.mxu0 %v7516
        %v7576 = vpop.f32.mrf.mxu0
        %v7577 = vadd.f32 0.0, %v7576
        %v7578 = vpop.f32.mrf.mxu0
        %v7579 = vadd.f32 0.0, %v7578
        %7580 = vmatmul.bf16.gmra.mxu0 %v7519
        %v7581 = vpop.f32.mrf.mxu0
        %v7582 = vadd.f32 0.0, %v7581
        %v7583 = vpop.f32.mrf.mxu0
        %v7584 = vadd.f32 0.0, %v7583
        %7585 = vmatmul.bf16.gmra.mxu0 %v7522
        %v7586 = vpop.f32.mrf.mxu0
        %v7587 = vadd.f32 0.0, %v7586
        %v7588 = vpop.f32.mrf.mxu0
        %v7589 = vadd.f32 0.0, %v7588
        %7590 = vmatmul.bf16.gmra.mxu0 %v7525
        %v7591 = vpop.f32.mrf.mxu0
        %v7592 = vadd.f32 0.0, %v7591
        %v7593 = vpop.f32.mrf.mxu0
        %v7594 = vadd.f32 0.0, %v7593
        %7595 = vmatmul.bf16.gmra.mxu0 %v7528
        %v7596 = vpop.f32.mrf.mxu0
        %v7597 = vadd.f32 0.0, %v7596
        %v7598 = vpop.f32.mrf.mxu0
        %v7599 = vadd.f32 0.0, %v7598
        %7600 = vmatmul.bf16.gmra.mxu0 %v7531
        %v7601 = vpop.f32.mrf.mxu0
        %v7602 = vadd.f32 0.0, %v7601
        %v7603 = vpop.f32.mrf.mxu0
        %v7604 = vadd.f32 0.0, %v7603
        %7605 = vmatmul.bf16.gmra.mxu0 %v7534
        %v7606 = vpop.f32.mrf.mxu0
        %v7607 = vadd.f32 0.0, %v7606
        %v7608 = vpop.f32.mrf.mxu0
        %v7609 = vadd.f32 0.0, %v7608
        %7610 = vmatmul.bf16.gmra.mxu0 %v7537
        %v7611 = vpop.f32.mrf.mxu0
        %v7612 = vadd.f32 0.0, %v7611
        %v7613 = vpop.f32.mrf.mxu0
        %v7614 = vadd.f32 0.0, %v7613
        %7615 = vmatmul.bf16.gmra.mxu0 %v7540
        %v7616 = vpop.f32.mrf.mxu0
        %v7617 = vadd.f32 0.0, %v7616
        %v7618 = vpop.f32.mrf.mxu0
        %v7619 = vadd.f32 0.0, %v7618
        %7620 = vmatmul.bf16.gmra.mxu0 %v7543
        %v7621 = vpop.f32.mrf.mxu0
        %v7622 = vadd.f32 0.0, %v7621
        %v7623 = vpop.f32.mrf.mxu0
        %v7624 = vadd.f32 0.0, %v7623
        %7625 = vmatmul.bf16.gmra.mxu0 %v7546
        %v7626 = vpop.f32.mrf.mxu0
        %v7627 = vadd.f32 0.0, %v7626
        %v7628 = vpop.f32.mrf.mxu0
        %v7629 = vadd.f32 0.0, %v7628
        %7630 = vmatmul.bf16.gmra.mxu0 %v7549
        %v7631 = vpop.f32.mrf.mxu0
        %v7632 = vadd.f32 0.0, %v7631
        %v7633 = vpop.f32.mrf.mxu0
        %v7634 = vadd.f32 0.0, %v7633
        %7635 = vmatmul.bf16.gmra.mxu0 %v7552
        %v7636 = vpop.f32.mrf.mxu0
        %v7637 = vadd.f32 0.0, %v7636
        %v7638 = vpop.f32.mrf.mxu0
        %v7639 = vadd.f32 0.0, %v7638
        %7640 = vmatmul.bf16.gmra.mxu0 %v7555
        %v7641 = vpop.f32.mrf.mxu0
        %v7642 = vadd.f32 0.0, %v7641
        %v7643 = vpop.f32.mrf.mxu0
        %v7644 = vadd.f32 0.0, %v7643
        %7645 = vdwg.mxu0
        %v7646 = vadd.f32 %v7285, %v7567
        %v7647 = vadd.f32 %v7286, %v7569
        %v7648 = vadd.f32 %v7287, %v7572
        %v7649 = vadd.f32 %v7288, %v7574
        %v7650 = vadd.f32 %v7289, %v7577
        %v7651 = vadd.f32 %v7290, %v7579
        %v7652 = vadd.f32 %v7291, %v7582
        %v7653 = vadd.f32 %v7292, %v7584
        %v7654 = vadd.f32 %v7293, %v7587
        %v7655 = vadd.f32 %v7294, %v7589
        %v7656 = vadd.f32 %v7295, %v7592
        %v7657 = vadd.f32 %v7296, %v7594
        %v7658 = vadd.f32 %v7297, %v7597
        %v7659 = vadd.f32 %v7298, %v7599
        %v7660 = vadd.f32 %v7299, %v7602
        %v7661 = vadd.f32 %v7300, %v7604
        %v7662 = vadd.f32 %v7301, %v7607
        %v7663 = vadd.f32 %v7302, %v7609
        %v7664 = vadd.f32 %v7303, %v7612
        %v7665 = vadd.f32 %v7304, %v7614
        %v7666 = vadd.f32 %v7305, %v7617
        %v7667 = vadd.f32 %v7306, %v7619
        %v7668 = vadd.f32 %v7307, %v7622
        %v7669 = vadd.f32 %v7308, %v7624
        %v7670 = vadd.f32 %v7309, %v7627
        %v7671 = vadd.f32 %v7310, %v7629
        %v7672 = vadd.f32 %v7311, %v7632
        %v7673 = vadd.f32 %v7312, %v7634
        %v7674 = vadd.f32 %v7313, %v7637
        %v7675 = vadd.f32 %v7314, %v7639
        %v7676 = vadd.f32 %v7315, %v7642
        %v7677 = vadd.f32 %v7316, %v7644
        %v7678 = vld [vmem:[%s31] sm:$0x1]
        %v7680 = vperm.slane %v7678, 0
        %v7682 = vmul.f32 %v7646, %v7680
        %v7683 = vmul.f32 %v7647, %v7680
        %v7684 = vmul.f32 %v7648, %v7680
        %v7685 = vmul.f32 %v7649, %v7680
        %v7686 = vmul.f32 %v7650, %v7680
        %v7687 = vmul.f32 %v7651, %v7680
        %v7688 = vmul.f32 %v7652, %v7680
        %v7689 = vmul.f32 %v7653, %v7680
        %v7690 = vmul.f32 %v7654, %v7680
        %v7691 = vmul.f32 %v7655, %v7680
        %v7692 = vmul.f32 %v7656, %v7680
        %v7693 = vmul.f32 %v7657, %v7680
        %v7694 = vmul.f32 %v7658, %v7680
        %v7695 = vmul.f32 %v7659, %v7680
        %v7696 = vmul.f32 %v7660, %v7680
        %v7697 = vmul.f32 %v7661, %v7680
        %v7698 = vmul.f32 %v7662, %v7680
        %v7699 = vmul.f32 %v7663, %v7680
        %v7700 = vmul.f32 %v7664, %v7680
        %v7701 = vmul.f32 %v7665, %v7680
        %v7702 = vmul.f32 %v7666, %v7680
        %v7703 = vmul.f32 %v7667, %v7680
        %v7704 = vmul.f32 %v7668, %v7680
        %v7705 = vmul.f32 %v7669, %v7680
        %v7706 = vmul.f32 %v7670, %v7680
        %v7707 = vmul.f32 %v7671, %v7680
        %v7708 = vmul.f32 %v7672, %v7680
        %v7709 = vmul.f32 %v7673, %v7680
        %v7710 = vmul.f32 %v7674, %v7680
        %v7711 = vmul.f32 %v7675, %v7680
        %v7712 = vmul.f32 %v7676, %v7680
        %v7713 = vmul.f32 %v7677, %v7680
        %v7714 = vld [vmem:[%s33] sm:$0x1]
        %v7716 = vperm.slane %v7714, 0
        %v7718 = vadd.f32 %v7682, %v7716
        %v7719 = vadd.f32 %v7683, %v7716
        %v7720 = vadd.f32 %v7684, %v7716
        %v7721 = vadd.f32 %v7685, %v7716
        %v7722 = vadd.f32 %v7686, %v7716
        %v7723 = vadd.f32 %v7687, %v7716
        %v7724 = vadd.f32 %v7688, %v7716
        %v7725 = vadd.f32 %v7689, %v7716
        %v7726 = vadd.f32 %v7690, %v7716
        %v7727 = vadd.f32 %v7691, %v7716
        %v7728 = vadd.f32 %v7692, %v7716
        %v7729 = vadd.f32 %v7693, %v7716
        %v7730 = vadd.f32 %v7694, %v7716
        %v7731 = vadd.f32 %v7695, %v7716
        %v7732 = vadd.f32 %v7696, %v7716
        %v7733 = vadd.f32 %v7697, %v7716
        %v7734 = vadd.f32 %v7698, %v7716
        %v7735 = vadd.f32 %v7699, %v7716
        %v7736 = vadd.f32 %v7700, %v7716
        %v7737 = vadd.f32 %v7701, %v7716
        %v7738 = vadd.f32 %v7702, %v7716
        %v7739 = vadd.f32 %v7703, %v7716
        %v7740 = vadd.f32 %v7704, %v7716
        %v7741 = vadd.f32 %v7705, %v7716
        %v7742 = vadd.f32 %v7706, %v7716
        %v7743 = vadd.f32 %v7707, %v7716
        %v7744 = vadd.f32 %v7708, %v7716
        %v7745 = vadd.f32 %v7709, %v7716
        %v7746 = vadd.f32 %v7710, %v7716
        %v7747 = vadd.f32 %v7711, %v7716
        %v7748 = vadd.f32 %v7712, %v7716
        %v7749 = vadd.f32 %v7713, %v7716
        %v7750 = vmax.f32 %v7718, 0.0
        %v7751 = vmax.f32 %v7719, 0.0
        %v7752 = vmax.f32 %v7720, 0.0
        %v7753 = vmax.f32 %v7721, 0.0
        %v7754 = vmax.f32 %v7722, 0.0
        %v7755 = vmax.f32 %v7723, 0.0
        %v7756 = vmax.f32 %v7724, 0.0
        %v7757 = vmax.f32 %v7725, 0.0
        %v7758 = vmax.f32 %v7726, 0.0
        %v7759 = vmax.f32 %v7727, 0.0
        %v7760 = vmax.f32 %v7728, 0.0
        %v7761 = vmax.f32 %v7729, 0.0
        %v7762 = vmax.f32 %v7730, 0.0
        %v7763 = vmax.f32 %v7731, 0.0
        %v7764 = vmax.f32 %v7732, 0.0
        %v7765 = vmax.f32 %v7733, 0.0
        %v7766 = vmax.f32 %v7734, 0.0
        %v7767 = vmax.f32 %v7735, 0.0
        %v7768 = vmax.f32 %v7736, 0.0
        %v7769 = vmax.f32 %v7737, 0.0
        %v7770 = vmax.f32 %v7738, 0.0
        %v7771 = vmax.f32 %v7739, 0.0
        %v7772 = vmax.f32 %v7740, 0.0
        %v7773 = vmax.f32 %v7741, 0.0
        %v7774 = vmax.f32 %v7742, 0.0
        %v7775 = vmax.f32 %v7743, 0.0
        %v7776 = vmax.f32 %v7744, 0.0
        %v7777 = vmax.f32 %v7745, 0.0
        %v7778 = vmax.f32 %v7746, 0.0
        %v7779 = vmax.f32 %v7747, 0.0
        %v7780 = vmax.f32 %v7748, 0.0
        %v7781 = vmax.f32 %v7749, 0.0
        %v7782 = vld [vmem:[%s39] sm:$0xff]
        %v7783 = vld [vmem:[%s39 + $0x8] sm:$0xff]
        %v7784 = vld [vmem:[%s39 + $0x10] sm:$0xff]
        %v7785 = vld [vmem:[%s39 + $0x18] sm:$0xff]
        %v7786 = vpack.c.bf16 %v7751, %v7750
        %v7787 = vpack.c.bf16 %v7753, %v7752
        %v7788 = vpack.c.bf16 %v7755, %v7754
        %v7789 = vpack.c.bf16 %v7757, %v7756
        %v7790 = vpack.c.bf16 %v7759, %v7758
        %v7791 = vpack.c.bf16 %v7761, %v7760
        %v7792 = vpack.c.bf16 %v7763, %v7762
        %v7793 = vpack.c.bf16 %v7765, %v7764
        %v7794 = vpack.c.bf16 %v7767, %v7766
        %v7795 = vpack.c.bf16 %v7769, %v7768
        %v7796 = vpack.c.bf16 %v7771, %v7770
        %v7797 = vpack.c.bf16 %v7773, %v7772
        %v7798 = vpack.c.bf16 %v7775, %v7774
        %v7799 = vpack.c.bf16 %v7777, %v7776
        %v7800 = vpack.c.bf16 %v7779, %v7778
        %v7801 = vpack.c.bf16 %v7781, %v7780
        %v7806 = vunpack.c.l.b16 %v7782
        %v7807 = vunpack.c.h.b16 %v7782
        %v7808 = vunpack.c.l.b16 %v7783
        %v7809 = vunpack.c.h.b16 %v7783
        %v7810 = vunpack.c.l.b16 %v7784
        %v7811 = vunpack.c.h.b16 %v7784
        %v7812 = vunpack.c.l.b16 %v7785
        %v7813 = vunpack.c.h.b16 %v7785
        %v7814 = vpack.c.b16 %v7808, %v7806
        %v7815 = vpack.c.b16 %v7809, %v7807
        %v7816 = vpack.c.b16 %v7812, %v7810
        %v7817 = vpack.c.b16 %v7813, %v7811
        %7822 = vmatpush.bf16.msra.mxu0 %v7793
        %7823 = vmatpush.bf16.msra.mxu0 %v7792
        %7824 = vmatpush.bf16.msra.mxu0 %v7791
        %7825 = vmatpush.bf16.msra.mxu0 %v7790
        %7826 = vmatpush.bf16.msra.mxu0 %v7789
        %7827 = vmatpush.bf16.msra.mxu0 %v7788
        %7828 = vmatpush.bf16.msra.mxu0 %v7787
        %7829 = vmatpush.bf16.msra.mxu0 %v7786
        %7830 = vmatmul.bf16.gmra.mxu0 %v7814
        %v7831 = vpop.f32.mrf.mxu0
        %v7832 = vadd.f32 0.0, %v7831
        %v7833 = vpop.f32.mrf.mxu0
        %v7834 = vadd.f32 0.0, %v7833
        %7835 = vmatmul.bf16.gmra.mxu0 %v7816
        %v7836 = vpop.f32.mrf.mxu0
        %v7837 = vadd.f32 0.0, %v7836
        %v7838 = vpop.f32.mrf.mxu0
        %v7839 = vadd.f32 0.0, %v7838
        %7840 = vdwg.mxu0
        %7841 = vmatpush.bf16.msra.mxu0 %v7801
        %7842 = vmatpush.bf16.msra.mxu0 %v7800
        %7843 = vmatpush.bf16.msra.mxu0 %v7799
        %7844 = vmatpush.bf16.msra.mxu0 %v7798
        %7845 = vmatpush.bf16.msra.mxu0 %v7797
        %7846 = vmatpush.bf16.msra.mxu0 %v7796
        %7847 = vmatpush.bf16.msra.mxu0 %v7795
        %7848 = vmatpush.bf16.msra.mxu0 %v7794
        %7849 = vmatmul.bf16.gmra.mxu0 %v7815
        %v7850 = vpop.f32.mrf.mxu0
        %v7851 = vadd.f32 %v7832, %v7850
        %v7852 = vpop.f32.mrf.mxu0
        %v7853 = vadd.f32 %v7834, %v7852
        %7854 = vmatmul.bf16.gmra.mxu0 %v7817
        %v7855 = vpop.f32.mrf.mxu0
        %v7856 = vadd.f32 %v7837, %v7855
        %v7857 = vpop.f32.mrf.mxu0
        %v7858 = vadd.f32 %v7839, %v7857
        %7859 = vdwg.mxu0
        %v7860 = vld [vmem:[%s41] sm:$0xf]
        %v7861 = vld [vmem:[%s41 + $0x4] sm:$0xf]
        %v7862 = vld [vmem:[%s41 + $0x8] sm:$0xf]
        %v7863 = vld [vmem:[%s41 + $0xc] sm:$0xf]
        %v7864 = vpack.c.bf16 %v7853, %v7851
        %v7865 = vpack.c.bf16 %v7858, %v7856
        %v7870 = vunpack.c.l.b16 %v7860
        %v7871 = vunpack.c.l.b16 %v7861
        %v7872 = vunpack.c.l.b16 %v7862
        %v7873 = vunpack.c.l.b16 %v7863
        %v7874 = vpack.c.b16 %v7871, %v7870
        %v7875 = vpack.c.b16 %v7873, %v7872
        %v7879 = vsel %vm1140, %v7864, 0
        %v7882 = vsel %vm1140, %v7865, 0
        %7884 = vmatpush.bf16.msra.mxu0 0
        %7885 = vmatpush.bf16.msra.mxu0 0
        %7886 = vmatpush.bf16.msra.mxu0 0
        %7887 = vmatpush.bf16.msra.mxu0 0
        %7888 = vmatpush.bf16.msra.mxu0 0
        %7889 = vmatpush.bf16.msra.mxu0 0
        %7890 = vmatpush.bf16.msra.mxu0 %v7875
        %7891 = vmatpush.bf16.msra.mxu0 %v7874
        %7892 = vmatmul.bf16.gmra.mxu0 %v7879
        %v7893 = vpop.f32.mrf.mxu0
        %v7894 = vadd.f32 0.0, %v7893
        %v7895 = vpop.f32.mrf.mxu0
        %v7896 = vadd.f32 0.0, %v7895
        %7897 = vmatmul.bf16.gmra.mxu0 %v7882
        %v7898 = vpop.f32.mrf.mxu0
        %v7899 = vadd.f32 0.0, %v7898
        %v7900 = vpop.f32.mrf.mxu0
        %v7901 = vadd.f32 0.0, %v7900
        %7902 = vdwg.mxu0
        %v7903 = vld [vmem:[%s43] sm:$0x1]
        %v7905 = vperm.slane %v7903, 0
        %v7907 = vmul.f32 %v7894, %v7905
        %v7908 = vmul.f32 %v7896, %v7905
        %v7909 = vmul.f32 %v7899, %v7905
        %v7910 = vmul.f32 %v7901, %v7905
        %v7911 = vld [vmem:[%s45] sm:$0x1]
        %v7913 = vperm.slane %v7911, 0
        %v7915 = vadd.f32 %v7907, %v7913
        %v7916 = vadd.f32 %v7908, %v7913
        %v7917 = vadd.f32 %v7909, %v7913
        %v7918 = vadd.f32 %v7910, %v7913
        %v7919 = vadd.f32 %v7915, 3.0
        %v7920 = vadd.f32 %v7916, 3.0
        %v7921 = vadd.f32 %v7917, 3.0
        %v7922 = vadd.f32 %v7918, 3.0
        %v7923 = vmax.f32 %v7919, 0.0
        %v7924 = vmax.f32 %v7920, 0.0
        %v7925 = vmax.f32 %v7921, 0.0
        %v7926 = vmax.f32 %v7922, 0.0
        %v7927 = vmin.f32 %v7923, 6.0
        %v7928 = vmin.f32 %v7924, 6.0
        %v7929 = vmin.f32 %v7925, 6.0
        %v7930 = vmin.f32 %v7926, 6.0
        %v7931 = vmul.f32 %v7927, 0.16666667
        %v7932 = vmul.f32 %v7928, 0.16666667
        %v7933 = vmul.f32 %v7929, 0.16666667
        %v7934 = vmul.f32 %v7930, 0.16666667
        %v7935 = vmul.f32 %v7915, %v7931
        %v7936 = vmul.f32 %v7916, %v7932
        %v7937 = vmul.f32 %v7917, %v7933
        %v7938 = vmul.f32 %v7918, %v7934
        %v7939 = vld [vmem:[%s47] sm:$0xf]
        %v7940 = vpack.c.bf16 %v7936, %v7935
        %v7941 = vld [vmem:[%s49] sm:$0x1]
        %v7943 = vperm.slane %v7941, 0
        %v7946 = vsel %vm2658, %v7940, 0
        %v7949 = vsel %vm2707, %v7939, 0
        %7951 = vmatpush.bf16.msra.mxu0 0
        %7952 = vmatpush.bf16.msra.mxu0 0
        %7953 = vmatpush.bf16.msra.mxu0 0
        %7954 = vmatpush.bf16.msra.mxu0 0
        %7955 = vmatpush.bf16.msra.mxu0 0
        %7956 = vmatpush.bf16.msra.mxu0 0
        %7957 = vmatpush.bf16.msra.mxu0 0
        %7958 = vmatpush.bf16.msra.mxu0 %v7949
        %7959 = vmatmul.bf16.gmra.mxu0 %v7946
        %v7960 = vpop.f32.mrf.mxu0
        %v7961 = vadd.f32 %v7943, %v7960
        %v7962 = vpop.f32.mrf.mxu0
        %v7963 = vadd.f32 %v7943, %v7962
        %7964 = vdwg.mxu0
        %v7965 = vxor.u32 %v7961, 2147483648
        %v7966 = vxor.u32 %v7963, 2147483648
        %v7967 = vmul.f32 %v7965, 1.442695
        %v7968 = vpow.pop %v7967
        %v7969 = vmul.f32 %v7966, 1.442695
        %v7970 = vpow.pop %v7969
        %v7971 = vadd.f32 %v7968, 1.0
        %v7972 = vadd.f32 %v7970, 1.0
        %v7973 = vrcp.pop %v7971
        %v7974 = vmul.f32 %v7971, %v7973
        %v7975 = vsub.f32 1.0, %v7974
        %v7976 = vmul.f32 %v7973, %v7975
        %v7977 = vadd.f32 %v7973, %v7976
        %vm7978 = vweird.f32 %v7971
        %vm7979 = vweird.f32 %v7973
        %vm7980 = vmor %vm7978, %vm7979
        %v7981 = vsel %vm7980, %v7973, %v7977
        %v7982 = vand.u32 2147483647, %v7971
        %vm7983 = vcmp.eq.f32.partialorder %v7982, 8.507059e+37
        %v7984 = vand.u32 %v7971, 2147483648
        %v7985 = vor.u32 1.1754944e-38, %v7984
        %v7986 = vsel %vm7983, %v7985, %v7981
        %v7987 = vmul.f32 1.0, %v7986
        %v7988 = vrcp.pop %v7972
        %v7989 = vmul.f32 %v7972, %v7988
        %v7990 = vsub.f32 1.0, %v7989
        %v7991 = vmul.f32 %v7988, %v7990
        %v7992 = vadd.f32 %v7988, %v7991
        %vm7993 = vweird.f32 %v7972
        %vm7994 = vweird.f32 %v7988
        %vm7995 = vmor %vm7993, %vm7994
        %v7996 = vsel %vm7995, %v7988, %v7992
        %v7997 = vand.u32 2147483647, %v7972
        %vm7998 = vcmp.eq.f32.partialorder %v7997, 8.507059e+37
        %v7999 = vand.u32 %v7972, 2147483648
        %v8000 = vor.u32 1.1754944e-38, %v7999
        %v8001 = vsel %vm7998, %v8000, %v7996
        %v8002 = vmul.f32 1.0, %v8001
        %v8003 = vld [vmem:[%s51] sm:$0xf]
        %v8004 = vpack.c.bf16 %v7938, %v7937
        %v8005 = vld [vmem:[%s53] sm:$0x1]
        %v8007 = vperm.slane %v8005, 0
        %v8010 = vsel %vm2658, %v8004, 0
        %v8013 = vsel %vm2707, %v8003, 0
        %8015 = vmatpush.bf16.msra.mxu0 0
        %8016 = vmatpush.bf16.msra.mxu0 0
        %8017 = vmatpush.bf16.msra.mxu0 0
        %8018 = vmatpush.bf16.msra.mxu0 0
        %8019 = vmatpush.bf16.msra.mxu0 0
        %8020 = vmatpush.bf16.msra.mxu0 0
        %8021 = vmatpush.bf16.msra.mxu0 0
        %8022 = vmatpush.bf16.msra.mxu0 %v8013
        %8023 = vmatmul.bf16.gmra.mxu0 %v8010
        %v8024 = vpop.f32.mrf.mxu0
        %v8025 = vadd.f32 %v8007, %v8024
        %v8026 = vpop.f32.mrf.mxu0
        %v8027 = vadd.f32 %v8007, %v8026
        %8028 = vdwg.mxu0
        %v8029 = vxor.u32 %v8025, 2147483648
        %v8030 = vxor.u32 %v8027, 2147483648
        %v8031 = vmul.f32 %v8029, 1.442695
        %v8032 = vpow.pop %v8031
        %v8033 = vmul.f32 %v8030, 1.442695
        %v8034 = vpow.pop %v8033
        %v8035 = vadd.f32 %v8032, 1.0
        %v8036 = vadd.f32 %v8034, 1.0
        %v8037 = vrcp.pop %v8035
        %v8038 = vmul.f32 %v8035, %v8037
        %v8039 = vsub.f32 1.0, %v8038
        %v8040 = vmul.f32 %v8037, %v8039
        %v8041 = vadd.f32 %v8037, %v8040
        %vm8042 = vweird.f32 %v8035
        %vm8043 = vweird.f32 %v8037
        %vm8044 = vmor %vm8042, %vm8043
        %v8045 = vsel %vm8044, %v8037, %v8041
        %v8046 = vand.u32 2147483647, %v8035
        %vm8047 = vcmp.eq.f32.partialorder %v8046, 8.507059e+37
        %v8048 = vand.u32 %v8035, 2147483648
        %v8049 = vor.u32 1.1754944e-38, %v8048
        %v8050 = vsel %vm8047, %v8049, %v8045
        %v8051 = vmul.f32 1.0, %v8050
        %v8052 = vrcp.pop %v8036
        %v8053 = vmul.f32 %v8036, %v8052
        %v8054 = vsub.f32 1.0, %v8053
        %v8055 = vmul.f32 %v8052, %v8054
        %v8056 = vadd.f32 %v8052, %v8055
        %vm8057 = vweird.f32 %v8036
        %vm8058 = vweird.f32 %v8052
        %vm8059 = vmor %vm8057, %vm8058
        %v8060 = vsel %vm8059, %v8052, %v8056
        %v8061 = vand.u32 2147483647, %v8036
        %vm8062 = vcmp.eq.f32.partialorder %v8061, 8.507059e+37
        %v8063 = vand.u32 %v8036, 2147483648
        %v8064 = vor.u32 1.1754944e-38, %v8063
        %v8065 = vsel %vm8062, %v8064, %v8060
        %v8066 = vmul.f32 1.0, %v8065
        %v8067 = vld [vmem:[%s55] sm:$0xf]
        %v8068 = vld [vmem:[%s55 + $0x4] sm:$0xf]
        %v8069 = vld [vmem:[%s55 + $0x8] sm:$0xf]
        %v8070 = vld [vmem:[%s55 + $0xc] sm:$0xf]
        %v8071 = vld [vmem:[%s55 + $0x10] sm:$0xf]
        %v8072 = vld [vmem:[%s55 + $0x14] sm:$0xf]
        %v8073 = vld [vmem:[%s55 + $0x18] sm:$0xf]
        %v8074 = vld [vmem:[%s55 + $0x1c] sm:$0xf]
        %v8075 = vld [vmem:[%s55 + $0x20] sm:$0xf]
        %v8076 = vld [vmem:[%s55 + $0x24] sm:$0xf]
        %v8077 = vld [vmem:[%s55 + $0x28] sm:$0xf]
        %v8078 = vld [vmem:[%s55 + $0x2c] sm:$0xf]
        %v8079 = vld [vmem:[%s55 + $0x30] sm:$0xf]
        %v8080 = vld [vmem:[%s55 + $0x34] sm:$0xf]
        %v8081 = vld [vmem:[%s55 + $0x38] sm:$0xf]
        %v8082 = vld [vmem:[%s55 + $0x3c] sm:$0xf]
        %v8083 = vld [vmem:[%s55 + $0x40] sm:$0xf]
        %v8084 = vld [vmem:[%s55 + $0x44] sm:$0xf]
        %v8085 = vld [vmem:[%s55 + $0x48] sm:$0xf]
        %v8086 = vld [vmem:[%s55 + $0x4c] sm:$0xf]
        %v8087 = vld [vmem:[%s55 + $0x50] sm:$0xf]
        %v8088 = vld [vmem:[%s55 + $0x54] sm:$0xf]
        %v8089 = vld [vmem:[%s55 + $0x58] sm:$0xf]
        %v8090 = vld [vmem:[%s55 + $0x5c] sm:$0xf]
        %v8091 = vld [vmem:[%s55 + $0x60] sm:$0xf]
        %v8092 = vld [vmem:[%s55 + $0x64] sm:$0xf]
        %v8093 = vld [vmem:[%s55 + $0x68] sm:$0xf]
        %v8094 = vld [vmem:[%s55 + $0x6c] sm:$0xf]
        %v8095 = vld [vmem:[%s55 + $0x70] sm:$0xf]
        %v8096 = vld [vmem:[%s55 + $0x74] sm:$0xf]
        %v8097 = vld [vmem:[%s55 + $0x78] sm:$0xf]
        %v8098 = vld [vmem:[%s55 + $0x7c] sm:$0xf]
        %v8099 = vpack.c.bf16 %v8002, %v7987
        %v8132 = vunpack.c.l.b16 %v8067
        %v8133 = vunpack.c.l.b16 %v8068
        %v8134 = vunpack.c.l.b16 %v8069
        %v8135 = vunpack.c.l.b16 %v8070
        %v8136 = vunpack.c.l.b16 %v8071
        %v8137 = vunpack.c.l.b16 %v8072
        %v8138 = vunpack.c.l.b16 %v8073
        %v8139 = vunpack.c.l.b16 %v8074
        %v8140 = vunpack.c.l.b16 %v8075
        %v8141 = vunpack.c.l.b16 %v8076
        %v8142 = vunpack.c.l.b16 %v8077
        %v8143 = vunpack.c.l.b16 %v8078
        %v8144 = vunpack.c.l.b16 %v8079
        %v8145 = vunpack.c.l.b16 %v8080
        %v8146 = vunpack.c.l.b16 %v8081
        %v8147 = vunpack.c.l.b16 %v8082
        %v8148 = vunpack.c.l.b16 %v8083
        %v8149 = vunpack.c.l.b16 %v8084
        %v8150 = vunpack.c.l.b16 %v8085
        %v8151 = vunpack.c.l.b16 %v8086
        %v8152 = vunpack.c.l.b16 %v8087
        %v8153 = vunpack.c.l.b16 %v8088
        %v8154 = vunpack.c.l.b16 %v8089
        %v8155 = vunpack.c.l.b16 %v8090
        %v8156 = vunpack.c.l.b16 %v8091
        %v8157 = vunpack.c.l.b16 %v8092
        %v8158 = vunpack.c.l.b16 %v8093
        %v8159 = vunpack.c.l.b16 %v8094
        %v8160 = vunpack.c.l.b16 %v8095
        %v8161 = vunpack.c.l.b16 %v8096
        %v8162 = vunpack.c.l.b16 %v8097
        %v8163 = vunpack.c.l.b16 %v8098
        %v8164 = vpack.c.b16 %v8133, %v8132
        %v8165 = vpack.c.b16 %v8135, %v8134
        %v8166 = vpack.c.b16 %v8137, %v8136
        %v8167 = vpack.c.b16 %v8139, %v8138
        %v8168 = vpack.c.b16 %v8141, %v8140
        %v8169 = vpack.c.b16 %v8143, %v8142
        %v8170 = vpack.c.b16 %v8145, %v8144
        %v8171 = vpack.c.b16 %v8147, %v8146
        %v8172 = vpack.c.b16 %v8149, %v8148
        %v8173 = vpack.c.b16 %v8151, %v8150
        %v8174 = vpack.c.b16 %v8153, %v8152
        %v8175 = vpack.c.b16 %v8155, %v8154
        %v8176 = vpack.c.b16 %v8157, %v8156
        %v8177 = vpack.c.b16 %v8159, %v8158
        %v8178 = vpack.c.b16 %v8161, %v8160
        %v8179 = vpack.c.b16 %v8163, %v8162
        %vm8180 = vcmask 130048
        %v8182 = vsel %vm8180, %v8164, 0
        %v8185 = vsel %vm8180, %v8165, 0
        %v8188 = vsel %vm8180, %v8166, 0
        %v8191 = vsel %vm8180, %v8167, 0
        %v8194 = vsel %vm8180, %v8168, 0
        %v8197 = vsel %vm8180, %v8169, 0
        %v8200 = vsel %vm8180, %v8170, 0
        %v8203 = vsel %vm8180, %v8171, 0
        %v8206 = vsel %vm8180, %v8172, 0
        %v8209 = vsel %vm8180, %v8173, 0
        %v8212 = vsel %vm8180, %v8174, 0
        %v8215 = vsel %vm8180, %v8175, 0
        %v8218 = vsel %vm8180, %v8176, 0
        %v8221 = vsel %vm8180, %v8177, 0
        %v8224 = vsel %vm8180, %v8178, 0
        %v8227 = vsel %vm8180, %v8179, 0
        %8229 = vmatpush.bf16.msra.mxu0 0
        %8230 = vmatpush.bf16.msra.mxu0 0
        %8231 = vmatpush.bf16.msra.mxu0 0
        %8232 = vmatpush.bf16.msra.mxu0 0
        %8233 = vmatpush.bf16.msra.mxu0 0
        %8234 = vmatpush.bf16.msra.mxu0 0
        %8235 = vmatpush.bf16.msra.mxu0 0
        %8236 = vmatpush.bf16.msra.mxu0 %v8099
        %8237 = vmatmul.bf16.gmra.mxu0 %v8182
        %v8238 = vpop.f32.mrf.mxu0
        %v8239 = vadd.f32 0.0, %v8238
        %v8240 = vpop.f32.mrf.mxu0
        %v8241 = vadd.f32 0.0, %v8240
        %8242 = vmatmul.bf16.gmra.mxu0 %v8185
        %v8243 = vpop.f32.mrf.mxu0
        %v8244 = vadd.f32 0.0, %v8243
        %v8245 = vpop.f32.mrf.mxu0
        %v8246 = vadd.f32 0.0, %v8245
        %8247 = vmatmul.bf16.gmra.mxu0 %v8188
        %v8248 = vpop.f32.mrf.mxu0
        %v8249 = vadd.f32 0.0, %v8248
        %v8250 = vpop.f32.mrf.mxu0
        %v8251 = vadd.f32 0.0, %v8250
        %8252 = vmatmul.bf16.gmra.mxu0 %v8191
        %v8253 = vpop.f32.mrf.mxu0
        %v8254 = vadd.f32 0.0, %v8253
        %v8255 = vpop.f32.mrf.mxu0
        %v8256 = vadd.f32 0.0, %v8255
        %8257 = vmatmul.bf16.gmra.mxu0 %v8194
        %v8258 = vpop.f32.mrf.mxu0
        %v8259 = vadd.f32 0.0, %v8258
        %v8260 = vpop.f32.mrf.mxu0
        %v8261 = vadd.f32 0.0, %v8260
        %8262 = vmatmul.bf16.gmra.mxu0 %v8197
        %v8263 = vpop.f32.mrf.mxu0
        %v8264 = vadd.f32 0.0, %v8263
        %v8265 = vpop.f32.mrf.mxu0
        %v8266 = vadd.f32 0.0, %v8265
        %8267 = vmatmul.bf16.gmra.mxu0 %v8200
        %v8268 = vpop.f32.mrf.mxu0
        %v8269 = vadd.f32 0.0, %v8268
        %v8270 = vpop.f32.mrf.mxu0
        %v8271 = vadd.f32 0.0, %v8270
        %8272 = vmatmul.bf16.gmra.mxu0 %v8203
        %v8273 = vpop.f32.mrf.mxu0
        %v8274 = vadd.f32 0.0, %v8273
        %v8275 = vpop.f32.mrf.mxu0
        %v8276 = vadd.f32 0.0, %v8275
        %8277 = vmatmul.bf16.gmra.mxu0 %v8206
        %v8278 = vpop.f32.mrf.mxu0
        %v8279 = vadd.f32 0.0, %v8278
        %v8280 = vpop.f32.mrf.mxu0
        %v8281 = vadd.f32 0.0, %v8280
        %8282 = vmatmul.bf16.gmra.mxu0 %v8209
        %v8283 = vpop.f32.mrf.mxu0
        %v8284 = vadd.f32 0.0, %v8283
        %v8285 = vpop.f32.mrf.mxu0
        %v8286 = vadd.f32 0.0, %v8285
        %8287 = vmatmul.bf16.gmra.mxu0 %v8212
        %v8288 = vpop.f32.mrf.mxu0
        %v8289 = vadd.f32 0.0, %v8288
        %v8290 = vpop.f32.mrf.mxu0
        %v8291 = vadd.f32 0.0, %v8290
        %8292 = vmatmul.bf16.gmra.mxu0 %v8215
        %v8293 = vpop.f32.mrf.mxu0
        %v8294 = vadd.f32 0.0, %v8293
        %v8295 = vpop.f32.mrf.mxu0
        %v8296 = vadd.f32 0.0, %v8295
        %8297 = vmatmul.bf16.gmra.mxu0 %v8218
        %v8298 = vpop.f32.mrf.mxu0
        %v8299 = vadd.f32 0.0, %v8298
        %v8300 = vpop.f32.mrf.mxu0
        %v8301 = vadd.f32 0.0, %v8300
        %8302 = vmatmul.bf16.gmra.mxu0 %v8221
        %v8303 = vpop.f32.mrf.mxu0
        %v8304 = vadd.f32 0.0, %v8303
        %v8305 = vpop.f32.mrf.mxu0
        %v8306 = vadd.f32 0.0, %v8305
        %8307 = vmatmul.bf16.gmra.mxu0 %v8224
        %v8308 = vpop.f32.mrf.mxu0
        %v8309 = vadd.f32 0.0, %v8308
        %v8310 = vpop.f32.mrf.mxu0
        %v8311 = vadd.f32 0.0, %v8310
        %8312 = vmatmul.bf16.gmra.mxu0 %v8227
        %v8313 = vpop.f32.mrf.mxu0
        %v8314 = vadd.f32 0.0, %v8313
        %v8315 = vpop.f32.mrf.mxu0
        %v8316 = vadd.f32 0.0, %v8315
        %8317 = vdwg.mxu0
        %v8318 = vld [vmem:[%s57] sm:$0xf]
        %v8319 = vld [vmem:[%s57 + $0x4] sm:$0xf]
        %v8320 = vld [vmem:[%s57 + $0x8] sm:$0xf]
        %v8321 = vld [vmem:[%s57 + $0xc] sm:$0xf]
        %v8322 = vld [vmem:[%s57 + $0x10] sm:$0xf]
        %v8323 = vld [vmem:[%s57 + $0x14] sm:$0xf]
        %v8324 = vld [vmem:[%s57 + $0x18] sm:$0xf]
        %v8325 = vld [vmem:[%s57 + $0x1c] sm:$0xf]
        %v8326 = vld [vmem:[%s57 + $0x20] sm:$0xf]
        %v8327 = vld [vmem:[%s57 + $0x24] sm:$0xf]
        %v8328 = vld [vmem:[%s57 + $0x28] sm:$0xf]
        %v8329 = vld [vmem:[%s57 + $0x2c] sm:$0xf]
        %v8330 = vld [vmem:[%s57 + $0x30] sm:$0xf]
        %v8331 = vld [vmem:[%s57 + $0x34] sm:$0xf]
        %v8332 = vld [vmem:[%s57 + $0x38] sm:$0xf]
        %v8333 = vld [vmem:[%s57 + $0x3c] sm:$0xf]
        %v8334 = vld [vmem:[%s57 + $0x40] sm:$0xf]
        %v8335 = vld [vmem:[%s57 + $0x44] sm:$0xf]
        %v8336 = vld [vmem:[%s57 + $0x48] sm:$0xf]
        %v8337 = vld [vmem:[%s57 + $0x4c] sm:$0xf]
        %v8338 = vld [vmem:[%s57 + $0x50] sm:$0xf]
        %v8339 = vld [vmem:[%s57 + $0x54] sm:$0xf]
        %v8340 = vld [vmem:[%s57 + $0x58] sm:$0xf]
        %v8341 = vld [vmem:[%s57 + $0x5c] sm:$0xf]
        %v8342 = vld [vmem:[%s57 + $0x60] sm:$0xf]
        %v8343 = vld [vmem:[%s57 + $0x64] sm:$0xf]
        %v8344 = vld [vmem:[%s57 + $0x68] sm:$0xf]
        %v8345 = vld [vmem:[%s57 + $0x6c] sm:$0xf]
        %v8346 = vld [vmem:[%s57 + $0x70] sm:$0xf]
        %v8347 = vld [vmem:[%s57 + $0x74] sm:$0xf]
        %v8348 = vld [vmem:[%s57 + $0x78] sm:$0xf]
        %v8349 = vld [vmem:[%s57 + $0x7c] sm:$0xf]
        %v8350 = vpack.c.bf16 %v8066, %v8051
        %v8383 = vunpack.c.l.b16 %v8318
        %v8384 = vunpack.c.l.b16 %v8319
        %v8385 = vunpack.c.l.b16 %v8320
        %v8386 = vunpack.c.l.b16 %v8321
        %v8387 = vunpack.c.l.b16 %v8322
        %v8388 = vunpack.c.l.b16 %v8323
        %v8389 = vunpack.c.l.b16 %v8324
        %v8390 = vunpack.c.l.b16 %v8325
        %v8391 = vunpack.c.l.b16 %v8326
        %v8392 = vunpack.c.l.b16 %v8327
        %v8393 = vunpack.c.l.b16 %v8328
        %v8394 = vunpack.c.l.b16 %v8329
        %v8395 = vunpack.c.l.b16 %v8330
        %v8396 = vunpack.c.l.b16 %v8331
        %v8397 = vunpack.c.l.b16 %v8332
        %v8398 = vunpack.c.l.b16 %v8333
        %v8399 = vunpack.c.l.b16 %v8334
        %v8400 = vunpack.c.l.b16 %v8335
        %v8401 = vunpack.c.l.b16 %v8336
        %v8402 = vunpack.c.l.b16 %v8337
        %v8403 = vunpack.c.l.b16 %v8338
        %v8404 = vunpack.c.l.b16 %v8339
        %v8405 = vunpack.c.l.b16 %v8340
        %v8406 = vunpack.c.l.b16 %v8341
        %v8407 = vunpack.c.l.b16 %v8342
        %v8408 = vunpack.c.l.b16 %v8343
        %v8409 = vunpack.c.l.b16 %v8344
        %v8410 = vunpack.c.l.b16 %v8345
        %v8411 = vunpack.c.l.b16 %v8346
        %v8412 = vunpack.c.l.b16 %v8347
        %v8413 = vunpack.c.l.b16 %v8348
        %v8414 = vunpack.c.l.b16 %v8349
        %v8415 = vpack.c.b16 %v8384, %v8383
        %v8416 = vpack.c.b16 %v8386, %v8385
        %v8417 = vpack.c.b16 %v8388, %v8387
        %v8418 = vpack.c.b16 %v8390, %v8389
        %v8419 = vpack.c.b16 %v8392, %v8391
        %v8420 = vpack.c.b16 %v8394, %v8393
        %v8421 = vpack.c.b16 %v8396, %v8395
        %v8422 = vpack.c.b16 %v8398, %v8397
        %v8423 = vpack.c.b16 %v8400, %v8399
        %v8424 = vpack.c.b16 %v8402, %v8401
        %v8425 = vpack.c.b16 %v8404, %v8403
        %v8426 = vpack.c.b16 %v8406, %v8405
        %v8427 = vpack.c.b16 %v8408, %v8407
        %v8428 = vpack.c.b16 %v8410, %v8409
        %v8429 = vpack.c.b16 %v8412, %v8411
        %v8430 = vpack.c.b16 %v8414, %v8413
        %v8432 = vsel %vm8180, %v8415, 0
        %v8435 = vsel %vm8180, %v8416, 0
        %v8438 = vsel %vm8180, %v8417, 0
        %v8441 = vsel %vm8180, %v8418, 0
        %v8444 = vsel %vm8180, %v8419, 0
        %v8447 = vsel %vm8180, %v8420, 0
        %v8450 = vsel %vm8180, %v8421, 0
        %v8453 = vsel %vm8180, %v8422, 0
        %v8456 = vsel %vm8180, %v8423, 0
        %v8459 = vsel %vm8180, %v8424, 0
        %v8462 = vsel %vm8180, %v8425, 0
        %v8465 = vsel %vm8180, %v8426, 0
        %v8468 = vsel %vm8180, %v8427, 0
        %v8471 = vsel %vm8180, %v8428, 0
        %v8474 = vsel %vm8180, %v8429, 0
        %v8477 = vsel %vm8180, %v8430, 0
        %8479 = vmatpush.bf16.msra.mxu0 0
        %8480 = vmatpush.bf16.msra.mxu0 0
        %8481 = vmatpush.bf16.msra.mxu0 0
        %8482 = vmatpush.bf16.msra.mxu0 0
        %8483 = vmatpush.bf16.msra.mxu0 0
        %8484 = vmatpush.bf16.msra.mxu0 0
        %8485 = vmatpush.bf16.msra.mxu0 0
        %8486 = vmatpush.bf16.msra.mxu0 %v8350
        %8487 = vmatmul.bf16.gmra.mxu0 %v8432
        %v8488 = vpop.f32.mrf.mxu0
        %v8489 = vadd.f32 0.0, %v8488
        %v8490 = vpop.f32.mrf.mxu0
        %v8491 = vadd.f32 0.0, %v8490
        %8492 = vmatmul.bf16.gmra.mxu0 %v8435
        %v8493 = vpop.f32.mrf.mxu0
        %v8494 = vadd.f32 0.0, %v8493
        %v8495 = vpop.f32.mrf.mxu0
        %v8496 = vadd.f32 0.0, %v8495
        %8497 = vmatmul.bf16.gmra.mxu0 %v8438
        %v8498 = vpop.f32.mrf.mxu0
        %v8499 = vadd.f32 0.0, %v8498
        %v8500 = vpop.f32.mrf.mxu0
        %v8501 = vadd.f32 0.0, %v8500
        %8502 = vmatmul.bf16.gmra.mxu0 %v8441
        %v8503 = vpop.f32.mrf.mxu0
        %v8504 = vadd.f32 0.0, %v8503
        %v8505 = vpop.f32.mrf.mxu0
        %v8506 = vadd.f32 0.0, %v8505
        %8507 = vmatmul.bf16.gmra.mxu0 %v8444
        %v8508 = vpop.f32.mrf.mxu0
        %v8509 = vadd.f32 0.0, %v8508
        %v8510 = vpop.f32.mrf.mxu0
        %v8511 = vadd.f32 0.0, %v8510
        %8512 = vmatmul.bf16.gmra.mxu0 %v8447
        %v8513 = vpop.f32.mrf.mxu0
        %v8514 = vadd.f32 0.0, %v8513
        %v8515 = vpop.f32.mrf.mxu0
        %v8516 = vadd.f32 0.0, %v8515
        %8517 = vmatmul.bf16.gmra.mxu0 %v8450
        %v8518 = vpop.f32.mrf.mxu0
        %v8519 = vadd.f32 0.0, %v8518
        %v8520 = vpop.f32.mrf.mxu0
        %v8521 = vadd.f32 0.0, %v8520
        %8522 = vmatmul.bf16.gmra.mxu0 %v8453
        %v8523 = vpop.f32.mrf.mxu0
        %v8524 = vadd.f32 0.0, %v8523
        %v8525 = vpop.f32.mrf.mxu0
        %v8526 = vadd.f32 0.0, %v8525
        %8527 = vmatmul.bf16.gmra.mxu0 %v8456
        %v8528 = vpop.f32.mrf.mxu0
        %v8529 = vadd.f32 0.0, %v8528
        %v8530 = vpop.f32.mrf.mxu0
        %v8531 = vadd.f32 0.0, %v8530
        %8532 = vmatmul.bf16.gmra.mxu0 %v8459
        %v8533 = vpop.f32.mrf.mxu0
        %v8534 = vadd.f32 0.0, %v8533
        %v8535 = vpop.f32.mrf.mxu0
        %v8536 = vadd.f32 0.0, %v8535
        %8537 = vmatmul.bf16.gmra.mxu0 %v8462
        %v8538 = vpop.f32.mrf.mxu0
        %v8539 = vadd.f32 0.0, %v8538
        %v8540 = vpop.f32.mrf.mxu0
        %v8541 = vadd.f32 0.0, %v8540
        %8542 = vmatmul.bf16.gmra.mxu0 %v8465
        %v8543 = vpop.f32.mrf.mxu0
        %v8544 = vadd.f32 0.0, %v8543
        %v8545 = vpop.f32.mrf.mxu0
        %v8546 = vadd.f32 0.0, %v8545
        %8547 = vmatmul.bf16.gmra.mxu0 %v8468
        %v8548 = vpop.f32.mrf.mxu0
        %v8549 = vadd.f32 0.0, %v8548
        %v8550 = vpop.f32.mrf.mxu0
        %v8551 = vadd.f32 0.0, %v8550
        %8552 = vmatmul.bf16.gmra.mxu0 %v8471
        %v8553 = vpop.f32.mrf.mxu0
        %v8554 = vadd.f32 0.0, %v8553
        %v8555 = vpop.f32.mrf.mxu0
        %v8556 = vadd.f32 0.0, %v8555
        %8557 = vmatmul.bf16.gmra.mxu0 %v8474
        %v8558 = vpop.f32.mrf.mxu0
        %v8559 = vadd.f32 0.0, %v8558
        %v8560 = vpop.f32.mrf.mxu0
        %v8561 = vadd.f32 0.0, %v8560
        %8562 = vmatmul.bf16.gmra.mxu0 %v8477
        %v8563 = vpop.f32.mrf.mxu0
        %v8564 = vadd.f32 0.0, %v8563
        %v8565 = vpop.f32.mrf.mxu0
        %v8566 = vadd.f32 0.0, %v8565
        %8567 = vdwg.mxu0
        %v8568 = vmul.f32 %v8239, %v8489
        %v8569 = vmul.f32 %v8241, %v8491
        %v8570 = vmul.f32 %v8244, %v8494
        %v8571 = vmul.f32 %v8246, %v8496
        %v8572 = vmul.f32 %v8249, %v8499
        %v8573 = vmul.f32 %v8251, %v8501
        %v8574 = vmul.f32 %v8254, %v8504
        %v8575 = vmul.f32 %v8256, %v8506
        %v8576 = vmul.f32 %v8259, %v8509
        %v8577 = vmul.f32 %v8261, %v8511
        %v8578 = vmul.f32 %v8264, %v8514
        %v8579 = vmul.f32 %v8266, %v8516
        %v8580 = vmul.f32 %v8269, %v8519
        %v8581 = vmul.f32 %v8271, %v8521
        %v8582 = vmul.f32 %v8274, %v8524
        %v8583 = vmul.f32 %v8276, %v8526
        %v8584 = vmul.f32 %v8279, %v8529
        %v8585 = vmul.f32 %v8281, %v8531
        %v8586 = vmul.f32 %v8284, %v8534
        %v8587 = vmul.f32 %v8286, %v8536
        %v8588 = vmul.f32 %v8289, %v8539
        %v8589 = vmul.f32 %v8291, %v8541
        %v8590 = vmul.f32 %v8294, %v8544
        %v8591 = vmul.f32 %v8296, %v8546
        %v8592 = vmul.f32 %v8299, %v8549
        %v8593 = vmul.f32 %v8301, %v8551
        %v8594 = vmul.f32 %v8304, %v8554
        %v8595 = vmul.f32 %v8306, %v8556
        %v8596 = vmul.f32 %v8309, %v8559
        %v8597 = vmul.f32 %v8311, %v8561
        %v8598 = vmul.f32 %v8314, %v8564
        %v8599 = vmul.f32 %v8316, %v8566
        %v8600 = vmul.f32 %v7750, %v8568
        %v8601 = vmul.f32 %v7751, %v8569
        %v8602 = vmul.f32 %v7752, %v8570
        %v8603 = vmul.f32 %v7753, %v8571
        %v8604 = vmul.f32 %v7754, %v8572
        %v8605 = vmul.f32 %v7755, %v8573
        %v8606 = vmul.f32 %v7756, %v8574
        %v8607 = vmul.f32 %v7757, %v8575
        %v8608 = vmul.f32 %v7758, %v8576
        %v8609 = vmul.f32 %v7759, %v8577
        %v8610 = vmul.f32 %v7760, %v8578
        %v8611 = vmul.f32 %v7761, %v8579
        %v8612 = vmul.f32 %v7762, %v8580
        %v8613 = vmul.f32 %v7763, %v8581
        %v8614 = vmul.f32 %v7764, %v8582
        %v8615 = vmul.f32 %v7765, %v8583
        %v8616 = vmul.f32 %v7766, %v8584
        %v8617 = vmul.f32 %v7767, %v8585
        %v8618 = vmul.f32 %v7768, %v8586
        %v8619 = vmul.f32 %v7769, %v8587
        %v8620 = vmul.f32 %v7770, %v8588
        %v8621 = vmul.f32 %v7771, %v8589
        %v8622 = vmul.f32 %v7772, %v8590
        %v8623 = vmul.f32 %v7773, %v8591
        %v8624 = vmul.f32 %v7774, %v8592
        %v8625 = vmul.f32 %v7775, %v8593
        %v8626 = vmul.f32 %v7776, %v8594
        %v8627 = vmul.f32 %v7777, %v8595
        %v8628 = vmul.f32 %v7778, %v8596
        %v8629 = vmul.f32 %v7779, %v8597
        %v8630 = vmul.f32 %v7780, %v8598
        %v8631 = vmul.f32 %v7781, %v8599
        %8632 = vst.msk [vmem:[%s981] sm:$0xff] %vm1140, %v8600
        %8633 = vst.msk [vmem:[%s981 + $0x8] sm:$0xff] %vm1140, %v8601
        %8634 = vst.msk [vmem:[%s981 + $0x10] sm:$0xff] %vm1140, %v8602
        %8635 = vst.msk [vmem:[%s981 + $0x18] sm:$0xff] %vm1140, %v8603
        %8636 = vst.msk [vmem:[%s981 + $0x20] sm:$0xff] %vm1140, %v8604
        %8637 = vst.msk [vmem:[%s981 + $0x28] sm:$0xff] %vm1140, %v8605
        %8638 = vst.msk [vmem:[%s981 + $0x30] sm:$0xff] %vm1140, %v8606
        %8639 = vst.msk [vmem:[%s981 + $0x38] sm:$0xff] %vm1140, %v8607
        %8640 = vst.msk [vmem:[%s981 + $0x40] sm:$0xff] %vm1140, %v8608
        %8641 = vst.msk [vmem:[%s981 + $0x48] sm:$0xff] %vm1140, %v8609
        %8642 = vst.msk [vmem:[%s981 + $0x50] sm:$0xff] %vm1140, %v8610
        %8643 = vst.msk [vmem:[%s981 + $0x58] sm:$0xff] %vm1140, %v8611
        %8644 = vst.msk [vmem:[%s981 + $0x60] sm:$0xff] %vm1140, %v8612
        %8645 = vst.msk [vmem:[%s981 + $0x68] sm:$0xff] %vm1140, %v8613
        %8646 = vst.msk [vmem:[%s981 + $0x70] sm:$0xff] %vm1140, %v8614
        %8647 = vst.msk [vmem:[%s981 + $0x78] sm:$0xff] %vm1140, %v8615
        %8648 = vst.msk [vmem:[%s981 + $0x80] sm:$0xff] %vm1140, %v8616
        %8649 = vst.msk [vmem:[%s981 + $0x88] sm:$0xff] %vm1140, %v8617
        %8650 = vst.msk [vmem:[%s981 + $0x90] sm:$0xff] %vm1140, %v8618
        %8651 = vst.msk [vmem:[%s981 + $0x98] sm:$0xff] %vm1140, %v8619
        %8652 = vst.msk [vmem:[%s981 + $0xa0] sm:$0xff] %vm1140, %v8620
        %8653 = vst.msk [vmem:[%s981 + $0xa8] sm:$0xff] %vm1140, %v8621
        %8654 = vst.msk [vmem:[%s981 + $0xb0] sm:$0xff] %vm1140, %v8622
        %8655 = vst.msk [vmem:[%s981 + $0xb8] sm:$0xff] %vm1140, %v8623
        %8656 = vst.msk [vmem:[%s981 + $0xc0] sm:$0xff] %vm1140, %v8624
        %8657 = vst.msk [vmem:[%s981 + $0xc8] sm:$0xff] %vm1140, %v8625
        %8658 = vst.msk [vmem:[%s981 + $0xd0] sm:$0xff] %vm1140, %v8626
        %8659 = vst.msk [vmem:[%s981 + $0xd8] sm:$0xff] %vm1140, %v8627
        %8660 = vst.msk [vmem:[%s981 + $0xe0] sm:$0xff] %vm1140, %v8628
        %8661 = vst.msk [vmem:[%s981 + $0xe8] sm:$0xff] %vm1140, %v8629
        %8662 = vst.msk [vmem:[%s981 + $0xf0] sm:$0xff] %vm1140, %v8630
        %8663 = vst.msk [vmem:[%s981 + $0xf8] sm:$0xff] %vm1140, %v8631
        %s8664 = sand.u32 %s713, 1
        %s8665 = scalar_lea.sflag [#allocation5], %s8664
        %s8666 = sand.u32 %s713, 1
        %s8667 = smul.addr %s8666, 256
        %s8668 = scalar_lea.vmem [#allocation8], %s8667
        // Predicated region
        $region145: #{tam_forward.1} parent=135 // pred_check
          %p8669 = pneg %p723
        $region146: #{tam_forward.1} parent=135 // pred_check_branch
          %8671 = sbr.rel (%p8669) target = $region148
        $region147: #{tam_forward.1} parent=135 // pred_region
          %8673 = vsyncadd %s8665, 0
          %s8674 = smul.addr %s81, 32
          %s8675 = smul.addr %s8674, 8
          %s8676 = scalar_lea.hbm %s59, %s8675
          %s8677 = sshll.u32 %s8668, 4
          %s8678 = int_to_ptr.vmem [resolvable:$true] %s8677
          %s8679 = sshll.u32 %s8676, 4
          %s8680 = int_to_ptr.hbm [resolvable:$true] %s8679
          %8685 = dma.vmem_to_hbm [thread:$0]  %s8678, 4096, %s8680, %s8665, 128, 128, 8
        $region148: #{tam_forward.1} parent=135 // pred_fallthru
          _
      $region136: #{tam_forward.1} parent=5 // pred_fallthru
        _
      %p8686 = scmp.le.s32.totalorder 2, %s76
      // Predicated region
      $region149: #{tam_forward.1} parent=5 // pred_check
        %p8687 = pneg %p8686
      $region150: #{tam_forward.1} parent=5 // pred_check_branch
        %8689 = sbr.rel (%p8687) target = $region152
      $region151: #{tam_forward.1} parent=5 // pred_region
        %s8690 = ssub.s32 %s76, 2
        // Predicated region
        $region153: #{tam_forward.1} parent=151 // pred_check
          %p8691 = pneg %p729
        $region154: #{tam_forward.1} parent=151 // pred_check_branch
          %8693 = sbr.rel (%p8691) target = $region156
        $region155: #{tam_forward.1} parent=151 // pred_region
          %s8694 = sand.u32 %s714, 1
          %s8695 = scalar_lea.sflag [#allocation5], %s8694
          %s8696 = sand.u32 %s714, 1
          %s8697 = smul.addr %s8696, 256
          %s8698 = scalar_lea.vmem [#allocation8], %s8697
          %8700 = dma.done %s8695, 4096
        $region156: #{tam_forward.1} parent=151 // pred_fallthru
          _
      $region152: #{tam_forward.1} parent=5 // pred_fallthru
        _
    $region6: #{tam_forward.1} parent=1 // loop_footer
      %s80 = sadd.s32 1, %s76
    $region7: #{tam_forward.1} parent=1 // loop_footer_branch
      %75 = sbr.rel target = $region3
    $region8: #{tam_forward.1} parent=1 // loop_exit
      _
    %8701 = vsyncpa [#allocation4], 1
    %s8702 = scalar_lea.sflag [#allocation4], 1
    %8703 = vsyncpa %s8702, 1
    %8704 = vsyncpa [#allocation7], 1
    %s8705 = scalar_lea.sflag [#allocation7], 1
    %8706 = vsyncpa %s8705, 1
    %8707 = vsyncpa [#allocation5], 1
    %s8708 = scalar_lea.sflag [#allocation5], 1
    %8709 = vsyncpa %s8708, 1

</llo_original>
